<compile_context>
chip_gen: v7x
topology: tpu7x:2x2x1
jax: 0.10.0
libtpu: 0.0.40
codegen_flags: <defaults>
</compile_context>

<pallas_src>
import jax
import jax.numpy as jnp
from jax.experimental import pallas as pl
from jax.experimental.pallas import tpu as pltpu

# Synthetic lane-dense config (stands in for the pretrained checkpoint).
B = 2          # batch
S = 128        # sequence length
H = 256        # hidden size            (multiple of 128)
NH = 2         # attention heads
HD = H // NH   # head dim = 128         (multiple of 128 -> aligned slices)
FFN = 512      # feed-forward hidden    (multiple of 128)
VOCAB = 128    # vocab size             (multiple of 128 for the one-hot gather)
LAYERS = 2
T = B * S      # folded matmul rows = 256
EPS = 1e-12    # BERT layernorm eps


def _layernorm(x, gamma, beta):
    # f32 VPU math on every generation (v5e has no bf16 VPU).
    mu = jnp.mean(x, axis=-1, keepdims=True)
    var = jnp.mean((x - mu) ** 2, axis=-1, keepdims=True)
    return (x - mu) * jax.lax.rsqrt(var + EPS) * gamma + beta


# ---------------------------------------------------------------------------
# Kernel: one grid step == one encoder layer on the resident (T,H) activation.
# Layer 0 additionally builds the embeddings; the last layer mean-pools.
# ---------------------------------------------------------------------------
def encoder_layer_kernel(ids_ref, tok_emb_ref, pos_ref, embln_ref,
                         wqkv_ref, bqkv_ref, wo_ref, bo_ref, ln1_ref,
                         w1_ref, b1_ref, w2_ref, b2_ref, ln2_ref,
                         out_ref, x_ref):
    li = pl.program_id(0)

    # ---- layer 0: embedding lookup (one-hot MXU gather) + LayerNorm --------
    @pl.when(li == 0)
    def _():
        ids = ids_ref[...]                                             # (B,S) i32
        iota = jax.lax.broadcasted_iota(jnp.int32, (B, S, VOCAB), 2)
        onehot = (ids[:, :, None] == iota).astype(jnp.bfloat16)        # (B,S,V)
        tok = jnp.dot(onehot.reshape(T, VOCAB), tok_emb_ref[...],
                      preferred_element_type=jnp.float32)              # (T,H)
        pos = jnp.tile(pos_ref[...], (B, 1))                           # (T,H)
        emb_ln = embln_ref[...]                                        # (2,H)
        x_ref[...] = _layernorm(tok + pos, emb_ln[0:1, :], emb_ln[1:2, :])

    # ---- one encoder layer --------------------------------------------------
    x = x_ref[...]                      # (T,H) f32, resident across layers
    xb = x.astype(jnp.bfloat16)         # hoisted cast (one per layer)

    # fused QKV: single (T,H)x(H,3H) MXU matmul; Q weights pre-scaled at init.
    qkv = jnp.dot(xb, wqkv_ref[...], preferred_element_type=jnp.float32) \
          + bqkv_ref[...]                                               # (T,3H) f32
    qkvb = qkv.astype(jnp.bfloat16)     # hoisted cast shared by all heads
    qkv3 = qkvb.reshape(B, S, 3 * H)    # split of leading (sublane) dim: free

    heads = []
    for h in range(NH):                 # NH=2; slices at 0/128 -> lane-aligned,
        q = qkv3[:, :, h * HD:(h + 1) * HD]            # full K=128 MXU matmuls
        k = qkv3[:, :, H + h * HD:H + (h + 1) * HD]
        v = qkv3[:, :, 2 * H + h * HD:2 * H + (h + 1) * HD]
        s = jnp.einsum('bqd,bkd->bqk', q, k,
                       preferred_element_type=jnp.float32)             # (B,S,S)
        s = s - jnp.max(s, axis=-1, keepdims=True)
        p = jnp.exp(s)
        p = p * pl.reciprocal(jnp.sum(p, axis=-1, keepdims=True), approx=True)
        heads.append(jnp.einsum('bqk,bkd->bqd', p.astype(jnp.bfloat16), v,
                                preferred_element_type=jnp.float32))    # (B,S,HD)
    ctx = jnp.concatenate(heads, axis=-1).reshape(T, H)                 # aligned

    attn = jnp.dot(ctx.astype(jnp.bfloat16), wo_ref[...],
                   preferred_element_type=jnp.float32) + bo_ref[...]    # (T,H)
    ln1 = ln1_ref[...]
    x1 = _layernorm(x + attn, ln1[0:1, :], ln1[1:2, :])                 # post-LN

    h1 = jnp.dot(x1.astype(jnp.bfloat16), w1_ref[...],
                 preferred_element_type=jnp.float32) + b1_ref[...]      # (T,FFN)
    h1 = jax.nn.gelu(h1, approximate=True)
    h2 = jnp.dot(h1.astype(jnp.bfloat16), w2_ref[...],
                 preferred_element_type=jnp.float32) + b2_ref[...]      # (T,H)
    ln2 = ln2_ref[...]
    xo = _layernorm(x1 + h2, ln2[0:1, :], ln2[1:2, :])                  # (T,H)
    x_ref[...] = xo

    # ---- last layer: mean over sequence == last_hidden_state.mean(dim=1) ---
    @pl.when(li == pl.num_programs(0) - 1)
    def _():
        out_ref[...] = jnp.mean(xo.reshape(B, S, H), axis=1).astype(out_ref.dtype)


# ---------------------------------------------------------------------------
# Pallas wrapper: one launch, layer axis as a pipelined grid.
# ---------------------------------------------------------------------------
def text_embedding_forward(input_ids, params):
    def full(shape):
        return pl.BlockSpec(shape, lambda l: (0,) * len(shape))

    def per_layer(d1, d2):
        # (LAYERS, d1, d2) -> kernel sees (d1, d2) of the current layer.
        return pl.BlockSpec((None, d1, d2), lambda l: (l, 0, 0))

    in_specs = [
        full((B, S)),                                   # input_ids
        full((VOCAB, H)),                               # token embedding table
        full((S, H)),                                   # position embeddings
        full((2, H)),                                   # embedding LayerNorm
        per_layer(H, 3 * H), per_layer(1, 3 * H),       # wqkv, bqkv
        per_layer(H, H), per_layer(1, H),               # wo, bo
        per_layer(2, H),                                # ln1
        per_layer(H, FFN), per_layer(1, FFN),           # w1, b1
        per_layer(FFN, H), per_layer(1, H),             # w2, b2
        per_layer(2, H),                                # ln2
    ]
    args = (input_ids, params["tok_emb"], params["pos_emb"], params["emb_ln"],
            params["wqkv"], params["bqkv"], params["wo"], params["bo"], params["ln1"],
            params["w1"], params["b1"], params["w2"], params["b2"], params["ln2"])

    return pl.pallas_call(
        encoder_layer_kernel,
        out_shape=jax.ShapeDtypeStruct((B, H), jnp.float32),
        grid_spec=pltpu.PrefetchScalarGridSpec(
            num_scalar_prefetch=0,
            grid=(LAYERS,),
            in_specs=in_specs,
            out_specs=pl.BlockSpec((B, H), lambda l: (0, 0)),
            scratch_shapes=[pltpu.VMEM((T, H), jnp.float32)],   # carried activation
        ),
        compiler_params=pltpu.CompilerParams(
            dimension_semantics=("arbitrary",),       # layer axis carries state
            vmem_limit_bytes=32 * 1024 * 1024,        # above v5e's 16 MiB default,
        ),                                            # headroom under v7x's 64 MiB
    )(*args)


# ---------------------------------------------------------------------------
# Deterministic synthetic parameter init (stands in for from_pretrained)
# ---------------------------------------------------------------------------
def init_params(key):
    def normal(k, shape, dtype, scale=0.02):
        return (scale * jax.random.normal(k, shape, jnp.float32)).astype(dtype)

    keys = jax.random.split(key, 6)
    ln = jnp.stack([jnp.ones((H,), jnp.float32),
                    jnp.zeros((H,), jnp.float32)], axis=0)            # (2,H)
    ln_layers = jnp.tile(ln[None], (LAYERS, 1, 1))                    # (LAYERS,2,H)

    # fold the 1/sqrt(HD) attention scale into the Q projection (and its bias):
    # scaling q instead of the (B,S,S) scores is HD/S x fewer VPU multiplies,
    # and pre-scaling the weights makes it free at runtime.
    scale = 1.0 / (HD ** 0.5)
    wqkv = normal(keys[2], (LAYERS, H, 3 * H), jnp.float32)
    wqkv = wqkv.at[:, :, 0:H].multiply(scale)
    bqkv = jnp.zeros((LAYERS, 1, 3 * H), jnp.float32)   # Q bias pre-scaled too (zeros)

    return {
        "tok_emb": normal(keys[0], (VOCAB, H), jnp.bfloat16),
        "pos_emb": normal(keys[1], (S, H), jnp.float32),
        "emb_ln": ln,
        # MXU weights in bf16 (f32 accumulation in-kernel), biases/LN in f32.
        "wqkv": wqkv.astype(jnp.bfloat16),
        "bqkv": bqkv,
        "wo":   normal(keys[3], (LAYERS, H, H), jnp.bfloat16),
        "bo":   jnp.zeros((LAYERS, 1, H), jnp.float32),
        "ln1":  ln_layers,
        "w1":   normal(keys[4], (LAYERS, H, FFN), jnp.bfloat16),
        "b1":   jnp.zeros((LAYERS, 1, FFN), jnp.float32),
        "w2":   normal(keys[5], (LAYERS, FFN, H), jnp.bfloat16),
        "b2":   jnp.zeros((LAYERS, 1, H), jnp.float32),
        "ln2":  ln_layers,
    }


if __name__ == "__main__":
    key = jax.random.PRNGKey(0)
    pkey, ikey = jax.random.split(key)
    params = init_params(pkey)
    input_ids = jax.random.randint(ikey, (B, S), 0, VOCAB, dtype=jnp.int32)

    emb = text_embedding_forward(input_ids, params)
    emb = jax.block_until_ready(emb)
    assert emb.shape == (B, H) and emb.dtype == jnp.float32
    assert bool(jnp.all(jnp.isfinite(emb)))
    print("KERNEL_OK")
</pallas_src>

<mosaic_0001>
module attributes {stable_mosaic.version = 11 : i64} {
  func.func @encoder_layer_kernel(%arg0: i32, %arg1: memref<2x128xi32, #tpu.memory_space<vmem>>, %arg2: memref<128x256xbf16, #tpu.memory_space<vmem>>, %arg3: memref<128x256xf32, #tpu.memory_space<vmem>>, %arg4: memref<2x256xf32, #tpu.memory_space<vmem>>, %arg5: memref<1x256x768xbf16, #tpu.memory_space<vmem>>, %arg6: memref<1x1x768xf32, #tpu.memory_space<vmem>>, %arg7: memref<1x256x256xbf16, #tpu.memory_space<vmem>>, %arg8: memref<1x1x256xf32, #tpu.memory_space<vmem>>, %arg9: memref<1x2x256xf32, #tpu.memory_space<vmem>>, %arg10: memref<1x256x512xbf16, #tpu.memory_space<vmem>>, %arg11: memref<1x1x512xf32, #tpu.memory_space<vmem>>, %arg12: memref<1x512x256xbf16, #tpu.memory_space<vmem>>, %arg13: memref<1x1x256xf32, #tpu.memory_space<vmem>>, %arg14: memref<1x2x256xf32, #tpu.memory_space<vmem>>, %arg15: memref<2x256xf32, #tpu.memory_space<vmem>>, %arg16: memref<256x256xf32, #tpu.memory_space<vmem>>) attributes {dimension_semantics = [#tpu.dimension_semantics<arbitrary>], iteration_bounds = array<i64: 2>, scalar_prefetch = 0 : i64, scratch_operands = 1 : i64, tpu.core_type = #tpu.core_type<tc>, window_params = [{pipeline_mode = #tpu.pipeline_mode<synchronous>, transform_indices = @transform_0, window_bounds = array<i64: 2, 128>}, {pipeline_mode = #tpu.pipeline_mode<synchronous>, transform_indices = @transform_1, window_bounds = array<i64: 128, 256>}, {pipeline_mode = #tpu.pipeline_mode<synchronous>, transform_indices = @transform_2, window_bounds = array<i64: 128, 256>}, {pipeline_mode = #tpu.pipeline_mode<synchronous>, transform_indices = @transform_3, window_bounds = array<i64: 2, 256>}, {transform_indices = @transform_4, window_bounds = array<i64: 1, 256, 768>}, {transform_indices = @transform_5, window_bounds = array<i64: 1, 1, 768>}, {transform_indices = @transform_6, window_bounds = array<i64: 1, 256, 256>}, {transform_indices = @transform_7, window_bounds = array<i64: 1, 1, 256>}, {transform_indices = @transform_8, window_bounds = array<i64: 1, 2, 256>}, {transform_indices = @transform_9, window_bounds = array<i64: 1, 256, 512>}, {transform_indices = @transform_10, window_bounds = array<i64: 1, 1, 512>}, {transform_indices = @transform_11, window_bounds = array<i64: 1, 512, 256>}, {transform_indices = @transform_12, window_bounds = array<i64: 1, 1, 256>}, {transform_indices = @transform_13, window_bounds = array<i64: 1, 2, 256>}, {pipeline_mode = #tpu.pipeline_mode<synchronous>, transform_indices = @transform_14, window_bounds = array<i64: 2, 256>}]} {
    %c0_i32 = arith.constant 0 : i32
    %0 = arith.cmpi eq, %arg0, %c0_i32 : i32
    %1 = arith.extui %0 : i1 to i32
    %c0_i32_0 = arith.constant 0 : i32
    %2 = arith.cmpi ne, %1, %c0_i32_0 : i32
    scf.if %2 {
      %c0_60 = arith.constant 0 : index
      %c0_61 = arith.constant 0 : index
      %143 = vector.load %arg1[%c0_60, %c0_61] : memref<2x128xi32, #tpu.memory_space<vmem>>, vector<2x128xi32>
      %144 = tpu.iota {dimensions = array<i32: 2>} : vector<2x128x128xi32>
      %145 = vector.shape_cast %143 : vector<2x128xi32> to vector<2x128x1xi32>
      %146 = vector.broadcast %145 : vector<2x128x1xi32> to vector<2x128x128xi32>
      %147 = arith.cmpi eq, %146, %144 : vector<2x128x128xi32>
      %148 = arith.extui %147 : vector<2x128x128xi1> to vector<2x128x128xi32>
      %149 = arith.sitofp %148 : vector<2x128x128xi32> to vector<2x128x128xf32>
      %150 = arith.truncf %149 : vector<2x128x128xf32> to vector<2x128x128xbf16>
      %151 = vector.shape_cast %150 : vector<2x128x128xbf16> to vector<256x128xbf16>
      %c0_62 = arith.constant 0 : index
      %c0_63 = arith.constant 0 : index
      %152 = vector.load %arg2[%c0_62, %c0_63] : memref<128x256xbf16, #tpu.memory_space<vmem>>, vector<128x256xbf16>
      %cst_64 = arith.constant dense<0.000000e+00> : vector<256x256xf32>
      %153 = tpu.matmul %151, %152, %cst_64 {dimension_numbers = #tpu.dot_dimension_numbers<[1], [0], [0], [1], [0, 0, 1, 1], [], []>} : vector<256x128xbf16>, vector<128x256xbf16>, vector<256x256xf32> -> vector<256x256xf32>
      %c0_65 = arith.constant 0 : index
      %c0_66 = arith.constant 0 : index
      %154 = vector.load %arg3[%c0_65, %c0_66] : memref<128x256xf32, #tpu.memory_space<vmem>>, vector<128x256xf32>
      %155 = tpu.concatenate %154, %154 in 0 : vector<128x256xf32>, vector<128x256xf32> -> vector<256x256xf32>
      %c0_67 = arith.constant 0 : index
      %c0_68 = arith.constant 0 : index
      %156 = vector.load %arg4[%c0_67, %c0_68] : memref<2x256xf32, #tpu.memory_space<vmem>>, vector<2x256xf32>
      %157 = arith.addf %153, %155 : vector<256x256xf32>
      %158 = vector.extract_strided_slice %156 {offsets = [0, 0], sizes = [1, 256], strides = [1, 1]} : vector<2x256xf32> to vector<1x256xf32>
      %159 = vector.extract_strided_slice %156 {offsets = [1, 0], sizes = [1, 256], strides = [1, 1]} : vector<2x256xf32> to vector<1x256xf32>
      %cst_69 = arith.constant dense<0.000000e+00> : vector<256xf32>
      %160 = vector.multi_reduction <add>, %157, %cst_69 [1] : vector<256x256xf32> to vector<256xf32>
      %161 = vector.shape_cast %160 : vector<256xf32> to vector<256x1xf32>
      %cst_70 = arith.constant 2.560000e+02 : f32
      %162 = vector.broadcast %cst_70 : f32 to vector<256x1xf32>
      %163 = arith.divf %161, %162 : vector<256x1xf32>
      %164 = vector.broadcast %163 : vector<256x1xf32> to vector<256x256xf32>
      %165 = arith.subf %157, %164 : vector<256x256xf32>
      %166 = arith.mulf %165, %165 : vector<256x256xf32>
      %cst_71 = arith.constant dense<0.000000e+00> : vector<256xf32>
      %167 = vector.multi_reduction <add>, %166, %cst_71 [1] : vector<256x256xf32> to vector<256xf32>
      %168 = vector.shape_cast %167 : vector<256xf32> to vector<256x1xf32>
      %cst_72 = arith.constant 2.560000e+02 : f32
      %169 = vector.broadcast %cst_72 : f32 to vector<256x1xf32>
      %170 = arith.divf %168, %169 : vector<256x1xf32>
      %171 = vector.broadcast %163 : vector<256x1xf32> to vector<256x256xf32>
      %172 = arith.subf %157, %171 : vector<256x256xf32>
      %cst_73 = arith.constant 9.99999996E-13 : f32
      %173 = vector.broadcast %cst_73 : f32 to vector<256x1xf32>
      %174 = arith.addf %170, %173 : vector<256x1xf32>
      %175 = math.rsqrt %174 : vector<256x1xf32>
      %176 = vector.broadcast %175 : vector<256x1xf32> to vector<256x256xf32>
      %177 = arith.mulf %172, %176 : vector<256x256xf32>
      %178 = vector.broadcast %158 : vector<1x256xf32> to vector<256x256xf32>
      %179 = arith.mulf %177, %178 : vector<256x256xf32>
      %180 = vector.broadcast %159 : vector<1x256xf32> to vector<256x256xf32>
      %181 = arith.addf %179, %180 : vector<256x256xf32>
      %c0_74 = arith.constant 0 : index
      %c0_75 = arith.constant 0 : index
      %182 = vector.load %arg16[%c0_74, %c0_75] : memref<256x256xf32, #tpu.memory_space<vmem>>, vector<256x256xf32>
      tpu.vector_store %arg16[%c0_74, %c0_75], %181 {strides = array<i32>} : memref<256x256xf32, #tpu.memory_space<vmem>>, vector<256x256xf32>,
    } else {
    }
    %c0 = arith.constant 0 : index
    %c0_1 = arith.constant 0 : index
    %3 = vector.load %arg16[%c0, %c0_1] : memref<256x256xf32, #tpu.memory_space<vmem>>, vector<256x256xf32>
    %4 = arith.truncf %3 : vector<256x256xf32> to vector<256x256xbf16>
    %c0_2 = arith.constant 0 : index
    %c0_3 = arith.constant 0 : index
    %c0_4 = arith.constant 0 : index
    %5 = vector.load %arg5[%c0_2, %c0_3, %c0_4] : memref<1x256x768xbf16, #tpu.memory_space<vmem>>, vector<1x256x768xbf16>
    %6 = vector.shape_cast %5 : vector<1x256x768xbf16> to vector<256x768xbf16>
    %cst = arith.constant dense<0.000000e+00> : vector<256x768xf32>
    %7 = tpu.matmul %4, %6, %cst {dimension_numbers = #tpu.dot_dimension_numbers<[1], [0], [0], [1], [0, 0, 1, 1], [], []>} : vector<256x256xbf16>, vector<256x768xbf16>, vector<256x768xf32> -> vector<256x768xf32>
    %c0_5 = arith.constant 0 : index
    %c0_6 = arith.constant 0 : index
    %c0_7 = arith.constant 0 : index
    %8 = vector.load %arg6[%c0_5, %c0_6, %c0_7] : memref<1x1x768xf32, #tpu.memory_space<vmem>>, vector<1x1x768xf32>
    %9 = vector.shape_cast %8 : vector<1x1x768xf32> to vector<1x768xf32>
    %10 = vector.broadcast %9 : vector<1x768xf32> to vector<256x768xf32>
    %11 = arith.addf %7, %10 : vector<256x768xf32>
    %12 = arith.truncf %11 : vector<256x768xf32> to vector<256x768xbf16>
    %13 = vector.shape_cast %12 : vector<256x768xbf16> to vector<2x128x768xbf16>
    %14 = vector.extract_strided_slice %13 {offsets = [0, 0, 0], sizes = [2, 128, 128], strides = [1, 1, 1]} : vector<2x128x768xbf16> to vector<2x128x128xbf16>
    %15 = vector.extract_strided_slice %13 {offsets = [0, 0, 256], sizes = [2, 128, 128], strides = [1, 1, 1]} : vector<2x128x768xbf16> to vector<2x128x128xbf16>
    %16 = vector.extract_strided_slice %13 {offsets = [0, 0, 512], sizes = [2, 128, 128], strides = [1, 1, 1]} : vector<2x128x768xbf16> to vector<2x128x128xbf16>
    "tpu.trace_start"() <{level = 10 : i32, message = "bqd,bkd->bqk"}> : () -> ()
    %cst_8 = arith.constant dense<0.000000e+00> : vector<2x128x128xf32>
    %17 = tpu.matmul %14, %15, %cst_8 {dimension_numbers = #tpu.dot_dimension_numbers<[2], [2], [1], [1], [0, 0, 0, 1, 1, 1], [0], [0]>} : vector<2x128x128xbf16>, vector<2x128x128xbf16>, vector<2x128x128xf32> -> vector<2x128x128xf32>
    "tpu.trace_stop"() : () -> ()
    %cst_9 = arith.constant dense<0xFF800000> : vector<2x128xf32>
    %18 = vector.multi_reduction <maximumf>, %17, %cst_9 [2] : vector<2x128x128xf32> to vector<2x128xf32>
    %19 = vector.shape_cast %18 : vector<2x128xf32> to vector<2x128x1xf32>
    %20 = vector.broadcast %19 : vector<2x128x1xf32> to vector<2x128x128xf32>
    %21 = arith.subf %17, %20 : vector<2x128x128xf32>
    %22 = math.exp %21 : vector<2x128x128xf32>
    %cst_10 = arith.constant dense<0.000000e+00> : vector<2x128xf32>
    %23 = vector.multi_reduction <add>, %22, %cst_10 [2] : vector<2x128x128xf32> to vector<2x128xf32>
    %24 = vector.shape_cast %23 : vector<2x128xf32> to vector<2x128x1xf32>
    %25 = tpu.reciprocal %24 {approx = true} : vector<2x128x1xf32> -> vector<2x128x1xf32>
    %26 = vector.broadcast %25 : vector<2x128x1xf32> to vector<2x128x128xf32>
    %27 = arith.mulf %22, %26 : vector<2x128x128xf32>
    %28 = arith.truncf %27 : vector<2x128x128xf32> to vector<2x128x128xbf16>
    "tpu.trace_start"() <{level = 10 : i32, message = "bqk,bkd->bqd"}> : () -> ()
    %cst_11 = arith.constant dense<0.000000e+00> : vector<2x128x128xf32>
    %29 = tpu.matmul %28, %16, %cst_11 {dimension_numbers = #tpu.dot_dimension_numbers<[2], [1], [1], [2], [0, 0, 0, 1, 1, 2], [0], [0]>} : vector<2x128x128xbf16>, vector<2x128x128xbf16>, vector<2x128x128xf32> -> vector<2x128x128xf32>
    "tpu.trace_stop"() : () -> ()
    %30 = vector.extract_strided_slice %13 {offsets = [0, 0, 128], sizes = [2, 128, 128], strides = [1, 1, 1]} : vector<2x128x768xbf16> to vector<2x128x128xbf16>
    %31 = vector.extract_strided_slice %13 {offsets = [0, 0, 384], sizes = [2, 128, 128], strides = [1, 1, 1]} : vector<2x128x768xbf16> to vector<2x128x128xbf16>
    %32 = vector.extract_strided_slice %13 {offsets = [0, 0, 640], sizes = [2, 128, 128], strides = [1, 1, 1]} : vector<2x128x768xbf16> to vector<2x128x128xbf16>
    "tpu.trace_start"() <{level = 10 : i32, message = "bqd,bkd->bqk"}> : () -> ()
    %cst_12 = arith.constant dense<0.000000e+00> : vector<2x128x128xf32>
    %33 = tpu.matmul %30, %31, %cst_12 {dimension_numbers = #tpu.dot_dimension_numbers<[2], [2], [1], [1], [0, 0, 0, 1, 1, 1], [0], [0]>} : vector<2x128x128xbf16>, vector<2x128x128xbf16>, vector<2x128x128xf32> -> vector<2x128x128xf32>
    "tpu.trace_stop"() : () -> ()
    %cst_13 = arith.constant dense<0xFF800000> : vector<2x128xf32>
    %34 = vector.multi_reduction <maximumf>, %33, %cst_13 [2] : vector<2x128x128xf32> to vector<2x128xf32>
    %35 = vector.shape_cast %34 : vector<2x128xf32> to vector<2x128x1xf32>
    %36 = vector.broadcast %35 : vector<2x128x1xf32> to vector<2x128x128xf32>
    %37 = arith.subf %33, %36 : vector<2x128x128xf32>
    %38 = math.exp %37 : vector<2x128x128xf32>
    %cst_14 = arith.constant dense<0.000000e+00> : vector<2x128xf32>
    %39 = vector.multi_reduction <add>, %38, %cst_14 [2] : vector<2x128x128xf32> to vector<2x128xf32>
    %40 = vector.shape_cast %39 : vector<2x128xf32> to vector<2x128x1xf32>
    %41 = tpu.reciprocal %40 {approx = true} : vector<2x128x1xf32> -> vector<2x128x1xf32>
    %42 = vector.broadcast %41 : vector<2x128x1xf32> to vector<2x128x128xf32>
    %43 = arith.mulf %38, %42 : vector<2x128x128xf32>
    %44 = arith.truncf %43 : vector<2x128x128xf32> to vector<2x128x128xbf16>
    "tpu.trace_start"() <{level = 10 : i32, message = "bqk,bkd->bqd"}> : () -> ()
    %cst_15 = arith.constant dense<0.000000e+00> : vector<2x128x128xf32>
    %45 = tpu.matmul %44, %32, %cst_15 {dimension_numbers = #tpu.dot_dimension_numbers<[2], [1], [1], [2], [0, 0, 0, 1, 1, 2], [0], [0]>} : vector<2x128x128xbf16>, vector<2x128x128xbf16>, vector<2x128x128xf32> -> vector<2x128x128xf32>
    "tpu.trace_stop"() : () -> ()
    %46 = tpu.concatenate %29, %45 in 2 : vector<2x128x128xf32>, vector<2x128x128xf32> -> vector<2x128x256xf32>
    %47 = vector.shape_cast %46 : vector<2x128x256xf32> to vector<256x256xf32>
    %48 = arith.truncf %47 : vector<256x256xf32> to vector<256x256xbf16>
    %c0_16 = arith.constant 0 : index
    %c0_17 = arith.constant 0 : index
    %c0_18 = arith.constant 0 : index
    %49 = vector.load %arg7[%c0_16, %c0_17, %c0_18] : memref<1x256x256xbf16, #tpu.memory_space<vmem>>, vector<1x256x256xbf16>
    %50 = vector.shape_cast %49 : vector<1x256x256xbf16> to vector<256x256xbf16>
    %cst_19 = arith.constant dense<0.000000e+00> : vector<256x256xf32>
    %51 = tpu.matmul %48, %50, %cst_19 {dimension_numbers = #tpu.dot_dimension_numbers<[1], [0], [0], [1], [0, 0, 1, 1], [], []>} : vector<256x256xbf16>, vector<256x256xbf16>, vector<256x256xf32> -> vector<256x256xf32>
    %c0_20 = arith.constant 0 : index
    %c0_21 = arith.constant 0 : index
    %c0_22 = arith.constant 0 : index
    %52 = vector.load %arg8[%c0_20, %c0_21, %c0_22] : memref<1x1x256xf32, #tpu.memory_space<vmem>>, vector<1x1x256xf32>
    %53 = vector.shape_cast %52 : vector<1x1x256xf32> to vector<1x256xf32>
    %54 = vector.broadcast %53 : vector<1x256xf32> to vector<256x256xf32>
    %55 = arith.addf %51, %54 : vector<256x256xf32>
    %c0_23 = arith.constant 0 : index
    %c0_24 = arith.constant 0 : index
    %c0_25 = arith.constant 0 : index
    %56 = vector.load %arg9[%c0_23, %c0_24, %c0_25] : memref<1x2x256xf32, #tpu.memory_space<vmem>>, vector<1x2x256xf32>
    %57 = vector.shape_cast %56 : vector<1x2x256xf32> to vector<2x256xf32>
    %58 = arith.addf %3, %55 : vector<256x256xf32>
    %59 = vector.extract_strided_slice %57 {offsets = [0, 0], sizes = [1, 256], strides = [1, 1]} : vector<2x256xf32> to vector<1x256xf32>
    %60 = vector.extract_strided_slice %57 {offsets = [1, 0], sizes = [1, 256], strides = [1, 1]} : vector<2x256xf32> to vector<1x256xf32>
    %cst_26 = arith.constant dense<0.000000e+00> : vector<256xf32>
    %61 = vector.multi_reduction <add>, %58, %cst_26 [1] : vector<256x256xf32> to vector<256xf32>
    %62 = vector.shape_cast %61 : vector<256xf32> to vector<256x1xf32>
    %cst_27 = arith.constant 2.560000e+02 : f32
    %63 = vector.broadcast %cst_27 : f32 to vector<256x1xf32>
    %64 = arith.divf %62, %63 : vector<256x1xf32>
    %65 = vector.broadcast %64 : vector<256x1xf32> to vector<256x256xf32>
    %66 = arith.subf %58, %65 : vector<256x256xf32>
    %67 = arith.mulf %66, %66 : vector<256x256xf32>
    %cst_28 = arith.constant dense<0.000000e+00> : vector<256xf32>
    %68 = vector.multi_reduction <add>, %67, %cst_28 [1] : vector<256x256xf32> to vector<256xf32>
    %69 = vector.shape_cast %68 : vector<256xf32> to vector<256x1xf32>
    %cst_29 = arith.constant 2.560000e+02 : f32
    %70 = vector.broadcast %cst_29 : f32 to vector<256x1xf32>
    %71 = arith.divf %69, %70 : vector<256x1xf32>
    %72 = vector.broadcast %64 : vector<256x1xf32> to vector<256x256xf32>
    %73 = arith.subf %58, %72 : vector<256x256xf32>
    %cst_30 = arith.constant 9.99999996E-13 : f32
    %74 = vector.broadcast %cst_30 : f32 to vector<256x1xf32>
    %75 = arith.addf %71, %74 : vector<256x1xf32>
    %76 = math.rsqrt %75 : vector<256x1xf32>
    %77 = vector.broadcast %76 : vector<256x1xf32> to vector<256x256xf32>
    %78 = arith.mulf %73, %77 : vector<256x256xf32>
    %79 = vector.broadcast %59 : vector<1x256xf32> to vector<256x256xf32>
    %80 = arith.mulf %78, %79 : vector<256x256xf32>
    %81 = vector.broadcast %60 : vector<1x256xf32> to vector<256x256xf32>
    %82 = arith.addf %80, %81 : vector<256x256xf32>
    %83 = arith.truncf %82 : vector<256x256xf32> to vector<256x256xbf16>
    %c0_31 = arith.constant 0 : index
    %c0_32 = arith.constant 0 : index
    %c0_33 = arith.constant 0 : index
    %84 = vector.load %arg10[%c0_31, %c0_32, %c0_33] : memref<1x256x512xbf16, #tpu.memory_space<vmem>>, vector<1x256x512xbf16>
    %85 = vector.shape_cast %84 : vector<1x256x512xbf16> to vector<256x512xbf16>
    %cst_34 = arith.constant dense<0.000000e+00> : vector<256x512xf32>
    %86 = tpu.matmul %83, %85, %cst_34 {dimension_numbers = #tpu.dot_dimension_numbers<[1], [0], [0], [1], [0, 0, 1, 1], [], []>} : vector<256x256xbf16>, vector<256x512xbf16>, vector<256x512xf32> -> vector<256x512xf32>
    %c0_35 = arith.constant 0 : index
    %c0_36 = arith.constant 0 : index
    %c0_37 = arith.constant 0 : index
    %87 = vector.load %arg11[%c0_35, %c0_36, %c0_37] : memref<1x1x512xf32, #tpu.memory_space<vmem>>, vector<1x1x512xf32>
    %88 = vector.shape_cast %87 : vector<1x1x512xf32> to vector<1x512xf32>
    %89 = vector.broadcast %88 : vector<1x512xf32> to vector<256x512xf32>
    %90 = arith.addf %86, %89 : vector<256x512xf32>
    %91 = arith.mulf %90, %90 : vector<256x512xf32>
    %92 = arith.mulf %90, %91 : vector<256x512xf32>
    %cst_38 = arith.constant 4.471500e-02 : f32
    %93 = vector.broadcast %cst_38 : f32 to vector<256x512xf32>
    %94 = arith.mulf %93, %92 : vector<256x512xf32>
    %95 = arith.addf %90, %94 : vector<256x512xf32>
    %cst_39 = arith.constant 0.797884583 : f32
    %96 = vector.broadcast %cst_39 : f32 to vector<256x512xf32>
    %97 = arith.mulf %96, %95 : vector<256x512xf32>
    %98 = math.tanh %97 : vector<256x512xf32>
    %cst_40 = arith.constant 1.000000e+00 : f32
    %99 = vector.broadcast %cst_40 : f32 to vector<256x512xf32>
    %100 = arith.addf %99, %98 : vector<256x512xf32>
    %cst_41 = arith.constant 5.000000e-01 : f32
    %101 = vector.broadcast %cst_41 : f32 to vector<256x512xf32>
    %102 = arith.mulf %101, %100 : vector<256x512xf32>
    %103 = arith.mulf %90, %102 : vector<256x512xf32>
    %104 = arith.truncf %103 : vector<256x512xf32> to vector<256x512xbf16>
    %c0_42 = arith.constant 0 : index
    %c0_43 = arith.constant 0 : index
    %c0_44 = arith.constant 0 : index
    %105 = vector.load %arg12[%c0_42, %c0_43, %c0_44] : memref<1x512x256xbf16, #tpu.memory_space<vmem>>, vector<1x512x256xbf16>
    %106 = vector.shape_cast %105 : vector<1x512x256xbf16> to vector<512x256xbf16>
    %cst_45 = arith.constant dense<0.000000e+00> : vector<256x256xf32>
    %107 = tpu.matmul %104, %106, %cst_45 {dimension_numbers = #tpu.dot_dimension_numbers<[1], [0], [0], [1], [0, 0, 1, 1], [], []>} : vector<256x512xbf16>, vector<512x256xbf16>, vector<256x256xf32> -> vector<256x256xf32>
    %c0_46 = arith.constant 0 : index
    %c0_47 = arith.constant 0 : index
    %c0_48 = arith.constant 0 : index
    %108 = vector.load %arg13[%c0_46, %c0_47, %c0_48] : memref<1x1x256xf32, #tpu.memory_space<vmem>>, vector<1x1x256xf32>
    %109 = vector.shape_cast %108 : vector<1x1x256xf32> to vector<1x256xf32>
    %110 = vector.broadcast %109 : vector<1x256xf32> to vector<256x256xf32>
    %111 = arith.addf %107, %110 : vector<256x256xf32>
    %c0_49 = arith.constant 0 : index
    %c0_50 = arith.constant 0 : index
    %c0_51 = arith.constant 0 : index
    %112 = vector.load %arg14[%c0_49, %c0_50, %c0_51] : memref<1x2x256xf32, #tpu.memory_space<vmem>>, vector<1x2x256xf32>
    %113 = vector.shape_cast %112 : vector<1x2x256xf32> to vector<2x256xf32>
    %114 = arith.addf %82, %111 : vector<256x256xf32>
    %115 = vector.extract_strided_slice %113 {offsets = [0, 0], sizes = [1, 256], strides = [1, 1]} : vector<2x256xf32> to vector<1x256xf32>
    %116 = vector.extract_strided_slice %113 {offsets = [1, 0], sizes = [1, 256], strides = [1, 1]} : vector<2x256xf32> to vector<1x256xf32>
    %cst_52 = arith.constant dense<0.000000e+00> : vector<256xf32>
    %117 = vector.multi_reduction <add>, %114, %cst_52 [1] : vector<256x256xf32> to vector<256xf32>
    %118 = vector.shape_cast %117 : vector<256xf32> to vector<256x1xf32>
    %cst_53 = arith.constant 2.560000e+02 : f32
    %119 = vector.broadcast %cst_53 : f32 to vector<256x1xf32>
    %120 = arith.divf %118, %119 : vector<256x1xf32>
    %121 = vector.broadcast %120 : vector<256x1xf32> to vector<256x256xf32>
    %122 = arith.subf %114, %121 : vector<256x256xf32>
    %123 = arith.mulf %122, %122 : vector<256x256xf32>
    %cst_54 = arith.constant dense<0.000000e+00> : vector<256xf32>
    %124 = vector.multi_reduction <add>, %123, %cst_54 [1] : vector<256x256xf32> to vector<256xf32>
    %125 = vector.shape_cast %124 : vector<256xf32> to vector<256x1xf32>
    %cst_55 = arith.constant 2.560000e+02 : f32
    %126 = vector.broadcast %cst_55 : f32 to vector<256x1xf32>
    %127 = arith.divf %125, %126 : vector<256x1xf32>
    %128 = vector.broadcast %120 : vector<256x1xf32> to vector<256x256xf32>
    %129 = arith.subf %114, %128 : vector<256x256xf32>
    %cst_56 = arith.constant 9.99999996E-13 : f32
    %130 = vector.broadcast %cst_56 : f32 to vector<256x1xf32>
    %131 = arith.addf %127, %130 : vector<256x1xf32>
    %132 = math.rsqrt %131 : vector<256x1xf32>
    %133 = vector.broadcast %132 : vector<256x1xf32> to vector<256x256xf32>
    %134 = arith.mulf %129, %133 : vector<256x256xf32>
    %135 = vector.broadcast %115 : vector<1x256xf32> to vector<256x256xf32>
    %136 = arith.mulf %134, %135 : vector<256x256xf32>
    %137 = vector.broadcast %116 : vector<1x256xf32> to vector<256x256xf32>
    %138 = arith.addf %136, %137 : vector<256x256xf32>
    %c0_57 = arith.constant 0 : index
    %c0_58 = arith.constant 0 : index
    %139 = vector.load %arg16[%c0_57, %c0_58] : memref<256x256xf32, #tpu.memory_space<vmem>>, vector<256x256xf32>
    tpu.vector_store %arg16[%c0_57, %c0_58], %138 {strides = array<i32>} : memref<256x256xf32, #tpu.memory_space<vmem>>, vector<256x256xf32>,
    %c1_i32 = arith.constant 1 : i32
    %140 = arith.cmpi eq, %arg0, %c1_i32 : i32
    %141 = arith.extui %140 : i1 to i32
    %c0_i32_59 = arith.constant 0 : i32
    %142 = arith.cmpi ne, %141, %c0_i32_59 : i32
    scf.if %142 {
      %143 = vector.shape_cast %138 : vector<256x256xf32> to vector<2x128x256xf32>
      %cst_60 = arith.constant dense<0.000000e+00> : vector<2x256xf32>
      %144 = vector.multi_reduction <add>, %143, %cst_60 [1] : vector<2x128x256xf32> to vector<2x256xf32>
      %cst_61 = arith.constant 1.280000e+02 : f32
      %145 = vector.broadcast %cst_61 : f32 to vector<2x256xf32>
      %146 = arith.divf %144, %145 : vector<2x256xf32>
      %c0_62 = arith.constant 0 : index
      %c0_63 = arith.constant 0 : index
      %147 = vector.load %arg15[%c0_62, %c0_63] : memref<2x256xf32, #tpu.memory_space<vmem>>, vector<2x256xf32>
      tpu.vector_store %arg15[%c0_62, %c0_63], %146 {strides = array<i32>} : memref<2x256xf32, #tpu.memory_space<vmem>>, vector<2x256xf32>,
    } else {
    }
    return
  }
  func.func @transform_0(%arg0: i32) -> (i32, i32) {
    %c0_i32 = arith.constant 0 : i32
    %c0_i32_0 = arith.constant 0 : i32
    %c0_i32_1 = arith.constant 0 : i32
    return %c0_i32, %c0_i32_0 : i32, i32
  }
  func.func @transform_1(%arg0: i32) -> (i32, i32) {
    %c0_i32 = arith.constant 0 : i32
    %c0_i32_0 = arith.constant 0 : i32
    %c0_i32_1 = arith.constant 0 : i32
    return %c0_i32, %c0_i32_0 : i32, i32
  }
  func.func @transform_2(%arg0: i32) -> (i32, i32) {
    %c0_i32 = arith.constant 0 : i32
    %c0_i32_0 = arith.constant 0 : i32
    %c0_i32_1 = arith.constant 0 : i32
    return %c0_i32, %c0_i32_0 : i32, i32
  }
  func.func @transform_3(%arg0: i32) -> (i32, i32) {
    %c0_i32 = arith.constant 0 : i32
    %c0_i32_0 = arith.constant 0 : i32
    %c0_i32_1 = arith.constant 0 : i32
    return %c0_i32, %c0_i32_0 : i32, i32
  }
  func.func @transform_4(%arg0: i32) -> (i32, i32, i32) {
    %c0_i32 = arith.constant 0 : i32
    %c0_i32_0 = arith.constant 0 : i32
    %c0_i32_1 = arith.constant 0 : i32
    return %arg0, %c0_i32, %c0_i32_0 : i32, i32, i32
  }
  func.func @transform_5(%arg0: i32) -> (i32, i32, i32) {
    %c0_i32 = arith.constant 0 : i32
    %c0_i32_0 = arith.constant 0 : i32
    %c0_i32_1 = arith.constant 0 : i32
    return %arg0, %c0_i32, %c0_i32_0 : i32, i32, i32
  }
  func.func @transform_6(%arg0: i32) -> (i32, i32, i32) {
    %c0_i32 = arith.constant 0 : i32
    %c0_i32_0 = arith.constant 0 : i32
    %c0_i32_1 = arith.constant 0 : i32
    return %arg0, %c0_i32, %c0_i32_0 : i32, i32, i32
  }
  func.func @transform_7(%arg0: i32) -> (i32, i32, i32) {
    %c0_i32 = arith.constant 0 : i32
    %c0_i32_0 = arith.constant 0 : i32
    %c0_i32_1 = arith.constant 0 : i32
    return %arg0, %c0_i32, %c0_i32_0 : i32, i32, i32
  }
  func.func @transform_8(%arg0: i32) -> (i32, i32, i32) {
    %c0_i32 = arith.constant 0 : i32
    %c0_i32_0 = arith.constant 0 : i32
    %c0_i32_1 = arith.constant 0 : i32
    return %arg0, %c0_i32, %c0_i32_0 : i32, i32, i32
  }
  func.func @transform_9(%arg0: i32) -> (i32, i32, i32) {
    %c0_i32 = arith.constant 0 : i32
    %c0_i32_0 = arith.constant 0 : i32
    %c0_i32_1 = arith.constant 0 : i32
    return %arg0, %c0_i32, %c0_i32_0 : i32, i32, i32
  }
  func.func @transform_10(%arg0: i32) -> (i32, i32, i32) {
    %c0_i32 = arith.constant 0 : i32
    %c0_i32_0 = arith.constant 0 : i32
    %c0_i32_1 = arith.constant 0 : i32
    return %arg0, %c0_i32, %c0_i32_0 : i32, i32, i32
  }
  func.func @transform_11(%arg0: i32) -> (i32, i32, i32) {
    %c0_i32 = arith.constant 0 : i32
    %c0_i32_0 = arith.constant 0 : i32
    %c0_i32_1 = arith.constant 0 : i32
    return %arg0, %c0_i32, %c0_i32_0 : i32, i32, i32
  }
  func.func @transform_12(%arg0: i32) -> (i32, i32, i32) {
    %c0_i32 = arith.constant 0 : i32
    %c0_i32_0 = arith.constant 0 : i32
    %c0_i32_1 = arith.constant 0 : i32
    return %arg0, %c0_i32, %c0_i32_0 : i32, i32, i32
  }
  func.func @transform_13(%arg0: i32) -> (i32, i32, i32) {
    %c0_i32 = arith.constant 0 : i32
    %c0_i32_0 = arith.constant 0 : i32
    %c0_i32_1 = arith.constant 0 : i32
    return %arg0, %c0_i32, %c0_i32_0 : i32, i32, i32
  }
  func.func @transform_14(%arg0: i32) -> (i32, i32) {
    %c0_i32 = arith.constant 0 : i32
    %c0_i32_0 = arith.constant 0 : i32
    %c0_i32_1 = arith.constant 0 : i32
    return %c0_i32, %c0_i32_0 : i32, i32
  }
}

</mosaic_0001>

<llo_original>
// kernel: tpu_custom_call.1
$region0: #{tpu_custom_call.1}
  #allocation0 [shape = 'u32[]', space=smem, size = 0x4, offset = 0x4, fixed_abs, tag = 'smem constant byte address 0x4 - core index']
  #allocation1 [shape = 'u32[144,128]{1,0:T(1,128)}', space=vmem, size = 0x12000, scoped, tag = 'internal scratch']
  #allocation2 [shape = 'f32[256,256]{1,0:T(8,128)}', space=vmem, size = 0x40000, scoped, tag = 'scratch operand']
  %s0 = inlined_call_operand.hbm [shape: s32[2,128], index: 0, kind: input, shape index: {}]
  %s1 = inlined_call_operand.hbm [shape: bf16[128,256], index: 1, kind: input, shape index: {}]
  %s2 = inlined_call_operand.hbm [shape: f32[128,256], index: 2, kind: input, shape index: {}]
  %s3 = inlined_call_operand.hbm [shape: f32[2,256], index: 3, kind: input, shape index: {}]
  %s4 = inlined_call_operand.hbm [shape: bf16[2,256,768], index: 4, kind: input, shape index: {}]
  %s5 = inlined_call_operand.vmem [shape: f32[2,1,768], index: 5, kind: input, shape index: {}]
  %s6 = inlined_call_operand.hbm [shape: bf16[2,256,256], index: 6, kind: input, shape index: {}]
  %s7 = inlined_call_operand.hbm [shape: f32[2,1,256], index: 7, kind: input, shape index: {}]
  %s8 = inlined_call_operand.vmem [shape: f32[2,2,256], index: 8, kind: input, shape index: {}]
  %s9 = inlined_call_operand.hbm [shape: bf16[2,256,512], index: 9, kind: input, shape index: {}]
  %s10 = inlined_call_operand.vmem [shape: f32[2,1,512], index: 10, kind: input, shape index: {}]
  %s11 = inlined_call_operand.hbm [shape: bf16[2,512,256], index: 11, kind: input, shape index: {}]
  %s12 = inlined_call_operand.vmem [shape: f32[2,1,256], index: 12, kind: input, shape index: {}]
  %s13 = inlined_call_operand.vmem [shape: f32[2,2,256], index: 13, kind: input, shape index: {}]
  %s14 = inlined_call_operand.hbm [shape: f32[2,256], index: 14, kind: output, shape index: {}]
  %s15 = sld [smem:[#allocation0]]
  $region133: #{tpu_custom_call.1} parent=0
    _
  %s17 = ssub.s32 1, %s15
  %s18 = scalar_select 0, %s17, %s15
  $region1: #{tpu_custom_call.1} parent=0
    #allocation3 [shape = 'u8[1024]{0}', space=vmem, size = 0x400, scoped, tag = 'input window, operand 0, single buffered']
    #allocation4 [shape = 's32[2]{0}', space=sflag, size = 0x8, scoped, tag = 'scoped memory for tpu_custom_call.1']
    #allocation5 [shape = 's32[2]{0}', space=sflag, size = 0x8, scoped, tag = 'scoped memory for tpu_custom_call.1']
    #allocation6 [shape = 'u8[65536]{0}', space=vmem, size = 0x10000, scoped, tag = 'input window, operand 1, single buffered']
    #allocation7 [shape = 's32[1]{0}', space=sflag, size = 0x4, scoped, tag = 'scoped memory for tpu_custom_call.1']
    #allocation8 [shape = 'u8[131072]{0}', space=vmem, size = 0x20000, scoped, tag = 'input window, operand 2, single buffered']
    #allocation9 [shape = 'u8[2048]{0}', space=vmem, size = 0x800, scoped, tag = 'input window, operand 3, single buffered']
    #allocation10 [shape = 's32[1]{0}', space=sflag, size = 0x4, scoped, tag = 'scoped memory for tpu_custom_call.1']
    #allocation11 [shape = 'u8[786432]{0}', space=vmem, size = 0xc0000, scoped, tag = 'input window, operand 4']
    #allocation12 [shape = 'u8[262144]{0}', space=vmem, size = 0x40000, scoped, tag = 'input window, operand 6']
    #allocation13 [shape = 'u8[2048]{0}', space=vmem, size = 0x800, scoped, tag = 'input window, operand 7']
    #allocation14 [shape = 'u8[524288]{0}', space=vmem, size = 0x80000, scoped, tag = 'input window, operand 9']
    #allocation15 [shape = 'u8[524288]{0}', space=vmem, size = 0x80000, scoped, tag = 'input window, operand 11']
    #allocation16 [shape = 'u8[2048]{0}', space=vmem, size = 0x800, scoped, tag = 'output window, operand 0, single buffered']
    %19 = vsyncpa [#allocation4], 0
    %20 = vsyncpa [#allocation7], 0
    %21 = vsyncpa [#allocation10], 0
    %22 = vsyncpa [#allocation5], 0
    loop: start=0, step=1, limit=4
    $region2: #{tpu_custom_call.1} parent=1 // loop_pre_header
      _
    $region3: #{tpu_custom_call.1} parent=1 // loop_header
      %s24 = sphi 0, %s28
      %p25 = scmp.ge.s32.totalorder %s24, 4
      %s32 = sphi 0, %s32
      %s34 = sphi 0, %s32
      %s35 = sphi 0, %s34
      %s49 = sphi 0, %s35
      %s53 = sphi 0, %s53
      %s55 = sphi 0, %s53
      %s56 = sphi 0, %s55
      %s70 = sphi 0, %s56
      %s74 = sphi 0, %s74
      %s76 = sphi 0, %s74
      %s77 = sphi 0, %s76
      %s91 = sphi 0, %s77
      %s95 = sphi 0, %s95
      %s97 = sphi 0, %s95
      %s98 = sphi 0, %s97
      %s112 = sphi 0, %s98
      %s118 = sphi 0, %s120
      %s121 = sphi 0, %s118
      %s122 = sphi 0, %s121
      %s138 = sphi 0, %s122
      %s144 = sphi 0, %s146
      %s147 = sphi 0, %s144
      %s148 = sphi 0, %s147
      %s164 = sphi 0, %s148
      %s170 = sphi 0, %s172
      %s173 = sphi 0, %s170
      %s174 = sphi 0, %s173
      %s190 = sphi 0, %s174
      %s196 = sphi 0, %s198
      %s199 = sphi 0, %s196
      %s200 = sphi 0, %s199
      %s216 = sphi 0, %s200
      %s222 = sphi 0, %s224
      %s225 = sphi 0, %s222
      %s226 = sphi 0, %s225
      %s242 = sphi 0, %s226
      %s248 = sphi 0, %s250
      %s251 = sphi 0, %s248
      %s252 = sphi 0, %s251
      %s268 = sphi 0, %s252
      %s274 = sphi 0, %s276
      %s277 = sphi 0, %s274
      %s278 = sphi 0, %s277
      %s294 = sphi 0, %s278
      %s300 = sphi 0, %s302
      %s303 = sphi 0, %s300
      %s304 = sphi 0, %s303
      %s320 = sphi 0, %s304
      %s326 = sphi 0, %s328
      %s329 = sphi 0, %s326
      %s330 = sphi 0, %s329
      %s346 = sphi 0, %s330
      %s352 = sphi 0, %s354
      %s355 = sphi 0, %s352
      %s356 = sphi 0, %s355
      %s372 = sphi 0, %s356
      %s376 = sphi 0, %s376
      %s378 = sphi 0, %s376
      %s379 = sphi 0, %s378
      %s393 = sphi 0, %s379
    $region4: #{tpu_custom_call.1} parent=1 // loop_header_branch
      %27 = sbr.rel (%p25) target = $region8
    $region5: #{tpu_custom_call.1} parent=1 // loop_body
      %s29 = ssub.s32 %s24, 1
      %s30 = ssub.s32 %s24, 2
      %s31 = sadd.s32 %s24, 1
      %s33 = sadd.s32 %s32, 1
      %p36 = scmp.eq.s32.totalorder %s24, 1
      %p37 = scmp.ne.s32.totalorder %s32, %s34
      %p38 = scmp.eq.s32.totalorder %s24, 0
      %p39 = por %p37, %p38
      %p40 = scmp.ne.s32.totalorder %s32, %s34
      %p41 = scmp.eq.s32.totalorder %s29, 1
      %p42 = por %p40, %p41
      %p43 = scmp.ne.s32.totalorder %s34, %s35
      %p44 = scmp.eq.s32.totalorder %s29, 0
      %p45 = por %p43, %p44
      %p46 = scmp.ne.s32.totalorder %s34, %s35
      %p47 = scmp.eq.s32.totalorder %s30, 1
      %p48 = por %p46, %p47
      %p50 = scmp.ne.s32.totalorder %s35, %s49
      %p51 = scmp.eq.s32.totalorder %s30, 0
      %p52 = por %p50, %p51
      %s54 = sadd.s32 %s53, 1
      %p57 = scmp.eq.s32.totalorder %s24, 1
      %p58 = scmp.ne.s32.totalorder %s53, %s55
      %p59 = scmp.eq.s32.totalorder %s24, 0
      %p60 = por %p58, %p59
      %p61 = scmp.ne.s32.totalorder %s53, %s55
      %p62 = scmp.eq.s32.totalorder %s29, 1
      %p63 = por %p61, %p62
      %p64 = scmp.ne.s32.totalorder %s55, %s56
      %p65 = scmp.eq.s32.totalorder %s29, 0
      %p66 = por %p64, %p65
      %p67 = scmp.ne.s32.totalorder %s55, %s56
      %p68 = scmp.eq.s32.totalorder %s30, 1
      %p69 = por %p67, %p68
      %p71 = scmp.ne.s32.totalorder %s56, %s70
      %p72 = scmp.eq.s32.totalorder %s30, 0
      %p73 = por %p71, %p72
      %s75 = sadd.s32 %s74, 1
      %p78 = scmp.eq.s32.totalorder %s24, 1
      %p79 = scmp.ne.s32.totalorder %s74, %s76
      %p80 = scmp.eq.s32.totalorder %s24, 0
      %p81 = por %p79, %p80
      %p82 = scmp.ne.s32.totalorder %s74, %s76
      %p83 = scmp.eq.s32.totalorder %s29, 1
      %p84 = por %p82, %p83
      %p85 = scmp.ne.s32.totalorder %s76, %s77
      %p86 = scmp.eq.s32.totalorder %s29, 0
      %p87 = por %p85, %p86
      %p88 = scmp.ne.s32.totalorder %s76, %s77
      %p89 = scmp.eq.s32.totalorder %s30, 1
      %p90 = por %p88, %p89
      %p92 = scmp.ne.s32.totalorder %s77, %s91
      %p93 = scmp.eq.s32.totalorder %s30, 0
      %p94 = por %p92, %p93
      %s96 = sadd.s32 %s95, 1
      %p99 = scmp.eq.s32.totalorder %s24, 1
      %p100 = scmp.ne.s32.totalorder %s95, %s97
      %p101 = scmp.eq.s32.totalorder %s24, 0
      %p102 = por %p100, %p101
      %p103 = scmp.ne.s32.totalorder %s95, %s97
      %p104 = scmp.eq.s32.totalorder %s29, 1
      %p105 = por %p103, %p104
      %p106 = scmp.ne.s32.totalorder %s97, %s98
      %p107 = scmp.eq.s32.totalorder %s29, 0
      %p108 = por %p106, %p107
      %p109 = scmp.ne.s32.totalorder %s97, %s98
      %p110 = scmp.eq.s32.totalorder %s30, 1
      %p111 = por %p109, %p110
      %p113 = scmp.ne.s32.totalorder %s98, %s112
      %p114 = scmp.eq.s32.totalorder %s30, 0
      %p115 = por %p113, %p114
      %s116 = ssub.s32 %s24, %s31
      %p117 = scmp.eq.s32.totalorder %s116, 0
      %s119 = sadd.s32 %s118, 1
      %s120 = scalar_select %p117, %s118, %s119
      %p123 = pneg %p117
      %p124 = scmp.eq.s32.totalorder %s24, 1
      %p125 = por %p123, %p124
      %p126 = scmp.ne.s32.totalorder %s118, %s121
      %p127 = scmp.eq.s32.totalorder %s24, 0
      %p128 = por %p126, %p127
      %p129 = scmp.ne.s32.totalorder %s118, %s121
      %p130 = scmp.eq.s32.totalorder %s29, 1
      %p131 = por %p129, %p130
      %p132 = scmp.ne.s32.totalorder %s121, %s122
      %p133 = scmp.eq.s32.totalorder %s29, 0
      %p134 = por %p132, %p133
      %p135 = scmp.ne.s32.totalorder %s121, %s122
      %p136 = scmp.eq.s32.totalorder %s30, 1
      %p137 = por %p135, %p136
      %p139 = scmp.ne.s32.totalorder %s122, %s138
      %p140 = scmp.eq.s32.totalorder %s30, 0
      %p141 = por %p139, %p140
      %s142 = ssub.s32 %s24, %s31
      %p143 = scmp.eq.s32.totalorder %s142, 0
      %s145 = sadd.s32 %s144, 1
      %s146 = scalar_select %p143, %s144, %s145
      %p149 = pneg %p143
      %p150 = scmp.eq.s32.totalorder %s24, 1
      %p151 = por %p149, %p150
      %p152 = scmp.ne.s32.totalorder %s144, %s147
      %p153 = scmp.eq.s32.totalorder %s24, 0
      %p154 = por %p152, %p153
      %p155 = scmp.ne.s32.totalorder %s144, %s147
      %p156 = scmp.eq.s32.totalorder %s29, 1
      %p157 = por %p155, %p156
      %p158 = scmp.ne.s32.totalorder %s147, %s148
      %p159 = scmp.eq.s32.totalorder %s29, 0
      %p160 = por %p158, %p159
      %p161 = scmp.ne.s32.totalorder %s147, %s148
      %p162 = scmp.eq.s32.totalorder %s30, 1
      %p163 = por %p161, %p162
      %p165 = scmp.ne.s32.totalorder %s148, %s164
      %p166 = scmp.eq.s32.totalorder %s30, 0
      %p167 = por %p165, %p166
      %s168 = ssub.s32 %s24, %s31
      %p169 = scmp.eq.s32.totalorder %s168, 0
      %s171 = sadd.s32 %s170, 1
      %s172 = scalar_select %p169, %s170, %s171
      %p175 = pneg %p169
      %p176 = scmp.eq.s32.totalorder %s24, 1
      %p177 = por %p175, %p176
      %p178 = scmp.ne.s32.totalorder %s170, %s173
      %p179 = scmp.eq.s32.totalorder %s24, 0
      %p180 = por %p178, %p179
      %p181 = scmp.ne.s32.totalorder %s170, %s173
      %p182 = scmp.eq.s32.totalorder %s29, 1
      %p183 = por %p181, %p182
      %p184 = scmp.ne.s32.totalorder %s173, %s174
      %p185 = scmp.eq.s32.totalorder %s29, 0
      %p186 = por %p184, %p185
      %p187 = scmp.ne.s32.totalorder %s173, %s174
      %p188 = scmp.eq.s32.totalorder %s30, 1
      %p189 = por %p187, %p188
      %p191 = scmp.ne.s32.totalorder %s174, %s190
      %p192 = scmp.eq.s32.totalorder %s30, 0
      %p193 = por %p191, %p192
      %s194 = ssub.s32 %s24, %s31
      %p195 = scmp.eq.s32.totalorder %s194, 0
      %s197 = sadd.s32 %s196, 1
      %s198 = scalar_select %p195, %s196, %s197
      %p201 = pneg %p195
      %p202 = scmp.eq.s32.totalorder %s24, 1
      %p203 = por %p201, %p202
      %p204 = scmp.ne.s32.totalorder %s196, %s199
      %p205 = scmp.eq.s32.totalorder %s24, 0
      %p206 = por %p204, %p205
      %p207 = scmp.ne.s32.totalorder %s196, %s199
      %p208 = scmp.eq.s32.totalorder %s29, 1
      %p209 = por %p207, %p208
      %p210 = scmp.ne.s32.totalorder %s199, %s200
      %p211 = scmp.eq.s32.totalorder %s29, 0
      %p212 = por %p210, %p211
      %p213 = scmp.ne.s32.totalorder %s199, %s200
      %p214 = scmp.eq.s32.totalorder %s30, 1
      %p215 = por %p213, %p214
      %p217 = scmp.ne.s32.totalorder %s200, %s216
      %p218 = scmp.eq.s32.totalorder %s30, 0
      %p219 = por %p217, %p218
      %s220 = ssub.s32 %s24, %s31
      %p221 = scmp.eq.s32.totalorder %s220, 0
      %s223 = sadd.s32 %s222, 1
      %s224 = scalar_select %p221, %s222, %s223
      %p227 = pneg %p221
      %p228 = scmp.eq.s32.totalorder %s24, 1
      %p229 = por %p227, %p228
      %p230 = scmp.ne.s32.totalorder %s222, %s225
      %p231 = scmp.eq.s32.totalorder %s24, 0
      %p232 = por %p230, %p231
      %p233 = scmp.ne.s32.totalorder %s222, %s225
      %p234 = scmp.eq.s32.totalorder %s29, 1
      %p235 = por %p233, %p234
      %p236 = scmp.ne.s32.totalorder %s225, %s226
      %p237 = scmp.eq.s32.totalorder %s29, 0
      %p238 = por %p236, %p237
      %p239 = scmp.ne.s32.totalorder %s225, %s226
      %p240 = scmp.eq.s32.totalorder %s30, 1
      %p241 = por %p239, %p240
      %p243 = scmp.ne.s32.totalorder %s226, %s242
      %p244 = scmp.eq.s32.totalorder %s30, 0
      %p245 = por %p243, %p244
      %s246 = ssub.s32 %s24, %s31
      %p247 = scmp.eq.s32.totalorder %s246, 0
      %s249 = sadd.s32 %s248, 1
      %s250 = scalar_select %p247, %s248, %s249
      %p253 = pneg %p247
      %p254 = scmp.eq.s32.totalorder %s24, 1
      %p255 = por %p253, %p254
      %p256 = scmp.ne.s32.totalorder %s248, %s251
      %p257 = scmp.eq.s32.totalorder %s24, 0
      %p258 = por %p256, %p257
      %p259 = scmp.ne.s32.totalorder %s248, %s251
      %p260 = scmp.eq.s32.totalorder %s29, 1
      %p261 = por %p259, %p260
      %p262 = scmp.ne.s32.totalorder %s251, %s252
      %p263 = scmp.eq.s32.totalorder %s29, 0
      %p264 = por %p262, %p263
      %p265 = scmp.ne.s32.totalorder %s251, %s252
      %p266 = scmp.eq.s32.totalorder %s30, 1
      %p267 = por %p265, %p266
      %p269 = scmp.ne.s32.totalorder %s252, %s268
      %p270 = scmp.eq.s32.totalorder %s30, 0
      %p271 = por %p269, %p270
      %s272 = ssub.s32 %s24, %s31
      %p273 = scmp.eq.s32.totalorder %s272, 0
      %s275 = sadd.s32 %s274, 1
      %s276 = scalar_select %p273, %s274, %s275
      %p279 = pneg %p273
      %p280 = scmp.eq.s32.totalorder %s24, 1
      %p281 = por %p279, %p280
      %p282 = scmp.ne.s32.totalorder %s274, %s277
      %p283 = scmp.eq.s32.totalorder %s24, 0
      %p284 = por %p282, %p283
      %p285 = scmp.ne.s32.totalorder %s274, %s277
      %p286 = scmp.eq.s32.totalorder %s29, 1
      %p287 = por %p285, %p286
      %p288 = scmp.ne.s32.totalorder %s277, %s278
      %p289 = scmp.eq.s32.totalorder %s29, 0
      %p290 = por %p288, %p289
      %p291 = scmp.ne.s32.totalorder %s277, %s278
      %p292 = scmp.eq.s32.totalorder %s30, 1
      %p293 = por %p291, %p292
      %p295 = scmp.ne.s32.totalorder %s278, %s294
      %p296 = scmp.eq.s32.totalorder %s30, 0
      %p297 = por %p295, %p296
      %s298 = ssub.s32 %s24, %s31
      %p299 = scmp.eq.s32.totalorder %s298, 0
      %s301 = sadd.s32 %s300, 1
      %s302 = scalar_select %p299, %s300, %s301
      %p305 = pneg %p299
      %p306 = scmp.eq.s32.totalorder %s24, 1
      %p307 = por %p305, %p306
      %p308 = scmp.ne.s32.totalorder %s300, %s303
      %p309 = scmp.eq.s32.totalorder %s24, 0
      %p310 = por %p308, %p309
      %p311 = scmp.ne.s32.totalorder %s300, %s303
      %p312 = scmp.eq.s32.totalorder %s29, 1
      %p313 = por %p311, %p312
      %p314 = scmp.ne.s32.totalorder %s303, %s304
      %p315 = scmp.eq.s32.totalorder %s29, 0
      %p316 = por %p314, %p315
      %p317 = scmp.ne.s32.totalorder %s303, %s304
      %p318 = scmp.eq.s32.totalorder %s30, 1
      %p319 = por %p317, %p318
      %p321 = scmp.ne.s32.totalorder %s304, %s320
      %p322 = scmp.eq.s32.totalorder %s30, 0
      %p323 = por %p321, %p322
      %s324 = ssub.s32 %s24, %s31
      %p325 = scmp.eq.s32.totalorder %s324, 0
      %s327 = sadd.s32 %s326, 1
      %s328 = scalar_select %p325, %s326, %s327
      %p331 = pneg %p325
      %p332 = scmp.eq.s32.totalorder %s24, 1
      %p333 = por %p331, %p332
      %p334 = scmp.ne.s32.totalorder %s326, %s329
      %p335 = scmp.eq.s32.totalorder %s24, 0
      %p336 = por %p334, %p335
      %p337 = scmp.ne.s32.totalorder %s326, %s329
      %p338 = scmp.eq.s32.totalorder %s29, 1
      %p339 = por %p337, %p338
      %p340 = scmp.ne.s32.totalorder %s329, %s330
      %p341 = scmp.eq.s32.totalorder %s29, 0
      %p342 = por %p340, %p341
      %p343 = scmp.ne.s32.totalorder %s329, %s330
      %p344 = scmp.eq.s32.totalorder %s30, 1
      %p345 = por %p343, %p344
      %p347 = scmp.ne.s32.totalorder %s330, %s346
      %p348 = scmp.eq.s32.totalorder %s30, 0
      %p349 = por %p347, %p348
      %s350 = ssub.s32 %s24, %s31
      %p351 = scmp.eq.s32.totalorder %s350, 0
      %s353 = sadd.s32 %s352, 1
      %s354 = scalar_select %p351, %s352, %s353
      %p357 = pneg %p351
      %p358 = scmp.eq.s32.totalorder %s24, 1
      %p359 = por %p357, %p358
      %p360 = scmp.ne.s32.totalorder %s352, %s355
      %p361 = scmp.eq.s32.totalorder %s24, 0
      %p362 = por %p360, %p361
      %p363 = scmp.ne.s32.totalorder %s352, %s355
      %p364 = scmp.eq.s32.totalorder %s29, 1
      %p365 = por %p363, %p364
      %p366 = scmp.ne.s32.totalorder %s355, %s356
      %p367 = scmp.eq.s32.totalorder %s29, 0
      %p368 = por %p366, %p367
      %p369 = scmp.ne.s32.totalorder %s355, %s356
      %p370 = scmp.eq.s32.totalorder %s30, 1
      %p371 = por %p369, %p370
      %p373 = scmp.ne.s32.totalorder %s356, %s372
      %p374 = scmp.eq.s32.totalorder %s30, 0
      %p375 = por %p373, %p374
      %s377 = sadd.s32 %s376, 1
      %p380 = scmp.eq.s32.totalorder %s24, 1
      %p381 = scmp.ne.s32.totalorder %s376, %s378
      %p382 = scmp.eq.s32.totalorder %s24, 0
      %p383 = por %p381, %p382
      %p384 = scmp.ne.s32.totalorder %s376, %s378
      %p385 = scmp.eq.s32.totalorder %s29, 1
      %p386 = por %p384, %p385
      %p387 = scmp.ne.s32.totalorder %s378, %s379
      %p388 = scmp.eq.s32.totalorder %s29, 0
      %p389 = por %p387, %p388
      %p390 = scmp.ne.s32.totalorder %s378, %s379
      %p391 = scmp.eq.s32.totalorder %s30, 1
      %p392 = por %p390, %p391
      %p394 = scmp.ne.s32.totalorder %s379, %s393
      %p395 = scmp.eq.s32.totalorder %s30, 0
      %p396 = por %p394, %p395
      %p397 = scmp.le.s32.totalorder 1, %s24
      %p398 = scmp.lt.s32.totalorder %s24, 3
      %p399 = pnand %p397, %p398
      %p400 = pneg %p399
      // Predicated region
      $region9: #{tpu_custom_call.1} parent=5 // pred_check
        _
      $region10: #{tpu_custom_call.1} parent=5 // pred_check_branch
        %402 = sbr.rel (%p399) target = $region12
      $region11: #{tpu_custom_call.1} parent=5 // pred_region
        %s403 = ssub.s32 %s24, 1
        // Predicated region
        $region13: #{tpu_custom_call.1} parent=11 // pred_check
          %p404 = pneg %p45
        $region14: #{tpu_custom_call.1} parent=11 // pred_check_branch
          %406 = sbr.rel (%p404) target = $region16
        $region15: #{tpu_custom_call.1} parent=11 // pred_region
          %s408 = ssub.s32 32, 32
          %409 = vsyncadd [#allocation4], %s408
          %s411 = sshll.u32 [#allocation3], 4
          %s412 = int_to_ptr.vmem [resolvable:$true] %s411
          %414 = dma.hbm_to_vmem [thread:$0]  %s0, 32, %s412, [#allocation4]
        $region16: #{tpu_custom_call.1} parent=11 // pred_fallthru
          _
        // Predicated region
        $region17: #{tpu_custom_call.1} parent=11 // pred_check
          %p415 = pneg %p66
        $region18: #{tpu_custom_call.1} parent=11 // pred_check_branch
          %417 = sbr.rel (%p415) target = $region20
        $region19: #{tpu_custom_call.1} parent=11 // pred_region
          %s419 = ssub.s32 2048, 2048
          %420 = vsyncadd [#allocation7], %s419
          %s421 = sshll.u32 [#allocation6], 4
          %s422 = int_to_ptr.vmem [resolvable:$true] %s421
          %427 = dma.hbm_to_vmem [thread:$0]  %s1, 2048, %s422, [#allocation7], 128, 128, 8
        $region20: #{tpu_custom_call.1} parent=11 // pred_fallthru
          _
        // Predicated region
        $region21: #{tpu_custom_call.1} parent=11 // pred_check
          %p428 = pneg %p87
        $region22: #{tpu_custom_call.1} parent=11 // pred_check_branch
          %430 = sbr.rel (%p428) target = $region24
        $region23: #{tpu_custom_call.1} parent=11 // pred_region
          %s432 = ssub.s32 4096, 4096
          %433 = vsyncadd [#allocation7], %s432
          %s434 = sshll.u32 [#allocation8], 4
          %s435 = int_to_ptr.vmem [resolvable:$true] %s434
          %440 = dma.hbm_to_vmem [thread:$0]  %s2, 4096, %s435, [#allocation7], 256, 256, 16
        $region24: #{tpu_custom_call.1} parent=11 // pred_fallthru
          _
        // Predicated region
        $region25: #{tpu_custom_call.1} parent=11 // pred_check
          %p441 = pneg %p108
        $region26: #{tpu_custom_call.1} parent=11 // pred_check_branch
          %443 = sbr.rel (%p441) target = $region28
        $region27: #{tpu_custom_call.1} parent=11 // pred_region
          %s445 = ssub.s32 64, 64
          %446 = vsyncadd [#allocation10], %s445
          %s448 = sshll.u32 [#allocation9], 4
          %s449 = int_to_ptr.vmem [resolvable:$true] %s448
          %451 = dma.hbm_to_vmem [thread:$0]  %s3, 64, %s449, [#allocation10]
        $region28: #{tpu_custom_call.1} parent=11 // pred_fallthru
          _
      $region12: #{tpu_custom_call.1} parent=5 // pred_fallthru
        _
      %p452 = scmp.lt.s32.totalorder %s24, 2
      // Predicated region
      $region29: #{tpu_custom_call.1} parent=5 // pred_check
        %p453 = pneg %p452
      $region30: #{tpu_custom_call.1} parent=5 // pred_check_branch
        %455 = sbr.rel (%p453) target = $region32
      $region31: #{tpu_custom_call.1} parent=5 // pred_region
        // Predicated region
        $region33: #{tpu_custom_call.1} parent=31 // pred_check
          %p456 = pneg %p128
        $region34: #{tpu_custom_call.1} parent=31 // pred_check_branch
          %458 = sbr.rel (%p456) target = $region36
        $region35: #{tpu_custom_call.1} parent=31 // pred_region
          %s459 = sand.u32 %s24, 1
          %s460 = scalar_lea.sflag [#allocation4], %s459
          %s461 = sand.u32 %s118, 1
          %s462 = smul.addr %s461, 768
          %s463 = scalar_lea.vmem [#allocation11], %s462
          %s465 = ssub.s32 12288, 12288
          %466 = vsyncadd %s460, %s465
          %s467 = smul.addr %s24, 192
          %s468 = smul.addr %s467, 64
          %s469 = scalar_lea.hbm %s4, %s468
          %s470 = sshll.u32 %s463, 4
          %s471 = int_to_ptr.vmem [resolvable:$true] %s470
          %476 = dma.hbm_to_vmem [thread:$0]  %s469, 12288, %s471, %s460, 384, 384, 24
        $region36: #{tpu_custom_call.1} parent=31 // pred_fallthru
          _
        // Predicated region
        $region37: #{tpu_custom_call.1} parent=31 // pred_check
          %p477 = pneg %p154
        $region38: #{tpu_custom_call.1} parent=31 // pred_check_branch
          %479 = sbr.rel (%p477) target = $region40
        $region39: #{tpu_custom_call.1} parent=31 // pred_region
          %p480 = scmp.lt.s32.totalorder %s24, 1
          %s481 = scalar_select %p480, %s24, 1
          %s482 = smul.addr %s481, 6
          %s483 = scalar_lea.vmem %s5, %s482
        $region40: #{tpu_custom_call.1} parent=31 // pred_fallthru
          _
        // Predicated region
        $region41: #{tpu_custom_call.1} parent=31 // pred_check
          %p484 = pneg %p180
        $region42: #{tpu_custom_call.1} parent=31 // pred_check_branch
          %486 = sbr.rel (%p484) target = $region44
        $region43: #{tpu_custom_call.1} parent=31 // pred_region
          %s487 = sand.u32 %s24, 1
          %s488 = scalar_lea.sflag [#allocation4], %s487
          %s489 = sand.u32 %s170, 1
          %s490 = smul.addr %s489, 256
          %s491 = scalar_lea.vmem [#allocation12], %s490
          %s493 = ssub.s32 4096, 4096
          %494 = vsyncadd %s488, %s493
          %s495 = smul.addr %s24, 64
          %s496 = smul.addr %s495, 64
          %s497 = scalar_lea.hbm %s6, %s496
          %s498 = sshll.u32 %s491, 4
          %s499 = int_to_ptr.vmem [resolvable:$true] %s498
          %504 = dma.hbm_to_vmem [thread:$0]  %s497, 4096, %s499, %s488, 128, 128, 8
        $region44: #{tpu_custom_call.1} parent=31 // pred_fallthru
          _
        // Predicated region
        $region45: #{tpu_custom_call.1} parent=31 // pred_check
          %p505 = pneg %p206
        $region46: #{tpu_custom_call.1} parent=31 // pred_check_branch
          %507 = sbr.rel (%p505) target = $region48
        $region47: #{tpu_custom_call.1} parent=31 // pred_region
          %s508 = sand.u32 %s24, 1
          %s509 = scalar_lea.sflag [#allocation4], %s508
          %s510 = sand.u32 %s196, 1
          %s511 = smul.addr %s510, 2
          %s512 = scalar_lea.vmem [#allocation13], %s511
          %s514 = ssub.s32 32, 32
          %515 = vsyncadd %s509, %s514
          %s516 = smul.addr %s24, 2
          %s517 = smul.addr %s516, 16
          %s518 = scalar_lea.hbm %s7, %s517
          %s520 = sshll.u32 %s512, 4
          %s521 = int_to_ptr.vmem [resolvable:$true] %s520
          %523 = dma.hbm_to_vmem [thread:$0]  %s518, 32, %s521, %s509
        $region48: #{tpu_custom_call.1} parent=31 // pred_fallthru
          _
        // Predicated region
        $region49: #{tpu_custom_call.1} parent=31 // pred_check
          %p524 = pneg %p232
        $region50: #{tpu_custom_call.1} parent=31 // pred_check_branch
          %526 = sbr.rel (%p524) target = $region52
        $region51: #{tpu_custom_call.1} parent=31 // pred_region
          %p527 = scmp.lt.s32.totalorder %s24, 1
          %s528 = scalar_select %p527, %s24, 1
          %s529 = smul.addr %s528, 2
          %s530 = smul.addr %s529, 2
          %s531 = scalar_lea.vmem %s8, %s530
        $region52: #{tpu_custom_call.1} parent=31 // pred_fallthru
          _
        // Predicated region
        $region53: #{tpu_custom_call.1} parent=31 // pred_check
          %p532 = pneg %p258
        $region54: #{tpu_custom_call.1} parent=31 // pred_check_branch
          %534 = sbr.rel (%p532) target = $region56
        $region55: #{tpu_custom_call.1} parent=31 // pred_region
          %s535 = sand.u32 %s24, 1
          %s536 = scalar_lea.sflag [#allocation4], %s535
          %s537 = sand.u32 %s248, 1
          %s538 = smul.addr %s537, 512
          %s539 = scalar_lea.vmem [#allocation14], %s538
          %s541 = ssub.s32 8192, 8192
          %542 = vsyncadd %s536, %s541
          %s543 = smul.addr %s24, 128
          %s544 = smul.addr %s543, 64
          %s545 = scalar_lea.hbm %s9, %s544
          %s546 = sshll.u32 %s539, 4
          %s547 = int_to_ptr.vmem [resolvable:$true] %s546
          %552 = dma.hbm_to_vmem [thread:$0]  %s545, 8192, %s547, %s536, 256, 256, 16
        $region56: #{tpu_custom_call.1} parent=31 // pred_fallthru
          _
        // Predicated region
        $region57: #{tpu_custom_call.1} parent=31 // pred_check
          %p553 = pneg %p284
        $region58: #{tpu_custom_call.1} parent=31 // pred_check_branch
          %555 = sbr.rel (%p553) target = $region60
        $region59: #{tpu_custom_call.1} parent=31 // pred_region
          %p556 = scmp.lt.s32.totalorder %s24, 1
          %s557 = scalar_select %p556, %s24, 1
          %s558 = smul.addr %s557, 4
          %s559 = scalar_lea.vmem %s10, %s558
        $region60: #{tpu_custom_call.1} parent=31 // pred_fallthru
          _
        // Predicated region
        $region61: #{tpu_custom_call.1} parent=31 // pred_check
          %p560 = pneg %p310
        $region62: #{tpu_custom_call.1} parent=31 // pred_check_branch
          %562 = sbr.rel (%p560) target = $region64
        $region63: #{tpu_custom_call.1} parent=31 // pred_region
          %s563 = sand.u32 %s24, 1
          %s564 = scalar_lea.sflag [#allocation4], %s563
          %s565 = sand.u32 %s300, 1
          %s566 = smul.addr %s565, 512
          %s567 = scalar_lea.vmem [#allocation15], %s566
          %s569 = ssub.s32 8192, 8192
          %570 = vsyncadd %s564, %s569
          %s571 = smul.addr %s24, 128
          %s572 = smul.addr %s571, 64
          %s573 = scalar_lea.hbm %s11, %s572
          %s574 = sshll.u32 %s567, 4
          %s575 = int_to_ptr.vmem [resolvable:$true] %s574
          %580 = dma.hbm_to_vmem [thread:$0]  %s573, 8192, %s575, %s564, 128, 128, 8
        $region64: #{tpu_custom_call.1} parent=31 // pred_fallthru
          _
        // Predicated region
        $region65: #{tpu_custom_call.1} parent=31 // pred_check
          %p581 = pneg %p336
        $region66: #{tpu_custom_call.1} parent=31 // pred_check_branch
          %583 = sbr.rel (%p581) target = $region68
        $region67: #{tpu_custom_call.1} parent=31 // pred_region
          %p584 = scmp.lt.s32.totalorder %s24, 1
          %s585 = scalar_select %p584, %s24, 1
          %s586 = smul.addr %s585, 2
          %s587 = scalar_lea.vmem %s12, %s586
        $region68: #{tpu_custom_call.1} parent=31 // pred_fallthru
          _
        // Predicated region
        $region69: #{tpu_custom_call.1} parent=31 // pred_check
          %p588 = pneg %p362
        $region70: #{tpu_custom_call.1} parent=31 // pred_check_branch
          %590 = sbr.rel (%p588) target = $region72
        $region71: #{tpu_custom_call.1} parent=31 // pred_region
          %p591 = scmp.lt.s32.totalorder %s24, 1
          %s592 = scalar_select %p591, %s24, 1
          %s593 = smul.addr %s592, 2
          %s594 = smul.addr %s593, 2
          %s595 = scalar_lea.vmem %s13, %s594
        $region72: #{tpu_custom_call.1} parent=31 // pred_fallthru
          _
      $region32: #{tpu_custom_call.1} parent=5 // pred_fallthru
        _
      %p596 = scmp.le.s32.totalorder 1, %s24
      %p597 = scmp.lt.s32.totalorder %s24, 3
      %p598 = pnand %p596, %p597
      %p599 = pneg %p598
      // Predicated region
      $region73: #{tpu_custom_call.1} parent=5 // pred_check
        _
      $region74: #{tpu_custom_call.1} parent=5 // pred_check_branch
        %601 = sbr.rel (%p598) target = $region76
      $region75: #{tpu_custom_call.1} parent=5 // pred_region
        %s602 = ssub.s32 %s24, 1
        // Predicated region
        $region77: #{tpu_custom_call.1} parent=75 // pred_check
          %p603 = pneg %p45
        $region78: #{tpu_custom_call.1} parent=75 // pred_check_branch
          %605 = sbr.rel (%p603) target = $region80
        $region79: #{tpu_custom_call.1} parent=75 // pred_region
          %606 = dma.done [#allocation4], 32
        $region80: #{tpu_custom_call.1} parent=75 // pred_fallthru
          _
        // Predicated region
        $region81: #{tpu_custom_call.1} parent=75 // pred_check
          %p607 = pneg %p66
        $region82: #{tpu_custom_call.1} parent=75 // pred_check_branch
          %609 = sbr.rel (%p607) target = $region84
        $region83: #{tpu_custom_call.1} parent=75 // pred_region
          %610 = dma.done [#allocation7], 2048
        $region84: #{tpu_custom_call.1} parent=75 // pred_fallthru
          _
        // Predicated region
        $region85: #{tpu_custom_call.1} parent=75 // pred_check
          %p611 = pneg %p87
        $region86: #{tpu_custom_call.1} parent=75 // pred_check_branch
          %613 = sbr.rel (%p611) target = $region88
        $region87: #{tpu_custom_call.1} parent=75 // pred_region
          %614 = dma.done [#allocation7], 4096
        $region88: #{tpu_custom_call.1} parent=75 // pred_fallthru
          _
        // Predicated region
        $region89: #{tpu_custom_call.1} parent=75 // pred_check
          %p615 = pneg %p108
        $region90: #{tpu_custom_call.1} parent=75 // pred_check_branch
          %617 = sbr.rel (%p615) target = $region92
        $region91: #{tpu_custom_call.1} parent=75 // pred_region
          %618 = dma.done [#allocation10], 64
        $region92: #{tpu_custom_call.1} parent=75 // pred_fallthru
          _
        %s619 = sand.u32 %s29, 1
        %s620 = scalar_lea.sflag [#allocation4], %s619
        %s621 = sand.u32 %s121, 1
        %s622 = smul.addr %s621, 768
        %s623 = scalar_lea.vmem [#allocation11], %s622
        // Predicated region
        $region93: #{tpu_custom_call.1} parent=75 // pred_check
          %p624 = pneg %p134
        $region94: #{tpu_custom_call.1} parent=75 // pred_check_branch
          %626 = sbr.rel (%p624) target = $region96
        $region95: #{tpu_custom_call.1} parent=75 // pred_region
          %627 = dma.done %s620, 12288
        $region96: #{tpu_custom_call.1} parent=75 // pred_fallthru
          _
        %s628 = sand.u32 %s29, 1
        %s629 = scalar_lea.sflag [#allocation4], %s628
        %s630 = sand.u32 %s173, 1
        %s631 = smul.addr %s630, 256
        %s632 = scalar_lea.vmem [#allocation12], %s631
        // Predicated region
        $region97: #{tpu_custom_call.1} parent=75 // pred_check
          %p633 = pneg %p186
        $region98: #{tpu_custom_call.1} parent=75 // pred_check_branch
          %635 = sbr.rel (%p633) target = $region100
        $region99: #{tpu_custom_call.1} parent=75 // pred_region
          %636 = dma.done %s629, 4096
        $region100: #{tpu_custom_call.1} parent=75 // pred_fallthru
          _
        %s637 = sand.u32 %s29, 1
        %s638 = scalar_lea.sflag [#allocation4], %s637
        %s639 = sand.u32 %s199, 1
        %s640 = smul.addr %s639, 2
        %s641 = scalar_lea.vmem [#allocation13], %s640
        // Predicated region
        $region101: #{tpu_custom_call.1} parent=75 // pred_check
          %p642 = pneg %p212
        $region102: #{tpu_custom_call.1} parent=75 // pred_check_branch
          %644 = sbr.rel (%p642) target = $region104
        $region103: #{tpu_custom_call.1} parent=75 // pred_region
          %645 = dma.done %s638, 32
        $region104: #{tpu_custom_call.1} parent=75 // pred_fallthru
          _
        %s646 = sand.u32 %s29, 1
        %s647 = scalar_lea.sflag [#allocation4], %s646
        %s648 = sand.u32 %s251, 1
        %s649 = smul.addr %s648, 512
        %s650 = scalar_lea.vmem [#allocation14], %s649
        // Predicated region
        $region105: #{tpu_custom_call.1} parent=75 // pred_check
          %p651 = pneg %p264
        $region106: #{tpu_custom_call.1} parent=75 // pred_check_branch
          %653 = sbr.rel (%p651) target = $region108
        $region107: #{tpu_custom_call.1} parent=75 // pred_region
          %654 = dma.done %s647, 8192
        $region108: #{tpu_custom_call.1} parent=75 // pred_fallthru
          _
        %s655 = sand.u32 %s29, 1
        %s656 = scalar_lea.sflag [#allocation4], %s655
        %s657 = sand.u32 %s303, 1
        %s658 = smul.addr %s657, 512
        %s659 = scalar_lea.vmem [#allocation15], %s658
        // Predicated region
        $region109: #{tpu_custom_call.1} parent=75 // pred_check
          %p660 = pneg %p316
        $region110: #{tpu_custom_call.1} parent=75 // pred_check_branch
          %662 = sbr.rel (%p660) target = $region112
        $region111: #{tpu_custom_call.1} parent=75 // pred_region
          %663 = dma.done %s656, 8192
        $region112: #{tpu_custom_call.1} parent=75 // pred_fallthru
          _
        %p664 = pneg %p45
        %p665 = pneg %p42
        %p666 = pneg %p66
        %p667 = pneg %p63
        %p668 = pneg %p87
        %p669 = pneg %p84
        %p670 = pneg %p108
        %p671 = pneg %p105
        %s672 = sand.u32 %s29, 1
        %s673 = scalar_lea.sflag [#allocation4], %s672
        %s674 = sand.u32 %s121, 1
        %s675 = smul.addr %s674, 768
        %s676 = scalar_lea.vmem [#allocation11], %s675
        %p677 = pneg %p134
        %p678 = pneg %p131
        %p679 = scmp.lt.s32.totalorder %s29, 1
        %s680 = scalar_select %p679, %s29, 1
        %s681 = smul.addr %s680, 6
        %s682 = scalar_lea.vmem %s5, %s681
        %p683 = pneg %p160
        %p684 = pneg %p157
        %s685 = sand.u32 %s29, 1
        %s686 = scalar_lea.sflag [#allocation4], %s685
        %s687 = sand.u32 %s173, 1
        %s688 = smul.addr %s687, 256
        %s689 = scalar_lea.vmem [#allocation12], %s688
        %p690 = pneg %p186
        %p691 = pneg %p183
        %s692 = sand.u32 %s29, 1
        %s693 = scalar_lea.sflag [#allocation4], %s692
        %s694 = sand.u32 %s199, 1
        %s695 = smul.addr %s694, 2
        %s696 = scalar_lea.vmem [#allocation13], %s695
        %p697 = pneg %p212
        %p698 = pneg %p209
        %p699 = scmp.lt.s32.totalorder %s29, 1
        %s700 = scalar_select %p699, %s29, 1
        %s701 = smul.addr %s700, 2
        %s702 = smul.addr %s701, 2
        %s703 = scalar_lea.vmem %s8, %s702
        %p704 = pneg %p238
        %p705 = pneg %p235
        %s706 = sand.u32 %s29, 1
        %s707 = scalar_lea.sflag [#allocation4], %s706
        %s708 = sand.u32 %s251, 1
        %s709 = smul.addr %s708, 512
        %s710 = scalar_lea.vmem [#allocation14], %s709
        %p711 = pneg %p264
        %p712 = pneg %p261
        %p713 = scmp.lt.s32.totalorder %s29, 1
        %s714 = scalar_select %p713, %s29, 1
        %s715 = smul.addr %s714, 4
        %s716 = scalar_lea.vmem %s10, %s715
        %p717 = pneg %p290
        %p718 = pneg %p287
        %s719 = sand.u32 %s29, 1
        %s720 = scalar_lea.sflag [#allocation4], %s719
        %s721 = sand.u32 %s303, 1
        %s722 = smul.addr %s721, 512
        %s723 = scalar_lea.vmem [#allocation15], %s722
        %p724 = pneg %p316
        %p725 = pneg %p313
        %p726 = scmp.lt.s32.totalorder %s29, 1
        %s727 = scalar_select %p726, %s29, 1
        %s728 = smul.addr %s727, 2
        %s729 = scalar_lea.vmem %s12, %s728
        %p730 = pneg %p342
        %p731 = pneg %p339
        %p732 = scmp.lt.s32.totalorder %s29, 1
        %s733 = scalar_select %p732, %s29, 1
        %s734 = smul.addr %s733, 2
        %s735 = smul.addr %s734, 2
        %s736 = scalar_lea.vmem %s13, %s735
        %p737 = pneg %p368
        %p738 = pneg %p365
        %p739 = pneg %p389
        %p740 = pneg %p386
        %p741 = scmp.lt.s32.totalorder %s29, 1
        %s742 = scalar_select %p741, %s29, 1
        %s743 = smul.addr %s742, 6
        %s744 = scalar_lea.vmem %s5, %s743
        %p745 = scmp.lt.s32.totalorder %s29, 1
        %s746 = scalar_select %p745, %s29, 1
        %s747 = smul.addr %s746, 2
        %s748 = smul.addr %s747, 2
        %s749 = scalar_lea.vmem %s8, %s748
        %p750 = scmp.lt.s32.totalorder %s29, 1
        %s751 = scalar_select %p750, %s29, 1
        %s752 = smul.addr %s751, 4
        %s753 = scalar_lea.vmem %s10, %s752
        %p754 = scmp.lt.s32.totalorder %s29, 1
        %s755 = scalar_select %p754, %s29, 1
        %s756 = smul.addr %s755, 2
        %s757 = scalar_lea.vmem %s12, %s756
        %p758 = scmp.lt.s32.totalorder %s29, 1
        %s759 = scalar_select %p758, %s29, 1
        %s760 = smul.addr %s759, 2
        %s761 = smul.addr %s760, 2
        %s762 = scalar_lea.vmem %s13, %s761
        %p764 = scmp.eq.s32.totalorder %s29, 0
        // Predicated region
        $region113: #{tpu_custom_call.1} parent=75 // pred_check
          %p765 = pneg %p764
        $region114: #{tpu_custom_call.1} parent=75 // pred_check_branch
          %767 = sbr.rel (%p765) target = $region116
        $region115: #{tpu_custom_call.1} parent=75 // pred_region
          %v768 = vld [vmem:[#allocation3] sm:$0x3]
          %v769 = vlaneseq
          %v770 = vand.u32 %v769, 127
          %v771 = vlaneseq
          %v772 = vshrl.u32 %v771, 7
          %v773 = vsub.s32 0, %v772
          %v774 = vrot.slane %v768, %v773
          %776 = vbcast.lane.b32.xlu0 %v774, 256
          %v777 = vpop.permute.xlu0 %776
          %s779 = sor.u32 256, 8
          %780 = vbcast.lane.b32.xlu0 %v774, %s779
          %v781 = vpop.permute.xlu0 %780
          %s783 = sor.u32 256, 16
          %784 = vbcast.lane.b32.xlu0 %v774, %s783
          %v785 = vpop.permute.xlu0 %784
          %s787 = sor.u32 256, 24
          %788 = vbcast.lane.b32.xlu0 %v774, %s787
          %v789 = vpop.permute.xlu0 %788
          %s791 = sor.u32 256, 32
          %792 = vbcast.lane.b32.xlu0 %v774, %s791
          %v793 = vpop.permute.xlu0 %792
          %s795 = sor.u32 256, 40
          %796 = vbcast.lane.b32.xlu0 %v774, %s795
          %v797 = vpop.permute.xlu0 %796
          %s799 = sor.u32 256, 48
          %800 = vbcast.lane.b32.xlu0 %v774, %s799
          %v801 = vpop.permute.xlu0 %800
          %s803 = sor.u32 256, 56
          %804 = vbcast.lane.b32.xlu0 %v774, %s803
          %v805 = vpop.permute.xlu0 %804
          %s807 = sor.u32 256, 64
          %808 = vbcast.lane.b32.xlu0 %v774, %s807
          %v809 = vpop.permute.xlu0 %808
          %s811 = sor.u32 256, 72
          %812 = vbcast.lane.b32.xlu0 %v774, %s811
          %v813 = vpop.permute.xlu0 %812
          %s815 = sor.u32 256, 80
          %816 = vbcast.lane.b32.xlu0 %v774, %s815
          %v817 = vpop.permute.xlu0 %816
          %s819 = sor.u32 256, 88
          %820 = vbcast.lane.b32.xlu0 %v774, %s819
          %v821 = vpop.permute.xlu0 %820
          %s823 = sor.u32 256, 96
          %824 = vbcast.lane.b32.xlu0 %v774, %s823
          %v825 = vpop.permute.xlu0 %824
          %s827 = sor.u32 256, 104
          %828 = vbcast.lane.b32.xlu0 %v774, %s827
          %v829 = vpop.permute.xlu0 %828
          %s831 = sor.u32 256, 112
          %832 = vbcast.lane.b32.xlu0 %v774, %s831
          %v833 = vpop.permute.xlu0 %832
          %s835 = sor.u32 256, 120
          %836 = vbcast.lane.b32.xlu0 %v774, %s835
          %v837 = vpop.permute.xlu0 %836
          %v838 = vlaneseq
          %v839 = vshrl.u32 %v838, 7
          %v840 = vsub.s32 1, %v839
          %v841 = vrot.slane %v768, %v840
          %843 = vbcast.lane.b32.xlu0 %v841, 256
          %v844 = vpop.permute.xlu0 %843
          %s846 = sor.u32 256, 8
          %847 = vbcast.lane.b32.xlu0 %v841, %s846
          %v848 = vpop.permute.xlu0 %847
          %s850 = sor.u32 256, 16
          %851 = vbcast.lane.b32.xlu0 %v841, %s850
          %v852 = vpop.permute.xlu0 %851
          %s854 = sor.u32 256, 24
          %855 = vbcast.lane.b32.xlu0 %v841, %s854
          %v856 = vpop.permute.xlu0 %855
          %s858 = sor.u32 256, 32
          %859 = vbcast.lane.b32.xlu0 %v841, %s858
          %v860 = vpop.permute.xlu0 %859
          %s862 = sor.u32 256, 40
          %863 = vbcast.lane.b32.xlu0 %v841, %s862
          %v864 = vpop.permute.xlu0 %863
          %s866 = sor.u32 256, 48
          %867 = vbcast.lane.b32.xlu0 %v841, %s866
          %v868 = vpop.permute.xlu0 %867
          %s870 = sor.u32 256, 56
          %871 = vbcast.lane.b32.xlu0 %v841, %s870
          %v872 = vpop.permute.xlu0 %871
          %s874 = sor.u32 256, 64
          %875 = vbcast.lane.b32.xlu0 %v841, %s874
          %v876 = vpop.permute.xlu0 %875
          %s878 = sor.u32 256, 72
          %879 = vbcast.lane.b32.xlu0 %v841, %s878
          %v880 = vpop.permute.xlu0 %879
          %s882 = sor.u32 256, 80
          %883 = vbcast.lane.b32.xlu0 %v841, %s882
          %v884 = vpop.permute.xlu0 %883
          %s886 = sor.u32 256, 88
          %887 = vbcast.lane.b32.xlu0 %v841, %s886
          %v888 = vpop.permute.xlu0 %887
          %s890 = sor.u32 256, 96
          %891 = vbcast.lane.b32.xlu0 %v841, %s890
          %v892 = vpop.permute.xlu0 %891
          %s894 = sor.u32 256, 104
          %895 = vbcast.lane.b32.xlu0 %v841, %s894
          %v896 = vpop.permute.xlu0 %895
          %s898 = sor.u32 256, 112
          %899 = vbcast.lane.b32.xlu0 %v841, %s898
          %v900 = vpop.permute.xlu0 %899
          %s902 = sor.u32 256, 120
          %903 = vbcast.lane.b32.xlu0 %v841, %s902
          %v904 = vpop.permute.xlu0 %903
          %vm905 = vcmp.eq.s32.totalorder %v777, %v770
          %vm906 = vcmp.eq.s32.totalorder %v781, %v770
          %vm907 = vcmp.eq.s32.totalorder %v785, %v770
          %vm908 = vcmp.eq.s32.totalorder %v789, %v770
          %vm909 = vcmp.eq.s32.totalorder %v793, %v770
          %vm910 = vcmp.eq.s32.totalorder %v797, %v770
          %vm911 = vcmp.eq.s32.totalorder %v801, %v770
          %vm912 = vcmp.eq.s32.totalorder %v805, %v770
          %vm913 = vcmp.eq.s32.totalorder %v809, %v770
          %vm914 = vcmp.eq.s32.totalorder %v813, %v770
          %vm915 = vcmp.eq.s32.totalorder %v817, %v770
          %vm916 = vcmp.eq.s32.totalorder %v821, %v770
          %vm917 = vcmp.eq.s32.totalorder %v825, %v770
          %vm918 = vcmp.eq.s32.totalorder %v829, %v770
          %vm919 = vcmp.eq.s32.totalorder %v833, %v770
          %vm920 = vcmp.eq.s32.totalorder %v837, %v770
          %vm921 = vcmp.eq.s32.totalorder %v844, %v770
          %vm922 = vcmp.eq.s32.totalorder %v848, %v770
          %vm923 = vcmp.eq.s32.totalorder %v852, %v770
          %vm924 = vcmp.eq.s32.totalorder %v856, %v770
          %vm925 = vcmp.eq.s32.totalorder %v860, %v770
          %vm926 = vcmp.eq.s32.totalorder %v864, %v770
          %vm927 = vcmp.eq.s32.totalorder %v868, %v770
          %vm928 = vcmp.eq.s32.totalorder %v872, %v770
          %vm929 = vcmp.eq.s32.totalorder %v876, %v770
          %vm930 = vcmp.eq.s32.totalorder %v880, %v770
          %vm931 = vcmp.eq.s32.totalorder %v884, %v770
          %vm932 = vcmp.eq.s32.totalorder %v888, %v770
          %vm933 = vcmp.eq.s32.totalorder %v892, %v770
          %vm934 = vcmp.eq.s32.totalorder %v896, %v770
          %vm935 = vcmp.eq.s32.totalorder %v900, %v770
          %vm936 = vcmp.eq.s32.totalorder %v904, %v770
          %v937 = vsel %vm905, 1, 0
          %v938 = vsel %vm906, 1, 0
          %v939 = vsel %vm907, 1, 0
          %v940 = vsel %vm908, 1, 0
          %v941 = vsel %vm909, 1, 0
          %v942 = vsel %vm910, 1, 0
          %v943 = vsel %vm911, 1, 0
          %v944 = vsel %vm912, 1, 0
          %v945 = vsel %vm913, 1, 0
          %v946 = vsel %vm914, 1, 0
          %v947 = vsel %vm915, 1, 0
          %v948 = vsel %vm916, 1, 0
          %v949 = vsel %vm917, 1, 0
          %v950 = vsel %vm918, 1, 0
          %v951 = vsel %vm919, 1, 0
          %v952 = vsel %vm920, 1, 0
          %v953 = vsel %vm921, 1, 0
          %v954 = vsel %vm922, 1, 0
          %v955 = vsel %vm923, 1, 0
          %v956 = vsel %vm924, 1, 0
          %v957 = vsel %vm925, 1, 0
          %v958 = vsel %vm926, 1, 0
          %v959 = vsel %vm927, 1, 0
          %v960 = vsel %vm928, 1, 0
          %v961 = vsel %vm929, 1, 0
          %v962 = vsel %vm930, 1, 0
          %v963 = vsel %vm931, 1, 0
          %v964 = vsel %vm932, 1, 0
          %v965 = vsel %vm933, 1, 0
          %v966 = vsel %vm934, 1, 0
          %v967 = vsel %vm935, 1, 0
          %v968 = vsel %vm936, 1, 0
          %v969 = vcvt.s32.f32 %v937
          %v970 = vcvt.s32.f32 %v938
          %v971 = vcvt.s32.f32 %v939
          %v972 = vcvt.s32.f32 %v940
          %v973 = vcvt.s32.f32 %v941
          %v974 = vcvt.s32.f32 %v942
          %v975 = vcvt.s32.f32 %v943
          %v976 = vcvt.s32.f32 %v944
          %v977 = vcvt.s32.f32 %v945
          %v978 = vcvt.s32.f32 %v946
          %v979 = vcvt.s32.f32 %v947
          %v980 = vcvt.s32.f32 %v948
          %v981 = vcvt.s32.f32 %v949
          %v982 = vcvt.s32.f32 %v950
          %v983 = vcvt.s32.f32 %v951
          %v984 = vcvt.s32.f32 %v952
          %v985 = vcvt.s32.f32 %v953
          %v986 = vcvt.s32.f32 %v954
          %v987 = vcvt.s32.f32 %v955
          %v988 = vcvt.s32.f32 %v956
          %v989 = vcvt.s32.f32 %v957
          %v990 = vcvt.s32.f32 %v958
          %v991 = vcvt.s32.f32 %v959
          %v992 = vcvt.s32.f32 %v960
          %v993 = vcvt.s32.f32 %v961
          %v994 = vcvt.s32.f32 %v962
          %v995 = vcvt.s32.f32 %v963
          %v996 = vcvt.s32.f32 %v964
          %v997 = vcvt.s32.f32 %v965
          %v998 = vcvt.s32.f32 %v966
          %v999 = vcvt.s32.f32 %v967
          %v1000 = vcvt.s32.f32 %v968
          %v1001 = vpack.c.bf16 %v970, %v969
          %v1002 = vpack.c.bf16 %v972, %v971
          %v1003 = vpack.c.bf16 %v974, %v973
          %v1004 = vpack.c.bf16 %v976, %v975
          %v1005 = vpack.c.bf16 %v978, %v977
          %v1006 = vpack.c.bf16 %v980, %v979
          %v1007 = vpack.c.bf16 %v982, %v981
          %v1008 = vpack.c.bf16 %v984, %v983
          %v1009 = vpack.c.bf16 %v986, %v985
          %v1010 = vpack.c.bf16 %v988, %v987
          %v1011 = vpack.c.bf16 %v990, %v989
          %v1012 = vpack.c.bf16 %v992, %v991
          %v1013 = vpack.c.bf16 %v994, %v993
          %v1014 = vpack.c.bf16 %v996, %v995
          %v1015 = vpack.c.bf16 %v998, %v997
          %v1016 = vpack.c.bf16 %v1000, %v999
          %v1017 = vld [vmem:[#allocation6] sm:$0xff]
          %v1018 = vld [vmem:[#allocation6 + $0x8] sm:$0xff]
          %v1019 = vld [vmem:[#allocation6 + $0x10] sm:$0xff]
          %v1020 = vld [vmem:[#allocation6 + $0x18] sm:$0xff]
          %v1021 = vld [vmem:[#allocation6 + $0x20] sm:$0xff]
          %v1022 = vld [vmem:[#allocation6 + $0x28] sm:$0xff]
          %v1023 = vld [vmem:[#allocation6 + $0x30] sm:$0xff]
          %v1024 = vld [vmem:[#allocation6 + $0x38] sm:$0xff]
          %v1025 = vld [vmem:[#allocation6 + $0x40] sm:$0xff]
          %v1026 = vld [vmem:[#allocation6 + $0x48] sm:$0xff]
          %v1027 = vld [vmem:[#allocation6 + $0x50] sm:$0xff]
          %v1028 = vld [vmem:[#allocation6 + $0x58] sm:$0xff]
          %v1029 = vld [vmem:[#allocation6 + $0x60] sm:$0xff]
          %v1030 = vld [vmem:[#allocation6 + $0x68] sm:$0xff]
          %v1031 = vld [vmem:[#allocation6 + $0x70] sm:$0xff]
          %v1032 = vld [vmem:[#allocation6 + $0x78] sm:$0xff]
          %v1033 = vld [vmem:[#allocation8] sm:$0xff]
          %v1034 = vld [vmem:[#allocation8 + $0x8] sm:$0xff]
          %v1035 = vld [vmem:[#allocation8 + $0x10] sm:$0xff]
          %v1036 = vld [vmem:[#allocation8 + $0x18] sm:$0xff]
          %v1037 = vld [vmem:[#allocation8 + $0x20] sm:$0xff]
          %v1038 = vld [vmem:[#allocation8 + $0x28] sm:$0xff]
          %v1039 = vld [vmem:[#allocation8 + $0x30] sm:$0xff]
          %v1040 = vld [vmem:[#allocation8 + $0x38] sm:$0xff]
          %v1041 = vld [vmem:[#allocation8 + $0x40] sm:$0xff]
          %v1042 = vld [vmem:[#allocation8 + $0x48] sm:$0xff]
          %v1043 = vld [vmem:[#allocation8 + $0x50] sm:$0xff]
          %v1044 = vld [vmem:[#allocation8 + $0x58] sm:$0xff]
          %v1045 = vld [vmem:[#allocation8 + $0x60] sm:$0xff]
          %v1046 = vld [vmem:[#allocation8 + $0x68] sm:$0xff]
          %v1047 = vld [vmem:[#allocation8 + $0x70] sm:$0xff]
          %v1048 = vld [vmem:[#allocation8 + $0x78] sm:$0xff]
          %v1049 = vld [vmem:[#allocation8 + $0x80] sm:$0xff]
          %v1050 = vld [vmem:[#allocation8 + $0x88] sm:$0xff]
          %v1051 = vld [vmem:[#allocation8 + $0x90] sm:$0xff]
          %v1052 = vld [vmem:[#allocation8 + $0x98] sm:$0xff]
          %v1053 = vld [vmem:[#allocation8 + $0xa0] sm:$0xff]
          %v1054 = vld [vmem:[#allocation8 + $0xa8] sm:$0xff]
          %v1055 = vld [vmem:[#allocation8 + $0xb0] sm:$0xff]
          %v1056 = vld [vmem:[#allocation8 + $0xb8] sm:$0xff]
          %v1057 = vld [vmem:[#allocation8 + $0xc0] sm:$0xff]
          %v1058 = vld [vmem:[#allocation8 + $0xc8] sm:$0xff]
          %v1059 = vld [vmem:[#allocation8 + $0xd0] sm:$0xff]
          %v1060 = vld [vmem:[#allocation8 + $0xd8] sm:$0xff]
          %v1061 = vld [vmem:[#allocation8 + $0xe0] sm:$0xff]
          %v1062 = vld [vmem:[#allocation8 + $0xe8] sm:$0xff]
          %v1063 = vld [vmem:[#allocation8 + $0xf0] sm:$0xff]
          %v1064 = vld [vmem:[#allocation8 + $0xf8] sm:$0xff]
          %v1065 = vld [vmem:[#allocation9] sm:$0xf]
          %v1082 = vunpack.c.l.b16 %v1017
          %v1083 = vunpack.c.h.b16 %v1017
          %v1084 = vunpack.c.l.b16 %v1018
          %v1085 = vunpack.c.h.b16 %v1018
          %v1086 = vunpack.c.l.b16 %v1019
          %v1087 = vunpack.c.h.b16 %v1019
          %v1088 = vunpack.c.l.b16 %v1020
          %v1089 = vunpack.c.h.b16 %v1020
          %v1090 = vunpack.c.l.b16 %v1021
          %v1091 = vunpack.c.h.b16 %v1021
          %v1092 = vunpack.c.l.b16 %v1022
          %v1093 = vunpack.c.h.b16 %v1022
          %v1094 = vunpack.c.l.b16 %v1023
          %v1095 = vunpack.c.h.b16 %v1023
          %v1096 = vunpack.c.l.b16 %v1024
          %v1097 = vunpack.c.h.b16 %v1024
          %v1098 = vunpack.c.l.b16 %v1025
          %v1099 = vunpack.c.h.b16 %v1025
          %v1100 = vunpack.c.l.b16 %v1026
          %v1101 = vunpack.c.h.b16 %v1026
          %v1102 = vunpack.c.l.b16 %v1027
          %v1103 = vunpack.c.h.b16 %v1027
          %v1104 = vunpack.c.l.b16 %v1028
          %v1105 = vunpack.c.h.b16 %v1028
          %v1106 = vunpack.c.l.b16 %v1029
          %v1107 = vunpack.c.h.b16 %v1029
          %v1108 = vunpack.c.l.b16 %v1030
          %v1109 = vunpack.c.h.b16 %v1030
          %v1110 = vunpack.c.l.b16 %v1031
          %v1111 = vunpack.c.h.b16 %v1031
          %v1112 = vunpack.c.l.b16 %v1032
          %v1113 = vunpack.c.h.b16 %v1032
          %v1114 = vpack.c.b16 %v1084, %v1082
          %v1115 = vpack.c.b16 %v1085, %v1083
          %v1116 = vpack.c.b16 %v1088, %v1086
          %v1117 = vpack.c.b16 %v1089, %v1087
          %v1118 = vpack.c.b16 %v1092, %v1090
          %v1119 = vpack.c.b16 %v1093, %v1091
          %v1120 = vpack.c.b16 %v1096, %v1094
          %v1121 = vpack.c.b16 %v1097, %v1095
          %v1122 = vpack.c.b16 %v1100, %v1098
          %v1123 = vpack.c.b16 %v1101, %v1099
          %v1124 = vpack.c.b16 %v1104, %v1102
          %v1125 = vpack.c.b16 %v1105, %v1103
          %v1126 = vpack.c.b16 %v1108, %v1106
          %v1127 = vpack.c.b16 %v1109, %v1107
          %v1128 = vpack.c.b16 %v1112, %v1110
          %v1129 = vpack.c.b16 %v1113, %v1111
          %1146 = vmatprep.subr.bf16.mxu0 %v1115
          %1147 = vmatpush1.bf16.msra.mxu0 %v1114
          %1148 = vmatprep.subr.bf16.mxu0 %v1117
          %1149 = vmatpush1.bf16.msra.mxu0 %v1116
          %1150 = vmatprep.subr.bf16.mxu0 %v1119
          %1151 = vmatpush1.bf16.msra.mxu0 %v1118
          %1152 = vmatprep.subr.bf16.mxu0 %v1121
          %1153 = vmatpush1.bf16.msra.mxu0 %v1120
          %1154 = vmatprep.subr.bf16.mxu0 %v1123
          %1155 = vmatpush1.bf16.msra.mxu0 %v1122
          %1156 = vmatprep.subr.bf16.mxu0 %v1125
          %1157 = vmatpush1.bf16.msra.mxu0 %v1124
          %1158 = vmatprep.subr.bf16.mxu0 %v1127
          %1159 = vmatpush1.bf16.msra.mxu0 %v1126
          %1160 = vmatprep.subr.bf16.mxu0 %v1129
          %1161 = vmatpush1.bf16.msra.mxu0 %v1128
          %1162 = vmatprep.subr.bf16.mxu0 0
          %1163 = vmatpush1.bf16.msra.mxu0 0
          %1164 = vmatprep.subr.bf16.mxu0 0
          %1165 = vmatpush1.bf16.msra.mxu0 0
          %1166 = vmatprep.subr.bf16.mxu0 0
          %1167 = vmatpush1.bf16.msra.mxu0 0
          %1168 = vmatprep.subr.bf16.mxu0 0
          %1169 = vmatpush1.bf16.msra.mxu0 0
          %1170 = vmatprep.subr.bf16.mxu0 0
          %1171 = vmatpush1.bf16.msra.mxu0 0
          %1172 = vmatprep.subr.bf16.mxu0 0
          %1173 = vmatpush1.bf16.msra.mxu0 0
          %1174 = vmatprep.subr.bf16.mxu0 0
          %1175 = vmatpush1.bf16.msra.mxu0 0
          %1176 = vmatprep.subr.bf16.mxu0 0
          %1177 = vmatpush1.bf16.msra.mxu0 0
          %1178 = vmatprep.mubr.bf16.mxu0 0
          %1179 = vmatmul.mubr.bf16.gmra.mrb[0].mxu0 %v1001
          %v1180 = vpop.f32.mrb[0].mxu0
          %v1181 = vadd.f32 %v1033, %v1180
          %v1182 = vpop.f32.mrb[0].mxu0
          %v1183 = vadd.f32 %v1034, %v1182
          %v1184 = vpop.f32.mrb[0].mxu0
          %v1185 = vadd.f32 %v1035, %v1184
          %v1186 = vpop.f32.mrb[0].mxu0
          %v1187 = vadd.f32 %v1036, %v1186
          %1188 = vmatprep.mubr.bf16.mxu0 0
          %1189 = vmatmul.mubr.bf16.gmra.mrb[0].mxu0 %v1002
          %v1190 = vpop.f32.mrb[0].mxu0
          %v1191 = vadd.f32 %v1037, %v1190
          %v1192 = vpop.f32.mrb[0].mxu0
          %v1193 = vadd.f32 %v1038, %v1192
          %v1194 = vpop.f32.mrb[0].mxu0
          %v1195 = vadd.f32 %v1039, %v1194
          %v1196 = vpop.f32.mrb[0].mxu0
          %v1197 = vadd.f32 %v1040, %v1196
          %1198 = vmatprep.mubr.bf16.mxu0 0
          %1199 = vmatmul.mubr.bf16.gmra.mrb[0].mxu0 %v1003
          %v1200 = vpop.f32.mrb[0].mxu0
          %v1201 = vadd.f32 %v1041, %v1200
          %v1202 = vpop.f32.mrb[0].mxu0
          %v1203 = vadd.f32 %v1042, %v1202
          %v1204 = vpop.f32.mrb[0].mxu0
          %v1205 = vadd.f32 %v1043, %v1204
          %v1206 = vpop.f32.mrb[0].mxu0
          %v1207 = vadd.f32 %v1044, %v1206
          %1208 = vmatprep.mubr.bf16.mxu0 0
          %1209 = vmatmul.mubr.bf16.gmra.mrb[0].mxu0 %v1004
          %v1210 = vpop.f32.mrb[0].mxu0
          %v1211 = vadd.f32 %v1045, %v1210
          %v1212 = vpop.f32.mrb[0].mxu0
          %v1213 = vadd.f32 %v1046, %v1212
          %v1214 = vpop.f32.mrb[0].mxu0
          %v1215 = vadd.f32 %v1047, %v1214
          %v1216 = vpop.f32.mrb[0].mxu0
          %v1217 = vadd.f32 %v1048, %v1216
          %1218 = vmatprep.mubr.bf16.mxu0 0
          %1219 = vmatmul.mubr.bf16.gmra.mrb[0].mxu0 %v1005
          %v1220 = vpop.f32.mrb[0].mxu0
          %v1221 = vadd.f32 %v1049, %v1220
          %v1222 = vpop.f32.mrb[0].mxu0
          %v1223 = vadd.f32 %v1050, %v1222
          %v1224 = vpop.f32.mrb[0].mxu0
          %v1225 = vadd.f32 %v1051, %v1224
          %v1226 = vpop.f32.mrb[0].mxu0
          %v1227 = vadd.f32 %v1052, %v1226
          %1228 = vmatprep.mubr.bf16.mxu0 0
          %1229 = vmatmul.mubr.bf16.gmra.mrb[0].mxu0 %v1006
          %v1230 = vpop.f32.mrb[0].mxu0
          %v1231 = vadd.f32 %v1053, %v1230
          %v1232 = vpop.f32.mrb[0].mxu0
          %v1233 = vadd.f32 %v1054, %v1232
          %v1234 = vpop.f32.mrb[0].mxu0
          %v1235 = vadd.f32 %v1055, %v1234
          %v1236 = vpop.f32.mrb[0].mxu0
          %v1237 = vadd.f32 %v1056, %v1236
          %1238 = vmatprep.mubr.bf16.mxu0 0
          %1239 = vmatmul.mubr.bf16.gmra.mrb[0].mxu0 %v1007
          %v1240 = vpop.f32.mrb[0].mxu0
          %v1241 = vadd.f32 %v1057, %v1240
          %v1242 = vpop.f32.mrb[0].mxu0
          %v1243 = vadd.f32 %v1058, %v1242
          %v1244 = vpop.f32.mrb[0].mxu0
          %v1245 = vadd.f32 %v1059, %v1244
          %v1246 = vpop.f32.mrb[0].mxu0
          %v1247 = vadd.f32 %v1060, %v1246
          %1248 = vmatprep.mubr.bf16.mxu0 0
          %1249 = vmatmul.mubr.bf16.gmra.mrb[0].mxu0 %v1008
          %v1250 = vpop.f32.mrb[0].mxu0
          %v1251 = vadd.f32 %v1061, %v1250
          %v1252 = vpop.f32.mrb[0].mxu0
          %v1253 = vadd.f32 %v1062, %v1252
          %v1254 = vpop.f32.mrb[0].mxu0
          %v1255 = vadd.f32 %v1063, %v1254
          %v1256 = vpop.f32.mrb[0].mxu0
          %v1257 = vadd.f32 %v1064, %v1256
          %1258 = vmatprep.mubr.bf16.mxu0 0
          %1259 = vmatmul.mubr.bf16.gmra.mrb[0].mxu0 %v1009
          %v1260 = vpop.f32.mrb[0].mxu0
          %v1261 = vadd.f32 %v1033, %v1260
          %v1262 = vpop.f32.mrb[0].mxu0
          %v1263 = vadd.f32 %v1034, %v1262
          %v1264 = vpop.f32.mrb[0].mxu0
          %v1265 = vadd.f32 %v1035, %v1264
          %v1266 = vpop.f32.mrb[0].mxu0
          %v1267 = vadd.f32 %v1036, %v1266
          %1268 = vmatprep.mubr.bf16.mxu0 0
          %1269 = vmatmul.mubr.bf16.gmra.mrb[0].mxu0 %v1010
          %v1270 = vpop.f32.mrb[0].mxu0
          %v1271 = vadd.f32 %v1037, %v1270
          %v1272 = vpop.f32.mrb[0].mxu0
          %v1273 = vadd.f32 %v1038, %v1272
          %v1274 = vpop.f32.mrb[0].mxu0
          %v1275 = vadd.f32 %v1039, %v1274
          %v1276 = vpop.f32.mrb[0].mxu0
          %v1277 = vadd.f32 %v1040, %v1276
          %1278 = vmatprep.mubr.bf16.mxu0 0
          %1279 = vmatmul.mubr.bf16.gmra.mrb[0].mxu0 %v1011
          %v1280 = vpop.f32.mrb[0].mxu0
          %v1281 = vadd.f32 %v1041, %v1280
          %v1282 = vpop.f32.mrb[0].mxu0
          %v1283 = vadd.f32 %v1042, %v1282
          %v1284 = vpop.f32.mrb[0].mxu0
          %v1285 = vadd.f32 %v1043, %v1284
          %v1286 = vpop.f32.mrb[0].mxu0
          %v1287 = vadd.f32 %v1044, %v1286
          %1288 = vmatprep.mubr.bf16.mxu0 0
          %1289 = vmatmul.mubr.bf16.gmra.mrb[0].mxu0 %v1012
          %v1290 = vpop.f32.mrb[0].mxu0
          %v1291 = vadd.f32 %v1045, %v1290
          %v1292 = vpop.f32.mrb[0].mxu0
          %v1293 = vadd.f32 %v1046, %v1292
          %v1294 = vpop.f32.mrb[0].mxu0
          %v1295 = vadd.f32 %v1047, %v1294
          %v1296 = vpop.f32.mrb[0].mxu0
          %v1297 = vadd.f32 %v1048, %v1296
          %1298 = vmatprep.mubr.bf16.mxu0 0
          %1299 = vmatmul.mubr.bf16.gmra.mrb[0].mxu0 %v1013
          %v1300 = vpop.f32.mrb[0].mxu0
          %v1301 = vadd.f32 %v1049, %v1300
          %v1302 = vpop.f32.mrb[0].mxu0
          %v1303 = vadd.f32 %v1050, %v1302
          %v1304 = vpop.f32.mrb[0].mxu0
          %v1305 = vadd.f32 %v1051, %v1304
          %v1306 = vpop.f32.mrb[0].mxu0
          %v1307 = vadd.f32 %v1052, %v1306
          %1308 = vmatprep.mubr.bf16.mxu0 0
          %1309 = vmatmul.mubr.bf16.gmra.mrb[0].mxu0 %v1014
          %v1310 = vpop.f32.mrb[0].mxu0
          %v1311 = vadd.f32 %v1053, %v1310
          %v1312 = vpop.f32.mrb[0].mxu0
          %v1313 = vadd.f32 %v1054, %v1312
          %v1314 = vpop.f32.mrb[0].mxu0
          %v1315 = vadd.f32 %v1055, %v1314
          %v1316 = vpop.f32.mrb[0].mxu0
          %v1317 = vadd.f32 %v1056, %v1316
          %1318 = vmatprep.mubr.bf16.mxu0 0
          %1319 = vmatmul.mubr.bf16.gmra.mrb[0].mxu0 %v1015
          %v1320 = vpop.f32.mrb[0].mxu0
          %v1321 = vadd.f32 %v1057, %v1320
          %v1322 = vpop.f32.mrb[0].mxu0
          %v1323 = vadd.f32 %v1058, %v1322
          %v1324 = vpop.f32.mrb[0].mxu0
          %v1325 = vadd.f32 %v1059, %v1324
          %v1326 = vpop.f32.mrb[0].mxu0
          %v1327 = vadd.f32 %v1060, %v1326
          %1328 = vmatprep.mubr.bf16.mxu0 0
          %1329 = vmatmul.mubr.bf16.gmra.mrb[0].mxu0 %v1016
          %v1330 = vpop.f32.mrb[0].mxu0
          %v1331 = vadd.f32 %v1061, %v1330
          %v1332 = vpop.f32.mrb[0].mxu0
          %v1333 = vadd.f32 %v1062, %v1332
          %v1334 = vpop.f32.mrb[0].mxu0
          %v1335 = vadd.f32 %v1063, %v1334
          %v1336 = vpop.f32.mrb[0].mxu0
          %v1337 = vadd.f32 %v1064, %v1336
          %1338 = vdwg.mxu0
          %v1339 = vadd.f32 %v1181, %v1183
          %1340 = vadd.xlane.f32.xlu0 %v1339
          %v1341 = vpop.xlane.xlu0 %1340
          %v1342 = vadd.f32 %v1185, %v1187
          %1343 = vadd.xlane.f32.xlu0 %v1342
          %v1344 = vpop.xlane.xlu0 %1343
          %v1345 = vadd.f32 %v1191, %v1193
          %1346 = vadd.xlane.f32.xlu0 %v1345
          %v1347 = vpop.xlane.xlu0 %1346
          %v1348 = vadd.f32 %v1195, %v1197
          %1349 = vadd.xlane.f32.xlu0 %v1348
          %v1350 = vpop.xlane.xlu0 %1349
          %v1351 = vadd.f32 %v1201, %v1203
          %1352 = vadd.xlane.f32.xlu0 %v1351
          %v1353 = vpop.xlane.xlu0 %1352
          %v1354 = vadd.f32 %v1205, %v1207
          %1355 = vadd.xlane.f32.xlu0 %v1354
          %v1356 = vpop.xlane.xlu0 %1355
          %v1357 = vadd.f32 %v1211, %v1213
          %1358 = vadd.xlane.f32.xlu0 %v1357
          %v1359 = vpop.xlane.xlu0 %1358
          %v1360 = vadd.f32 %v1215, %v1217
          %1361 = vadd.xlane.f32.xlu0 %v1360
          %v1362 = vpop.xlane.xlu0 %1361
          %v1363 = vadd.f32 %v1221, %v1223
          %1364 = vadd.xlane.f32.xlu0 %v1363
          %v1365 = vpop.xlane.xlu0 %1364
          %v1366 = vadd.f32 %v1225, %v1227
          %1367 = vadd.xlane.f32.xlu0 %v1366
          %v1368 = vpop.xlane.xlu0 %1367
          %v1369 = vadd.f32 %v1231, %v1233
          %1370 = vadd.xlane.f32.xlu0 %v1369
          %v1371 = vpop.xlane.xlu0 %1370
          %v1372 = vadd.f32 %v1235, %v1237
          %1373 = vadd.xlane.f32.xlu0 %v1372
          %v1374 = vpop.xlane.xlu0 %1373
          %v1375 = vadd.f32 %v1241, %v1243
          %1376 = vadd.xlane.f32.xlu0 %v1375
          %v1377 = vpop.xlane.xlu0 %1376
          %v1378 = vadd.f32 %v1245, %v1247
          %1379 = vadd.xlane.f32.xlu0 %v1378
          %v1380 = vpop.xlane.xlu0 %1379
          %v1381 = vadd.f32 %v1251, %v1253
          %1382 = vadd.xlane.f32.xlu0 %v1381
          %v1383 = vpop.xlane.xlu0 %1382
          %v1384 = vadd.f32 %v1255, %v1257
          %1385 = vadd.xlane.f32.xlu0 %v1384
          %v1386 = vpop.xlane.xlu0 %1385
          %v1387 = vadd.f32 %v1261, %v1263
          %1388 = vadd.xlane.f32.xlu0 %v1387
          %v1389 = vpop.xlane.xlu0 %1388
          %v1390 = vadd.f32 %v1265, %v1267
          %1391 = vadd.xlane.f32.xlu0 %v1390
          %v1392 = vpop.xlane.xlu0 %1391
          %v1393 = vadd.f32 %v1271, %v1273
          %1394 = vadd.xlane.f32.xlu0 %v1393
          %v1395 = vpop.xlane.xlu0 %1394
          %v1396 = vadd.f32 %v1275, %v1277
          %1397 = vadd.xlane.f32.xlu0 %v1396
          %v1398 = vpop.xlane.xlu0 %1397
          %v1399 = vadd.f32 %v1281, %v1283
          %1400 = vadd.xlane.f32.xlu0 %v1399
          %v1401 = vpop.xlane.xlu0 %1400
          %v1402 = vadd.f32 %v1285, %v1287
          %1403 = vadd.xlane.f32.xlu0 %v1402
          %v1404 = vpop.xlane.xlu0 %1403
          %v1405 = vadd.f32 %v1291, %v1293
          %1406 = vadd.xlane.f32.xlu0 %v1405
          %v1407 = vpop.xlane.xlu0 %1406
          %v1408 = vadd.f32 %v1295, %v1297
          %1409 = vadd.xlane.f32.xlu0 %v1408
          %v1410 = vpop.xlane.xlu0 %1409
          %v1411 = vadd.f32 %v1301, %v1303
          %1412 = vadd.xlane.f32.xlu0 %v1411
          %v1413 = vpop.xlane.xlu0 %1412
          %v1414 = vadd.f32 %v1305, %v1307
          %1415 = vadd.xlane.f32.xlu0 %v1414
          %v1416 = vpop.xlane.xlu0 %1415
          %v1417 = vadd.f32 %v1311, %v1313
          %1418 = vadd.xlane.f32.xlu0 %v1417
          %v1419 = vpop.xlane.xlu0 %1418
          %v1420 = vadd.f32 %v1315, %v1317
          %1421 = vadd.xlane.f32.xlu0 %v1420
          %v1422 = vpop.xlane.xlu0 %1421
          %v1423 = vadd.f32 %v1321, %v1323
          %1424 = vadd.xlane.f32.xlu0 %v1423
          %v1425 = vpop.xlane.xlu0 %1424
          %v1426 = vadd.f32 %v1325, %v1327
          %1427 = vadd.xlane.f32.xlu0 %v1426
          %v1428 = vpop.xlane.xlu0 %1427
          %v1429 = vadd.f32 %v1331, %v1333
          %1430 = vadd.xlane.f32.xlu0 %v1429
          %v1431 = vpop.xlane.xlu0 %1430
          %v1432 = vadd.f32 %v1335, %v1337
          %1433 = vadd.xlane.f32.xlu0 %v1432
          %v1434 = vpop.xlane.xlu0 %1433
          %v1435 = vrcp.pop 256.0
          %v1436 = vmul.f32 %v1341, %v1435
          %v1437 = vmul.f32 %v1344, %v1435
          %v1438 = vmul.f32 %v1347, %v1435
          %v1439 = vmul.f32 %v1350, %v1435
          %v1440 = vmul.f32 %v1353, %v1435
          %v1441 = vmul.f32 %v1356, %v1435
          %v1442 = vmul.f32 %v1359, %v1435
          %v1443 = vmul.f32 %v1362, %v1435
          %v1444 = vmul.f32 %v1365, %v1435
          %v1445 = vmul.f32 %v1368, %v1435
          %v1446 = vmul.f32 %v1371, %v1435
          %v1447 = vmul.f32 %v1374, %v1435
          %v1448 = vmul.f32 %v1377, %v1435
          %v1449 = vmul.f32 %v1380, %v1435
          %v1450 = vmul.f32 %v1383, %v1435
          %v1451 = vmul.f32 %v1386, %v1435
          %v1452 = vmul.f32 %v1389, %v1435
          %v1453 = vmul.f32 %v1392, %v1435
          %v1454 = vmul.f32 %v1395, %v1435
          %v1455 = vmul.f32 %v1398, %v1435
          %v1456 = vmul.f32 %v1401, %v1435
          %v1457 = vmul.f32 %v1404, %v1435
          %v1458 = vmul.f32 %v1407, %v1435
          %v1459 = vmul.f32 %v1410, %v1435
          %v1460 = vmul.f32 %v1413, %v1435
          %v1461 = vmul.f32 %v1416, %v1435
          %v1462 = vmul.f32 %v1419, %v1435
          %v1463 = vmul.f32 %v1422, %v1435
          %v1464 = vmul.f32 %v1425, %v1435
          %v1465 = vmul.f32 %v1428, %v1435
          %v1466 = vmul.f32 %v1431, %v1435
          %v1467 = vmul.f32 %v1434, %v1435
          %v1468 = vsub.f32 %v1181, %v1436
          %v1469 = vsub.f32 %v1183, %v1436
          %v1470 = vsub.f32 %v1185, %v1437
          %v1471 = vsub.f32 %v1187, %v1437
          %v1472 = vsub.f32 %v1191, %v1438
          %v1473 = vsub.f32 %v1193, %v1438
          %v1474 = vsub.f32 %v1195, %v1439
          %v1475 = vsub.f32 %v1197, %v1439
          %v1476 = vsub.f32 %v1201, %v1440
          %v1477 = vsub.f32 %v1203, %v1440
          %v1478 = vsub.f32 %v1205, %v1441
          %v1479 = vsub.f32 %v1207, %v1441
          %v1480 = vsub.f32 %v1211, %v1442
          %v1481 = vsub.f32 %v1213, %v1442
          %v1482 = vsub.f32 %v1215, %v1443
          %v1483 = vsub.f32 %v1217, %v1443
          %v1484 = vsub.f32 %v1221, %v1444
          %v1485 = vsub.f32 %v1223, %v1444
          %v1486 = vsub.f32 %v1225, %v1445
          %v1487 = vsub.f32 %v1227, %v1445
          %v1488 = vsub.f32 %v1231, %v1446
          %v1489 = vsub.f32 %v1233, %v1446
          %v1490 = vsub.f32 %v1235, %v1447
          %v1491 = vsub.f32 %v1237, %v1447
          %v1492 = vsub.f32 %v1241, %v1448
          %v1493 = vsub.f32 %v1243, %v1448
          %v1494 = vsub.f32 %v1245, %v1449
          %v1495 = vsub.f32 %v1247, %v1449
          %v1496 = vsub.f32 %v1251, %v1450
          %v1497 = vsub.f32 %v1253, %v1450
          %v1498 = vsub.f32 %v1255, %v1451
          %v1499 = vsub.f32 %v1257, %v1451
          %v1500 = vsub.f32 %v1261, %v1452
          %v1501 = vsub.f32 %v1263, %v1452
          %v1502 = vsub.f32 %v1265, %v1453
          %v1503 = vsub.f32 %v1267, %v1453
          %v1504 = vsub.f32 %v1271, %v1454
          %v1505 = vsub.f32 %v1273, %v1454
          %v1506 = vsub.f32 %v1275, %v1455
          %v1507 = vsub.f32 %v1277, %v1455
          %v1508 = vsub.f32 %v1281, %v1456
          %v1509 = vsub.f32 %v1283, %v1456
          %v1510 = vsub.f32 %v1285, %v1457
          %v1511 = vsub.f32 %v1287, %v1457
          %v1512 = vsub.f32 %v1291, %v1458
          %v1513 = vsub.f32 %v1293, %v1458
          %v1514 = vsub.f32 %v1295, %v1459
          %v1515 = vsub.f32 %v1297, %v1459
          %v1516 = vsub.f32 %v1301, %v1460
          %v1517 = vsub.f32 %v1303, %v1460
          %v1518 = vsub.f32 %v1305, %v1461
          %v1519 = vsub.f32 %v1307, %v1461
          %v1520 = vsub.f32 %v1311, %v1462
          %v1521 = vsub.f32 %v1313, %v1462
          %v1522 = vsub.f32 %v1315, %v1463
          %v1523 = vsub.f32 %v1317, %v1463
          %v1524 = vsub.f32 %v1321, %v1464
          %v1525 = vsub.f32 %v1323, %v1464
          %v1526 = vsub.f32 %v1325, %v1465
          %v1527 = vsub.f32 %v1327, %v1465
          %v1528 = vsub.f32 %v1331, %v1466
          %v1529 = vsub.f32 %v1333, %v1466
          %v1530 = vsub.f32 %v1335, %v1467
          %v1531 = vsub.f32 %v1337, %v1467
          %v1532 = vmul.f32 %v1468, %v1468
          %v1533 = vmul.f32 %v1469, %v1469
          %v1534 = vmul.f32 %v1470, %v1470
          %v1535 = vmul.f32 %v1471, %v1471
          %v1536 = vmul.f32 %v1472, %v1472
          %v1537 = vmul.f32 %v1473, %v1473
          %v1538 = vmul.f32 %v1474, %v1474
          %v1539 = vmul.f32 %v1475, %v1475
          %v1540 = vmul.f32 %v1476, %v1476
          %v1541 = vmul.f32 %v1477, %v1477
          %v1542 = vmul.f32 %v1478, %v1478
          %v1543 = vmul.f32 %v1479, %v1479
          %v1544 = vmul.f32 %v1480, %v1480
          %v1545 = vmul.f32 %v1481, %v1481
          %v1546 = vmul.f32 %v1482, %v1482
          %v1547 = vmul.f32 %v1483, %v1483
          %v1548 = vmul.f32 %v1484, %v1484
          %v1549 = vmul.f32 %v1485, %v1485
          %v1550 = vmul.f32 %v1486, %v1486
          %v1551 = vmul.f32 %v1487, %v1487
          %v1552 = vmul.f32 %v1488, %v1488
          %v1553 = vmul.f32 %v1489, %v1489
          %v1554 = vmul.f32 %v1490, %v1490
          %v1555 = vmul.f32 %v1491, %v1491
          %v1556 = vmul.f32 %v1492, %v1492
          %v1557 = vmul.f32 %v1493, %v1493
          %v1558 = vmul.f32 %v1494, %v1494
          %v1559 = vmul.f32 %v1495, %v1495
          %v1560 = vmul.f32 %v1496, %v1496
          %v1561 = vmul.f32 %v1497, %v1497
          %v1562 = vmul.f32 %v1498, %v1498
          %v1563 = vmul.f32 %v1499, %v1499
          %v1564 = vmul.f32 %v1500, %v1500
          %v1565 = vmul.f32 %v1501, %v1501
          %v1566 = vmul.f32 %v1502, %v1502
          %v1567 = vmul.f32 %v1503, %v1503
          %v1568 = vmul.f32 %v1504, %v1504
          %v1569 = vmul.f32 %v1505, %v1505
          %v1570 = vmul.f32 %v1506, %v1506
          %v1571 = vmul.f32 %v1507, %v1507
          %v1572 = vmul.f32 %v1508, %v1508
          %v1573 = vmul.f32 %v1509, %v1509
          %v1574 = vmul.f32 %v1510, %v1510
          %v1575 = vmul.f32 %v1511, %v1511
          %v1576 = vmul.f32 %v1512, %v1512
          %v1577 = vmul.f32 %v1513, %v1513
          %v1578 = vmul.f32 %v1514, %v1514
          %v1579 = vmul.f32 %v1515, %v1515
          %v1580 = vmul.f32 %v1516, %v1516
          %v1581 = vmul.f32 %v1517, %v1517
          %v1582 = vmul.f32 %v1518, %v1518
          %v1583 = vmul.f32 %v1519, %v1519
          %v1584 = vmul.f32 %v1520, %v1520
          %v1585 = vmul.f32 %v1521, %v1521
          %v1586 = vmul.f32 %v1522, %v1522
          %v1587 = vmul.f32 %v1523, %v1523
          %v1588 = vmul.f32 %v1524, %v1524
          %v1589 = vmul.f32 %v1525, %v1525
          %v1590 = vmul.f32 %v1526, %v1526
          %v1591 = vmul.f32 %v1527, %v1527
          %v1592 = vmul.f32 %v1528, %v1528
          %v1593 = vmul.f32 %v1529, %v1529
          %v1594 = vmul.f32 %v1530, %v1530
          %v1595 = vmul.f32 %v1531, %v1531
          %v1596 = vadd.f32 %v1532, %v1533
          %1597 = vadd.xlane.f32.xlu0 %v1596
          %v1598 = vpop.xlane.xlu0 %1597
          %v1599 = vadd.f32 %v1534, %v1535
          %1600 = vadd.xlane.f32.xlu0 %v1599
          %v1601 = vpop.xlane.xlu0 %1600
          %v1602 = vadd.f32 %v1536, %v1537
          %1603 = vadd.xlane.f32.xlu0 %v1602
          %v1604 = vpop.xlane.xlu0 %1603
          %v1605 = vadd.f32 %v1538, %v1539
          %1606 = vadd.xlane.f32.xlu0 %v1605
          %v1607 = vpop.xlane.xlu0 %1606
          %v1608 = vadd.f32 %v1540, %v1541
          %1609 = vadd.xlane.f32.xlu0 %v1608
          %v1610 = vpop.xlane.xlu0 %1609
          %v1611 = vadd.f32 %v1542, %v1543
          %1612 = vadd.xlane.f32.xlu0 %v1611
          %v1613 = vpop.xlane.xlu0 %1612
          %v1614 = vadd.f32 %v1544, %v1545
          %1615 = vadd.xlane.f32.xlu0 %v1614
          %v1616 = vpop.xlane.xlu0 %1615
          %v1617 = vadd.f32 %v1546, %v1547
          %1618 = vadd.xlane.f32.xlu0 %v1617
          %v1619 = vpop.xlane.xlu0 %1618
          %v1620 = vadd.f32 %v1548, %v1549
          %1621 = vadd.xlane.f32.xlu0 %v1620
          %v1622 = vpop.xlane.xlu0 %1621
          %v1623 = vadd.f32 %v1550, %v1551
          %1624 = vadd.xlane.f32.xlu0 %v1623
          %v1625 = vpop.xlane.xlu0 %1624
          %v1626 = vadd.f32 %v1552, %v1553
          %1627 = vadd.xlane.f32.xlu0 %v1626
          %v1628 = vpop.xlane.xlu0 %1627
          %v1629 = vadd.f32 %v1554, %v1555
          %1630 = vadd.xlane.f32.xlu0 %v1629
          %v1631 = vpop.xlane.xlu0 %1630
          %v1632 = vadd.f32 %v1556, %v1557
          %1633 = vadd.xlane.f32.xlu0 %v1632
          %v1634 = vpop.xlane.xlu0 %1633
          %v1635 = vadd.f32 %v1558, %v1559
          %1636 = vadd.xlane.f32.xlu0 %v1635
          %v1637 = vpop.xlane.xlu0 %1636
          %v1638 = vadd.f32 %v1560, %v1561
          %1639 = vadd.xlane.f32.xlu0 %v1638
          %v1640 = vpop.xlane.xlu0 %1639
          %v1641 = vadd.f32 %v1562, %v1563
          %1642 = vadd.xlane.f32.xlu0 %v1641
          %v1643 = vpop.xlane.xlu0 %1642
          %v1644 = vadd.f32 %v1564, %v1565
          %1645 = vadd.xlane.f32.xlu0 %v1644
          %v1646 = vpop.xlane.xlu0 %1645
          %v1647 = vadd.f32 %v1566, %v1567
          %1648 = vadd.xlane.f32.xlu0 %v1647
          %v1649 = vpop.xlane.xlu0 %1648
          %v1650 = vadd.f32 %v1568, %v1569
          %1651 = vadd.xlane.f32.xlu0 %v1650
          %v1652 = vpop.xlane.xlu0 %1651
          %v1653 = vadd.f32 %v1570, %v1571
          %1654 = vadd.xlane.f32.xlu0 %v1653
          %v1655 = vpop.xlane.xlu0 %1654
          %v1656 = vadd.f32 %v1572, %v1573
          %1657 = vadd.xlane.f32.xlu0 %v1656
          %v1658 = vpop.xlane.xlu0 %1657
          %v1659 = vadd.f32 %v1574, %v1575
          %1660 = vadd.xlane.f32.xlu0 %v1659
          %v1661 = vpop.xlane.xlu0 %1660
          %v1662 = vadd.f32 %v1576, %v1577
          %1663 = vadd.xlane.f32.xlu0 %v1662
          %v1664 = vpop.xlane.xlu0 %1663
          %v1665 = vadd.f32 %v1578, %v1579
          %1666 = vadd.xlane.f32.xlu0 %v1665
          %v1667 = vpop.xlane.xlu0 %1666
          %v1668 = vadd.f32 %v1580, %v1581
          %1669 = vadd.xlane.f32.xlu0 %v1668
          %v1670 = vpop.xlane.xlu0 %1669
          %v1671 = vadd.f32 %v1582, %v1583
          %1672 = vadd.xlane.f32.xlu0 %v1671
          %v1673 = vpop.xlane.xlu0 %1672
          %v1674 = vadd.f32 %v1584, %v1585
          %1675 = vadd.xlane.f32.xlu0 %v1674
          %v1676 = vpop.xlane.xlu0 %1675
          %v1677 = vadd.f32 %v1586, %v1587
          %1678 = vadd.xlane.f32.xlu0 %v1677
          %v1679 = vpop.xlane.xlu0 %1678
          %v1680 = vadd.f32 %v1588, %v1589
          %1681 = vadd.xlane.f32.xlu0 %v1680
          %v1682 = vpop.xlane.xlu0 %1681
          %v1683 = vadd.f32 %v1590, %v1591
          %1684 = vadd.xlane.f32.xlu0 %v1683
          %v1685 = vpop.xlane.xlu0 %1684
          %v1686 = vadd.f32 %v1592, %v1593
          %1687 = vadd.xlane.f32.xlu0 %v1686
          %v1688 = vpop.xlane.xlu0 %1687
          %v1689 = vadd.f32 %v1594, %v1595
          %1690 = vadd.xlane.f32.xlu0 %v1689
          %v1691 = vpop.xlane.xlu0 %1690
          %v1692 = vmul.f32 %v1598, %v1435
          %v1693 = vmul.f32 %v1601, %v1435
          %v1694 = vmul.f32 %v1604, %v1435
          %v1695 = vmul.f32 %v1607, %v1435
          %v1696 = vmul.f32 %v1610, %v1435
          %v1697 = vmul.f32 %v1613, %v1435
          %v1698 = vmul.f32 %v1616, %v1435
          %v1699 = vmul.f32 %v1619, %v1435
          %v1700 = vmul.f32 %v1622, %v1435
          %v1701 = vmul.f32 %v1625, %v1435
          %v1702 = vmul.f32 %v1628, %v1435
          %v1703 = vmul.f32 %v1631, %v1435
          %v1704 = vmul.f32 %v1634, %v1435
          %v1705 = vmul.f32 %v1637, %v1435
          %v1706 = vmul.f32 %v1640, %v1435
          %v1707 = vmul.f32 %v1643, %v1435
          %v1708 = vmul.f32 %v1646, %v1435
          %v1709 = vmul.f32 %v1649, %v1435
          %v1710 = vmul.f32 %v1652, %v1435
          %v1711 = vmul.f32 %v1655, %v1435
          %v1712 = vmul.f32 %v1658, %v1435
          %v1713 = vmul.f32 %v1661, %v1435
          %v1714 = vmul.f32 %v1664, %v1435
          %v1715 = vmul.f32 %v1667, %v1435
          %v1716 = vmul.f32 %v1670, %v1435
          %v1717 = vmul.f32 %v1673, %v1435
          %v1718 = vmul.f32 %v1676, %v1435
          %v1719 = vmul.f32 %v1679, %v1435
          %v1720 = vmul.f32 %v1682, %v1435
          %v1721 = vmul.f32 %v1685, %v1435
          %v1722 = vmul.f32 %v1688, %v1435
          %v1723 = vmul.f32 %v1691, %v1435
          %v1724 = vadd.f32 %v1692, 1e-12
          %v1725 = vadd.f32 %v1693, 1e-12
          %v1726 = vadd.f32 %v1694, 1e-12
          %v1727 = vadd.f32 %v1695, 1e-12
          %v1728 = vadd.f32 %v1696, 1e-12
          %v1729 = vadd.f32 %v1697, 1e-12
          %v1730 = vadd.f32 %v1698, 1e-12
          %v1731 = vadd.f32 %v1699, 1e-12
          %v1732 = vadd.f32 %v1700, 1e-12
          %v1733 = vadd.f32 %v1701, 1e-12
          %v1734 = vadd.f32 %v1702, 1e-12
          %v1735 = vadd.f32 %v1703, 1e-12
          %v1736 = vadd.f32 %v1704, 1e-12
          %v1737 = vadd.f32 %v1705, 1e-12
          %v1738 = vadd.f32 %v1706, 1e-12
          %v1739 = vadd.f32 %v1707, 1e-12
          %v1740 = vadd.f32 %v1708, 1e-12
          %v1741 = vadd.f32 %v1709, 1e-12
          %v1742 = vadd.f32 %v1710, 1e-12
          %v1743 = vadd.f32 %v1711, 1e-12
          %v1744 = vadd.f32 %v1712, 1e-12
          %v1745 = vadd.f32 %v1713, 1e-12
          %v1746 = vadd.f32 %v1714, 1e-12
          %v1747 = vadd.f32 %v1715, 1e-12
          %v1748 = vadd.f32 %v1716, 1e-12
          %v1749 = vadd.f32 %v1717, 1e-12
          %v1750 = vadd.f32 %v1718, 1e-12
          %v1751 = vadd.f32 %v1719, 1e-12
          %v1752 = vadd.f32 %v1720, 1e-12
          %v1753 = vadd.f32 %v1721, 1e-12
          %v1754 = vadd.f32 %v1722, 1e-12
          %v1755 = vadd.f32 %v1723, 1e-12
          %v1756 = vrsqrt.pop %v1724
          %v1757 = vrsqrt.pop %v1725
          %v1758 = vrsqrt.pop %v1726
          %v1759 = vrsqrt.pop %v1727
          %v1760 = vrsqrt.pop %v1728
          %v1761 = vrsqrt.pop %v1729
          %v1762 = vrsqrt.pop %v1730
          %v1763 = vrsqrt.pop %v1731
          %v1764 = vrsqrt.pop %v1732
          %v1765 = vrsqrt.pop %v1733
          %v1766 = vrsqrt.pop %v1734
          %v1767 = vrsqrt.pop %v1735
          %v1768 = vrsqrt.pop %v1736
          %v1769 = vrsqrt.pop %v1737
          %v1770 = vrsqrt.pop %v1738
          %v1771 = vrsqrt.pop %v1739
          %v1772 = vrsqrt.pop %v1740
          %v1773 = vrsqrt.pop %v1741
          %v1774 = vrsqrt.pop %v1742
          %v1775 = vrsqrt.pop %v1743
          %v1776 = vrsqrt.pop %v1744
          %v1777 = vrsqrt.pop %v1745
          %v1778 = vrsqrt.pop %v1746
          %v1779 = vrsqrt.pop %v1747
          %v1780 = vrsqrt.pop %v1748
          %v1781 = vrsqrt.pop %v1749
          %v1782 = vrsqrt.pop %v1750
          %v1783 = vrsqrt.pop %v1751
          %v1784 = vrsqrt.pop %v1752
          %v1785 = vrsqrt.pop %v1753
          %v1786 = vrsqrt.pop %v1754
          %v1787 = vrsqrt.pop %v1755
          %v1788 = vmul.f32 %v1468, %v1756
          %v1789 = vmul.f32 %v1469, %v1756
          %v1790 = vmul.f32 %v1470, %v1757
          %v1791 = vmul.f32 %v1471, %v1757
          %v1792 = vmul.f32 %v1472, %v1758
          %v1793 = vmul.f32 %v1473, %v1758
          %v1794 = vmul.f32 %v1474, %v1759
          %v1795 = vmul.f32 %v1475, %v1759
          %v1796 = vmul.f32 %v1476, %v1760
          %v1797 = vmul.f32 %v1477, %v1760
          %v1798 = vmul.f32 %v1478, %v1761
          %v1799 = vmul.f32 %v1479, %v1761
          %v1800 = vmul.f32 %v1480, %v1762
          %v1801 = vmul.f32 %v1481, %v1762
          %v1802 = vmul.f32 %v1482, %v1763
          %v1803 = vmul.f32 %v1483, %v1763
          %v1804 = vmul.f32 %v1484, %v1764
          %v1805 = vmul.f32 %v1485, %v1764
          %v1806 = vmul.f32 %v1486, %v1765
          %v1807 = vmul.f32 %v1487, %v1765
          %v1808 = vmul.f32 %v1488, %v1766
          %v1809 = vmul.f32 %v1489, %v1766
          %v1810 = vmul.f32 %v1490, %v1767
          %v1811 = vmul.f32 %v1491, %v1767
          %v1812 = vmul.f32 %v1492, %v1768
          %v1813 = vmul.f32 %v1493, %v1768
          %v1814 = vmul.f32 %v1494, %v1769
          %v1815 = vmul.f32 %v1495, %v1769
          %v1816 = vmul.f32 %v1496, %v1770
          %v1817 = vmul.f32 %v1497, %v1770
          %v1818 = vmul.f32 %v1498, %v1771
          %v1819 = vmul.f32 %v1499, %v1771
          %v1820 = vmul.f32 %v1500, %v1772
          %v1821 = vmul.f32 %v1501, %v1772
          %v1822 = vmul.f32 %v1502, %v1773
          %v1823 = vmul.f32 %v1503, %v1773
          %v1824 = vmul.f32 %v1504, %v1774
          %v1825 = vmul.f32 %v1505, %v1774
          %v1826 = vmul.f32 %v1506, %v1775
          %v1827 = vmul.f32 %v1507, %v1775
          %v1828 = vmul.f32 %v1508, %v1776
          %v1829 = vmul.f32 %v1509, %v1776
          %v1830 = vmul.f32 %v1510, %v1777
          %v1831 = vmul.f32 %v1511, %v1777
          %v1832 = vmul.f32 %v1512, %v1778
          %v1833 = vmul.f32 %v1513, %v1778
          %v1834 = vmul.f32 %v1514, %v1779
          %v1835 = vmul.f32 %v1515, %v1779
          %v1836 = vmul.f32 %v1516, %v1780
          %v1837 = vmul.f32 %v1517, %v1780
          %v1838 = vmul.f32 %v1518, %v1781
          %v1839 = vmul.f32 %v1519, %v1781
          %v1840 = vmul.f32 %v1520, %v1782
          %v1841 = vmul.f32 %v1521, %v1782
          %v1842 = vmul.f32 %v1522, %v1783
          %v1843 = vmul.f32 %v1523, %v1783
          %v1844 = vmul.f32 %v1524, %v1784
          %v1845 = vmul.f32 %v1525, %v1784
          %v1846 = vmul.f32 %v1526, %v1785
          %v1847 = vmul.f32 %v1527, %v1785
          %v1848 = vmul.f32 %v1528, %v1786
          %v1849 = vmul.f32 %v1529, %v1786
          %v1850 = vmul.f32 %v1530, %v1787
          %v1851 = vmul.f32 %v1531, %v1787
          %v1853 = vlaneseq
          %v1854 = vshrl.u32 %v1853, 7
          %v1855 = vsub.s32 0, %v1854
          %v1856 = vrot.slane %v1065, %v1855
          %v1857 = vlaneseq
          %v1858 = vshrl.u32 %v1857, 7
          %v1859 = vsub.s32 2, %v1858
          %v1860 = vrot.slane %v1065, %v1859
          %v1863 = vlaneseq
          %v1864 = vshrl.u32 %v1863, 7
          %v1865 = vsub.s32 0, %v1864
          %v1866 = vrot.slane %v1856, %v1865
          %v1867 = vlaneseq
          %v1868 = vshrl.u32 %v1867, 7
          %v1869 = vsub.s32 0, %v1868
          %v1870 = vrot.slane %v1860, %v1869
          %v1871 = vmul.f32 %v1788, %v1866
          %v1872 = vmul.f32 %v1789, %v1870
          %v1873 = vmul.f32 %v1790, %v1866
          %v1874 = vmul.f32 %v1791, %v1870
          %v1875 = vmul.f32 %v1792, %v1866
          %v1876 = vmul.f32 %v1793, %v1870
          %v1877 = vmul.f32 %v1794, %v1866
          %v1878 = vmul.f32 %v1795, %v1870
          %v1879 = vmul.f32 %v1796, %v1866
          %v1880 = vmul.f32 %v1797, %v1870
          %v1881 = vmul.f32 %v1798, %v1866
          %v1882 = vmul.f32 %v1799, %v1870
          %v1883 = vmul.f32 %v1800, %v1866
          %v1884 = vmul.f32 %v1801, %v1870
          %v1885 = vmul.f32 %v1802, %v1866
          %v1886 = vmul.f32 %v1803, %v1870
          %v1887 = vmul.f32 %v1804, %v1866
          %v1888 = vmul.f32 %v1805, %v1870
          %v1889 = vmul.f32 %v1806, %v1866
          %v1890 = vmul.f32 %v1807, %v1870
          %v1891 = vmul.f32 %v1808, %v1866
          %v1892 = vmul.f32 %v1809, %v1870
          %v1893 = vmul.f32 %v1810, %v1866
          %v1894 = vmul.f32 %v1811, %v1870
          %v1895 = vmul.f32 %v1812, %v1866
          %v1896 = vmul.f32 %v1813, %v1870
          %v1897 = vmul.f32 %v1814, %v1866
          %v1898 = vmul.f32 %v1815, %v1870
          %v1899 = vmul.f32 %v1816, %v1866
          %v1900 = vmul.f32 %v1817, %v1870
          %v1901 = vmul.f32 %v1818, %v1866
          %v1902 = vmul.f32 %v1819, %v1870
          %v1903 = vmul.f32 %v1820, %v1866
          %v1904 = vmul.f32 %v1821, %v1870
          %v1905 = vmul.f32 %v1822, %v1866
          %v1906 = vmul.f32 %v1823, %v1870
          %v1907 = vmul.f32 %v1824, %v1866
          %v1908 = vmul.f32 %v1825, %v1870
          %v1909 = vmul.f32 %v1826, %v1866
          %v1910 = vmul.f32 %v1827, %v1870
          %v1911 = vmul.f32 %v1828, %v1866
          %v1912 = vmul.f32 %v1829, %v1870
          %v1913 = vmul.f32 %v1830, %v1866
          %v1914 = vmul.f32 %v1831, %v1870
          %v1915 = vmul.f32 %v1832, %v1866
          %v1916 = vmul.f32 %v1833, %v1870
          %v1917 = vmul.f32 %v1834, %v1866
          %v1918 = vmul.f32 %v1835, %v1870
          %v1919 = vmul.f32 %v1836, %v1866
          %v1920 = vmul.f32 %v1837, %v1870
          %v1921 = vmul.f32 %v1838, %v1866
          %v1922 = vmul.f32 %v1839, %v1870
          %v1923 = vmul.f32 %v1840, %v1866
          %v1924 = vmul.f32 %v1841, %v1870
          %v1925 = vmul.f32 %v1842, %v1866
          %v1926 = vmul.f32 %v1843, %v1870
          %v1927 = vmul.f32 %v1844, %v1866
          %v1928 = vmul.f32 %v1845, %v1870
          %v1929 = vmul.f32 %v1846, %v1866
          %v1930 = vmul.f32 %v1847, %v1870
          %v1931 = vmul.f32 %v1848, %v1866
          %v1932 = vmul.f32 %v1849, %v1870
          %v1933 = vmul.f32 %v1850, %v1866
          %v1934 = vmul.f32 %v1851, %v1870
          %v1935 = vlaneseq
          %v1936 = vshrl.u32 %v1935, 7
          %v1937 = vsub.s32 1, %v1936
          %v1938 = vrot.slane %v1065, %v1937
          %v1939 = vlaneseq
          %v1940 = vshrl.u32 %v1939, 7
          %v1941 = vsub.s32 3, %v1940
          %v1942 = vrot.slane %v1065, %v1941
          %v1945 = vlaneseq
          %v1946 = vshrl.u32 %v1945, 7
          %v1947 = vsub.s32 1, %v1946
          %v1948 = vrot.slane %v1938, %v1947
          %v1949 = vlaneseq
          %v1950 = vshrl.u32 %v1949, 7
          %v1951 = vsub.s32 1, %v1950
          %v1952 = vrot.slane %v1942, %v1951
          %v1953 = vadd.f32 %v1871, %v1948
          %v1954 = vadd.f32 %v1872, %v1952
          %v1955 = vadd.f32 %v1873, %v1948
          %v1956 = vadd.f32 %v1874, %v1952
          %v1957 = vadd.f32 %v1875, %v1948
          %v1958 = vadd.f32 %v1876, %v1952
          %v1959 = vadd.f32 %v1877, %v1948
          %v1960 = vadd.f32 %v1878, %v1952
          %v1961 = vadd.f32 %v1879, %v1948
          %v1962 = vadd.f32 %v1880, %v1952
          %v1963 = vadd.f32 %v1881, %v1948
          %v1964 = vadd.f32 %v1882, %v1952
          %v1965 = vadd.f32 %v1883, %v1948
          %v1966 = vadd.f32 %v1884, %v1952
          %v1967 = vadd.f32 %v1885, %v1948
          %v1968 = vadd.f32 %v1886, %v1952
          %v1969 = vadd.f32 %v1887, %v1948
          %v1970 = vadd.f32 %v1888, %v1952
          %v1971 = vadd.f32 %v1889, %v1948
          %v1972 = vadd.f32 %v1890, %v1952
          %v1973 = vadd.f32 %v1891, %v1948
          %v1974 = vadd.f32 %v1892, %v1952
          %v1975 = vadd.f32 %v1893, %v1948
          %v1976 = vadd.f32 %v1894, %v1952
          %v1977 = vadd.f32 %v1895, %v1948
          %v1978 = vadd.f32 %v1896, %v1952
          %v1979 = vadd.f32 %v1897, %v1948
          %v1980 = vadd.f32 %v1898, %v1952
          %v1981 = vadd.f32 %v1899, %v1948
          %v1982 = vadd.f32 %v1900, %v1952
          %v1983 = vadd.f32 %v1901, %v1948
          %v1984 = vadd.f32 %v1902, %v1952
          %v1985 = vadd.f32 %v1903, %v1948
          %v1986 = vadd.f32 %v1904, %v1952
          %v1987 = vadd.f32 %v1905, %v1948
          %v1988 = vadd.f32 %v1906, %v1952
          %v1989 = vadd.f32 %v1907, %v1948
          %v1990 = vadd.f32 %v1908, %v1952
          %v1991 = vadd.f32 %v1909, %v1948
          %v1992 = vadd.f32 %v1910, %v1952
          %v1993 = vadd.f32 %v1911, %v1948
          %v1994 = vadd.f32 %v1912, %v1952
          %v1995 = vadd.f32 %v1913, %v1948
          %v1996 = vadd.f32 %v1914, %v1952
          %v1997 = vadd.f32 %v1915, %v1948
          %v1998 = vadd.f32 %v1916, %v1952
          %v1999 = vadd.f32 %v1917, %v1948
          %v2000 = vadd.f32 %v1918, %v1952
          %v2001 = vadd.f32 %v1919, %v1948
          %v2002 = vadd.f32 %v1920, %v1952
          %v2003 = vadd.f32 %v1921, %v1948
          %v2004 = vadd.f32 %v1922, %v1952
          %v2005 = vadd.f32 %v1923, %v1948
          %v2006 = vadd.f32 %v1924, %v1952
          %v2007 = vadd.f32 %v1925, %v1948
          %v2008 = vadd.f32 %v1926, %v1952
          %v2009 = vadd.f32 %v1927, %v1948
          %v2010 = vadd.f32 %v1928, %v1952
          %v2011 = vadd.f32 %v1929, %v1948
          %v2012 = vadd.f32 %v1930, %v1952
          %v2013 = vadd.f32 %v1931, %v1948
          %v2014 = vadd.f32 %v1932, %v1952
          %v2015 = vadd.f32 %v1933, %v1948
          %v2016 = vadd.f32 %v1934, %v1952
          %2017 = vst [vmem:[#allocation2] sm:$0xff] %v1953
          %2018 = vst [vmem:[#allocation2 + $0x8] sm:$0xff] %v1954
          %2019 = vst [vmem:[#allocation2 + $0x10] sm:$0xff] %v1955
          %2020 = vst [vmem:[#allocation2 + $0x18] sm:$0xff] %v1956
          %2021 = vst [vmem:[#allocation2 + $0x20] sm:$0xff] %v1957
          %2022 = vst [vmem:[#allocation2 + $0x28] sm:$0xff] %v1958
          %2023 = vst [vmem:[#allocation2 + $0x30] sm:$0xff] %v1959
          %2024 = vst [vmem:[#allocation2 + $0x38] sm:$0xff] %v1960
          %2025 = vst [vmem:[#allocation2 + $0x40] sm:$0xff] %v1961
          %2026 = vst [vmem:[#allocation2 + $0x48] sm:$0xff] %v1962
          %2027 = vst [vmem:[#allocation2 + $0x50] sm:$0xff] %v1963
          %2028 = vst [vmem:[#allocation2 + $0x58] sm:$0xff] %v1964
          %2029 = vst [vmem:[#allocation2 + $0x60] sm:$0xff] %v1965
          %2030 = vst [vmem:[#allocation2 + $0x68] sm:$0xff] %v1966
          %2031 = vst [vmem:[#allocation2 + $0x70] sm:$0xff] %v1967
          %2032 = vst [vmem:[#allocation2 + $0x78] sm:$0xff] %v1968
          %2033 = vst [vmem:[#allocation2 + $0x80] sm:$0xff] %v1969
          %2034 = vst [vmem:[#allocation2 + $0x88] sm:$0xff] %v1970
          %2035 = vst [vmem:[#allocation2 + $0x90] sm:$0xff] %v1971
          %2036 = vst [vmem:[#allocation2 + $0x98] sm:$0xff] %v1972
          %2037 = vst [vmem:[#allocation2 + $0xa0] sm:$0xff] %v1973
          %2038 = vst [vmem:[#allocation2 + $0xa8] sm:$0xff] %v1974
          %2039 = vst [vmem:[#allocation2 + $0xb0] sm:$0xff] %v1975
          %2040 = vst [vmem:[#allocation2 + $0xb8] sm:$0xff] %v1976
          %2041 = vst [vmem:[#allocation2 + $0xc0] sm:$0xff] %v1977
          %2042 = vst [vmem:[#allocation2 + $0xc8] sm:$0xff] %v1978
          %2043 = vst [vmem:[#allocation2 + $0xd0] sm:$0xff] %v1979
          %2044 = vst [vmem:[#allocation2 + $0xd8] sm:$0xff] %v1980
          %2045 = vst [vmem:[#allocation2 + $0xe0] sm:$0xff] %v1981
          %2046 = vst [vmem:[#allocation2 + $0xe8] sm:$0xff] %v1982
          %2047 = vst [vmem:[#allocation2 + $0xf0] sm:$0xff] %v1983
          %2048 = vst [vmem:[#allocation2 + $0xf8] sm:$0xff] %v1984
          %2049 = vst [vmem:[#allocation2 + $0x100] sm:$0xff] %v1985
          %2050 = vst [vmem:[#allocation2 + $0x108] sm:$0xff] %v1986
          %2051 = vst [vmem:[#allocation2 + $0x110] sm:$0xff] %v1987
          %2052 = vst [vmem:[#allocation2 + $0x118] sm:$0xff] %v1988
          %2053 = vst [vmem:[#allocation2 + $0x120] sm:$0xff] %v1989
          %2054 = vst [vmem:[#allocation2 + $0x128] sm:$0xff] %v1990
          %2055 = vst [vmem:[#allocation2 + $0x130] sm:$0xff] %v1991
          %2056 = vst [vmem:[#allocation2 + $0x138] sm:$0xff] %v1992
          %2057 = vst [vmem:[#allocation2 + $0x140] sm:$0xff] %v1993
          %2058 = vst [vmem:[#allocation2 + $0x148] sm:$0xff] %v1994
          %2059 = vst [vmem:[#allocation2 + $0x150] sm:$0xff] %v1995
          %2060 = vst [vmem:[#allocation2 + $0x158] sm:$0xff] %v1996
          %2061 = vst [vmem:[#allocation2 + $0x160] sm:$0xff] %v1997
          %2062 = vst [vmem:[#allocation2 + $0x168] sm:$0xff] %v1998
          %2063 = vst [vmem:[#allocation2 + $0x170] sm:$0xff] %v1999
          %2064 = vst [vmem:[#allocation2 + $0x178] sm:$0xff] %v2000
          %2065 = vst [vmem:[#allocation2 + $0x180] sm:$0xff] %v2001
          %2066 = vst [vmem:[#allocation2 + $0x188] sm:$0xff] %v2002
          %2067 = vst [vmem:[#allocation2 + $0x190] sm:$0xff] %v2003
          %2068 = vst [vmem:[#allocation2 + $0x198] sm:$0xff] %v2004
          %2069 = vst [vmem:[#allocation2 + $0x1a0] sm:$0xff] %v2005
          %2070 = vst [vmem:[#allocation2 + $0x1a8] sm:$0xff] %v2006
          %2071 = vst [vmem:[#allocation2 + $0x1b0] sm:$0xff] %v2007
          %2072 = vst [vmem:[#allocation2 + $0x1b8] sm:$0xff] %v2008
          %2073 = vst [vmem:[#allocation2 + $0x1c0] sm:$0xff] %v2009
          %2074 = vst [vmem:[#allocation2 + $0x1c8] sm:$0xff] %v2010
          %2075 = vst [vmem:[#allocation2 + $0x1d0] sm:$0xff] %v2011
          %2076 = vst [vmem:[#allocation2 + $0x1d8] sm:$0xff] %v2012
          %2077 = vst [vmem:[#allocation2 + $0x1e0] sm:$0xff] %v2013
          %2078 = vst [vmem:[#allocation2 + $0x1e8] sm:$0xff] %v2014
          %2079 = vst [vmem:[#allocation2 + $0x1f0] sm:$0xff] %v2015
          %2080 = vst [vmem:[#allocation2 + $0x1f8] sm:$0xff] %v2016
        $region116: #{tpu_custom_call.1} parent=75 // pred_fallthru
          _
        %v2081 = vld [vmem:[#allocation2] sm:$0xff]
        %v2082 = vld [vmem:[#allocation2 + $0x8] sm:$0xff]
        %v2083 = vld [vmem:[#allocation2 + $0x10] sm:$0xff]
        %v2084 = vld [vmem:[#allocation2 + $0x18] sm:$0xff]
        %v2085 = vld [vmem:[#allocation2 + $0x20] sm:$0xff]
        %v2086 = vld [vmem:[#allocation2 + $0x28] sm:$0xff]
        %v2087 = vld [vmem:[#allocation2 + $0x30] sm:$0xff]
        %v2088 = vld [vmem:[#allocation2 + $0x38] sm:$0xff]
        %v2089 = vld [vmem:[#allocation2 + $0x40] sm:$0xff]
        %v2090 = vld [vmem:[#allocation2 + $0x48] sm:$0xff]
        %v2091 = vld [vmem:[#allocation2 + $0x50] sm:$0xff]
        %v2092 = vld [vmem:[#allocation2 + $0x58] sm:$0xff]
        %v2093 = vld [vmem:[#allocation2 + $0x60] sm:$0xff]
        %v2094 = vld [vmem:[#allocation2 + $0x68] sm:$0xff]
        %v2095 = vld [vmem:[#allocation2 + $0x70] sm:$0xff]
        %v2096 = vld [vmem:[#allocation2 + $0x78] sm:$0xff]
        %v2097 = vld [vmem:[#allocation2 + $0x80] sm:$0xff]
        %v2098 = vld [vmem:[#allocation2 + $0x88] sm:$0xff]
        %v2099 = vld [vmem:[#allocation2 + $0x90] sm:$0xff]
        %v2100 = vld [vmem:[#allocation2 + $0x98] sm:$0xff]
        %v2101 = vld [vmem:[#allocation2 + $0xa0] sm:$0xff]
        %v2102 = vld [vmem:[#allocation2 + $0xa8] sm:$0xff]
        %v2103 = vld [vmem:[#allocation2 + $0xb0] sm:$0xff]
        %v2104 = vld [vmem:[#allocation2 + $0xb8] sm:$0xff]
        %v2105 = vld [vmem:[#allocation2 + $0xc0] sm:$0xff]
        %v2106 = vld [vmem:[#allocation2 + $0xc8] sm:$0xff]
        %v2107 = vld [vmem:[#allocation2 + $0xd0] sm:$0xff]
        %v2108 = vld [vmem:[#allocation2 + $0xd8] sm:$0xff]
        %v2109 = vld [vmem:[#allocation2 + $0xe0] sm:$0xff]
        %v2110 = vld [vmem:[#allocation2 + $0xe8] sm:$0xff]
        %v2111 = vld [vmem:[#allocation2 + $0xf0] sm:$0xff]
        %v2112 = vld [vmem:[#allocation2 + $0xf8] sm:$0xff]
        %v2113 = vld [vmem:[#allocation2 + $0x100] sm:$0xff]
        %v2114 = vld [vmem:[#allocation2 + $0x108] sm:$0xff]
        %v2115 = vld [vmem:[#allocation2 + $0x110] sm:$0xff]
        %v2116 = vld [vmem:[#allocation2 + $0x118] sm:$0xff]
        %v2117 = vld [vmem:[#allocation2 + $0x120] sm:$0xff]
        %v2118 = vld [vmem:[#allocation2 + $0x128] sm:$0xff]
        %v2119 = vld [vmem:[#allocation2 + $0x130] sm:$0xff]
        %v2120 = vld [vmem:[#allocation2 + $0x138] sm:$0xff]
        %v2121 = vld [vmem:[#allocation2 + $0x140] sm:$0xff]
        %v2122 = vld [vmem:[#allocation2 + $0x148] sm:$0xff]
        %v2123 = vld [vmem:[#allocation2 + $0x150] sm:$0xff]
        %v2124 = vld [vmem:[#allocation2 + $0x158] sm:$0xff]
        %v2125 = vld [vmem:[#allocation2 + $0x160] sm:$0xff]
        %v2126 = vld [vmem:[#allocation2 + $0x168] sm:$0xff]
        %v2127 = vld [vmem:[#allocation2 + $0x170] sm:$0xff]
        %v2128 = vld [vmem:[#allocation2 + $0x178] sm:$0xff]
        %v2129 = vld [vmem:[#allocation2 + $0x180] sm:$0xff]
        %v2130 = vld [vmem:[#allocation2 + $0x188] sm:$0xff]
        %v2131 = vld [vmem:[#allocation2 + $0x190] sm:$0xff]
        %v2132 = vld [vmem:[#allocation2 + $0x198] sm:$0xff]
        %v2133 = vld [vmem:[#allocation2 + $0x1a0] sm:$0xff]
        %v2134 = vld [vmem:[#allocation2 + $0x1a8] sm:$0xff]
        %v2135 = vld [vmem:[#allocation2 + $0x1b0] sm:$0xff]
        %v2136 = vld [vmem:[#allocation2 + $0x1b8] sm:$0xff]
        %v2137 = vld [vmem:[#allocation2 + $0x1c0] sm:$0xff]
        %v2138 = vld [vmem:[#allocation2 + $0x1c8] sm:$0xff]
        %v2139 = vld [vmem:[#allocation2 + $0x1d0] sm:$0xff]
        %v2140 = vld [vmem:[#allocation2 + $0x1d8] sm:$0xff]
        %v2141 = vld [vmem:[#allocation2 + $0x1e0] sm:$0xff]
        %v2142 = vld [vmem:[#allocation2 + $0x1e8] sm:$0xff]
        %v2143 = vld [vmem:[#allocation2 + $0x1f0] sm:$0xff]
        %v2144 = vld [vmem:[#allocation2 + $0x1f8] sm:$0xff]
        %v2145 = vpack.c.bf16 %v2083, %v2081
        %v2146 = vpack.c.bf16 %v2084, %v2082
        %v2147 = vpack.c.bf16 %v2087, %v2085
        %v2148 = vpack.c.bf16 %v2088, %v2086
        %v2149 = vpack.c.bf16 %v2091, %v2089
        %v2150 = vpack.c.bf16 %v2092, %v2090
        %v2151 = vpack.c.bf16 %v2095, %v2093
        %v2152 = vpack.c.bf16 %v2096, %v2094
        %v2153 = vpack.c.bf16 %v2099, %v2097
        %v2154 = vpack.c.bf16 %v2100, %v2098
        %v2155 = vpack.c.bf16 %v2103, %v2101
        %v2156 = vpack.c.bf16 %v2104, %v2102
        %v2157 = vpack.c.bf16 %v2107, %v2105
        %v2158 = vpack.c.bf16 %v2108, %v2106
        %v2159 = vpack.c.bf16 %v2111, %v2109
        %v2160 = vpack.c.bf16 %v2112, %v2110
        %v2161 = vpack.c.bf16 %v2115, %v2113
        %v2162 = vpack.c.bf16 %v2116, %v2114
        %v2163 = vpack.c.bf16 %v2119, %v2117
        %v2164 = vpack.c.bf16 %v2120, %v2118
        %v2165 = vpack.c.bf16 %v2123, %v2121
        %v2166 = vpack.c.bf16 %v2124, %v2122
        %v2167 = vpack.c.bf16 %v2127, %v2125
        %v2168 = vpack.c.bf16 %v2128, %v2126
        %v2169 = vpack.c.bf16 %v2131, %v2129
        %v2170 = vpack.c.bf16 %v2132, %v2130
        %v2171 = vpack.c.bf16 %v2135, %v2133
        %v2172 = vpack.c.bf16 %v2136, %v2134
        %v2173 = vpack.c.bf16 %v2139, %v2137
        %v2174 = vpack.c.bf16 %v2140, %v2138
        %v2175 = vpack.c.bf16 %v2143, %v2141
        %v2176 = vpack.c.bf16 %v2144, %v2142
        %v2177 = vld [vmem:[%s623] sm:$0xff]
        %v2178 = vld [vmem:[%s623 + $0x8] sm:$0xff]
        %v2179 = vld [vmem:[%s623 + $0x10] sm:$0xff]
        %v2180 = vld [vmem:[%s623 + $0x18] sm:$0xff]
        %v2181 = vld [vmem:[%s623 + $0x20] sm:$0xff]
        %v2182 = vld [vmem:[%s623 + $0x28] sm:$0xff]
        %v2183 = vld [vmem:[%s623 + $0x30] sm:$0xff]
        %v2184 = vld [vmem:[%s623 + $0x38] sm:$0xff]
        %v2185 = vld [vmem:[%s623 + $0x40] sm:$0xff]
        %v2186 = vld [vmem:[%s623 + $0x48] sm:$0xff]
        %v2187 = vld [vmem:[%s623 + $0x50] sm:$0xff]
        %v2188 = vld [vmem:[%s623 + $0x58] sm:$0xff]
        %v2189 = vld [vmem:[%s623 + $0x60] sm:$0xff]
        %v2190 = vld [vmem:[%s623 + $0x68] sm:$0xff]
        %v2191 = vld [vmem:[%s623 + $0x70] sm:$0xff]
        %v2192 = vld [vmem:[%s623 + $0x78] sm:$0xff]
        %v2193 = vld [vmem:[%s623 + $0x80] sm:$0xff]
        %v2194 = vld [vmem:[%s623 + $0x88] sm:$0xff]
        %v2195 = vld [vmem:[%s623 + $0x90] sm:$0xff]
        %v2196 = vld [vmem:[%s623 + $0x98] sm:$0xff]
        %v2197 = vld [vmem:[%s623 + $0xa0] sm:$0xff]
        %v2198 = vld [vmem:[%s623 + $0xa8] sm:$0xff]
        %v2199 = vld [vmem:[%s623 + $0xb0] sm:$0xff]
        %v2200 = vld [vmem:[%s623 + $0xb8] sm:$0xff]
        %v2201 = vld [vmem:[%s623 + $0xc0] sm:$0xff]
        %v2202 = vld [vmem:[%s623 + $0xc8] sm:$0xff]
        %v2203 = vld [vmem:[%s623 + $0xd0] sm:$0xff]
        %v2204 = vld [vmem:[%s623 + $0xd8] sm:$0xff]
        %v2205 = vld [vmem:[%s623 + $0xe0] sm:$0xff]
        %v2206 = vld [vmem:[%s623 + $0xe8] sm:$0xff]
        %v2207 = vld [vmem:[%s623 + $0xf0] sm:$0xff]
        %v2208 = vld [vmem:[%s623 + $0xf8] sm:$0xff]
        %v2209 = vld [vmem:[%s623 + $0x100] sm:$0xff]
        %v2210 = vld [vmem:[%s623 + $0x108] sm:$0xff]
        %v2211 = vld [vmem:[%s623 + $0x110] sm:$0xff]
        %v2212 = vld [vmem:[%s623 + $0x118] sm:$0xff]
        %v2213 = vld [vmem:[%s623 + $0x120] sm:$0xff]
        %v2214 = vld [vmem:[%s623 + $0x128] sm:$0xff]
        %v2215 = vld [vmem:[%s623 + $0x130] sm:$0xff]
        %v2216 = vld [vmem:[%s623 + $0x138] sm:$0xff]
        %v2217 = vld [vmem:[%s623 + $0x140] sm:$0xff]
        %v2218 = vld [vmem:[%s623 + $0x148] sm:$0xff]
        %v2219 = vld [vmem:[%s623 + $0x150] sm:$0xff]
        %v2220 = vld [vmem:[%s623 + $0x158] sm:$0xff]
        %v2221 = vld [vmem:[%s623 + $0x160] sm:$0xff]
        %v2222 = vld [vmem:[%s623 + $0x168] sm:$0xff]
        %v2223 = vld [vmem:[%s623 + $0x170] sm:$0xff]
        %v2224 = vld [vmem:[%s623 + $0x178] sm:$0xff]
        %v2225 = vld [vmem:[%s623 + $0x180] sm:$0xff]
        %v2226 = vld [vmem:[%s623 + $0x188] sm:$0xff]
        %v2227 = vld [vmem:[%s623 + $0x190] sm:$0xff]
        %v2228 = vld [vmem:[%s623 + $0x198] sm:$0xff]
        %v2229 = vld [vmem:[%s623 + $0x1a0] sm:$0xff]
        %v2230 = vld [vmem:[%s623 + $0x1a8] sm:$0xff]
        %v2231 = vld [vmem:[%s623 + $0x1b0] sm:$0xff]
        %v2232 = vld [vmem:[%s623 + $0x1b8] sm:$0xff]
        %v2233 = vld [vmem:[%s623 + $0x1c0] sm:$0xff]
        %v2234 = vld [vmem:[%s623 + $0x1c8] sm:$0xff]
        %v2235 = vld [vmem:[%s623 + $0x1d0] sm:$0xff]
        %v2236 = vld [vmem:[%s623 + $0x1d8] sm:$0xff]
        %v2237 = vld [vmem:[%s623 + $0x1e0] sm:$0xff]
        %v2238 = vld [vmem:[%s623 + $0x1e8] sm:$0xff]
        %v2239 = vld [vmem:[%s623 + $0x1f0] sm:$0xff]
        %v2240 = vld [vmem:[%s623 + $0x1f8] sm:$0xff]
        %v2241 = vld [vmem:[%s623 + $0x200] sm:$0xff]
        %v2242 = vld [vmem:[%s623 + $0x208] sm:$0xff]
        %v2243 = vld [vmem:[%s623 + $0x210] sm:$0xff]
        %v2244 = vld [vmem:[%s623 + $0x218] sm:$0xff]
        %v2245 = vld [vmem:[%s623 + $0x220] sm:$0xff]
        %v2246 = vld [vmem:[%s623 + $0x228] sm:$0xff]
        %v2247 = vld [vmem:[%s623 + $0x230] sm:$0xff]
        %v2248 = vld [vmem:[%s623 + $0x238] sm:$0xff]
        %v2249 = vld [vmem:[%s623 + $0x240] sm:$0xff]
        %v2250 = vld [vmem:[%s623 + $0x248] sm:$0xff]
        %v2251 = vld [vmem:[%s623 + $0x250] sm:$0xff]
        %v2252 = vld [vmem:[%s623 + $0x258] sm:$0xff]
        %v2253 = vld [vmem:[%s623 + $0x260] sm:$0xff]
        %v2254 = vld [vmem:[%s623 + $0x268] sm:$0xff]
        %v2255 = vld [vmem:[%s623 + $0x270] sm:$0xff]
        %v2256 = vld [vmem:[%s623 + $0x278] sm:$0xff]
        %v2257 = vld [vmem:[%s623 + $0x280] sm:$0xff]
        %v2258 = vld [vmem:[%s623 + $0x288] sm:$0xff]
        %v2259 = vld [vmem:[%s623 + $0x290] sm:$0xff]
        %v2260 = vld [vmem:[%s623 + $0x298] sm:$0xff]
        %v2261 = vld [vmem:[%s623 + $0x2a0] sm:$0xff]
        %v2262 = vld [vmem:[%s623 + $0x2a8] sm:$0xff]
        %v2263 = vld [vmem:[%s623 + $0x2b0] sm:$0xff]
        %v2264 = vld [vmem:[%s623 + $0x2b8] sm:$0xff]
        %v2265 = vld [vmem:[%s623 + $0x2c0] sm:$0xff]
        %v2266 = vld [vmem:[%s623 + $0x2c8] sm:$0xff]
        %v2267 = vld [vmem:[%s623 + $0x2d0] sm:$0xff]
        %v2268 = vld [vmem:[%s623 + $0x2d8] sm:$0xff]
        %v2269 = vld [vmem:[%s623 + $0x2e0] sm:$0xff]
        %v2270 = vld [vmem:[%s623 + $0x2e8] sm:$0xff]
        %v2271 = vld [vmem:[%s623 + $0x2f0] sm:$0xff]
        %v2272 = vld [vmem:[%s623 + $0x2f8] sm:$0xff]
        %v2273 = vld [vmem:[%s744] sm:$0x3f]
        %v2275 = vlaneseq
        %v2276 = vshrl.u32 %v2275, 7
        %v2277 = vsub.s32 0, %v2276
        %v2278 = vrot.slane %v2273, %v2277
        %v2279 = vlaneseq
        %v2280 = vshrl.u32 %v2279, 7
        %v2281 = vsub.s32 1, %v2280
        %v2282 = vrot.slane %v2273, %v2281
        %v2283 = vlaneseq
        %v2284 = vshrl.u32 %v2283, 7
        %v2285 = vsub.s32 2, %v2284
        %v2286 = vrot.slane %v2273, %v2285
        %v2287 = vlaneseq
        %v2288 = vshrl.u32 %v2287, 7
        %v2289 = vsub.s32 3, %v2288
        %v2290 = vrot.slane %v2273, %v2289
        %v2291 = vlaneseq
        %v2292 = vshrl.u32 %v2291, 7
        %v2293 = vsub.s32 4, %v2292
        %v2294 = vrot.slane %v2273, %v2293
        %v2295 = vlaneseq
        %v2296 = vshrl.u32 %v2295, 7
        %v2297 = vsub.s32 5, %v2296
        %v2298 = vrot.slane %v2273, %v2297
        %v2401 = vunpack.c.l.b16 %v2177
        %v2402 = vunpack.c.h.b16 %v2177
        %v2403 = vunpack.c.l.b16 %v2178
        %v2404 = vunpack.c.h.b16 %v2178
        %v2405 = vunpack.c.l.b16 %v2179
        %v2406 = vunpack.c.h.b16 %v2179
        %v2407 = vunpack.c.l.b16 %v2180
        %v2408 = vunpack.c.h.b16 %v2180
        %v2409 = vunpack.c.l.b16 %v2181
        %v2410 = vunpack.c.h.b16 %v2181
        %v2411 = vunpack.c.l.b16 %v2182
        %v2412 = vunpack.c.h.b16 %v2182
        %v2413 = vunpack.c.l.b16 %v2183
        %v2414 = vunpack.c.h.b16 %v2183
        %v2415 = vunpack.c.l.b16 %v2184
        %v2416 = vunpack.c.h.b16 %v2184
        %v2417 = vunpack.c.l.b16 %v2185
        %v2418 = vunpack.c.h.b16 %v2185
        %v2419 = vunpack.c.l.b16 %v2186
        %v2420 = vunpack.c.h.b16 %v2186
        %v2421 = vunpack.c.l.b16 %v2187
        %v2422 = vunpack.c.h.b16 %v2187
        %v2423 = vunpack.c.l.b16 %v2188
        %v2424 = vunpack.c.h.b16 %v2188
        %v2425 = vunpack.c.l.b16 %v2189
        %v2426 = vunpack.c.h.b16 %v2189
        %v2427 = vunpack.c.l.b16 %v2190
        %v2428 = vunpack.c.h.b16 %v2190
        %v2429 = vunpack.c.l.b16 %v2191
        %v2430 = vunpack.c.h.b16 %v2191
        %v2431 = vunpack.c.l.b16 %v2192
        %v2432 = vunpack.c.h.b16 %v2192
        %v2433 = vunpack.c.l.b16 %v2193
        %v2434 = vunpack.c.h.b16 %v2193
        %v2435 = vunpack.c.l.b16 %v2194
        %v2436 = vunpack.c.h.b16 %v2194
        %v2437 = vunpack.c.l.b16 %v2195
        %v2438 = vunpack.c.h.b16 %v2195
        %v2439 = vunpack.c.l.b16 %v2196
        %v2440 = vunpack.c.h.b16 %v2196
        %v2441 = vunpack.c.l.b16 %v2197
        %v2442 = vunpack.c.h.b16 %v2197
        %v2443 = vunpack.c.l.b16 %v2198
        %v2444 = vunpack.c.h.b16 %v2198
        %v2445 = vunpack.c.l.b16 %v2199
        %v2446 = vunpack.c.h.b16 %v2199
        %v2447 = vunpack.c.l.b16 %v2200
        %v2448 = vunpack.c.h.b16 %v2200
        %v2449 = vunpack.c.l.b16 %v2201
        %v2450 = vunpack.c.h.b16 %v2201
        %v2451 = vunpack.c.l.b16 %v2202
        %v2452 = vunpack.c.h.b16 %v2202
        %v2453 = vunpack.c.l.b16 %v2203
        %v2454 = vunpack.c.h.b16 %v2203
        %v2455 = vunpack.c.l.b16 %v2204
        %v2456 = vunpack.c.h.b16 %v2204
        %v2457 = vunpack.c.l.b16 %v2205
        %v2458 = vunpack.c.h.b16 %v2205
        %v2459 = vunpack.c.l.b16 %v2206
        %v2460 = vunpack.c.h.b16 %v2206
        %v2461 = vunpack.c.l.b16 %v2207
        %v2462 = vunpack.c.h.b16 %v2207
        %v2463 = vunpack.c.l.b16 %v2208
        %v2464 = vunpack.c.h.b16 %v2208
        %v2465 = vunpack.c.l.b16 %v2209
        %v2466 = vunpack.c.h.b16 %v2209
        %v2467 = vunpack.c.l.b16 %v2210
        %v2468 = vunpack.c.h.b16 %v2210
        %v2469 = vunpack.c.l.b16 %v2211
        %v2470 = vunpack.c.h.b16 %v2211
        %v2471 = vunpack.c.l.b16 %v2212
        %v2472 = vunpack.c.h.b16 %v2212
        %v2473 = vunpack.c.l.b16 %v2213
        %v2474 = vunpack.c.h.b16 %v2213
        %v2475 = vunpack.c.l.b16 %v2214
        %v2476 = vunpack.c.h.b16 %v2214
        %v2477 = vunpack.c.l.b16 %v2215
        %v2478 = vunpack.c.h.b16 %v2215
        %v2479 = vunpack.c.l.b16 %v2216
        %v2480 = vunpack.c.h.b16 %v2216
        %v2481 = vunpack.c.l.b16 %v2217
        %v2482 = vunpack.c.h.b16 %v2217
        %v2483 = vunpack.c.l.b16 %v2218
        %v2484 = vunpack.c.h.b16 %v2218
        %v2485 = vunpack.c.l.b16 %v2219
        %v2486 = vunpack.c.h.b16 %v2219
        %v2487 = vunpack.c.l.b16 %v2220
        %v2488 = vunpack.c.h.b16 %v2220
        %v2489 = vunpack.c.l.b16 %v2221
        %v2490 = vunpack.c.h.b16 %v2221
        %v2491 = vunpack.c.l.b16 %v2222
        %v2492 = vunpack.c.h.b16 %v2222
        %v2493 = vunpack.c.l.b16 %v2223
        %v2494 = vunpack.c.h.b16 %v2223
        %v2495 = vunpack.c.l.b16 %v2224
        %v2496 = vunpack.c.h.b16 %v2224
        %v2497 = vunpack.c.l.b16 %v2225
        %v2498 = vunpack.c.h.b16 %v2225
        %v2499 = vunpack.c.l.b16 %v2226
        %v2500 = vunpack.c.h.b16 %v2226
        %v2501 = vunpack.c.l.b16 %v2227
        %v2502 = vunpack.c.h.b16 %v2227
        %v2503 = vunpack.c.l.b16 %v2228
        %v2504 = vunpack.c.h.b16 %v2228
        %v2505 = vunpack.c.l.b16 %v2229
        %v2506 = vunpack.c.h.b16 %v2229
        %v2507 = vunpack.c.l.b16 %v2230
        %v2508 = vunpack.c.h.b16 %v2230
        %v2509 = vunpack.c.l.b16 %v2231
        %v2510 = vunpack.c.h.b16 %v2231
        %v2511 = vunpack.c.l.b16 %v2232
        %v2512 = vunpack.c.h.b16 %v2232
        %v2513 = vunpack.c.l.b16 %v2233
        %v2514 = vunpack.c.h.b16 %v2233
        %v2515 = vunpack.c.l.b16 %v2234
        %v2516 = vunpack.c.h.b16 %v2234
        %v2517 = vunpack.c.l.b16 %v2235
        %v2518 = vunpack.c.h.b16 %v2235
        %v2519 = vunpack.c.l.b16 %v2236
        %v2520 = vunpack.c.h.b16 %v2236
        %v2521 = vunpack.c.l.b16 %v2237
        %v2522 = vunpack.c.h.b16 %v2237
        %v2523 = vunpack.c.l.b16 %v2238
        %v2524 = vunpack.c.h.b16 %v2238
        %v2525 = vunpack.c.l.b16 %v2239
        %v2526 = vunpack.c.h.b16 %v2239
        %v2527 = vunpack.c.l.b16 %v2240
        %v2528 = vunpack.c.h.b16 %v2240
        %v2529 = vunpack.c.l.b16 %v2241
        %v2530 = vunpack.c.h.b16 %v2241
        %v2531 = vunpack.c.l.b16 %v2242
        %v2532 = vunpack.c.h.b16 %v2242
        %v2533 = vunpack.c.l.b16 %v2243
        %v2534 = vunpack.c.h.b16 %v2243
        %v2535 = vunpack.c.l.b16 %v2244
        %v2536 = vunpack.c.h.b16 %v2244
        %v2537 = vunpack.c.l.b16 %v2245
        %v2538 = vunpack.c.h.b16 %v2245
        %v2539 = vunpack.c.l.b16 %v2246
        %v2540 = vunpack.c.h.b16 %v2246
        %v2541 = vunpack.c.l.b16 %v2247
        %v2542 = vunpack.c.h.b16 %v2247
        %v2543 = vunpack.c.l.b16 %v2248
        %v2544 = vunpack.c.h.b16 %v2248
        %v2545 = vunpack.c.l.b16 %v2249
        %v2546 = vunpack.c.h.b16 %v2249
        %v2547 = vunpack.c.l.b16 %v2250
        %v2548 = vunpack.c.h.b16 %v2250
        %v2549 = vunpack.c.l.b16 %v2251
        %v2550 = vunpack.c.h.b16 %v2251
        %v2551 = vunpack.c.l.b16 %v2252
        %v2552 = vunpack.c.h.b16 %v2252
        %v2553 = vunpack.c.l.b16 %v2253
        %v2554 = vunpack.c.h.b16 %v2253
        %v2555 = vunpack.c.l.b16 %v2254
        %v2556 = vunpack.c.h.b16 %v2254
        %v2557 = vunpack.c.l.b16 %v2255
        %v2558 = vunpack.c.h.b16 %v2255
        %v2559 = vunpack.c.l.b16 %v2256
        %v2560 = vunpack.c.h.b16 %v2256
        %v2561 = vunpack.c.l.b16 %v2257
        %v2562 = vunpack.c.h.b16 %v2257
        %v2563 = vunpack.c.l.b16 %v2258
        %v2564 = vunpack.c.h.b16 %v2258
        %v2565 = vunpack.c.l.b16 %v2259
        %v2566 = vunpack.c.h.b16 %v2259
        %v2567 = vunpack.c.l.b16 %v2260
        %v2568 = vunpack.c.h.b16 %v2260
        %v2569 = vunpack.c.l.b16 %v2261
        %v2570 = vunpack.c.h.b16 %v2261
        %v2571 = vunpack.c.l.b16 %v2262
        %v2572 = vunpack.c.h.b16 %v2262
        %v2573 = vunpack.c.l.b16 %v2263
        %v2574 = vunpack.c.h.b16 %v2263
        %v2575 = vunpack.c.l.b16 %v2264
        %v2576 = vunpack.c.h.b16 %v2264
        %v2577 = vunpack.c.l.b16 %v2265
        %v2578 = vunpack.c.h.b16 %v2265
        %v2579 = vunpack.c.l.b16 %v2266
        %v2580 = vunpack.c.h.b16 %v2266
        %v2581 = vunpack.c.l.b16 %v2267
        %v2582 = vunpack.c.h.b16 %v2267
        %v2583 = vunpack.c.l.b16 %v2268
        %v2584 = vunpack.c.h.b16 %v2268
        %v2585 = vunpack.c.l.b16 %v2269
        %v2586 = vunpack.c.h.b16 %v2269
        %v2587 = vunpack.c.l.b16 %v2270
        %v2588 = vunpack.c.h.b16 %v2270
        %v2589 = vunpack.c.l.b16 %v2271
        %v2590 = vunpack.c.h.b16 %v2271
        %v2591 = vunpack.c.l.b16 %v2272
        %v2592 = vunpack.c.h.b16 %v2272
        %v2593 = vpack.c.b16 %v2407, %v2401
        %v2594 = vpack.c.b16 %v2408, %v2402
        %v2595 = vpack.c.b16 %v2409, %v2403
        %v2596 = vpack.c.b16 %v2410, %v2404
        %v2597 = vpack.c.b16 %v2411, %v2405
        %v2598 = vpack.c.b16 %v2412, %v2406
        %v2599 = vpack.c.b16 %v2419, %v2413
        %v2600 = vpack.c.b16 %v2420, %v2414
        %v2601 = vpack.c.b16 %v2421, %v2415
        %v2602 = vpack.c.b16 %v2422, %v2416
        %v2603 = vpack.c.b16 %v2423, %v2417
        %v2604 = vpack.c.b16 %v2424, %v2418
        %v2605 = vpack.c.b16 %v2431, %v2425
        %v2606 = vpack.c.b16 %v2432, %v2426
        %v2607 = vpack.c.b16 %v2433, %v2427
        %v2608 = vpack.c.b16 %v2434, %v2428
        %v2609 = vpack.c.b16 %v2435, %v2429
        %v2610 = vpack.c.b16 %v2436, %v2430
        %v2611 = vpack.c.b16 %v2443, %v2437
        %v2612 = vpack.c.b16 %v2444, %v2438
        %v2613 = vpack.c.b16 %v2445, %v2439
        %v2614 = vpack.c.b16 %v2446, %v2440
        %v2615 = vpack.c.b16 %v2447, %v2441
        %v2616 = vpack.c.b16 %v2448, %v2442
        %v2617 = vpack.c.b16 %v2455, %v2449
        %v2618 = vpack.c.b16 %v2456, %v2450
        %v2619 = vpack.c.b16 %v2457, %v2451
        %v2620 = vpack.c.b16 %v2458, %v2452
        %v2621 = vpack.c.b16 %v2459, %v2453
        %v2622 = vpack.c.b16 %v2460, %v2454
        %v2623 = vpack.c.b16 %v2467, %v2461
        %v2624 = vpack.c.b16 %v2468, %v2462
        %v2625 = vpack.c.b16 %v2469, %v2463
        %v2626 = vpack.c.b16 %v2470, %v2464
        %v2627 = vpack.c.b16 %v2471, %v2465
        %v2628 = vpack.c.b16 %v2472, %v2466
        %v2629 = vpack.c.b16 %v2479, %v2473
        %v2630 = vpack.c.b16 %v2480, %v2474
        %v2631 = vpack.c.b16 %v2481, %v2475
        %v2632 = vpack.c.b16 %v2482, %v2476
        %v2633 = vpack.c.b16 %v2483, %v2477
        %v2634 = vpack.c.b16 %v2484, %v2478
        %v2635 = vpack.c.b16 %v2491, %v2485
        %v2636 = vpack.c.b16 %v2492, %v2486
        %v2637 = vpack.c.b16 %v2493, %v2487
        %v2638 = vpack.c.b16 %v2494, %v2488
        %v2639 = vpack.c.b16 %v2495, %v2489
        %v2640 = vpack.c.b16 %v2496, %v2490
        %v2641 = vpack.c.b16 %v2503, %v2497
        %v2642 = vpack.c.b16 %v2504, %v2498
        %v2643 = vpack.c.b16 %v2505, %v2499
        %v2644 = vpack.c.b16 %v2506, %v2500
        %v2645 = vpack.c.b16 %v2507, %v2501
        %v2646 = vpack.c.b16 %v2508, %v2502
        %v2647 = vpack.c.b16 %v2515, %v2509
        %v2648 = vpack.c.b16 %v2516, %v2510
        %v2649 = vpack.c.b16 %v2517, %v2511
        %v2650 = vpack.c.b16 %v2518, %v2512
        %v2651 = vpack.c.b16 %v2519, %v2513
        %v2652 = vpack.c.b16 %v2520, %v2514
        %v2653 = vpack.c.b16 %v2527, %v2521
        %v2654 = vpack.c.b16 %v2528, %v2522
        %v2655 = vpack.c.b16 %v2529, %v2523
        %v2656 = vpack.c.b16 %v2530, %v2524
        %v2657 = vpack.c.b16 %v2531, %v2525
        %v2658 = vpack.c.b16 %v2532, %v2526
        %v2659 = vpack.c.b16 %v2539, %v2533
        %v2660 = vpack.c.b16 %v2540, %v2534
        %v2661 = vpack.c.b16 %v2541, %v2535
        %v2662 = vpack.c.b16 %v2542, %v2536
        %v2663 = vpack.c.b16 %v2543, %v2537
        %v2664 = vpack.c.b16 %v2544, %v2538
        %v2665 = vpack.c.b16 %v2551, %v2545
        %v2666 = vpack.c.b16 %v2552, %v2546
        %v2667 = vpack.c.b16 %v2553, %v2547
        %v2668 = vpack.c.b16 %v2554, %v2548
        %v2669 = vpack.c.b16 %v2555, %v2549
        %v2670 = vpack.c.b16 %v2556, %v2550
        %v2671 = vpack.c.b16 %v2563, %v2557
        %v2672 = vpack.c.b16 %v2564, %v2558
        %v2673 = vpack.c.b16 %v2565, %v2559
        %v2674 = vpack.c.b16 %v2566, %v2560
        %v2675 = vpack.c.b16 %v2567, %v2561
        %v2676 = vpack.c.b16 %v2568, %v2562
        %v2677 = vpack.c.b16 %v2575, %v2569
        %v2678 = vpack.c.b16 %v2576, %v2570
        %v2679 = vpack.c.b16 %v2577, %v2571
        %v2680 = vpack.c.b16 %v2578, %v2572
        %v2681 = vpack.c.b16 %v2579, %v2573
        %v2682 = vpack.c.b16 %v2580, %v2574
        %v2683 = vpack.c.b16 %v2587, %v2581
        %v2684 = vpack.c.b16 %v2588, %v2582
        %v2685 = vpack.c.b16 %v2589, %v2583
        %v2686 = vpack.c.b16 %v2590, %v2584
        %v2687 = vpack.c.b16 %v2591, %v2585
        %v2688 = vpack.c.b16 %v2592, %v2586
        %2785 = vmatprep.subr.bf16.mxu0 %v2594
        %2786 = vmatpush1.bf16.msra.mxu0 %v2593
        %2787 = vmatprep.subr.bf16.mxu0 %v2600
        %2788 = vmatpush1.bf16.msra.mxu0 %v2599
        %2789 = vmatprep.subr.bf16.mxu0 %v2606
        %2790 = vmatpush1.bf16.msra.mxu0 %v2605
        %2791 = vmatprep.subr.bf16.mxu0 %v2612
        %2792 = vmatpush1.bf16.msra.mxu0 %v2611
        %2793 = vmatprep.subr.bf16.mxu0 %v2618
        %2794 = vmatpush1.bf16.msra.mxu0 %v2617
        %2795 = vmatprep.subr.bf16.mxu0 %v2624
        %2796 = vmatpush1.bf16.msra.mxu0 %v2623
        %2797 = vmatprep.subr.bf16.mxu0 %v2630
        %2798 = vmatpush1.bf16.msra.mxu0 %v2629
        %2799 = vmatprep.subr.bf16.mxu0 %v2636
        %2800 = vmatpush1.bf16.msra.mxu0 %v2635
        %2801 = vmatprep.subr.bf16.mxu0 %v2642
        %2802 = vmatpush1.bf16.msra.mxu0 %v2641
        %2803 = vmatprep.subr.bf16.mxu0 %v2648
        %2804 = vmatpush1.bf16.msra.mxu0 %v2647
        %2805 = vmatprep.subr.bf16.mxu0 %v2654
        %2806 = vmatpush1.bf16.msra.mxu0 %v2653
        %2807 = vmatprep.subr.bf16.mxu0 %v2660
        %2808 = vmatpush1.bf16.msra.mxu0 %v2659
        %2809 = vmatprep.subr.bf16.mxu0 %v2666
        %2810 = vmatpush1.bf16.msra.mxu0 %v2665
        %2811 = vmatprep.subr.bf16.mxu0 %v2672
        %2812 = vmatpush1.bf16.msra.mxu0 %v2671
        %2813 = vmatprep.subr.bf16.mxu0 %v2678
        %2814 = vmatpush1.bf16.msra.mxu0 %v2677
        %2815 = vmatprep.subr.bf16.mxu0 %v2684
        %2816 = vmatpush1.bf16.msra.mxu0 %v2683
        %2817 = vmatprep.mubr.bf16.mxu0 %v2146
        %2818 = vmatmul.mubr.bf16.gmra.mrb[0].mxu0 %v2145
        %v2819 = vpop.f32.mrb[0].mxu0
        %v2820 = vadd.f32 %v2278, %v2819
        %v2821 = vpop.f32.mrb[0].mxu0
        %v2822 = vadd.f32 %v2282, %v2821
        %v2823 = vpop.f32.mrb[0].mxu0
        %v2824 = vadd.f32 %v2278, %v2823
        %v2825 = vpop.f32.mrb[0].mxu0
        %v2826 = vadd.f32 %v2282, %v2825
        %2827 = vmatprep.mubr.bf16.mxu0 %v2148
        %2828 = vmatmul.mubr.bf16.gmra.mrb[0].mxu0 %v2147
        %v2829 = vpop.f32.mrb[0].mxu0
        %v2830 = vadd.f32 %v2278, %v2829
        %v2831 = vpop.f32.mrb[0].mxu0
        %v2832 = vadd.f32 %v2282, %v2831
        %v2833 = vpop.f32.mrb[0].mxu0
        %v2834 = vadd.f32 %v2278, %v2833
        %v2835 = vpop.f32.mrb[0].mxu0
        %v2836 = vadd.f32 %v2282, %v2835
        %2837 = vmatprep.mubr.bf16.mxu0 %v2150
        %2838 = vmatmul.mubr.bf16.gmra.mrb[0].mxu0 %v2149
        %v2839 = vpop.f32.mrb[0].mxu0
        %v2840 = vadd.f32 %v2278, %v2839
        %v2841 = vpop.f32.mrb[0].mxu0
        %v2842 = vadd.f32 %v2282, %v2841
        %v2843 = vpop.f32.mrb[0].mxu0
        %v2844 = vadd.f32 %v2278, %v2843
        %v2845 = vpop.f32.mrb[0].mxu0
        %v2846 = vadd.f32 %v2282, %v2845
        %2847 = vmatprep.mubr.bf16.mxu0 %v2152
        %2848 = vmatmul.mubr.bf16.gmra.mrb[0].mxu0 %v2151
        %v2849 = vpop.f32.mrb[0].mxu0
        %v2850 = vadd.f32 %v2278, %v2849
        %v2851 = vpop.f32.mrb[0].mxu0
        %v2852 = vadd.f32 %v2282, %v2851
        %v2853 = vpop.f32.mrb[0].mxu0
        %v2854 = vadd.f32 %v2278, %v2853
        %v2855 = vpop.f32.mrb[0].mxu0
        %v2856 = vadd.f32 %v2282, %v2855
        %2857 = vmatprep.mubr.bf16.mxu0 %v2154
        %2858 = vmatmul.mubr.bf16.gmra.mrb[0].mxu0 %v2153
        %v2859 = vpop.f32.mrb[0].mxu0
        %v2860 = vadd.f32 %v2278, %v2859
        %v2861 = vpop.f32.mrb[0].mxu0
        %v2862 = vadd.f32 %v2282, %v2861
        %v2863 = vpop.f32.mrb[0].mxu0
        %v2864 = vadd.f32 %v2278, %v2863
        %v2865 = vpop.f32.mrb[0].mxu0
        %v2866 = vadd.f32 %v2282, %v2865
        %2867 = vmatprep.mubr.bf16.mxu0 %v2156
        %2868 = vmatmul.mubr.bf16.gmra.mrb[0].mxu0 %v2155
        %v2869 = vpop.f32.mrb[0].mxu0
        %v2870 = vadd.f32 %v2278, %v2869
        %v2871 = vpop.f32.mrb[0].mxu0
        %v2872 = vadd.f32 %v2282, %v2871
        %v2873 = vpop.f32.mrb[0].mxu0
        %v2874 = vadd.f32 %v2278, %v2873
        %v2875 = vpop.f32.mrb[0].mxu0
        %v2876 = vadd.f32 %v2282, %v2875
        %2877 = vmatprep.mubr.bf16.mxu0 %v2158
        %2878 = vmatmul.mubr.bf16.gmra.mrb[0].mxu0 %v2157
        %v2879 = vpop.f32.mrb[0].mxu0
        %v2880 = vadd.f32 %v2278, %v2879
        %v2881 = vpop.f32.mrb[0].mxu0
        %v2882 = vadd.f32 %v2282, %v2881
        %v2883 = vpop.f32.mrb[0].mxu0
        %v2884 = vadd.f32 %v2278, %v2883
        %v2885 = vpop.f32.mrb[0].mxu0
        %v2886 = vadd.f32 %v2282, %v2885
        %2887 = vmatprep.mubr.bf16.mxu0 %v2160
        %2888 = vmatmul.mubr.bf16.gmra.mrb[0].mxu0 %v2159
        %v2889 = vpop.f32.mrb[0].mxu0
        %v2890 = vadd.f32 %v2278, %v2889
        %v2891 = vpop.f32.mrb[0].mxu0
        %v2892 = vadd.f32 %v2282, %v2891
        %v2893 = vpop.f32.mrb[0].mxu0
        %v2894 = vadd.f32 %v2278, %v2893
        %v2895 = vpop.f32.mrb[0].mxu0
        %v2896 = vadd.f32 %v2282, %v2895
        %2897 = vmatprep.mubr.bf16.mxu0 %v2162
        %2898 = vmatmul.mubr.bf16.gmra.mrb[0].mxu0 %v2161
        %v2899 = vpop.f32.mrb[0].mxu0
        %v2900 = vadd.f32 %v2278, %v2899
        %v2901 = vpop.f32.mrb[0].mxu0
        %v2902 = vadd.f32 %v2282, %v2901
        %v2903 = vpop.f32.mrb[0].mxu0
        %v2904 = vadd.f32 %v2278, %v2903
        %v2905 = vpop.f32.mrb[0].mxu0
        %v2906 = vadd.f32 %v2282, %v2905
        %2907 = vmatprep.mubr.bf16.mxu0 %v2164
        %2908 = vmatmul.mubr.bf16.gmra.mrb[0].mxu0 %v2163
        %v2909 = vpop.f32.mrb[0].mxu0
        %v2910 = vadd.f32 %v2278, %v2909
        %v2911 = vpop.f32.mrb[0].mxu0
        %v2912 = vadd.f32 %v2282, %v2911
        %v2913 = vpop.f32.mrb[0].mxu0
        %v2914 = vadd.f32 %v2278, %v2913
        %v2915 = vpop.f32.mrb[0].mxu0
        %v2916 = vadd.f32 %v2282, %v2915
        %2917 = vmatprep.mubr.bf16.mxu0 %v2166
        %2918 = vmatmul.mubr.bf16.gmra.mrb[0].mxu0 %v2165
        %v2919 = vpop.f32.mrb[0].mxu0
        %v2920 = vadd.f32 %v2278, %v2919
        %v2921 = vpop.f32.mrb[0].mxu0
        %v2922 = vadd.f32 %v2282, %v2921
        %v2923 = vpop.f32.mrb[0].mxu0
        %v2924 = vadd.f32 %v2278, %v2923
        %v2925 = vpop.f32.mrb[0].mxu0
        %v2926 = vadd.f32 %v2282, %v2925
        %2927 = vmatprep.mubr.bf16.mxu0 %v2168
        %2928 = vmatmul.mubr.bf16.gmra.mrb[0].mxu0 %v2167
        %v2929 = vpop.f32.mrb[0].mxu0
        %v2930 = vadd.f32 %v2278, %v2929
        %v2931 = vpop.f32.mrb[0].mxu0
        %v2932 = vadd.f32 %v2282, %v2931
        %v2933 = vpop.f32.mrb[0].mxu0
        %v2934 = vadd.f32 %v2278, %v2933
        %v2935 = vpop.f32.mrb[0].mxu0
        %v2936 = vadd.f32 %v2282, %v2935
        %2937 = vmatprep.mubr.bf16.mxu0 %v2170
        %2938 = vmatmul.mubr.bf16.gmra.mrb[0].mxu0 %v2169
        %v2939 = vpop.f32.mrb[0].mxu0
        %v2940 = vadd.f32 %v2278, %v2939
        %v2941 = vpop.f32.mrb[0].mxu0
        %v2942 = vadd.f32 %v2282, %v2941
        %v2943 = vpop.f32.mrb[0].mxu0
        %v2944 = vadd.f32 %v2278, %v2943
        %v2945 = vpop.f32.mrb[0].mxu0
        %v2946 = vadd.f32 %v2282, %v2945
        %2947 = vmatprep.mubr.bf16.mxu0 %v2172
        %2948 = vmatmul.mubr.bf16.gmra.mrb[0].mxu0 %v2171
        %v2949 = vpop.f32.mrb[0].mxu0
        %v2950 = vadd.f32 %v2278, %v2949
        %v2951 = vpop.f32.mrb[0].mxu0
        %v2952 = vadd.f32 %v2282, %v2951
        %v2953 = vpop.f32.mrb[0].mxu0
        %v2954 = vadd.f32 %v2278, %v2953
        %v2955 = vpop.f32.mrb[0].mxu0
        %v2956 = vadd.f32 %v2282, %v2955
        %2957 = vmatprep.mubr.bf16.mxu0 %v2174
        %2958 = vmatmul.mubr.bf16.gmra.mrb[0].mxu0 %v2173
        %v2959 = vpop.f32.mrb[0].mxu0
        %v2960 = vadd.f32 %v2278, %v2959
        %v2961 = vpop.f32.mrb[0].mxu0
        %v2962 = vadd.f32 %v2282, %v2961
        %v2963 = vpop.f32.mrb[0].mxu0
        %v2964 = vadd.f32 %v2278, %v2963
        %v2965 = vpop.f32.mrb[0].mxu0
        %v2966 = vadd.f32 %v2282, %v2965
        %2967 = vmatprep.mubr.bf16.mxu0 %v2176
        %2968 = vmatmul.mubr.bf16.gmra.mrb[0].mxu0 %v2175
        %v2969 = vpop.f32.mrb[0].mxu0
        %v2970 = vadd.f32 %v2278, %v2969
        %v2971 = vpop.f32.mrb[0].mxu0
        %v2972 = vadd.f32 %v2282, %v2971
        %v2973 = vpop.f32.mrb[0].mxu0
        %v2974 = vadd.f32 %v2278, %v2973
        %v2975 = vpop.f32.mrb[0].mxu0
        %v2976 = vadd.f32 %v2282, %v2975
        %2977 = vdwg.mxu0
        %2978 = vmatprep.subr.bf16.mxu0 %v2596
        %2979 = vmatpush1.bf16.msra.mxu0 %v2595
        %2980 = vmatprep.subr.bf16.mxu0 %v2602
        %2981 = vmatpush1.bf16.msra.mxu0 %v2601
        %2982 = vmatprep.subr.bf16.mxu0 %v2608
        %2983 = vmatpush1.bf16.msra.mxu0 %v2607
        %2984 = vmatprep.subr.bf16.mxu0 %v2614
        %2985 = vmatpush1.bf16.msra.mxu0 %v2613
        %2986 = vmatprep.subr.bf16.mxu0 %v2620
        %2987 = vmatpush1.bf16.msra.mxu0 %v2619
        %2988 = vmatprep.subr.bf16.mxu0 %v2626
        %2989 = vmatpush1.bf16.msra.mxu0 %v2625
        %2990 = vmatprep.subr.bf16.mxu0 %v2632
        %2991 = vmatpush1.bf16.msra.mxu0 %v2631
        %2992 = vmatprep.subr.bf16.mxu0 %v2638
        %2993 = vmatpush1.bf16.msra.mxu0 %v2637
        %2994 = vmatprep.subr.bf16.mxu0 %v2644
        %2995 = vmatpush1.bf16.msra.mxu0 %v2643
        %2996 = vmatprep.subr.bf16.mxu0 %v2650
        %2997 = vmatpush1.bf16.msra.mxu0 %v2649
        %2998 = vmatprep.subr.bf16.mxu0 %v2656
        %2999 = vmatpush1.bf16.msra.mxu0 %v2655
        %3000 = vmatprep.subr.bf16.mxu0 %v2662
        %3001 = vmatpush1.bf16.msra.mxu0 %v2661
        %3002 = vmatprep.subr.bf16.mxu0 %v2668
        %3003 = vmatpush1.bf16.msra.mxu0 %v2667
        %3004 = vmatprep.subr.bf16.mxu0 %v2674
        %3005 = vmatpush1.bf16.msra.mxu0 %v2673
        %3006 = vmatprep.subr.bf16.mxu0 %v2680
        %3007 = vmatpush1.bf16.msra.mxu0 %v2679
        %3008 = vmatprep.subr.bf16.mxu0 %v2686
        %3009 = vmatpush1.bf16.msra.mxu0 %v2685
        %3010 = vmatprep.mubr.bf16.mxu0 %v2146
        %3011 = vmatmul.mubr.bf16.gmra.mrb[0].mxu0 %v2145
        %v3012 = vpop.f32.mrb[0].mxu0
        %v3013 = vadd.f32 %v2286, %v3012
        %v3014 = vpop.f32.mrb[0].mxu0
        %v3015 = vadd.f32 %v2290, %v3014
        %v3016 = vpop.f32.mrb[0].mxu0
        %v3017 = vadd.f32 %v2286, %v3016
        %v3018 = vpop.f32.mrb[0].mxu0
        %v3019 = vadd.f32 %v2290, %v3018
        %3020 = vmatprep.mubr.bf16.mxu0 %v2148
        %3021 = vmatmul.mubr.bf16.gmra.mrb[0].mxu0 %v2147
        %v3022 = vpop.f32.mrb[0].mxu0
        %v3023 = vadd.f32 %v2286, %v3022
        %v3024 = vpop.f32.mrb[0].mxu0
        %v3025 = vadd.f32 %v2290, %v3024
        %v3026 = vpop.f32.mrb[0].mxu0
        %v3027 = vadd.f32 %v2286, %v3026
        %v3028 = vpop.f32.mrb[0].mxu0
        %v3029 = vadd.f32 %v2290, %v3028
        %3030 = vmatprep.mubr.bf16.mxu0 %v2150
        %3031 = vmatmul.mubr.bf16.gmra.mrb[0].mxu0 %v2149
        %v3032 = vpop.f32.mrb[0].mxu0
        %v3033 = vadd.f32 %v2286, %v3032
        %v3034 = vpop.f32.mrb[0].mxu0
        %v3035 = vadd.f32 %v2290, %v3034
        %v3036 = vpop.f32.mrb[0].mxu0
        %v3037 = vadd.f32 %v2286, %v3036
        %v3038 = vpop.f32.mrb[0].mxu0
        %v3039 = vadd.f32 %v2290, %v3038
        %3040 = vmatprep.mubr.bf16.mxu0 %v2152
        %3041 = vmatmul.mubr.bf16.gmra.mrb[0].mxu0 %v2151
        %v3042 = vpop.f32.mrb[0].mxu0
        %v3043 = vadd.f32 %v2286, %v3042
        %v3044 = vpop.f32.mrb[0].mxu0
        %v3045 = vadd.f32 %v2290, %v3044
        %v3046 = vpop.f32.mrb[0].mxu0
        %v3047 = vadd.f32 %v2286, %v3046
        %v3048 = vpop.f32.mrb[0].mxu0
        %v3049 = vadd.f32 %v2290, %v3048
        %3050 = vmatprep.mubr.bf16.mxu0 %v2154
        %3051 = vmatmul.mubr.bf16.gmra.mrb[0].mxu0 %v2153
        %v3052 = vpop.f32.mrb[0].mxu0
        %v3053 = vadd.f32 %v2286, %v3052
        %v3054 = vpop.f32.mrb[0].mxu0
        %v3055 = vadd.f32 %v2290, %v3054
        %v3056 = vpop.f32.mrb[0].mxu0
        %v3057 = vadd.f32 %v2286, %v3056
        %v3058 = vpop.f32.mrb[0].mxu0
        %v3059 = vadd.f32 %v2290, %v3058
        %3060 = vmatprep.mubr.bf16.mxu0 %v2156
        %3061 = vmatmul.mubr.bf16.gmra.mrb[0].mxu0 %v2155
        %v3062 = vpop.f32.mrb[0].mxu0
        %v3063 = vadd.f32 %v2286, %v3062
        %v3064 = vpop.f32.mrb[0].mxu0
        %v3065 = vadd.f32 %v2290, %v3064
        %v3066 = vpop.f32.mrb[0].mxu0
        %v3067 = vadd.f32 %v2286, %v3066
        %v3068 = vpop.f32.mrb[0].mxu0
        %v3069 = vadd.f32 %v2290, %v3068
        %3070 = vmatprep.mubr.bf16.mxu0 %v2158
        %3071 = vmatmul.mubr.bf16.gmra.mrb[0].mxu0 %v2157
        %v3072 = vpop.f32.mrb[0].mxu0
        %v3073 = vadd.f32 %v2286, %v3072
        %v3074 = vpop.f32.mrb[0].mxu0
        %v3075 = vadd.f32 %v2290, %v3074
        %v3076 = vpop.f32.mrb[0].mxu0
        %v3077 = vadd.f32 %v2286, %v3076
        %v3078 = vpop.f32.mrb[0].mxu0
        %v3079 = vadd.f32 %v2290, %v3078
        %3080 = vmatprep.mubr.bf16.mxu0 %v2160
        %3081 = vmatmul.mubr.bf16.gmra.mrb[0].mxu0 %v2159
        %v3082 = vpop.f32.mrb[0].mxu0
        %v3083 = vadd.f32 %v2286, %v3082
        %v3084 = vpop.f32.mrb[0].mxu0
        %v3085 = vadd.f32 %v2290, %v3084
        %v3086 = vpop.f32.mrb[0].mxu0
        %v3087 = vadd.f32 %v2286, %v3086
        %v3088 = vpop.f32.mrb[0].mxu0
        %v3089 = vadd.f32 %v2290, %v3088
        %3090 = vmatprep.mubr.bf16.mxu0 %v2162
        %3091 = vmatmul.mubr.bf16.gmra.mrb[0].mxu0 %v2161
        %v3092 = vpop.f32.mrb[0].mxu0
        %v3093 = vadd.f32 %v2286, %v3092
        %v3094 = vpop.f32.mrb[0].mxu0
        %v3095 = vadd.f32 %v2290, %v3094
        %v3096 = vpop.f32.mrb[0].mxu0
        %v3097 = vadd.f32 %v2286, %v3096
        %v3098 = vpop.f32.mrb[0].mxu0
        %v3099 = vadd.f32 %v2290, %v3098
        %3100 = vmatprep.mubr.bf16.mxu0 %v2164
        %3101 = vmatmul.mubr.bf16.gmra.mrb[0].mxu0 %v2163
        %v3102 = vpop.f32.mrb[0].mxu0
        %v3103 = vadd.f32 %v2286, %v3102
        %v3104 = vpop.f32.mrb[0].mxu0
        %v3105 = vadd.f32 %v2290, %v3104
        %v3106 = vpop.f32.mrb[0].mxu0
        %v3107 = vadd.f32 %v2286, %v3106
        %v3108 = vpop.f32.mrb[0].mxu0
        %v3109 = vadd.f32 %v2290, %v3108
        %3110 = vmatprep.mubr.bf16.mxu0 %v2166
        %3111 = vmatmul.mubr.bf16.gmra.mrb[0].mxu0 %v2165
        %v3112 = vpop.f32.mrb[0].mxu0
        %v3113 = vadd.f32 %v2286, %v3112
        %v3114 = vpop.f32.mrb[0].mxu0
        %v3115 = vadd.f32 %v2290, %v3114
        %v3116 = vpop.f32.mrb[0].mxu0
        %v3117 = vadd.f32 %v2286, %v3116
        %v3118 = vpop.f32.mrb[0].mxu0
        %v3119 = vadd.f32 %v2290, %v3118
        %3120 = vmatprep.mubr.bf16.mxu0 %v2168
        %3121 = vmatmul.mubr.bf16.gmra.mrb[0].mxu0 %v2167
        %v3122 = vpop.f32.mrb[0].mxu0
        %v3123 = vadd.f32 %v2286, %v3122
        %v3124 = vpop.f32.mrb[0].mxu0
        %v3125 = vadd.f32 %v2290, %v3124
        %v3126 = vpop.f32.mrb[0].mxu0
        %v3127 = vadd.f32 %v2286, %v3126
        %v3128 = vpop.f32.mrb[0].mxu0
        %v3129 = vadd.f32 %v2290, %v3128
        %3130 = vmatprep.mubr.bf16.mxu0 %v2170
        %3131 = vmatmul.mubr.bf16.gmra.mrb[0].mxu0 %v2169
        %v3132 = vpop.f32.mrb[0].mxu0
        %v3133 = vadd.f32 %v2286, %v3132
        %v3134 = vpop.f32.mrb[0].mxu0
        %v3135 = vadd.f32 %v2290, %v3134
        %v3136 = vpop.f32.mrb[0].mxu0
        %v3137 = vadd.f32 %v2286, %v3136
        %v3138 = vpop.f32.mrb[0].mxu0
        %v3139 = vadd.f32 %v2290, %v3138
        %3140 = vmatprep.mubr.bf16.mxu0 %v2172
        %3141 = vmatmul.mubr.bf16.gmra.mrb[0].mxu0 %v2171
        %v3142 = vpop.f32.mrb[0].mxu0
        %v3143 = vadd.f32 %v2286, %v3142
        %v3144 = vpop.f32.mrb[0].mxu0
        %v3145 = vadd.f32 %v2290, %v3144
        %v3146 = vpop.f32.mrb[0].mxu0
        %v3147 = vadd.f32 %v2286, %v3146
        %v3148 = vpop.f32.mrb[0].mxu0
        %v3149 = vadd.f32 %v2290, %v3148
        %3150 = vmatprep.mubr.bf16.mxu0 %v2174
        %3151 = vmatmul.mubr.bf16.gmra.mrb[0].mxu0 %v2173
        %v3152 = vpop.f32.mrb[0].mxu0
        %v3153 = vadd.f32 %v2286, %v3152
        %v3154 = vpop.f32.mrb[0].mxu0
        %v3155 = vadd.f32 %v2290, %v3154
        %v3156 = vpop.f32.mrb[0].mxu0
        %v3157 = vadd.f32 %v2286, %v3156
        %v3158 = vpop.f32.mrb[0].mxu0
        %v3159 = vadd.f32 %v2290, %v3158
        %3160 = vmatprep.mubr.bf16.mxu0 %v2176
        %3161 = vmatmul.mubr.bf16.gmra.mrb[0].mxu0 %v2175
        %v3162 = vpop.f32.mrb[0].mxu0
        %v3163 = vadd.f32 %v2286, %v3162
        %v3164 = vpop.f32.mrb[0].mxu0
        %v3165 = vadd.f32 %v2290, %v3164
        %v3166 = vpop.f32.mrb[0].mxu0
        %v3167 = vadd.f32 %v2286, %v3166
        %v3168 = vpop.f32.mrb[0].mxu0
        %v3169 = vadd.f32 %v2290, %v3168
        %3170 = vdwg.mxu0
        %3171 = vmatprep.subr.bf16.mxu0 %v2598
        %3172 = vmatpush1.bf16.msra.mxu0 %v2597
        %3173 = vmatprep.subr.bf16.mxu0 %v2604
        %3174 = vmatpush1.bf16.msra.mxu0 %v2603
        %3175 = vmatprep.subr.bf16.mxu0 %v2610
        %3176 = vmatpush1.bf16.msra.mxu0 %v2609
        %3177 = vmatprep.subr.bf16.mxu0 %v2616
        %3178 = vmatpush1.bf16.msra.mxu0 %v2615
        %3179 = vmatprep.subr.bf16.mxu0 %v2622
        %3180 = vmatpush1.bf16.msra.mxu0 %v2621
        %3181 = vmatprep.subr.bf16.mxu0 %v2628
        %3182 = vmatpush1.bf16.msra.mxu0 %v2627
        %3183 = vmatprep.subr.bf16.mxu0 %v2634
        %3184 = vmatpush1.bf16.msra.mxu0 %v2633
        %3185 = vmatprep.subr.bf16.mxu0 %v2640
        %3186 = vmatpush1.bf16.msra.mxu0 %v2639
        %3187 = vmatprep.subr.bf16.mxu0 %v2646
        %3188 = vmatpush1.bf16.msra.mxu0 %v2645
        %3189 = vmatprep.subr.bf16.mxu0 %v2652
        %3190 = vmatpush1.bf16.msra.mxu0 %v2651
        %3191 = vmatprep.subr.bf16.mxu0 %v2658
        %3192 = vmatpush1.bf16.msra.mxu0 %v2657
        %3193 = vmatprep.subr.bf16.mxu0 %v2664
        %3194 = vmatpush1.bf16.msra.mxu0 %v2663
        %3195 = vmatprep.subr.bf16.mxu0 %v2670
        %3196 = vmatpush1.bf16.msra.mxu0 %v2669
        %3197 = vmatprep.subr.bf16.mxu0 %v2676
        %3198 = vmatpush1.bf16.msra.mxu0 %v2675
        %3199 = vmatprep.subr.bf16.mxu0 %v2682
        %3200 = vmatpush1.bf16.msra.mxu0 %v2681
        %3201 = vmatprep.subr.bf16.mxu0 %v2688
        %3202 = vmatpush1.bf16.msra.mxu0 %v2687
        %3203 = vmatprep.mubr.bf16.mxu0 %v2146
        %3204 = vmatmul.mubr.bf16.gmra.mrb[0].mxu0 %v2145
        %v3205 = vpop.f32.mrb[0].mxu0
        %v3206 = vadd.f32 %v2294, %v3205
        %v3207 = vpop.f32.mrb[0].mxu0
        %v3208 = vadd.f32 %v2298, %v3207
        %v3209 = vpop.f32.mrb[0].mxu0
        %v3210 = vadd.f32 %v2294, %v3209
        %v3211 = vpop.f32.mrb[0].mxu0
        %v3212 = vadd.f32 %v2298, %v3211
        %3213 = vmatprep.mubr.bf16.mxu0 %v2148
        %3214 = vmatmul.mubr.bf16.gmra.mrb[0].mxu0 %v2147
        %v3215 = vpop.f32.mrb[0].mxu0
        %v3216 = vadd.f32 %v2294, %v3215
        %v3217 = vpop.f32.mrb[0].mxu0
        %v3218 = vadd.f32 %v2298, %v3217
        %v3219 = vpop.f32.mrb[0].mxu0
        %v3220 = vadd.f32 %v2294, %v3219
        %v3221 = vpop.f32.mrb[0].mxu0
        %v3222 = vadd.f32 %v2298, %v3221
        %3223 = vmatprep.mubr.bf16.mxu0 %v2150
        %3224 = vmatmul.mubr.bf16.gmra.mrb[0].mxu0 %v2149
        %v3225 = vpop.f32.mrb[0].mxu0
        %v3226 = vadd.f32 %v2294, %v3225
        %v3227 = vpop.f32.mrb[0].mxu0
        %v3228 = vadd.f32 %v2298, %v3227
        %v3229 = vpop.f32.mrb[0].mxu0
        %v3230 = vadd.f32 %v2294, %v3229
        %v3231 = vpop.f32.mrb[0].mxu0
        %v3232 = vadd.f32 %v2298, %v3231
        %3233 = vmatprep.mubr.bf16.mxu0 %v2152
        %3234 = vmatmul.mubr.bf16.gmra.mrb[0].mxu0 %v2151
        %v3235 = vpop.f32.mrb[0].mxu0
        %v3236 = vadd.f32 %v2294, %v3235
        %v3237 = vpop.f32.mrb[0].mxu0
        %v3238 = vadd.f32 %v2298, %v3237
        %v3239 = vpop.f32.mrb[0].mxu0
        %v3240 = vadd.f32 %v2294, %v3239
        %v3241 = vpop.f32.mrb[0].mxu0
        %v3242 = vadd.f32 %v2298, %v3241
        %3243 = vmatprep.mubr.bf16.mxu0 %v2154
        %3244 = vmatmul.mubr.bf16.gmra.mrb[0].mxu0 %v2153
        %v3245 = vpop.f32.mrb[0].mxu0
        %v3246 = vadd.f32 %v2294, %v3245
        %v3247 = vpop.f32.mrb[0].mxu0
        %v3248 = vadd.f32 %v2298, %v3247
        %v3249 = vpop.f32.mrb[0].mxu0
        %v3250 = vadd.f32 %v2294, %v3249
        %v3251 = vpop.f32.mrb[0].mxu0
        %v3252 = vadd.f32 %v2298, %v3251
        %3253 = vmatprep.mubr.bf16.mxu0 %v2156
        %3254 = vmatmul.mubr.bf16.gmra.mrb[0].mxu0 %v2155
        %v3255 = vpop.f32.mrb[0].mxu0
        %v3256 = vadd.f32 %v2294, %v3255
        %v3257 = vpop.f32.mrb[0].mxu0
        %v3258 = vadd.f32 %v2298, %v3257
        %v3259 = vpop.f32.mrb[0].mxu0
        %v3260 = vadd.f32 %v2294, %v3259
        %v3261 = vpop.f32.mrb[0].mxu0
        %v3262 = vadd.f32 %v2298, %v3261
        %3263 = vmatprep.mubr.bf16.mxu0 %v2158
        %3264 = vmatmul.mubr.bf16.gmra.mrb[0].mxu0 %v2157
        %v3265 = vpop.f32.mrb[0].mxu0
        %v3266 = vadd.f32 %v2294, %v3265
        %v3267 = vpop.f32.mrb[0].mxu0
        %v3268 = vadd.f32 %v2298, %v3267
        %v3269 = vpop.f32.mrb[0].mxu0
        %v3270 = vadd.f32 %v2294, %v3269
        %v3271 = vpop.f32.mrb[0].mxu0
        %v3272 = vadd.f32 %v2298, %v3271
        %3273 = vmatprep.mubr.bf16.mxu0 %v2160
        %3274 = vmatmul.mubr.bf16.gmra.mrb[0].mxu0 %v2159
        %v3275 = vpop.f32.mrb[0].mxu0
        %v3276 = vadd.f32 %v2294, %v3275
        %v3277 = vpop.f32.mrb[0].mxu0
        %v3278 = vadd.f32 %v2298, %v3277
        %v3279 = vpop.f32.mrb[0].mxu0
        %v3280 = vadd.f32 %v2294, %v3279
        %v3281 = vpop.f32.mrb[0].mxu0
        %v3282 = vadd.f32 %v2298, %v3281
        %3283 = vmatprep.mubr.bf16.mxu0 %v2162
        %3284 = vmatmul.mubr.bf16.gmra.mrb[0].mxu0 %v2161
        %v3285 = vpop.f32.mrb[0].mxu0
        %v3286 = vadd.f32 %v2294, %v3285
        %v3287 = vpop.f32.mrb[0].mxu0
        %v3288 = vadd.f32 %v2298, %v3287
        %v3289 = vpop.f32.mrb[0].mxu0
        %v3290 = vadd.f32 %v2294, %v3289
        %v3291 = vpop.f32.mrb[0].mxu0
        %v3292 = vadd.f32 %v2298, %v3291
        %3293 = vmatprep.mubr.bf16.mxu0 %v2164
        %3294 = vmatmul.mubr.bf16.gmra.mrb[0].mxu0 %v2163
        %v3295 = vpop.f32.mrb[0].mxu0
        %v3296 = vadd.f32 %v2294, %v3295
        %v3297 = vpop.f32.mrb[0].mxu0
        %v3298 = vadd.f32 %v2298, %v3297
        %v3299 = vpop.f32.mrb[0].mxu0
        %v3300 = vadd.f32 %v2294, %v3299
        %v3301 = vpop.f32.mrb[0].mxu0
        %v3302 = vadd.f32 %v2298, %v3301
        %3303 = vmatprep.mubr.bf16.mxu0 %v2166
        %3304 = vmatmul.mubr.bf16.gmra.mrb[0].mxu0 %v2165
        %v3305 = vpop.f32.mrb[0].mxu0
        %v3306 = vadd.f32 %v2294, %v3305
        %v3307 = vpop.f32.mrb[0].mxu0
        %v3308 = vadd.f32 %v2298, %v3307
        %v3309 = vpop.f32.mrb[0].mxu0
        %v3310 = vadd.f32 %v2294, %v3309
        %v3311 = vpop.f32.mrb[0].mxu0
        %v3312 = vadd.f32 %v2298, %v3311
        %3313 = vmatprep.mubr.bf16.mxu0 %v2168
        %3314 = vmatmul.mubr.bf16.gmra.mrb[0].mxu0 %v2167
        %v3315 = vpop.f32.mrb[0].mxu0
        %v3316 = vadd.f32 %v2294, %v3315
        %v3317 = vpop.f32.mrb[0].mxu0
        %v3318 = vadd.f32 %v2298, %v3317
        %v3319 = vpop.f32.mrb[0].mxu0
        %v3320 = vadd.f32 %v2294, %v3319
        %v3321 = vpop.f32.mrb[0].mxu0
        %v3322 = vadd.f32 %v2298, %v3321
        %3323 = vmatprep.mubr.bf16.mxu0 %v2170
        %3324 = vmatmul.mubr.bf16.gmra.mrb[0].mxu0 %v2169
        %v3325 = vpop.f32.mrb[0].mxu0
        %v3326 = vadd.f32 %v2294, %v3325
        %v3327 = vpop.f32.mrb[0].mxu0
        %v3328 = vadd.f32 %v2298, %v3327
        %v3329 = vpop.f32.mrb[0].mxu0
        %v3330 = vadd.f32 %v2294, %v3329
        %v3331 = vpop.f32.mrb[0].mxu0
        %v3332 = vadd.f32 %v2298, %v3331
        %3333 = vmatprep.mubr.bf16.mxu0 %v2172
        %3334 = vmatmul.mubr.bf16.gmra.mrb[0].mxu0 %v2171
        %v3335 = vpop.f32.mrb[0].mxu0
        %v3336 = vadd.f32 %v2294, %v3335
        %v3337 = vpop.f32.mrb[0].mxu0
        %v3338 = vadd.f32 %v2298, %v3337
        %v3339 = vpop.f32.mrb[0].mxu0
        %v3340 = vadd.f32 %v2294, %v3339
        %v3341 = vpop.f32.mrb[0].mxu0
        %v3342 = vadd.f32 %v2298, %v3341
        %3343 = vmatprep.mubr.bf16.mxu0 %v2174
        %3344 = vmatmul.mubr.bf16.gmra.mrb[0].mxu0 %v2173
        %v3345 = vpop.f32.mrb[0].mxu0
        %v3346 = vadd.f32 %v2294, %v3345
        %v3347 = vpop.f32.mrb[0].mxu0
        %v3348 = vadd.f32 %v2298, %v3347
        %v3349 = vpop.f32.mrb[0].mxu0
        %v3350 = vadd.f32 %v2294, %v3349
        %v3351 = vpop.f32.mrb[0].mxu0
        %v3352 = vadd.f32 %v2298, %v3351
        %3353 = vmatprep.mubr.bf16.mxu0 %v2176
        %3354 = vmatmul.mubr.bf16.gmra.mrb[0].mxu0 %v2175
        %v3355 = vpop.f32.mrb[0].mxu0
        %v3356 = vadd.f32 %v2294, %v3355
        %v3357 = vpop.f32.mrb[0].mxu0
        %v3358 = vadd.f32 %v2298, %v3357
        %v3359 = vpop.f32.mrb[0].mxu0
        %v3360 = vadd.f32 %v2294, %v3359
        %v3361 = vpop.f32.mrb[0].mxu0
        %v3362 = vadd.f32 %v2298, %v3361
        %3363 = vdwg.mxu0
        %v3364 = vpack.c.bf16 %v2824, %v2820
        %v3365 = vpack.c.bf16 %v2826, %v2822
        %v3366 = vpack.c.bf16 %v3017, %v3013
        %v3367 = vpack.c.bf16 %v3019, %v3015
        %v3368 = vpack.c.bf16 %v3210, %v3206
        %v3369 = vpack.c.bf16 %v3212, %v3208
        %v3370 = vpack.c.bf16 %v2834, %v2830
        %v3371 = vpack.c.bf16 %v2836, %v2832
        %v3372 = vpack.c.bf16 %v3027, %v3023
        %v3373 = vpack.c.bf16 %v3029, %v3025
        %v3374 = vpack.c.bf16 %v3220, %v3216
        %v3375 = vpack.c.bf16 %v3222, %v3218
        %v3376 = vpack.c.bf16 %v2844, %v2840
        %v3377 = vpack.c.bf16 %v2846, %v2842
        %v3378 = vpack.c.bf16 %v3037, %v3033
        %v3379 = vpack.c.bf16 %v3039, %v3035
        %v3380 = vpack.c.bf16 %v3230, %v3226
        %v3381 = vpack.c.bf16 %v3232, %v3228
        %v3382 = vpack.c.bf16 %v2854, %v2850
        %v3383 = vpack.c.bf16 %v2856, %v2852
        %v3384 = vpack.c.bf16 %v3047, %v3043
        %v3385 = vpack.c.bf16 %v3049, %v3045
        %v3386 = vpack.c.bf16 %v3240, %v3236
        %v3387 = vpack.c.bf16 %v3242, %v3238
        %v3388 = vpack.c.bf16 %v2864, %v2860
        %v3389 = vpack.c.bf16 %v2866, %v2862
        %v3390 = vpack.c.bf16 %v3057, %v3053
        %v3391 = vpack.c.bf16 %v3059, %v3055
        %v3392 = vpack.c.bf16 %v3250, %v3246
        %v3393 = vpack.c.bf16 %v3252, %v3248
        %v3394 = vpack.c.bf16 %v2874, %v2870
        %v3395 = vpack.c.bf16 %v2876, %v2872
        %v3396 = vpack.c.bf16 %v3067, %v3063
        %v3397 = vpack.c.bf16 %v3069, %v3065
        %v3398 = vpack.c.bf16 %v3260, %v3256
        %v3399 = vpack.c.bf16 %v3262, %v3258
        %v3400 = vpack.c.bf16 %v2884, %v2880
        %v3401 = vpack.c.bf16 %v2886, %v2882
        %v3402 = vpack.c.bf16 %v3077, %v3073
        %v3403 = vpack.c.bf16 %v3079, %v3075
        %v3404 = vpack.c.bf16 %v3270, %v3266
        %v3405 = vpack.c.bf16 %v3272, %v3268
        %v3406 = vpack.c.bf16 %v2894, %v2890
        %v3407 = vpack.c.bf16 %v2896, %v2892
        %v3408 = vpack.c.bf16 %v3087, %v3083
        %v3409 = vpack.c.bf16 %v3089, %v3085
        %v3410 = vpack.c.bf16 %v3280, %v3276
        %v3411 = vpack.c.bf16 %v3282, %v3278
        %v3412 = vpack.c.bf16 %v2904, %v2900
        %v3413 = vpack.c.bf16 %v2906, %v2902
        %v3414 = vpack.c.bf16 %v3097, %v3093
        %v3415 = vpack.c.bf16 %v3099, %v3095
        %v3416 = vpack.c.bf16 %v3290, %v3286
        %v3417 = vpack.c.bf16 %v3292, %v3288
        %v3418 = vpack.c.bf16 %v2914, %v2910
        %v3419 = vpack.c.bf16 %v2916, %v2912
        %v3420 = vpack.c.bf16 %v3107, %v3103
        %v3421 = vpack.c.bf16 %v3109, %v3105
        %v3422 = vpack.c.bf16 %v3300, %v3296
        %v3423 = vpack.c.bf16 %v3302, %v3298
        %v3424 = vpack.c.bf16 %v2924, %v2920
        %v3425 = vpack.c.bf16 %v2926, %v2922
        %v3426 = vpack.c.bf16 %v3117, %v3113
        %v3427 = vpack.c.bf16 %v3119, %v3115
        %v3428 = vpack.c.bf16 %v3310, %v3306
        %v3429 = vpack.c.bf16 %v3312, %v3308
        %v3430 = vpack.c.bf16 %v2934, %v2930
        %v3431 = vpack.c.bf16 %v2936, %v2932
        %v3432 = vpack.c.bf16 %v3127, %v3123
        %v3433 = vpack.c.bf16 %v3129, %v3125
        %v3434 = vpack.c.bf16 %v3320, %v3316
        %v3435 = vpack.c.bf16 %v3322, %v3318
        %v3436 = vpack.c.bf16 %v2944, %v2940
        %v3437 = vpack.c.bf16 %v2946, %v2942
        %v3438 = vpack.c.bf16 %v3137, %v3133
        %v3439 = vpack.c.bf16 %v3139, %v3135
        %v3440 = vpack.c.bf16 %v3330, %v3326
        %v3441 = vpack.c.bf16 %v3332, %v3328
        %v3442 = vpack.c.bf16 %v2954, %v2950
        %v3443 = vpack.c.bf16 %v2956, %v2952
        %v3444 = vpack.c.bf16 %v3147, %v3143
        %v3445 = vpack.c.bf16 %v3149, %v3145
        %v3446 = vpack.c.bf16 %v3340, %v3336
        %v3447 = vpack.c.bf16 %v3342, %v3338
        %v3448 = vpack.c.bf16 %v2964, %v2960
        %v3449 = vpack.c.bf16 %v2966, %v2962
        %v3450 = vpack.c.bf16 %v3157, %v3153
        %v3451 = vpack.c.bf16 %v3159, %v3155
        %v3452 = vpack.c.bf16 %v3350, %v3346
        %v3453 = vpack.c.bf16 %v3352, %v3348
        %v3454 = vpack.c.bf16 %v2974, %v2970
        %v3455 = vpack.c.bf16 %v2976, %v2972
        %v3456 = vpack.c.bf16 %v3167, %v3163
        %v3457 = vpack.c.bf16 %v3169, %v3165
        %v3458 = vpack.c.bf16 %v3360, %v3356
        %v3459 = vpack.c.bf16 %v3362, %v3358
        %3460 = vmatprep.subr.bf16.mxu0 0
        %3461 = vmatpush1.bf16.xpose.msra.mxu0 %v3366
        %3462 = vmatprep.subr.bf16.mxu0 0
        %3463 = vmatpush1.bf16.xpose.msra.mxu0 %v3372
        %3464 = vmatprep.subr.bf16.mxu0 0
        %3465 = vmatpush1.bf16.xpose.msra.mxu0 %v3378
        %3466 = vmatprep.subr.bf16.mxu0 0
        %3467 = vmatpush1.bf16.xpose.msra.mxu0 %v3384
        %3468 = vmatprep.subr.bf16.mxu0 0
        %3469 = vmatpush1.bf16.xpose.msra.mxu0 %v3390
        %3470 = vmatprep.subr.bf16.mxu0 0
        %3471 = vmatpush1.bf16.xpose.msra.mxu0 %v3396
        %3472 = vmatprep.subr.bf16.mxu0 0
        %3473 = vmatpush1.bf16.xpose.msra.mxu0 %v3402
        %3474 = vmatprep.subr.bf16.mxu0 0
        %3475 = vmatpush1.bf16.xpose.msra.mxu0 %v3408
        %3476 = vmatprep.subr.bf16.mxu0 0
        %3477 = vmatpush1.bf16.xpose.msra.mxu0 0
        %3478 = vmatprep.subr.bf16.mxu0 0
        %3479 = vmatpush1.bf16.xpose.msra.mxu0 0
        %3480 = vmatprep.subr.bf16.mxu0 0
        %3481 = vmatpush1.bf16.xpose.msra.mxu0 0
        %3482 = vmatprep.subr.bf16.mxu0 0
        %3483 = vmatpush1.bf16.xpose.msra.mxu0 0
        %3484 = vmatprep.subr.bf16.mxu0 0
        %3485 = vmatpush1.bf16.xpose.msra.mxu0 0
        %3486 = vmatprep.subr.bf16.mxu0 0
        %3487 = vmatpush1.bf16.xpose.msra.mxu0 0
        %3488 = vmatprep.subr.bf16.mxu0 0
        %3489 = vmatpush1.bf16.xpose.msra.mxu0 0
        %3490 = vmatprep.subr.bf16.mxu0 0
        %3491 = vmatpush1.bf16.xpose.msra.mxu0 0
        %3492 = vmatprep.mubr.bf16.mxu0 0
        %3493 = vmatmul.mubr.bf16.gmra.mrb[0].mxu0 %v3364
        %v3494 = vpop.f32.mrb[0].mxu0
        %v3495 = vadd.f32 0.0, %v3494
        %v3496 = vpop.f32.mrb[0].mxu0
        %v3497 = vpop.f32.mrb[0].mxu0
        %v3498 = vadd.f32 0.0, %v3497
        %v3499 = vpop.f32.mrb[0].mxu0
        %3500 = vmatprep.mubr.bf16.mxu0 0
        %3501 = vmatmul.mubr.bf16.gmra.mrb[0].mxu0 %v3370
        %v3502 = vpop.f32.mrb[0].mxu0
        %v3503 = vadd.f32 0.0, %v3502
        %v3504 = vpop.f32.mrb[0].mxu0
        %v3505 = vpop.f32.mrb[0].mxu0
        %v3506 = vadd.f32 0.0, %v3505
        %v3507 = vpop.f32.mrb[0].mxu0
        %3508 = vmatprep.mubr.bf16.mxu0 0
        %3509 = vmatmul.mubr.bf16.gmra.mrb[0].mxu0 %v3376
        %v3510 = vpop.f32.mrb[0].mxu0
        %v3511 = vadd.f32 0.0, %v3510
        %v3512 = vpop.f32.mrb[0].mxu0
        %v3513 = vpop.f32.mrb[0].mxu0
        %v3514 = vadd.f32 0.0, %v3513
        %v3515 = vpop.f32.mrb[0].mxu0
        %3516 = vmatprep.mubr.bf16.mxu0 0
        %3517 = vmatmul.mubr.bf16.gmra.mrb[0].mxu0 %v3382
        %v3518 = vpop.f32.mrb[0].mxu0
        %v3519 = vadd.f32 0.0, %v3518
        %v3520 = vpop.f32.mrb[0].mxu0
        %v3521 = vpop.f32.mrb[0].mxu0
        %v3522 = vadd.f32 0.0, %v3521
        %v3523 = vpop.f32.mrb[0].mxu0
        %3524 = vmatprep.mubr.bf16.mxu0 0
        %3525 = vmatmul.mubr.bf16.gmra.mrb[0].mxu0 %v3388
        %v3526 = vpop.f32.mrb[0].mxu0
        %v3527 = vadd.f32 0.0, %v3526
        %v3528 = vpop.f32.mrb[0].mxu0
        %v3529 = vpop.f32.mrb[0].mxu0
        %v3530 = vadd.f32 0.0, %v3529
        %v3531 = vpop.f32.mrb[0].mxu0
        %3532 = vmatprep.mubr.bf16.mxu0 0
        %3533 = vmatmul.mubr.bf16.gmra.mrb[0].mxu0 %v3394
        %v3534 = vpop.f32.mrb[0].mxu0
        %v3535 = vadd.f32 0.0, %v3534
        %v3536 = vpop.f32.mrb[0].mxu0
        %v3537 = vpop.f32.mrb[0].mxu0
        %v3538 = vadd.f32 0.0, %v3537
        %v3539 = vpop.f32.mrb[0].mxu0
        %3540 = vmatprep.mubr.bf16.mxu0 0
        %3541 = vmatmul.mubr.bf16.gmra.mrb[0].mxu0 %v3400
        %v3542 = vpop.f32.mrb[0].mxu0
        %v3543 = vadd.f32 0.0, %v3542
        %v3544 = vpop.f32.mrb[0].mxu0
        %v3545 = vpop.f32.mrb[0].mxu0
        %v3546 = vadd.f32 0.0, %v3545
        %v3547 = vpop.f32.mrb[0].mxu0
        %3548 = vmatprep.mubr.bf16.mxu0 0
        %3549 = vmatmul.mubr.bf16.gmra.mrb[0].mxu0 %v3406
        %v3550 = vpop.f32.mrb[0].mxu0
        %v3551 = vadd.f32 0.0, %v3550
        %v3552 = vpop.f32.mrb[0].mxu0
        %v3553 = vpop.f32.mrb[0].mxu0
        %v3554 = vadd.f32 0.0, %v3553
        %v3555 = vpop.f32.mrb[0].mxu0
        %3556 = vdwg.mxu0
        %3557 = vmatprep.subr.bf16.mxu0 0
        %3558 = vmatpush1.bf16.xpose.msra.mxu0 %v3414
        %3559 = vmatprep.subr.bf16.mxu0 0
        %3560 = vmatpush1.bf16.xpose.msra.mxu0 %v3420
        %3561 = vmatprep.subr.bf16.mxu0 0
        %3562 = vmatpush1.bf16.xpose.msra.mxu0 %v3426
        %3563 = vmatprep.subr.bf16.mxu0 0
        %3564 = vmatpush1.bf16.xpose.msra.mxu0 %v3432
        %3565 = vmatprep.subr.bf16.mxu0 0
        %3566 = vmatpush1.bf16.xpose.msra.mxu0 %v3438
        %3567 = vmatprep.subr.bf16.mxu0 0
        %3568 = vmatpush1.bf16.xpose.msra.mxu0 %v3444
        %3569 = vmatprep.subr.bf16.mxu0 0
        %3570 = vmatpush1.bf16.xpose.msra.mxu0 %v3450
        %3571 = vmatprep.subr.bf16.mxu0 0
        %3572 = vmatpush1.bf16.xpose.msra.mxu0 %v3456
        %3573 = vmatprep.subr.bf16.mxu0 0
        %3574 = vmatpush1.bf16.xpose.msra.mxu0 0
        %3575 = vmatprep.subr.bf16.mxu0 0
        %3576 = vmatpush1.bf16.xpose.msra.mxu0 0
        %3577 = vmatprep.subr.bf16.mxu0 0
        %3578 = vmatpush1.bf16.xpose.msra.mxu0 0
        %3579 = vmatprep.subr.bf16.mxu0 0
        %3580 = vmatpush1.bf16.xpose.msra.mxu0 0
        %3581 = vmatprep.subr.bf16.mxu0 0
        %3582 = vmatpush1.bf16.xpose.msra.mxu0 0
        %3583 = vmatprep.subr.bf16.mxu0 0
        %3584 = vmatpush1.bf16.xpose.msra.mxu0 0
        %3585 = vmatprep.subr.bf16.mxu0 0
        %3586 = vmatpush1.bf16.xpose.msra.mxu0 0
        %3587 = vmatprep.subr.bf16.mxu0 0
        %3588 = vmatpush1.bf16.xpose.msra.mxu0 0
        %3589 = vmatprep.mubr.bf16.mxu0 0
        %3590 = vmatmul.mubr.bf16.gmra.mrb[0].mxu0 %v3412
        %v3591 = vpop.f32.mrb[0].mxu0
        %v3592 = vadd.f32 0.0, %v3591
        %v3593 = vpop.f32.mrb[0].mxu0
        %v3594 = vpop.f32.mrb[0].mxu0
        %v3595 = vadd.f32 0.0, %v3594
        %v3596 = vpop.f32.mrb[0].mxu0
        %3597 = vmatprep.mubr.bf16.mxu0 0
        %3598 = vmatmul.mubr.bf16.gmra.mrb[0].mxu0 %v3418
        %v3599 = vpop.f32.mrb[0].mxu0
        %v3600 = vadd.f32 0.0, %v3599
        %v3601 = vpop.f32.mrb[0].mxu0
        %v3602 = vpop.f32.mrb[0].mxu0
        %v3603 = vadd.f32 0.0, %v3602
        %v3604 = vpop.f32.mrb[0].mxu0
        %3605 = vmatprep.mubr.bf16.mxu0 0
        %3606 = vmatmul.mubr.bf16.gmra.mrb[0].mxu0 %v3424
        %v3607 = vpop.f32.mrb[0].mxu0
        %v3608 = vadd.f32 0.0, %v3607
        %v3609 = vpop.f32.mrb[0].mxu0
        %v3610 = vpop.f32.mrb[0].mxu0
        %v3611 = vadd.f32 0.0, %v3610
        %v3612 = vpop.f32.mrb[0].mxu0
        %3613 = vmatprep.mubr.bf16.mxu0 0
        %3614 = vmatmul.mubr.bf16.gmra.mrb[0].mxu0 %v3430
        %v3615 = vpop.f32.mrb[0].mxu0
        %v3616 = vadd.f32 0.0, %v3615
        %v3617 = vpop.f32.mrb[0].mxu0
        %v3618 = vpop.f32.mrb[0].mxu0
        %v3619 = vadd.f32 0.0, %v3618
        %v3620 = vpop.f32.mrb[0].mxu0
        %3621 = vmatprep.mubr.bf16.mxu0 0
        %3622 = vmatmul.mubr.bf16.gmra.mrb[0].mxu0 %v3436
        %v3623 = vpop.f32.mrb[0].mxu0
        %v3624 = vadd.f32 0.0, %v3623
        %v3625 = vpop.f32.mrb[0].mxu0
        %v3626 = vpop.f32.mrb[0].mxu0
        %v3627 = vadd.f32 0.0, %v3626
        %v3628 = vpop.f32.mrb[0].mxu0
        %3629 = vmatprep.mubr.bf16.mxu0 0
        %3630 = vmatmul.mubr.bf16.gmra.mrb[0].mxu0 %v3442
        %v3631 = vpop.f32.mrb[0].mxu0
        %v3632 = vadd.f32 0.0, %v3631
        %v3633 = vpop.f32.mrb[0].mxu0
        %v3634 = vpop.f32.mrb[0].mxu0
        %v3635 = vadd.f32 0.0, %v3634
        %v3636 = vpop.f32.mrb[0].mxu0
        %3637 = vmatprep.mubr.bf16.mxu0 0
        %3638 = vmatmul.mubr.bf16.gmra.mrb[0].mxu0 %v3448
        %v3639 = vpop.f32.mrb[0].mxu0
        %v3640 = vadd.f32 0.0, %v3639
        %v3641 = vpop.f32.mrb[0].mxu0
        %v3642 = vpop.f32.mrb[0].mxu0
        %v3643 = vadd.f32 0.0, %v3642
        %v3644 = vpop.f32.mrb[0].mxu0
        %3645 = vmatprep.mubr.bf16.mxu0 0
        %3646 = vmatmul.mubr.bf16.gmra.mrb[0].mxu0 %v3454
        %v3647 = vpop.f32.mrb[0].mxu0
        %v3648 = vadd.f32 0.0, %v3647
        %v3649 = vpop.f32.mrb[0].mxu0
        %v3650 = vpop.f32.mrb[0].mxu0
        %v3651 = vadd.f32 0.0, %v3650
        %v3652 = vpop.f32.mrb[0].mxu0
        %3653 = vdwg.mxu0
        %3654 = vmax.xlane.f32.xlu0 %v3495
        %v3655 = vpop.xlane.xlu0 %3654
        %3656 = vmax.xlane.f32.xlu0 %v3498
        %v3657 = vpop.xlane.xlu0 %3656
        %3658 = vmax.xlane.f32.xlu0 %v3503
        %v3659 = vpop.xlane.xlu0 %3658
        %3660 = vmax.xlane.f32.xlu0 %v3506
        %v3661 = vpop.xlane.xlu0 %3660
        %3662 = vmax.xlane.f32.xlu0 %v3511
        %v3663 = vpop.xlane.xlu0 %3662
        %3664 = vmax.xlane.f32.xlu0 %v3514
        %v3665 = vpop.xlane.xlu0 %3664
        %3666 = vmax.xlane.f32.xlu0 %v3519
        %v3667 = vpop.xlane.xlu0 %3666
        %3668 = vmax.xlane.f32.xlu0 %v3522
        %v3669 = vpop.xlane.xlu0 %3668
        %3670 = vmax.xlane.f32.xlu0 %v3527
        %v3671 = vpop.xlane.xlu0 %3670
        %3672 = vmax.xlane.f32.xlu0 %v3530
        %v3673 = vpop.xlane.xlu0 %3672
        %3674 = vmax.xlane.f32.xlu0 %v3535
        %v3675 = vpop.xlane.xlu0 %3674
        %3676 = vmax.xlane.f32.xlu0 %v3538
        %v3677 = vpop.xlane.xlu0 %3676
        %3678 = vmax.xlane.f32.xlu0 %v3543
        %v3679 = vpop.xlane.xlu0 %3678
        %3680 = vmax.xlane.f32.xlu0 %v3546
        %v3681 = vpop.xlane.xlu0 %3680
        %3682 = vmax.xlane.f32.xlu0 %v3551
        %v3683 = vpop.xlane.xlu0 %3682
        %3684 = vmax.xlane.f32.xlu0 %v3554
        %v3685 = vpop.xlane.xlu0 %3684
        %3686 = vmax.xlane.f32.xlu0 %v3592
        %v3687 = vpop.xlane.xlu0 %3686
        %3688 = vmax.xlane.f32.xlu0 %v3595
        %v3689 = vpop.xlane.xlu0 %3688
        %3690 = vmax.xlane.f32.xlu0 %v3600
        %v3691 = vpop.xlane.xlu0 %3690
        %3692 = vmax.xlane.f32.xlu0 %v3603
        %v3693 = vpop.xlane.xlu0 %3692
        %3694 = vmax.xlane.f32.xlu0 %v3608
        %v3695 = vpop.xlane.xlu0 %3694
        %3696 = vmax.xlane.f32.xlu0 %v3611
        %v3697 = vpop.xlane.xlu0 %3696
        %3698 = vmax.xlane.f32.xlu0 %v3616
        %v3699 = vpop.xlane.xlu0 %3698
        %3700 = vmax.xlane.f32.xlu0 %v3619
        %v3701 = vpop.xlane.xlu0 %3700
        %3702 = vmax.xlane.f32.xlu0 %v3624
        %v3703 = vpop.xlane.xlu0 %3702
        %3704 = vmax.xlane.f32.xlu0 %v3627
        %v3705 = vpop.xlane.xlu0 %3704
        %3706 = vmax.xlane.f32.xlu0 %v3632
        %v3707 = vpop.xlane.xlu0 %3706
        %3708 = vmax.xlane.f32.xlu0 %v3635
        %v3709 = vpop.xlane.xlu0 %3708
        %3710 = vmax.xlane.f32.xlu0 %v3640
        %v3711 = vpop.xlane.xlu0 %3710
        %3712 = vmax.xlane.f32.xlu0 %v3643
        %v3713 = vpop.xlane.xlu0 %3712
        %3714 = vmax.xlane.f32.xlu0 %v3648
        %v3715 = vpop.xlane.xlu0 %3714
        %3716 = vmax.xlane.f32.xlu0 %v3651
        %v3717 = vpop.xlane.xlu0 %3716
        %v3718 = vsub.f32 %v3495, %v3655
        %v3719 = vsub.f32 %v3498, %v3657
        %v3720 = vsub.f32 %v3503, %v3659
        %v3721 = vsub.f32 %v3506, %v3661
        %v3722 = vsub.f32 %v3511, %v3663
        %v3723 = vsub.f32 %v3514, %v3665
        %v3724 = vsub.f32 %v3519, %v3667
        %v3725 = vsub.f32 %v3522, %v3669
        %v3726 = vsub.f32 %v3527, %v3671
        %v3727 = vsub.f32 %v3530, %v3673
        %v3728 = vsub.f32 %v3535, %v3675
        %v3729 = vsub.f32 %v3538, %v3677
        %v3730 = vsub.f32 %v3543, %v3679
        %v3731 = vsub.f32 %v3546, %v3681
        %v3732 = vsub.f32 %v3551, %v3683
        %v3733 = vsub.f32 %v3554, %v3685
        %v3734 = vsub.f32 %v3592, %v3687
        %v3735 = vsub.f32 %v3595, %v3689
        %v3736 = vsub.f32 %v3600, %v3691
        %v3737 = vsub.f32 %v3603, %v3693
        %v3738 = vsub.f32 %v3608, %v3695
        %v3739 = vsub.f32 %v3611, %v3697
        %v3740 = vsub.f32 %v3616, %v3699
        %v3741 = vsub.f32 %v3619, %v3701
        %v3742 = vsub.f32 %v3624, %v3703
        %v3743 = vsub.f32 %v3627, %v3705
        %v3744 = vsub.f32 %v3632, %v3707
        %v3745 = vsub.f32 %v3635, %v3709
        %v3746 = vsub.f32 %v3640, %v3711
        %v3747 = vsub.f32 %v3643, %v3713
        %v3748 = vsub.f32 %v3648, %v3715
        %v3749 = vsub.f32 %v3651, %v3717
        %v3750 = vmul.f32 %v3718, 1.442695
        %v3751 = vpow.pop %v3750
        %v3752 = vmul.f32 %v3719, 1.442695
        %v3753 = vpow.pop %v3752
        %v3754 = vmul.f32 %v3720, 1.442695
        %v3755 = vpow.pop %v3754
        %v3756 = vmul.f32 %v3721, 1.442695
        %v3757 = vpow.pop %v3756
        %v3758 = vmul.f32 %v3722, 1.442695
        %v3759 = vpow.pop %v3758
        %v3760 = vmul.f32 %v3723, 1.442695
        %v3761 = vpow.pop %v3760
        %v3762 = vmul.f32 %v3724, 1.442695
        %v3763 = vpow.pop %v3762
        %v3764 = vmul.f32 %v3725, 1.442695
        %v3765 = vpow.pop %v3764
        %v3766 = vmul.f32 %v3726, 1.442695
        %v3767 = vpow.pop %v3766
        %v3768 = vmul.f32 %v3727, 1.442695
        %v3769 = vpow.pop %v3768
        %v3770 = vmul.f32 %v3728, 1.442695
        %v3771 = vpow.pop %v3770
        %v3772 = vmul.f32 %v3729, 1.442695
        %v3773 = vpow.pop %v3772
        %v3774 = vmul.f32 %v3730, 1.442695
        %v3775 = vpow.pop %v3774
        %v3776 = vmul.f32 %v3731, 1.442695
        %v3777 = vpow.pop %v3776
        %v3778 = vmul.f32 %v3732, 1.442695
        %v3779 = vpow.pop %v3778
        %v3780 = vmul.f32 %v3733, 1.442695
        %v3781 = vpow.pop %v3780
        %v3782 = vmul.f32 %v3734, 1.442695
        %v3783 = vpow.pop %v3782
        %v3784 = vmul.f32 %v3735, 1.442695
        %v3785 = vpow.pop %v3784
        %v3786 = vmul.f32 %v3736, 1.442695
        %v3787 = vpow.pop %v3786
        %v3788 = vmul.f32 %v3737, 1.442695
        %v3789 = vpow.pop %v3788
        %v3790 = vmul.f32 %v3738, 1.442695
        %v3791 = vpow.pop %v3790
        %v3792 = vmul.f32 %v3739, 1.442695
        %v3793 = vpow.pop %v3792
        %v3794 = vmul.f32 %v3740, 1.442695
        %v3795 = vpow.pop %v3794
        %v3796 = vmul.f32 %v3741, 1.442695
        %v3797 = vpow.pop %v3796
        %v3798 = vmul.f32 %v3742, 1.442695
        %v3799 = vpow.pop %v3798
        %v3800 = vmul.f32 %v3743, 1.442695
        %v3801 = vpow.pop %v3800
        %v3802 = vmul.f32 %v3744, 1.442695
        %v3803 = vpow.pop %v3802
        %v3804 = vmul.f32 %v3745, 1.442695
        %v3805 = vpow.pop %v3804
        %v3806 = vmul.f32 %v3746, 1.442695
        %v3807 = vpow.pop %v3806
        %v3808 = vmul.f32 %v3747, 1.442695
        %v3809 = vpow.pop %v3808
        %v3810 = vmul.f32 %v3748, 1.442695
        %v3811 = vpow.pop %v3810
        %v3812 = vmul.f32 %v3749, 1.442695
        %v3813 = vpow.pop %v3812
        %3814 = vadd.xlane.f32.xlu0 %v3751
        %v3815 = vpop.xlane.xlu0 %3814
        %3816 = vadd.xlane.f32.xlu0 %v3753
        %v3817 = vpop.xlane.xlu0 %3816
        %3818 = vadd.xlane.f32.xlu0 %v3755
        %v3819 = vpop.xlane.xlu0 %3818
        %3820 = vadd.xlane.f32.xlu0 %v3757
        %v3821 = vpop.xlane.xlu0 %3820
        %3822 = vadd.xlane.f32.xlu0 %v3759
        %v3823 = vpop.xlane.xlu0 %3822
        %3824 = vadd.xlane.f32.xlu0 %v3761
        %v3825 = vpop.xlane.xlu0 %3824
        %3826 = vadd.xlane.f32.xlu0 %v3763
        %v3827 = vpop.xlane.xlu0 %3826
        %3828 = vadd.xlane.f32.xlu0 %v3765
        %v3829 = vpop.xlane.xlu0 %3828
        %3830 = vadd.xlane.f32.xlu0 %v3767
        %v3831 = vpop.xlane.xlu0 %3830
        %3832 = vadd.xlane.f32.xlu0 %v3769
        %v3833 = vpop.xlane.xlu0 %3832
        %3834 = vadd.xlane.f32.xlu0 %v3771
        %v3835 = vpop.xlane.xlu0 %3834
        %3836 = vadd.xlane.f32.xlu0 %v3773
        %v3837 = vpop.xlane.xlu0 %3836
        %3838 = vadd.xlane.f32.xlu0 %v3775
        %v3839 = vpop.xlane.xlu0 %3838
        %3840 = vadd.xlane.f32.xlu0 %v3777
        %v3841 = vpop.xlane.xlu0 %3840
        %3842 = vadd.xlane.f32.xlu0 %v3779
        %v3843 = vpop.xlane.xlu0 %3842
        %3844 = vadd.xlane.f32.xlu0 %v3781
        %v3845 = vpop.xlane.xlu0 %3844
        %3846 = vadd.xlane.f32.xlu0 %v3783
        %v3847 = vpop.xlane.xlu0 %3846
        %3848 = vadd.xlane.f32.xlu0 %v3785
        %v3849 = vpop.xlane.xlu0 %3848
        %3850 = vadd.xlane.f32.xlu0 %v3787
        %v3851 = vpop.xlane.xlu0 %3850
        %3852 = vadd.xlane.f32.xlu0 %v3789
        %v3853 = vpop.xlane.xlu0 %3852
        %3854 = vadd.xlane.f32.xlu0 %v3791
        %v3855 = vpop.xlane.xlu0 %3854
        %3856 = vadd.xlane.f32.xlu0 %v3793
        %v3857 = vpop.xlane.xlu0 %3856
        %3858 = vadd.xlane.f32.xlu0 %v3795
        %v3859 = vpop.xlane.xlu0 %3858
        %3860 = vadd.xlane.f32.xlu0 %v3797
        %v3861 = vpop.xlane.xlu0 %3860
        %3862 = vadd.xlane.f32.xlu0 %v3799
        %v3863 = vpop.xlane.xlu0 %3862
        %3864 = vadd.xlane.f32.xlu0 %v3801
        %v3865 = vpop.xlane.xlu0 %3864
        %3866 = vadd.xlane.f32.xlu0 %v3803
        %v3867 = vpop.xlane.xlu0 %3866
        %3868 = vadd.xlane.f32.xlu0 %v3805
        %v3869 = vpop.xlane.xlu0 %3868
        %3870 = vadd.xlane.f32.xlu0 %v3807
        %v3871 = vpop.xlane.xlu0 %3870
        %3872 = vadd.xlane.f32.xlu0 %v3809
        %v3873 = vpop.xlane.xlu0 %3872
        %3874 = vadd.xlane.f32.xlu0 %v3811
        %v3875 = vpop.xlane.xlu0 %3874
        %3876 = vadd.xlane.f32.xlu0 %v3813
        %v3877 = vpop.xlane.xlu0 %3876
        %v3878 = vrcp.pop %v3815
        %v3879 = vrcp.pop %v3817
        %v3880 = vrcp.pop %v3819
        %v3881 = vrcp.pop %v3821
        %v3882 = vrcp.pop %v3823
        %v3883 = vrcp.pop %v3825
        %v3884 = vrcp.pop %v3827
        %v3885 = vrcp.pop %v3829
        %v3886 = vrcp.pop %v3831
        %v3887 = vrcp.pop %v3833
        %v3888 = vrcp.pop %v3835
        %v3889 = vrcp.pop %v3837
        %v3890 = vrcp.pop %v3839
        %v3891 = vrcp.pop %v3841
        %v3892 = vrcp.pop %v3843
        %v3893 = vrcp.pop %v3845
        %v3894 = vrcp.pop %v3847
        %v3895 = vrcp.pop %v3849
        %v3896 = vrcp.pop %v3851
        %v3897 = vrcp.pop %v3853
        %v3898 = vrcp.pop %v3855
        %v3899 = vrcp.pop %v3857
        %v3900 = vrcp.pop %v3859
        %v3901 = vrcp.pop %v3861
        %v3902 = vrcp.pop %v3863
        %v3903 = vrcp.pop %v3865
        %v3904 = vrcp.pop %v3867
        %v3905 = vrcp.pop %v3869
        %v3906 = vrcp.pop %v3871
        %v3907 = vrcp.pop %v3873
        %v3908 = vrcp.pop %v3875
        %v3909 = vrcp.pop %v3877
        %v3910 = vmul.f32 %v3751, %v3878
        %v3911 = vmul.f32 %v3753, %v3879
        %v3912 = vmul.f32 %v3755, %v3880
        %v3913 = vmul.f32 %v3757, %v3881
        %v3914 = vmul.f32 %v3759, %v3882
        %v3915 = vmul.f32 %v3761, %v3883
        %v3916 = vmul.f32 %v3763, %v3884
        %v3917 = vmul.f32 %v3765, %v3885
        %v3918 = vmul.f32 %v3767, %v3886
        %v3919 = vmul.f32 %v3769, %v3887
        %v3920 = vmul.f32 %v3771, %v3888
        %v3921 = vmul.f32 %v3773, %v3889
        %v3922 = vmul.f32 %v3775, %v3890
        %v3923 = vmul.f32 %v3777, %v3891
        %v3924 = vmul.f32 %v3779, %v3892
        %v3925 = vmul.f32 %v3781, %v3893
        %v3926 = vmul.f32 %v3783, %v3894
        %v3927 = vmul.f32 %v3785, %v3895
        %v3928 = vmul.f32 %v3787, %v3896
        %v3929 = vmul.f32 %v3789, %v3897
        %v3930 = vmul.f32 %v3791, %v3898
        %v3931 = vmul.f32 %v3793, %v3899
        %v3932 = vmul.f32 %v3795, %v3900
        %v3933 = vmul.f32 %v3797, %v3901
        %v3934 = vmul.f32 %v3799, %v3902
        %v3935 = vmul.f32 %v3801, %v3903
        %v3936 = vmul.f32 %v3803, %v3904
        %v3937 = vmul.f32 %v3805, %v3905
        %v3938 = vmul.f32 %v3807, %v3906
        %v3939 = vmul.f32 %v3809, %v3907
        %v3940 = vmul.f32 %v3811, %v3908
        %v3941 = vmul.f32 %v3813, %v3909
        %v3942 = vpack.c.bf16 %v3911, %v3910
        %v3943 = vpack.c.bf16 %v3913, %v3912
        %v3944 = vpack.c.bf16 %v3915, %v3914
        %v3945 = vpack.c.bf16 %v3917, %v3916
        %v3946 = vpack.c.bf16 %v3919, %v3918
        %v3947 = vpack.c.bf16 %v3921, %v3920
        %v3948 = vpack.c.bf16 %v3923, %v3922
        %v3949 = vpack.c.bf16 %v3925, %v3924
        %v3950 = vpack.c.bf16 %v3927, %v3926
        %v3951 = vpack.c.bf16 %v3929, %v3928
        %v3952 = vpack.c.bf16 %v3931, %v3930
        %v3953 = vpack.c.bf16 %v3933, %v3932
        %v3954 = vpack.c.bf16 %v3935, %v3934
        %v3955 = vpack.c.bf16 %v3937, %v3936
        %v3956 = vpack.c.bf16 %v3939, %v3938
        %v3957 = vpack.c.bf16 %v3941, %v3940
        %3958 = vmatprep.subr.bf16.mxu0 0
        %3959 = vmatpush1.bf16.msra.mxu0 %v3368
        %3960 = vmatprep.subr.bf16.mxu0 0
        %3961 = vmatpush1.bf16.msra.mxu0 %v3374
        %3962 = vmatprep.subr.bf16.mxu0 0
        %3963 = vmatpush1.bf16.msra.mxu0 %v3380
        %3964 = vmatprep.subr.bf16.mxu0 0
        %3965 = vmatpush1.bf16.msra.mxu0 %v3386
        %3966 = vmatprep.subr.bf16.mxu0 0
        %3967 = vmatpush1.bf16.msra.mxu0 %v3392
        %3968 = vmatprep.subr.bf16.mxu0 0
        %3969 = vmatpush1.bf16.msra.mxu0 %v3398
        %3970 = vmatprep.subr.bf16.mxu0 0
        %3971 = vmatpush1.bf16.msra.mxu0 %v3404
        %3972 = vmatprep.subr.bf16.mxu0 0
        %3973 = vmatpush1.bf16.msra.mxu0 %v3410
        %3974 = vmatprep.subr.bf16.mxu0 0
        %3975 = vmatpush1.bf16.msra.mxu0 0
        %3976 = vmatprep.subr.bf16.mxu0 0
        %3977 = vmatpush1.bf16.msra.mxu0 0
        %3978 = vmatprep.subr.bf16.mxu0 0
        %3979 = vmatpush1.bf16.msra.mxu0 0
        %3980 = vmatprep.subr.bf16.mxu0 0
        %3981 = vmatpush1.bf16.msra.mxu0 0
        %3982 = vmatprep.subr.bf16.mxu0 0
        %3983 = vmatpush1.bf16.msra.mxu0 0
        %3984 = vmatprep.subr.bf16.mxu0 0
        %3985 = vmatpush1.bf16.msra.mxu0 0
        %3986 = vmatprep.subr.bf16.mxu0 0
        %3987 = vmatpush1.bf16.msra.mxu0 0
        %3988 = vmatprep.subr.bf16.mxu0 0
        %3989 = vmatpush1.bf16.msra.mxu0 0
        %3990 = vmatprep.mubr.bf16.mxu0 0
        %3991 = vmatmul.mubr.bf16.gmra.mrb[0].mxu0 %v3942
        %v3992 = vpop.f32.mrb[0].mxu0
        %v3993 = vadd.f32 0.0, %v3992
        %v3994 = vpop.f32.mrb[0].mxu0
        %v3995 = vpop.f32.mrb[0].mxu0
        %v3996 = vadd.f32 0.0, %v3995
        %v3997 = vpop.f32.mrb[0].mxu0
        %3998 = vmatprep.mubr.bf16.mxu0 0
        %3999 = vmatmul.mubr.bf16.gmra.mrb[0].mxu0 %v3943
        %v4000 = vpop.f32.mrb[0].mxu0
        %v4001 = vadd.f32 0.0, %v4000
        %v4002 = vpop.f32.mrb[0].mxu0
        %v4003 = vpop.f32.mrb[0].mxu0
        %v4004 = vadd.f32 0.0, %v4003
        %v4005 = vpop.f32.mrb[0].mxu0
        %4006 = vmatprep.mubr.bf16.mxu0 0
        %4007 = vmatmul.mubr.bf16.gmra.mrb[0].mxu0 %v3944
        %v4008 = vpop.f32.mrb[0].mxu0
        %v4009 = vadd.f32 0.0, %v4008
        %v4010 = vpop.f32.mrb[0].mxu0
        %v4011 = vpop.f32.mrb[0].mxu0
        %v4012 = vadd.f32 0.0, %v4011
        %v4013 = vpop.f32.mrb[0].mxu0
        %4014 = vmatprep.mubr.bf16.mxu0 0
        %4015 = vmatmul.mubr.bf16.gmra.mrb[0].mxu0 %v3945
        %v4016 = vpop.f32.mrb[0].mxu0
        %v4017 = vadd.f32 0.0, %v4016
        %v4018 = vpop.f32.mrb[0].mxu0
        %v4019 = vpop.f32.mrb[0].mxu0
        %v4020 = vadd.f32 0.0, %v4019
        %v4021 = vpop.f32.mrb[0].mxu0
        %4022 = vmatprep.mubr.bf16.mxu0 0
        %4023 = vmatmul.mubr.bf16.gmra.mrb[0].mxu0 %v3946
        %v4024 = vpop.f32.mrb[0].mxu0
        %v4025 = vadd.f32 0.0, %v4024
        %v4026 = vpop.f32.mrb[0].mxu0
        %v4027 = vpop.f32.mrb[0].mxu0
        %v4028 = vadd.f32 0.0, %v4027
        %v4029 = vpop.f32.mrb[0].mxu0
        %4030 = vmatprep.mubr.bf16.mxu0 0
        %4031 = vmatmul.mubr.bf16.gmra.mrb[0].mxu0 %v3947
        %v4032 = vpop.f32.mrb[0].mxu0
        %v4033 = vadd.f32 0.0, %v4032
        %v4034 = vpop.f32.mrb[0].mxu0
        %v4035 = vpop.f32.mrb[0].mxu0
        %v4036 = vadd.f32 0.0, %v4035
        %v4037 = vpop.f32.mrb[0].mxu0
        %4038 = vmatprep.mubr.bf16.mxu0 0
        %4039 = vmatmul.mubr.bf16.gmra.mrb[0].mxu0 %v3948
        %v4040 = vpop.f32.mrb[0].mxu0
        %v4041 = vadd.f32 0.0, %v4040
        %v4042 = vpop.f32.mrb[0].mxu0
        %v4043 = vpop.f32.mrb[0].mxu0
        %v4044 = vadd.f32 0.0, %v4043
        %v4045 = vpop.f32.mrb[0].mxu0
        %4046 = vmatprep.mubr.bf16.mxu0 0
        %4047 = vmatmul.mubr.bf16.gmra.mrb[0].mxu0 %v3949
        %v4048 = vpop.f32.mrb[0].mxu0
        %v4049 = vadd.f32 0.0, %v4048
        %v4050 = vpop.f32.mrb[0].mxu0
        %v4051 = vpop.f32.mrb[0].mxu0
        %v4052 = vadd.f32 0.0, %v4051
        %v4053 = vpop.f32.mrb[0].mxu0
        %4054 = vdwg.mxu0
        %4055 = vmatprep.subr.bf16.mxu0 0
        %4056 = vmatpush1.bf16.msra.mxu0 %v3416
        %4057 = vmatprep.subr.bf16.mxu0 0
        %4058 = vmatpush1.bf16.msra.mxu0 %v3422
        %4059 = vmatprep.subr.bf16.mxu0 0
        %4060 = vmatpush1.bf16.msra.mxu0 %v3428
        %4061 = vmatprep.subr.bf16.mxu0 0
        %4062 = vmatpush1.bf16.msra.mxu0 %v3434
        %4063 = vmatprep.subr.bf16.mxu0 0
        %4064 = vmatpush1.bf16.msra.mxu0 %v3440
        %4065 = vmatprep.subr.bf16.mxu0 0
        %4066 = vmatpush1.bf16.msra.mxu0 %v3446
        %4067 = vmatprep.subr.bf16.mxu0 0
        %4068 = vmatpush1.bf16.msra.mxu0 %v3452
        %4069 = vmatprep.subr.bf16.mxu0 0
        %4070 = vmatpush1.bf16.msra.mxu0 %v3458
        %4071 = vmatprep.subr.bf16.mxu0 0
        %4072 = vmatpush1.bf16.msra.mxu0 0
        %4073 = vmatprep.subr.bf16.mxu0 0
        %4074 = vmatpush1.bf16.msra.mxu0 0
        %4075 = vmatprep.subr.bf16.mxu0 0
        %4076 = vmatpush1.bf16.msra.mxu0 0
        %4077 = vmatprep.subr.bf16.mxu0 0
        %4078 = vmatpush1.bf16.msra.mxu0 0
        %4079 = vmatprep.subr.bf16.mxu0 0
        %4080 = vmatpush1.bf16.msra.mxu0 0
        %4081 = vmatprep.subr.bf16.mxu0 0
        %4082 = vmatpush1.bf16.msra.mxu0 0
        %4083 = vmatprep.subr.bf16.mxu0 0
        %4084 = vmatpush1.bf16.msra.mxu0 0
        %4085 = vmatprep.subr.bf16.mxu0 0
        %4086 = vmatpush1.bf16.msra.mxu0 0
        %4087 = vmatprep.mubr.bf16.mxu0 0
        %4088 = vmatmul.mubr.bf16.gmra.mrb[0].mxu0 %v3950
        %v4089 = vpop.f32.mrb[0].mxu0
        %v4090 = vadd.f32 0.0, %v4089
        %v4091 = vpop.f32.mrb[0].mxu0
        %v4092 = vpop.f32.mrb[0].mxu0
        %v4093 = vadd.f32 0.0, %v4092
        %v4094 = vpop.f32.mrb[0].mxu0
        %4095 = vmatprep.mubr.bf16.mxu0 0
        %4096 = vmatmul.mubr.bf16.gmra.mrb[0].mxu0 %v3951
        %v4097 = vpop.f32.mrb[0].mxu0
        %v4098 = vadd.f32 0.0, %v4097
        %v4099 = vpop.f32.mrb[0].mxu0
        %v4100 = vpop.f32.mrb[0].mxu0
        %v4101 = vadd.f32 0.0, %v4100
        %v4102 = vpop.f32.mrb[0].mxu0
        %4103 = vmatprep.mubr.bf16.mxu0 0
        %4104 = vmatmul.mubr.bf16.gmra.mrb[0].mxu0 %v3952
        %v4105 = vpop.f32.mrb[0].mxu0
        %v4106 = vadd.f32 0.0, %v4105
        %v4107 = vpop.f32.mrb[0].mxu0
        %v4108 = vpop.f32.mrb[0].mxu0
        %v4109 = vadd.f32 0.0, %v4108
        %v4110 = vpop.f32.mrb[0].mxu0
        %4111 = vmatprep.mubr.bf16.mxu0 0
        %4112 = vmatmul.mubr.bf16.gmra.mrb[0].mxu0 %v3953
        %v4113 = vpop.f32.mrb[0].mxu0
        %v4114 = vadd.f32 0.0, %v4113
        %v4115 = vpop.f32.mrb[0].mxu0
        %v4116 = vpop.f32.mrb[0].mxu0
        %v4117 = vadd.f32 0.0, %v4116
        %v4118 = vpop.f32.mrb[0].mxu0
        %4119 = vmatprep.mubr.bf16.mxu0 0
        %4120 = vmatmul.mubr.bf16.gmra.mrb[0].mxu0 %v3954
        %v4121 = vpop.f32.mrb[0].mxu0
        %v4122 = vadd.f32 0.0, %v4121
        %v4123 = vpop.f32.mrb[0].mxu0
        %v4124 = vpop.f32.mrb[0].mxu0
        %v4125 = vadd.f32 0.0, %v4124
        %v4126 = vpop.f32.mrb[0].mxu0
        %4127 = vmatprep.mubr.bf16.mxu0 0
        %4128 = vmatmul.mubr.bf16.gmra.mrb[0].mxu0 %v3955
        %v4129 = vpop.f32.mrb[0].mxu0
        %v4130 = vadd.f32 0.0, %v4129
        %v4131 = vpop.f32.mrb[0].mxu0
        %v4132 = vpop.f32.mrb[0].mxu0
        %v4133 = vadd.f32 0.0, %v4132
        %v4134 = vpop.f32.mrb[0].mxu0
        %4135 = vmatprep.mubr.bf16.mxu0 0
        %4136 = vmatmul.mubr.bf16.gmra.mrb[0].mxu0 %v3956
        %v4137 = vpop.f32.mrb[0].mxu0
        %v4138 = vadd.f32 0.0, %v4137
        %v4139 = vpop.f32.mrb[0].mxu0
        %v4140 = vpop.f32.mrb[0].mxu0
        %v4141 = vadd.f32 0.0, %v4140
        %v4142 = vpop.f32.mrb[0].mxu0
        %4143 = vmatprep.mubr.bf16.mxu0 0
        %4144 = vmatmul.mubr.bf16.gmra.mrb[0].mxu0 %v3957
        %v4145 = vpop.f32.mrb[0].mxu0
        %v4146 = vadd.f32 0.0, %v4145
        %v4147 = vpop.f32.mrb[0].mxu0
        %v4148 = vpop.f32.mrb[0].mxu0
        %v4149 = vadd.f32 0.0, %v4148
        %v4150 = vpop.f32.mrb[0].mxu0
        %4151 = vdwg.mxu0
        %4152 = vmatprep.subr.bf16.mxu0 0
        %4153 = vmatpush1.bf16.xpose.msra.mxu0 %v3367
        %4154 = vmatprep.subr.bf16.mxu0 0
        %4155 = vmatpush1.bf16.xpose.msra.mxu0 %v3373
        %4156 = vmatprep.subr.bf16.mxu0 0
        %4157 = vmatpush1.bf16.xpose.msra.mxu0 %v3379
        %4158 = vmatprep.subr.bf16.mxu0 0
        %4159 = vmatpush1.bf16.xpose.msra.mxu0 %v3385
        %4160 = vmatprep.subr.bf16.mxu0 0
        %4161 = vmatpush1.bf16.xpose.msra.mxu0 %v3391
        %4162 = vmatprep.subr.bf16.mxu0 0
        %4163 = vmatpush1.bf16.xpose.msra.mxu0 %v3397
        %4164 = vmatprep.subr.bf16.mxu0 0
        %4165 = vmatpush1.bf16.xpose.msra.mxu0 %v3403
        %4166 = vmatprep.subr.bf16.mxu0 0
        %4167 = vmatpush1.bf16.xpose.msra.mxu0 %v3409
        %4168 = vmatprep.subr.bf16.mxu0 0
        %4169 = vmatpush1.bf16.xpose.msra.mxu0 0
        %4170 = vmatprep.subr.bf16.mxu0 0
        %4171 = vmatpush1.bf16.xpose.msra.mxu0 0
        %4172 = vmatprep.subr.bf16.mxu0 0
        %4173 = vmatpush1.bf16.xpose.msra.mxu0 0
        %4174 = vmatprep.subr.bf16.mxu0 0
        %4175 = vmatpush1.bf16.xpose.msra.mxu0 0
        %4176 = vmatprep.subr.bf16.mxu0 0
        %4177 = vmatpush1.bf16.xpose.msra.mxu0 0
        %4178 = vmatprep.subr.bf16.mxu0 0
        %4179 = vmatpush1.bf16.xpose.msra.mxu0 0
        %4180 = vmatprep.subr.bf16.mxu0 0
        %4181 = vmatpush1.bf16.xpose.msra.mxu0 0
        %4182 = vmatprep.subr.bf16.mxu0 0
        %4183 = vmatpush1.bf16.xpose.msra.mxu0 0
        %4184 = vmatprep.mubr.bf16.mxu0 0
        %4185 = vmatmul.mubr.bf16.gmra.mrb[0].mxu0 %v3365
        %v4186 = vpop.f32.mrb[0].mxu0
        %v4187 = vadd.f32 0.0, %v4186
        %v4188 = vpop.f32.mrb[0].mxu0
        %v4189 = vpop.f32.mrb[0].mxu0
        %v4190 = vadd.f32 0.0, %v4189
        %v4191 = vpop.f32.mrb[0].mxu0
        %4192 = vmatprep.mubr.bf16.mxu0 0
        %4193 = vmatmul.mubr.bf16.gmra.mrb[0].mxu0 %v3371
        %v4194 = vpop.f32.mrb[0].mxu0
        %v4195 = vadd.f32 0.0, %v4194
        %v4196 = vpop.f32.mrb[0].mxu0
        %v4197 = vpop.f32.mrb[0].mxu0
        %v4198 = vadd.f32 0.0, %v4197
        %v4199 = vpop.f32.mrb[0].mxu0
        %4200 = vmatprep.mubr.bf16.mxu0 0
        %4201 = vmatmul.mubr.bf16.gmra.mrb[0].mxu0 %v3377
        %v4202 = vpop.f32.mrb[0].mxu0
        %v4203 = vadd.f32 0.0, %v4202
        %v4204 = vpop.f32.mrb[0].mxu0
        %v4205 = vpop.f32.mrb[0].mxu0
        %v4206 = vadd.f32 0.0, %v4205
        %v4207 = vpop.f32.mrb[0].mxu0
        %4208 = vmatprep.mubr.bf16.mxu0 0
        %4209 = vmatmul.mubr.bf16.gmra.mrb[0].mxu0 %v3383
        %v4210 = vpop.f32.mrb[0].mxu0
        %v4211 = vadd.f32 0.0, %v4210
        %v4212 = vpop.f32.mrb[0].mxu0
        %v4213 = vpop.f32.mrb[0].mxu0
        %v4214 = vadd.f32 0.0, %v4213
        %v4215 = vpop.f32.mrb[0].mxu0
        %4216 = vmatprep.mubr.bf16.mxu0 0
        %4217 = vmatmul.mubr.bf16.gmra.mrb[0].mxu0 %v3389
        %v4218 = vpop.f32.mrb[0].mxu0
        %v4219 = vadd.f32 0.0, %v4218
        %v4220 = vpop.f32.mrb[0].mxu0
        %v4221 = vpop.f32.mrb[0].mxu0
        %v4222 = vadd.f32 0.0, %v4221
        %v4223 = vpop.f32.mrb[0].mxu0
        %4224 = vmatprep.mubr.bf16.mxu0 0
        %4225 = vmatmul.mubr.bf16.gmra.mrb[0].mxu0 %v3395
        %v4226 = vpop.f32.mrb[0].mxu0
        %v4227 = vadd.f32 0.0, %v4226
        %v4228 = vpop.f32.mrb[0].mxu0
        %v4229 = vpop.f32.mrb[0].mxu0
        %v4230 = vadd.f32 0.0, %v4229
        %v4231 = vpop.f32.mrb[0].mxu0
        %4232 = vmatprep.mubr.bf16.mxu0 0
        %4233 = vmatmul.mubr.bf16.gmra.mrb[0].mxu0 %v3401
        %v4234 = vpop.f32.mrb[0].mxu0
        %v4235 = vadd.f32 0.0, %v4234
        %v4236 = vpop.f32.mrb[0].mxu0
        %v4237 = vpop.f32.mrb[0].mxu0
        %v4238 = vadd.f32 0.0, %v4237
        %v4239 = vpop.f32.mrb[0].mxu0
        %4240 = vmatprep.mubr.bf16.mxu0 0
        %4241 = vmatmul.mubr.bf16.gmra.mrb[0].mxu0 %v3407
        %v4242 = vpop.f32.mrb[0].mxu0
        %v4243 = vadd.f32 0.0, %v4242
        %v4244 = vpop.f32.mrb[0].mxu0
        %v4245 = vpop.f32.mrb[0].mxu0
        %v4246 = vadd.f32 0.0, %v4245
        %v4247 = vpop.f32.mrb[0].mxu0
        %4248 = vdwg.mxu0
        %4249 = vmatprep.subr.bf16.mxu0 0
        %4250 = vmatpush1.bf16.xpose.msra.mxu0 %v3415
        %4251 = vmatprep.subr.bf16.mxu0 0
        %4252 = vmatpush1.bf16.xpose.msra.mxu0 %v3421
        %4253 = vmatprep.subr.bf16.mxu0 0
        %4254 = vmatpush1.bf16.xpose.msra.mxu0 %v3427
        %4255 = vmatprep.subr.bf16.mxu0 0
        %4256 = vmatpush1.bf16.xpose.msra.mxu0 %v3433
        %4257 = vmatprep.subr.bf16.mxu0 0
        %4258 = vmatpush1.bf16.xpose.msra.mxu0 %v3439
        %4259 = vmatprep.subr.bf16.mxu0 0
        %4260 = vmatpush1.bf16.xpose.msra.mxu0 %v3445
        %4261 = vmatprep.subr.bf16.mxu0 0
        %4262 = vmatpush1.bf16.xpose.msra.mxu0 %v3451
        %4263 = vmatprep.subr.bf16.mxu0 0
        %4264 = vmatpush1.bf16.xpose.msra.mxu0 %v3457
        %4265 = vmatprep.subr.bf16.mxu0 0
        %4266 = vmatpush1.bf16.xpose.msra.mxu0 0
        %4267 = vmatprep.subr.bf16.mxu0 0
        %4268 = vmatpush1.bf16.xpose.msra.mxu0 0
        %4269 = vmatprep.subr.bf16.mxu0 0
        %4270 = vmatpush1.bf16.xpose.msra.mxu0 0
        %4271 = vmatprep.subr.bf16.mxu0 0
        %4272 = vmatpush1.bf16.xpose.msra.mxu0 0
        %4273 = vmatprep.subr.bf16.mxu0 0
        %4274 = vmatpush1.bf16.xpose.msra.mxu0 0
        %4275 = vmatprep.subr.bf16.mxu0 0
        %4276 = vmatpush1.bf16.xpose.msra.mxu0 0
        %4277 = vmatprep.subr.bf16.mxu0 0
        %4278 = vmatpush1.bf16.xpose.msra.mxu0 0
        %4279 = vmatprep.subr.bf16.mxu0 0
        %4280 = vmatpush1.bf16.xpose.msra.mxu0 0
        %4281 = vmatprep.mubr.bf16.mxu0 0
        %4282 = vmatmul.mubr.bf16.gmra.mrb[0].mxu0 %v3413
        %v4283 = vpop.f32.mrb[0].mxu0
        %v4284 = vadd.f32 0.0, %v4283
        %v4285 = vpop.f32.mrb[0].mxu0
        %v4286 = vpop.f32.mrb[0].mxu0
        %v4287 = vadd.f32 0.0, %v4286
        %v4288 = vpop.f32.mrb[0].mxu0
        %4289 = vmatprep.mubr.bf16.mxu0 0
        %4290 = vmatmul.mubr.bf16.gmra.mrb[0].mxu0 %v3419
        %v4291 = vpop.f32.mrb[0].mxu0
        %v4292 = vadd.f32 0.0, %v4291
        %v4293 = vpop.f32.mrb[0].mxu0
        %v4294 = vpop.f32.mrb[0].mxu0
        %v4295 = vadd.f32 0.0, %v4294
        %v4296 = vpop.f32.mrb[0].mxu0
        %4297 = vmatprep.mubr.bf16.mxu0 0
        %4298 = vmatmul.mubr.bf16.gmra.mrb[0].mxu0 %v3425
        %v4299 = vpop.f32.mrb[0].mxu0
        %v4300 = vadd.f32 0.0, %v4299
        %v4301 = vpop.f32.mrb[0].mxu0
        %v4302 = vpop.f32.mrb[0].mxu0
        %v4303 = vadd.f32 0.0, %v4302
        %v4304 = vpop.f32.mrb[0].mxu0
        %4305 = vmatprep.mubr.bf16.mxu0 0
        %4306 = vmatmul.mubr.bf16.gmra.mrb[0].mxu0 %v3431
        %v4307 = vpop.f32.mrb[0].mxu0
        %v4308 = vadd.f32 0.0, %v4307
        %v4309 = vpop.f32.mrb[0].mxu0
        %v4310 = vpop.f32.mrb[0].mxu0
        %v4311 = vadd.f32 0.0, %v4310
        %v4312 = vpop.f32.mrb[0].mxu0
        %4313 = vmatprep.mubr.bf16.mxu0 0
        %4314 = vmatmul.mubr.bf16.gmra.mrb[0].mxu0 %v3437
        %v4315 = vpop.f32.mrb[0].mxu0
        %v4316 = vadd.f32 0.0, %v4315
        %v4317 = vpop.f32.mrb[0].mxu0
        %v4318 = vpop.f32.mrb[0].mxu0
        %v4319 = vadd.f32 0.0, %v4318
        %v4320 = vpop.f32.mrb[0].mxu0
        %4321 = vmatprep.mubr.bf16.mxu0 0
        %4322 = vmatmul.mubr.bf16.gmra.mrb[0].mxu0 %v3443
        %v4323 = vpop.f32.mrb[0].mxu0
        %v4324 = vadd.f32 0.0, %v4323
        %v4325 = vpop.f32.mrb[0].mxu0
        %v4326 = vpop.f32.mrb[0].mxu0
        %v4327 = vadd.f32 0.0, %v4326
        %v4328 = vpop.f32.mrb[0].mxu0
        %4329 = vmatprep.mubr.bf16.mxu0 0
        %4330 = vmatmul.mubr.bf16.gmra.mrb[0].mxu0 %v3449
        %v4331 = vpop.f32.mrb[0].mxu0
        %v4332 = vadd.f32 0.0, %v4331
        %v4333 = vpop.f32.mrb[0].mxu0
        %v4334 = vpop.f32.mrb[0].mxu0
        %v4335 = vadd.f32 0.0, %v4334
        %v4336 = vpop.f32.mrb[0].mxu0
        %4337 = vmatprep.mubr.bf16.mxu0 0
        %4338 = vmatmul.mubr.bf16.gmra.mrb[0].mxu0 %v3455
        %v4339 = vpop.f32.mrb[0].mxu0
        %v4340 = vadd.f32 0.0, %v4339
        %v4341 = vpop.f32.mrb[0].mxu0
        %v4342 = vpop.f32.mrb[0].mxu0
        %v4343 = vadd.f32 0.0, %v4342
        %v4344 = vpop.f32.mrb[0].mxu0
        %4345 = vdwg.mxu0
        %4346 = vmax.xlane.f32.xlu0 %v4187
        %v4347 = vpop.xlane.xlu0 %4346
        %4348 = vmax.xlane.f32.xlu0 %v4190
        %v4349 = vpop.xlane.xlu0 %4348
        %4350 = vmax.xlane.f32.xlu0 %v4195
        %v4351 = vpop.xlane.xlu0 %4350
        %4352 = vmax.xlane.f32.xlu0 %v4198
        %v4353 = vpop.xlane.xlu0 %4352
        %4354 = vmax.xlane.f32.xlu0 %v4203
        %v4355 = vpop.xlane.xlu0 %4354
        %4356 = vmax.xlane.f32.xlu0 %v4206
        %v4357 = vpop.xlane.xlu0 %4356
        %4358 = vmax.xlane.f32.xlu0 %v4211
        %v4359 = vpop.xlane.xlu0 %4358
        %4360 = vmax.xlane.f32.xlu0 %v4214
        %v4361 = vpop.xlane.xlu0 %4360
        %4362 = vmax.xlane.f32.xlu0 %v4219
        %v4363 = vpop.xlane.xlu0 %4362
        %4364 = vmax.xlane.f32.xlu0 %v4222
        %v4365 = vpop.xlane.xlu0 %4364
        %4366 = vmax.xlane.f32.xlu0 %v4227
        %v4367 = vpop.xlane.xlu0 %4366
        %4368 = vmax.xlane.f32.xlu0 %v4230
        %v4369 = vpop.xlane.xlu0 %4368
        %4370 = vmax.xlane.f32.xlu0 %v4235
        %v4371 = vpop.xlane.xlu0 %4370
        %4372 = vmax.xlane.f32.xlu0 %v4238
        %v4373 = vpop.xlane.xlu0 %4372
        %4374 = vmax.xlane.f32.xlu0 %v4243
        %v4375 = vpop.xlane.xlu0 %4374
        %4376 = vmax.xlane.f32.xlu0 %v4246
        %v4377 = vpop.xlane.xlu0 %4376
        %4378 = vmax.xlane.f32.xlu0 %v4284
        %v4379 = vpop.xlane.xlu0 %4378
        %4380 = vmax.xlane.f32.xlu0 %v4287
        %v4381 = vpop.xlane.xlu0 %4380
        %4382 = vmax.xlane.f32.xlu0 %v4292
        %v4383 = vpop.xlane.xlu0 %4382
        %4384 = vmax.xlane.f32.xlu0 %v4295
        %v4385 = vpop.xlane.xlu0 %4384
        %4386 = vmax.xlane.f32.xlu0 %v4300
        %v4387 = vpop.xlane.xlu0 %4386
        %4388 = vmax.xlane.f32.xlu0 %v4303
        %v4389 = vpop.xlane.xlu0 %4388
        %4390 = vmax.xlane.f32.xlu0 %v4308
        %v4391 = vpop.xlane.xlu0 %4390
        %4392 = vmax.xlane.f32.xlu0 %v4311
        %v4393 = vpop.xlane.xlu0 %4392
        %4394 = vmax.xlane.f32.xlu0 %v4316
        %v4395 = vpop.xlane.xlu0 %4394
        %4396 = vmax.xlane.f32.xlu0 %v4319
        %v4397 = vpop.xlane.xlu0 %4396
        %4398 = vmax.xlane.f32.xlu0 %v4324
        %v4399 = vpop.xlane.xlu0 %4398
        %4400 = vmax.xlane.f32.xlu0 %v4327
        %v4401 = vpop.xlane.xlu0 %4400
        %4402 = vmax.xlane.f32.xlu0 %v4332
        %v4403 = vpop.xlane.xlu0 %4402
        %4404 = vmax.xlane.f32.xlu0 %v4335
        %v4405 = vpop.xlane.xlu0 %4404
        %4406 = vmax.xlane.f32.xlu0 %v4340
        %v4407 = vpop.xlane.xlu0 %4406
        %4408 = vmax.xlane.f32.xlu0 %v4343
        %v4409 = vpop.xlane.xlu0 %4408
        %v4410 = vsub.f32 %v4187, %v4347
        %v4411 = vsub.f32 %v4190, %v4349
        %v4412 = vsub.f32 %v4195, %v4351
        %v4413 = vsub.f32 %v4198, %v4353
        %v4414 = vsub.f32 %v4203, %v4355
        %v4415 = vsub.f32 %v4206, %v4357
        %v4416 = vsub.f32 %v4211, %v4359
        %v4417 = vsub.f32 %v4214, %v4361
        %v4418 = vsub.f32 %v4219, %v4363
        %v4419 = vsub.f32 %v4222, %v4365
        %v4420 = vsub.f32 %v4227, %v4367
        %v4421 = vsub.f32 %v4230, %v4369
        %v4422 = vsub.f32 %v4235, %v4371
        %v4423 = vsub.f32 %v4238, %v4373
        %v4424 = vsub.f32 %v4243, %v4375
        %v4425 = vsub.f32 %v4246, %v4377
        %v4426 = vsub.f32 %v4284, %v4379
        %v4427 = vsub.f32 %v4287, %v4381
        %v4428 = vsub.f32 %v4292, %v4383
        %v4429 = vsub.f32 %v4295, %v4385
        %v4430 = vsub.f32 %v4300, %v4387
        %v4431 = vsub.f32 %v4303, %v4389
        %v4432 = vsub.f32 %v4308, %v4391
        %v4433 = vsub.f32 %v4311, %v4393
        %v4434 = vsub.f32 %v4316, %v4395
        %v4435 = vsub.f32 %v4319, %v4397
        %v4436 = vsub.f32 %v4324, %v4399
        %v4437 = vsub.f32 %v4327, %v4401
        %v4438 = vsub.f32 %v4332, %v4403
        %v4439 = vsub.f32 %v4335, %v4405
        %v4440 = vsub.f32 %v4340, %v4407
        %v4441 = vsub.f32 %v4343, %v4409
        %v4442 = vmul.f32 %v4410, 1.442695
        %v4443 = vpow.pop %v4442
        %v4444 = vmul.f32 %v4411, 1.442695
        %v4445 = vpow.pop %v4444
        %v4446 = vmul.f32 %v4412, 1.442695
        %v4447 = vpow.pop %v4446
        %v4448 = vmul.f32 %v4413, 1.442695
        %v4449 = vpow.pop %v4448
        %v4450 = vmul.f32 %v4414, 1.442695
        %v4451 = vpow.pop %v4450
        %v4452 = vmul.f32 %v4415, 1.442695
        %v4453 = vpow.pop %v4452
        %v4454 = vmul.f32 %v4416, 1.442695
        %v4455 = vpow.pop %v4454
        %v4456 = vmul.f32 %v4417, 1.442695
        %v4457 = vpow.pop %v4456
        %v4458 = vmul.f32 %v4418, 1.442695
        %v4459 = vpow.pop %v4458
        %v4460 = vmul.f32 %v4419, 1.442695
        %v4461 = vpow.pop %v4460
        %v4462 = vmul.f32 %v4420, 1.442695
        %v4463 = vpow.pop %v4462
        %v4464 = vmul.f32 %v4421, 1.442695
        %v4465 = vpow.pop %v4464
        %v4466 = vmul.f32 %v4422, 1.442695
        %v4467 = vpow.pop %v4466
        %v4468 = vmul.f32 %v4423, 1.442695
        %v4469 = vpow.pop %v4468
        %v4470 = vmul.f32 %v4424, 1.442695
        %v4471 = vpow.pop %v4470
        %v4472 = vmul.f32 %v4425, 1.442695
        %v4473 = vpow.pop %v4472
        %v4474 = vmul.f32 %v4426, 1.442695
        %v4475 = vpow.pop %v4474
        %v4476 = vmul.f32 %v4427, 1.442695
        %v4477 = vpow.pop %v4476
        %v4478 = vmul.f32 %v4428, 1.442695
        %v4479 = vpow.pop %v4478
        %v4480 = vmul.f32 %v4429, 1.442695
        %v4481 = vpow.pop %v4480
        %v4482 = vmul.f32 %v4430, 1.442695
        %v4483 = vpow.pop %v4482
        %v4484 = vmul.f32 %v4431, 1.442695
        %v4485 = vpow.pop %v4484
        %v4486 = vmul.f32 %v4432, 1.442695
        %v4487 = vpow.pop %v4486
        %v4488 = vmul.f32 %v4433, 1.442695
        %v4489 = vpow.pop %v4488
        %v4490 = vmul.f32 %v4434, 1.442695
        %v4491 = vpow.pop %v4490
        %v4492 = vmul.f32 %v4435, 1.442695
        %v4493 = vpow.pop %v4492
        %v4494 = vmul.f32 %v4436, 1.442695
        %v4495 = vpow.pop %v4494
        %v4496 = vmul.f32 %v4437, 1.442695
        %v4497 = vpow.pop %v4496
        %v4498 = vmul.f32 %v4438, 1.442695
        %v4499 = vpow.pop %v4498
        %v4500 = vmul.f32 %v4439, 1.442695
        %v4501 = vpow.pop %v4500
        %v4502 = vmul.f32 %v4440, 1.442695
        %v4503 = vpow.pop %v4502
        %v4504 = vmul.f32 %v4441, 1.442695
        %v4505 = vpow.pop %v4504
        %4506 = vadd.xlane.f32.xlu0 %v4443
        %v4507 = vpop.xlane.xlu0 %4506
        %4508 = vadd.xlane.f32.xlu0 %v4445
        %v4509 = vpop.xlane.xlu0 %4508
        %4510 = vadd.xlane.f32.xlu0 %v4447
        %v4511 = vpop.xlane.xlu0 %4510
        %4512 = vadd.xlane.f32.xlu0 %v4449
        %v4513 = vpop.xlane.xlu0 %4512
        %4514 = vadd.xlane.f32.xlu0 %v4451
        %v4515 = vpop.xlane.xlu0 %4514
        %4516 = vadd.xlane.f32.xlu0 %v4453
        %v4517 = vpop.xlane.xlu0 %4516
        %4518 = vadd.xlane.f32.xlu0 %v4455
        %v4519 = vpop.xlane.xlu0 %4518
        %4520 = vadd.xlane.f32.xlu0 %v4457
        %v4521 = vpop.xlane.xlu0 %4520
        %4522 = vadd.xlane.f32.xlu0 %v4459
        %v4523 = vpop.xlane.xlu0 %4522
        %4524 = vadd.xlane.f32.xlu0 %v4461
        %v4525 = vpop.xlane.xlu0 %4524
        %4526 = vadd.xlane.f32.xlu0 %v4463
        %v4527 = vpop.xlane.xlu0 %4526
        %4528 = vadd.xlane.f32.xlu0 %v4465
        %v4529 = vpop.xlane.xlu0 %4528
        %4530 = vadd.xlane.f32.xlu0 %v4467
        %v4531 = vpop.xlane.xlu0 %4530
        %4532 = vadd.xlane.f32.xlu0 %v4469
        %v4533 = vpop.xlane.xlu0 %4532
        %4534 = vadd.xlane.f32.xlu0 %v4471
        %v4535 = vpop.xlane.xlu0 %4534
        %4536 = vadd.xlane.f32.xlu0 %v4473
        %v4537 = vpop.xlane.xlu0 %4536
        %4538 = vadd.xlane.f32.xlu0 %v4475
        %v4539 = vpop.xlane.xlu0 %4538
        %4540 = vadd.xlane.f32.xlu0 %v4477
        %v4541 = vpop.xlane.xlu0 %4540
        %4542 = vadd.xlane.f32.xlu0 %v4479
        %v4543 = vpop.xlane.xlu0 %4542
        %4544 = vadd.xlane.f32.xlu0 %v4481
        %v4545 = vpop.xlane.xlu0 %4544
        %4546 = vadd.xlane.f32.xlu0 %v4483
        %v4547 = vpop.xlane.xlu0 %4546
        %4548 = vadd.xlane.f32.xlu0 %v4485
        %v4549 = vpop.xlane.xlu0 %4548
        %4550 = vadd.xlane.f32.xlu0 %v4487
        %v4551 = vpop.xlane.xlu0 %4550
        %4552 = vadd.xlane.f32.xlu0 %v4489
        %v4553 = vpop.xlane.xlu0 %4552
        %4554 = vadd.xlane.f32.xlu0 %v4491
        %v4555 = vpop.xlane.xlu0 %4554
        %4556 = vadd.xlane.f32.xlu0 %v4493
        %v4557 = vpop.xlane.xlu0 %4556
        %4558 = vadd.xlane.f32.xlu0 %v4495
        %v4559 = vpop.xlane.xlu0 %4558
        %4560 = vadd.xlane.f32.xlu0 %v4497
        %v4561 = vpop.xlane.xlu0 %4560
        %4562 = vadd.xlane.f32.xlu0 %v4499
        %v4563 = vpop.xlane.xlu0 %4562
        %4564 = vadd.xlane.f32.xlu0 %v4501
        %v4565 = vpop.xlane.xlu0 %4564
        %4566 = vadd.xlane.f32.xlu0 %v4503
        %v4567 = vpop.xlane.xlu0 %4566
        %4568 = vadd.xlane.f32.xlu0 %v4505
        %v4569 = vpop.xlane.xlu0 %4568
        %v4570 = vrcp.pop %v4507
        %v4571 = vrcp.pop %v4509
        %v4572 = vrcp.pop %v4511
        %v4573 = vrcp.pop %v4513
        %v4574 = vrcp.pop %v4515
        %v4575 = vrcp.pop %v4517
        %v4576 = vrcp.pop %v4519
        %v4577 = vrcp.pop %v4521
        %v4578 = vrcp.pop %v4523
        %v4579 = vrcp.pop %v4525
        %v4580 = vrcp.pop %v4527
        %v4581 = vrcp.pop %v4529
        %v4582 = vrcp.pop %v4531
        %v4583 = vrcp.pop %v4533
        %v4584 = vrcp.pop %v4535
        %v4585 = vrcp.pop %v4537
        %v4586 = vrcp.pop %v4539
        %v4587 = vrcp.pop %v4541
        %v4588 = vrcp.pop %v4543
        %v4589 = vrcp.pop %v4545
        %v4590 = vrcp.pop %v4547
        %v4591 = vrcp.pop %v4549
        %v4592 = vrcp.pop %v4551
        %v4593 = vrcp.pop %v4553
        %v4594 = vrcp.pop %v4555
        %v4595 = vrcp.pop %v4557
        %v4596 = vrcp.pop %v4559
        %v4597 = vrcp.pop %v4561
        %v4598 = vrcp.pop %v4563
        %v4599 = vrcp.pop %v4565
        %v4600 = vrcp.pop %v4567
        %v4601 = vrcp.pop %v4569
        %v4602 = vmul.f32 %v4443, %v4570
        %v4603 = vmul.f32 %v4445, %v4571
        %v4604 = vmul.f32 %v4447, %v4572
        %v4605 = vmul.f32 %v4449, %v4573
        %v4606 = vmul.f32 %v4451, %v4574
        %v4607 = vmul.f32 %v4453, %v4575
        %v4608 = vmul.f32 %v4455, %v4576
        %v4609 = vmul.f32 %v4457, %v4577
        %v4610 = vmul.f32 %v4459, %v4578
        %v4611 = vmul.f32 %v4461, %v4579
        %v4612 = vmul.f32 %v4463, %v4580
        %v4613 = vmul.f32 %v4465, %v4581
        %v4614 = vmul.f32 %v4467, %v4582
        %v4615 = vmul.f32 %v4469, %v4583
        %v4616 = vmul.f32 %v4471, %v4584
        %v4617 = vmul.f32 %v4473, %v4585
        %v4618 = vmul.f32 %v4475, %v4586
        %v4619 = vmul.f32 %v4477, %v4587
        %v4620 = vmul.f32 %v4479, %v4588
        %v4621 = vmul.f32 %v4481, %v4589
        %v4622 = vmul.f32 %v4483, %v4590
        %v4623 = vmul.f32 %v4485, %v4591
        %v4624 = vmul.f32 %v4487, %v4592
        %v4625 = vmul.f32 %v4489, %v4593
        %v4626 = vmul.f32 %v4491, %v4594
        %v4627 = vmul.f32 %v4493, %v4595
        %v4628 = vmul.f32 %v4495, %v4596
        %v4629 = vmul.f32 %v4497, %v4597
        %v4630 = vmul.f32 %v4499, %v4598
        %v4631 = vmul.f32 %v4501, %v4599
        %v4632 = vmul.f32 %v4503, %v4600
        %v4633 = vmul.f32 %v4505, %v4601
        %v4634 = vpack.c.bf16 %v4603, %v4602
        %v4635 = vpack.c.bf16 %v4605, %v4604
        %v4636 = vpack.c.bf16 %v4607, %v4606
        %v4637 = vpack.c.bf16 %v4609, %v4608
        %v4638 = vpack.c.bf16 %v4611, %v4610
        %v4639 = vpack.c.bf16 %v4613, %v4612
        %v4640 = vpack.c.bf16 %v4615, %v4614
        %v4641 = vpack.c.bf16 %v4617, %v4616
        %v4642 = vpack.c.bf16 %v4619, %v4618
        %v4643 = vpack.c.bf16 %v4621, %v4620
        %v4644 = vpack.c.bf16 %v4623, %v4622
        %v4645 = vpack.c.bf16 %v4625, %v4624
        %v4646 = vpack.c.bf16 %v4627, %v4626
        %v4647 = vpack.c.bf16 %v4629, %v4628
        %v4648 = vpack.c.bf16 %v4631, %v4630
        %v4649 = vpack.c.bf16 %v4633, %v4632
        %4650 = vmatprep.subr.bf16.mxu0 0
        %4651 = vmatpush1.bf16.msra.mxu0 %v3369
        %4652 = vmatprep.subr.bf16.mxu0 0
        %4653 = vmatpush1.bf16.msra.mxu0 %v3375
        %4654 = vmatprep.subr.bf16.mxu0 0
        %4655 = vmatpush1.bf16.msra.mxu0 %v3381
        %4656 = vmatprep.subr.bf16.mxu0 0
        %4657 = vmatpush1.bf16.msra.mxu0 %v3387
        %4658 = vmatprep.subr.bf16.mxu0 0
        %4659 = vmatpush1.bf16.msra.mxu0 %v3393
        %4660 = vmatprep.subr.bf16.mxu0 0
        %4661 = vmatpush1.bf16.msra.mxu0 %v3399
        %4662 = vmatprep.subr.bf16.mxu0 0
        %4663 = vmatpush1.bf16.msra.mxu0 %v3405
        %4664 = vmatprep.subr.bf16.mxu0 0
        %4665 = vmatpush1.bf16.msra.mxu0 %v3411
        %4666 = vmatprep.subr.bf16.mxu0 0
        %4667 = vmatpush1.bf16.msra.mxu0 0
        %4668 = vmatprep.subr.bf16.mxu0 0
        %4669 = vmatpush1.bf16.msra.mxu0 0
        %4670 = vmatprep.subr.bf16.mxu0 0
        %4671 = vmatpush1.bf16.msra.mxu0 0
        %4672 = vmatprep.subr.bf16.mxu0 0
        %4673 = vmatpush1.bf16.msra.mxu0 0
        %4674 = vmatprep.subr.bf16.mxu0 0
        %4675 = vmatpush1.bf16.msra.mxu0 0
        %4676 = vmatprep.subr.bf16.mxu0 0
        %4677 = vmatpush1.bf16.msra.mxu0 0
        %4678 = vmatprep.subr.bf16.mxu0 0
        %4679 = vmatpush1.bf16.msra.mxu0 0
        %4680 = vmatprep.subr.bf16.mxu0 0
        %4681 = vmatpush1.bf16.msra.mxu0 0
        %4682 = vmatprep.mubr.bf16.mxu0 0
        %4683 = vmatmul.mubr.bf16.gmra.mrb[0].mxu0 %v4634
        %v4684 = vpop.f32.mrb[0].mxu0
        %v4685 = vadd.f32 0.0, %v4684
        %v4686 = vpop.f32.mrb[0].mxu0
        %v4687 = vpop.f32.mrb[0].mxu0
        %v4688 = vadd.f32 0.0, %v4687
        %v4689 = vpop.f32.mrb[0].mxu0
        %4690 = vmatprep.mubr.bf16.mxu0 0
        %4691 = vmatmul.mubr.bf16.gmra.mrb[0].mxu0 %v4635
        %v4692 = vpop.f32.mrb[0].mxu0
        %v4693 = vadd.f32 0.0, %v4692
        %v4694 = vpop.f32.mrb[0].mxu0
        %v4695 = vpop.f32.mrb[0].mxu0
        %v4696 = vadd.f32 0.0, %v4695
        %v4697 = vpop.f32.mrb[0].mxu0
        %4698 = vmatprep.mubr.bf16.mxu0 0
        %4699 = vmatmul.mubr.bf16.gmra.mrb[0].mxu0 %v4636
        %v4700 = vpop.f32.mrb[0].mxu0
        %v4701 = vadd.f32 0.0, %v4700
        %v4702 = vpop.f32.mrb[0].mxu0
        %v4703 = vpop.f32.mrb[0].mxu0
        %v4704 = vadd.f32 0.0, %v4703
        %v4705 = vpop.f32.mrb[0].mxu0
        %4706 = vmatprep.mubr.bf16.mxu0 0
        %4707 = vmatmul.mubr.bf16.gmra.mrb[0].mxu0 %v4637
        %v4708 = vpop.f32.mrb[0].mxu0
        %v4709 = vadd.f32 0.0, %v4708
        %v4710 = vpop.f32.mrb[0].mxu0
        %v4711 = vpop.f32.mrb[0].mxu0
        %v4712 = vadd.f32 0.0, %v4711
        %v4713 = vpop.f32.mrb[0].mxu0
        %4714 = vmatprep.mubr.bf16.mxu0 0
        %4715 = vmatmul.mubr.bf16.gmra.mrb[0].mxu0 %v4638
        %v4716 = vpop.f32.mrb[0].mxu0
        %v4717 = vadd.f32 0.0, %v4716
        %v4718 = vpop.f32.mrb[0].mxu0
        %v4719 = vpop.f32.mrb[0].mxu0
        %v4720 = vadd.f32 0.0, %v4719
        %v4721 = vpop.f32.mrb[0].mxu0
        %4722 = vmatprep.mubr.bf16.mxu0 0
        %4723 = vmatmul.mubr.bf16.gmra.mrb[0].mxu0 %v4639
        %v4724 = vpop.f32.mrb[0].mxu0
        %v4725 = vadd.f32 0.0, %v4724
        %v4726 = vpop.f32.mrb[0].mxu0
        %v4727 = vpop.f32.mrb[0].mxu0
        %v4728 = vadd.f32 0.0, %v4727
        %v4729 = vpop.f32.mrb[0].mxu0
        %4730 = vmatprep.mubr.bf16.mxu0 0
        %4731 = vmatmul.mubr.bf16.gmra.mrb[0].mxu0 %v4640
        %v4732 = vpop.f32.mrb[0].mxu0
        %v4733 = vadd.f32 0.0, %v4732
        %v4734 = vpop.f32.mrb[0].mxu0
        %v4735 = vpop.f32.mrb[0].mxu0
        %v4736 = vadd.f32 0.0, %v4735
        %v4737 = vpop.f32.mrb[0].mxu0
        %4738 = vmatprep.mubr.bf16.mxu0 0
        %4739 = vmatmul.mubr.bf16.gmra.mrb[0].mxu0 %v4641
        %v4740 = vpop.f32.mrb[0].mxu0
        %v4741 = vadd.f32 0.0, %v4740
        %v4742 = vpop.f32.mrb[0].mxu0
        %v4743 = vpop.f32.mrb[0].mxu0
        %v4744 = vadd.f32 0.0, %v4743
        %v4745 = vpop.f32.mrb[0].mxu0
        %4746 = vdwg.mxu0
        %4747 = vmatprep.subr.bf16.mxu0 0
        %4748 = vmatpush1.bf16.msra.mxu0 %v3417
        %4749 = vmatprep.subr.bf16.mxu0 0
        %4750 = vmatpush1.bf16.msra.mxu0 %v3423
        %4751 = vmatprep.subr.bf16.mxu0 0
        %4752 = vmatpush1.bf16.msra.mxu0 %v3429
        %4753 = vmatprep.subr.bf16.mxu0 0
        %4754 = vmatpush1.bf16.msra.mxu0 %v3435
        %4755 = vmatprep.subr.bf16.mxu0 0
        %4756 = vmatpush1.bf16.msra.mxu0 %v3441
        %4757 = vmatprep.subr.bf16.mxu0 0
        %4758 = vmatpush1.bf16.msra.mxu0 %v3447
        %4759 = vmatprep.subr.bf16.mxu0 0
        %4760 = vmatpush1.bf16.msra.mxu0 %v3453
        %4761 = vmatprep.subr.bf16.mxu0 0
        %4762 = vmatpush1.bf16.msra.mxu0 %v3459
        %4763 = vmatprep.subr.bf16.mxu0 0
        %4764 = vmatpush1.bf16.msra.mxu0 0
        %4765 = vmatprep.subr.bf16.mxu0 0
        %4766 = vmatpush1.bf16.msra.mxu0 0
        %4767 = vmatprep.subr.bf16.mxu0 0
        %4768 = vmatpush1.bf16.msra.mxu0 0
        %4769 = vmatprep.subr.bf16.mxu0 0
        %4770 = vmatpush1.bf16.msra.mxu0 0
        %4771 = vmatprep.subr.bf16.mxu0 0
        %4772 = vmatpush1.bf16.msra.mxu0 0
        %4773 = vmatprep.subr.bf16.mxu0 0
        %4774 = vmatpush1.bf16.msra.mxu0 0
        %4775 = vmatprep.subr.bf16.mxu0 0
        %4776 = vmatpush1.bf16.msra.mxu0 0
        %4777 = vmatprep.subr.bf16.mxu0 0
        %4778 = vmatpush1.bf16.msra.mxu0 0
        %4779 = vmatprep.mubr.bf16.mxu0 0
        %4780 = vmatmul.mubr.bf16.gmra.mrb[0].mxu0 %v4642
        %v4781 = vpop.f32.mrb[0].mxu0
        %v4782 = vadd.f32 0.0, %v4781
        %v4783 = vpop.f32.mrb[0].mxu0
        %v4784 = vpop.f32.mrb[0].mxu0
        %v4785 = vadd.f32 0.0, %v4784
        %v4786 = vpop.f32.mrb[0].mxu0
        %4787 = vmatprep.mubr.bf16.mxu0 0
        %4788 = vmatmul.mubr.bf16.gmra.mrb[0].mxu0 %v4643
        %v4789 = vpop.f32.mrb[0].mxu0
        %v4790 = vadd.f32 0.0, %v4789
        %v4791 = vpop.f32.mrb[0].mxu0
        %v4792 = vpop.f32.mrb[0].mxu0
        %v4793 = vadd.f32 0.0, %v4792
        %v4794 = vpop.f32.mrb[0].mxu0
        %4795 = vmatprep.mubr.bf16.mxu0 0
        %4796 = vmatmul.mubr.bf16.gmra.mrb[0].mxu0 %v4644
        %v4797 = vpop.f32.mrb[0].mxu0
        %v4798 = vadd.f32 0.0, %v4797
        %v4799 = vpop.f32.mrb[0].mxu0
        %v4800 = vpop.f32.mrb[0].mxu0
        %v4801 = vadd.f32 0.0, %v4800
        %v4802 = vpop.f32.mrb[0].mxu0
        %4803 = vmatprep.mubr.bf16.mxu0 0
        %4804 = vmatmul.mubr.bf16.gmra.mrb[0].mxu0 %v4645
        %v4805 = vpop.f32.mrb[0].mxu0
        %v4806 = vadd.f32 0.0, %v4805
        %v4807 = vpop.f32.mrb[0].mxu0
        %v4808 = vpop.f32.mrb[0].mxu0
        %v4809 = vadd.f32 0.0, %v4808
        %v4810 = vpop.f32.mrb[0].mxu0
        %4811 = vmatprep.mubr.bf16.mxu0 0
        %4812 = vmatmul.mubr.bf16.gmra.mrb[0].mxu0 %v4646
        %v4813 = vpop.f32.mrb[0].mxu0
        %v4814 = vadd.f32 0.0, %v4813
        %v4815 = vpop.f32.mrb[0].mxu0
        %v4816 = vpop.f32.mrb[0].mxu0
        %v4817 = vadd.f32 0.0, %v4816
        %v4818 = vpop.f32.mrb[0].mxu0
        %4819 = vmatprep.mubr.bf16.mxu0 0
        %4820 = vmatmul.mubr.bf16.gmra.mrb[0].mxu0 %v4647
        %v4821 = vpop.f32.mrb[0].mxu0
        %v4822 = vadd.f32 0.0, %v4821
        %v4823 = vpop.f32.mrb[0].mxu0
        %v4824 = vpop.f32.mrb[0].mxu0
        %v4825 = vadd.f32 0.0, %v4824
        %v4826 = vpop.f32.mrb[0].mxu0
        %4827 = vmatprep.mubr.bf16.mxu0 0
        %4828 = vmatmul.mubr.bf16.gmra.mrb[0].mxu0 %v4648
        %v4829 = vpop.f32.mrb[0].mxu0
        %v4830 = vadd.f32 0.0, %v4829
        %v4831 = vpop.f32.mrb[0].mxu0
        %v4832 = vpop.f32.mrb[0].mxu0
        %v4833 = vadd.f32 0.0, %v4832
        %v4834 = vpop.f32.mrb[0].mxu0
        %4835 = vmatprep.mubr.bf16.mxu0 0
        %4836 = vmatmul.mubr.bf16.gmra.mrb[0].mxu0 %v4649
        %v4837 = vpop.f32.mrb[0].mxu0
        %v4838 = vadd.f32 0.0, %v4837
        %v4839 = vpop.f32.mrb[0].mxu0
        %v4840 = vpop.f32.mrb[0].mxu0
        %v4841 = vadd.f32 0.0, %v4840
        %v4842 = vpop.f32.mrb[0].mxu0
        %4843 = vdwg.mxu0
        %v4844 = vpack.c.bf16 %v3996, %v3993
        %v4845 = vpack.c.bf16 %v4688, %v4685
        %v4846 = vpack.c.bf16 %v4004, %v4001
        %v4847 = vpack.c.bf16 %v4696, %v4693
        %v4848 = vpack.c.bf16 %v4012, %v4009
        %v4849 = vpack.c.bf16 %v4704, %v4701
        %v4850 = vpack.c.bf16 %v4020, %v4017
        %v4851 = vpack.c.bf16 %v4712, %v4709
        %v4852 = vpack.c.bf16 %v4028, %v4025
        %v4853 = vpack.c.bf16 %v4720, %v4717
        %v4854 = vpack.c.bf16 %v4036, %v4033
        %v4855 = vpack.c.bf16 %v4728, %v4725
        %v4856 = vpack.c.bf16 %v4044, %v4041
        %v4857 = vpack.c.bf16 %v4736, %v4733
        %v4858 = vpack.c.bf16 %v4052, %v4049
        %v4859 = vpack.c.bf16 %v4744, %v4741
        %v4860 = vpack.c.bf16 %v4093, %v4090
        %v4861 = vpack.c.bf16 %v4785, %v4782
        %v4862 = vpack.c.bf16 %v4101, %v4098
        %v4863 = vpack.c.bf16 %v4793, %v4790
        %v4864 = vpack.c.bf16 %v4109, %v4106
        %v4865 = vpack.c.bf16 %v4801, %v4798
        %v4866 = vpack.c.bf16 %v4117, %v4114
        %v4867 = vpack.c.bf16 %v4809, %v4806
        %v4868 = vpack.c.bf16 %v4125, %v4122
        %v4869 = vpack.c.bf16 %v4817, %v4814
        %v4870 = vpack.c.bf16 %v4133, %v4130
        %v4871 = vpack.c.bf16 %v4825, %v4822
        %v4872 = vpack.c.bf16 %v4141, %v4138
        %v4873 = vpack.c.bf16 %v4833, %v4830
        %v4874 = vpack.c.bf16 %v4149, %v4146
        %v4875 = vpack.c.bf16 %v4841, %v4838
        %v4876 = vld [vmem:[%s632] sm:$0xff]
        %v4877 = vld [vmem:[%s632 + $0x8] sm:$0xff]
        %v4878 = vld [vmem:[%s632 + $0x10] sm:$0xff]
        %v4879 = vld [vmem:[%s632 + $0x18] sm:$0xff]
        %v4880 = vld [vmem:[%s632 + $0x20] sm:$0xff]
        %v4881 = vld [vmem:[%s632 + $0x28] sm:$0xff]
        %v4882 = vld [vmem:[%s632 + $0x30] sm:$0xff]
        %v4883 = vld [vmem:[%s632 + $0x38] sm:$0xff]
        %v4884 = vld [vmem:[%s632 + $0x40] sm:$0xff]
        %v4885 = vld [vmem:[%s632 + $0x48] sm:$0xff]
        %v4886 = vld [vmem:[%s632 + $0x50] sm:$0xff]
        %v4887 = vld [vmem:[%s632 + $0x58] sm:$0xff]
        %v4888 = vld [vmem:[%s632 + $0x60] sm:$0xff]
        %v4889 = vld [vmem:[%s632 + $0x68] sm:$0xff]
        %v4890 = vld [vmem:[%s632 + $0x70] sm:$0xff]
        %v4891 = vld [vmem:[%s632 + $0x78] sm:$0xff]
        %v4892 = vld [vmem:[%s632 + $0x80] sm:$0xff]
        %v4893 = vld [vmem:[%s632 + $0x88] sm:$0xff]
        %v4894 = vld [vmem:[%s632 + $0x90] sm:$0xff]
        %v4895 = vld [vmem:[%s632 + $0x98] sm:$0xff]
        %v4896 = vld [vmem:[%s632 + $0xa0] sm:$0xff]
        %v4897 = vld [vmem:[%s632 + $0xa8] sm:$0xff]
        %v4898 = vld [vmem:[%s632 + $0xb0] sm:$0xff]
        %v4899 = vld [vmem:[%s632 + $0xb8] sm:$0xff]
        %v4900 = vld [vmem:[%s632 + $0xc0] sm:$0xff]
        %v4901 = vld [vmem:[%s632 + $0xc8] sm:$0xff]
        %v4902 = vld [vmem:[%s632 + $0xd0] sm:$0xff]
        %v4903 = vld [vmem:[%s632 + $0xd8] sm:$0xff]
        %v4904 = vld [vmem:[%s632 + $0xe0] sm:$0xff]
        %v4905 = vld [vmem:[%s632 + $0xe8] sm:$0xff]
        %v4906 = vld [vmem:[%s632 + $0xf0] sm:$0xff]
        %v4907 = vld [vmem:[%s632 + $0xf8] sm:$0xff]
        %v4908 = vld [vmem:[%s641] sm:$0x3]
        %v4910 = vlaneseq
        %v4911 = vshrl.u32 %v4910, 7
        %v4912 = vsub.s32 0, %v4911
        %v4913 = vrot.slane %v4908, %v4912
        %v4914 = vlaneseq
        %v4915 = vshrl.u32 %v4914, 7
        %v4916 = vsub.s32 1, %v4915
        %v4917 = vrot.slane %v4908, %v4916
        %v4952 = vunpack.c.l.b16 %v4876
        %v4953 = vunpack.c.h.b16 %v4876
        %v4954 = vunpack.c.l.b16 %v4877
        %v4955 = vunpack.c.h.b16 %v4877
        %v4956 = vunpack.c.l.b16 %v4878
        %v4957 = vunpack.c.h.b16 %v4878
        %v4958 = vunpack.c.l.b16 %v4879
        %v4959 = vunpack.c.h.b16 %v4879
        %v4960 = vunpack.c.l.b16 %v4880
        %v4961 = vunpack.c.h.b16 %v4880
        %v4962 = vunpack.c.l.b16 %v4881
        %v4963 = vunpack.c.h.b16 %v4881
        %v4964 = vunpack.c.l.b16 %v4882
        %v4965 = vunpack.c.h.b16 %v4882
        %v4966 = vunpack.c.l.b16 %v4883
        %v4967 = vunpack.c.h.b16 %v4883
        %v4968 = vunpack.c.l.b16 %v4884
        %v4969 = vunpack.c.h.b16 %v4884
        %v4970 = vunpack.c.l.b16 %v4885
        %v4971 = vunpack.c.h.b16 %v4885
        %v4972 = vunpack.c.l.b16 %v4886
        %v4973 = vunpack.c.h.b16 %v4886
        %v4974 = vunpack.c.l.b16 %v4887
        %v4975 = vunpack.c.h.b16 %v4887
        %v4976 = vunpack.c.l.b16 %v4888
        %v4977 = vunpack.c.h.b16 %v4888
        %v4978 = vunpack.c.l.b16 %v4889
        %v4979 = vunpack.c.h.b16 %v4889
        %v4980 = vunpack.c.l.b16 %v4890
        %v4981 = vunpack.c.h.b16 %v4890
        %v4982 = vunpack.c.l.b16 %v4891
        %v4983 = vunpack.c.h.b16 %v4891
        %v4984 = vunpack.c.l.b16 %v4892
        %v4985 = vunpack.c.h.b16 %v4892
        %v4986 = vunpack.c.l.b16 %v4893
        %v4987 = vunpack.c.h.b16 %v4893
        %v4988 = vunpack.c.l.b16 %v4894
        %v4989 = vunpack.c.h.b16 %v4894
        %v4990 = vunpack.c.l.b16 %v4895
        %v4991 = vunpack.c.h.b16 %v4895
        %v4992 = vunpack.c.l.b16 %v4896
        %v4993 = vunpack.c.h.b16 %v4896
        %v4994 = vunpack.c.l.b16 %v4897
        %v4995 = vunpack.c.h.b16 %v4897
        %v4996 = vunpack.c.l.b16 %v4898
        %v4997 = vunpack.c.h.b16 %v4898
        %v4998 = vunpack.c.l.b16 %v4899
        %v4999 = vunpack.c.h.b16 %v4899
        %v5000 = vunpack.c.l.b16 %v4900
        %v5001 = vunpack.c.h.b16 %v4900
        %v5002 = vunpack.c.l.b16 %v4901
        %v5003 = vunpack.c.h.b16 %v4901
        %v5004 = vunpack.c.l.b16 %v4902
        %v5005 = vunpack.c.h.b16 %v4902
        %v5006 = vunpack.c.l.b16 %v4903
        %v5007 = vunpack.c.h.b16 %v4903
        %v5008 = vunpack.c.l.b16 %v4904
        %v5009 = vunpack.c.h.b16 %v4904
        %v5010 = vunpack.c.l.b16 %v4905
        %v5011 = vunpack.c.h.b16 %v4905
        %v5012 = vunpack.c.l.b16 %v4906
        %v5013 = vunpack.c.h.b16 %v4906
        %v5014 = vunpack.c.l.b16 %v4907
        %v5015 = vunpack.c.h.b16 %v4907
        %v5016 = vpack.c.b16 %v4954, %v4952
        %v5017 = vpack.c.b16 %v4955, %v4953
        %v5018 = vpack.c.b16 %v4958, %v4956
        %v5019 = vpack.c.b16 %v4959, %v4957
        %v5020 = vpack.c.b16 %v4962, %v4960
        %v5021 = vpack.c.b16 %v4963, %v4961
        %v5022 = vpack.c.b16 %v4966, %v4964
        %v5023 = vpack.c.b16 %v4967, %v4965
        %v5024 = vpack.c.b16 %v4970, %v4968
        %v5025 = vpack.c.b16 %v4971, %v4969
        %v5026 = vpack.c.b16 %v4974, %v4972
        %v5027 = vpack.c.b16 %v4975, %v4973
        %v5028 = vpack.c.b16 %v4978, %v4976
        %v5029 = vpack.c.b16 %v4979, %v4977
        %v5030 = vpack.c.b16 %v4982, %v4980
        %v5031 = vpack.c.b16 %v4983, %v4981
        %v5032 = vpack.c.b16 %v4986, %v4984
        %v5033 = vpack.c.b16 %v4987, %v4985
        %v5034 = vpack.c.b16 %v4990, %v4988
        %v5035 = vpack.c.b16 %v4991, %v4989
        %v5036 = vpack.c.b16 %v4994, %v4992
        %v5037 = vpack.c.b16 %v4995, %v4993
        %v5038 = vpack.c.b16 %v4998, %v4996
        %v5039 = vpack.c.b16 %v4999, %v4997
        %v5040 = vpack.c.b16 %v5002, %v5000
        %v5041 = vpack.c.b16 %v5003, %v5001
        %v5042 = vpack.c.b16 %v5006, %v5004
        %v5043 = vpack.c.b16 %v5007, %v5005
        %v5044 = vpack.c.b16 %v5010, %v5008
        %v5045 = vpack.c.b16 %v5011, %v5009
        %v5046 = vpack.c.b16 %v5014, %v5012
        %v5047 = vpack.c.b16 %v5015, %v5013
        %5080 = vmatprep.subr.bf16.mxu0 %v5017
        %5081 = vmatpush1.bf16.msra.mxu0 %v5016
        %5082 = vmatprep.subr.bf16.mxu0 %v5019
        %5083 = vmatpush1.bf16.msra.mxu0 %v5018
        %5084 = vmatprep.subr.bf16.mxu0 %v5021
        %5085 = vmatpush1.bf16.msra.mxu0 %v5020
        %5086 = vmatprep.subr.bf16.mxu0 %v5023
        %5087 = vmatpush1.bf16.msra.mxu0 %v5022
        %5088 = vmatprep.subr.bf16.mxu0 %v5025
        %5089 = vmatpush1.bf16.msra.mxu0 %v5024
        %5090 = vmatprep.subr.bf16.mxu0 %v5027
        %5091 = vmatpush1.bf16.msra.mxu0 %v5026
        %5092 = vmatprep.subr.bf16.mxu0 %v5029
        %5093 = vmatpush1.bf16.msra.mxu0 %v5028
        %5094 = vmatprep.subr.bf16.mxu0 %v5031
        %5095 = vmatpush1.bf16.msra.mxu0 %v5030
        %5096 = vmatprep.subr.bf16.mxu0 %v5033
        %5097 = vmatpush1.bf16.msra.mxu0 %v5032
        %5098 = vmatprep.subr.bf16.mxu0 %v5035
        %5099 = vmatpush1.bf16.msra.mxu0 %v5034
        %5100 = vmatprep.subr.bf16.mxu0 %v5037
        %5101 = vmatpush1.bf16.msra.mxu0 %v5036
        %5102 = vmatprep.subr.bf16.mxu0 %v5039
        %5103 = vmatpush1.bf16.msra.mxu0 %v5038
        %5104 = vmatprep.subr.bf16.mxu0 %v5041
        %5105 = vmatpush1.bf16.msra.mxu0 %v5040
        %5106 = vmatprep.subr.bf16.mxu0 %v5043
        %5107 = vmatpush1.bf16.msra.mxu0 %v5042
        %5108 = vmatprep.subr.bf16.mxu0 %v5045
        %5109 = vmatpush1.bf16.msra.mxu0 %v5044
        %5110 = vmatprep.subr.bf16.mxu0 %v5047
        %5111 = vmatpush1.bf16.msra.mxu0 %v5046
        %5112 = vmatprep.mubr.bf16.mxu0 %v4845
        %5113 = vmatmul.mubr.bf16.gmra.mrb[0].mxu0 %v4844
        %v5114 = vpop.f32.mrb[0].mxu0
        %v5115 = vadd.f32 %v4913, %v5114
        %v5116 = vpop.f32.mrb[0].mxu0
        %v5117 = vadd.f32 %v4917, %v5116
        %v5118 = vpop.f32.mrb[0].mxu0
        %v5119 = vadd.f32 %v4913, %v5118
        %v5120 = vpop.f32.mrb[0].mxu0
        %v5121 = vadd.f32 %v4917, %v5120
        %5122 = vmatprep.mubr.bf16.mxu0 %v4847
        %5123 = vmatmul.mubr.bf16.gmra.mrb[0].mxu0 %v4846
        %v5124 = vpop.f32.mrb[0].mxu0
        %v5125 = vadd.f32 %v4913, %v5124
        %v5126 = vpop.f32.mrb[0].mxu0
        %v5127 = vadd.f32 %v4917, %v5126
        %v5128 = vpop.f32.mrb[0].mxu0
        %v5129 = vadd.f32 %v4913, %v5128
        %v5130 = vpop.f32.mrb[0].mxu0
        %v5131 = vadd.f32 %v4917, %v5130
        %5132 = vmatprep.mubr.bf16.mxu0 %v4849
        %5133 = vmatmul.mubr.bf16.gmra.mrb[0].mxu0 %v4848
        %v5134 = vpop.f32.mrb[0].mxu0
        %v5135 = vadd.f32 %v4913, %v5134
        %v5136 = vpop.f32.mrb[0].mxu0
        %v5137 = vadd.f32 %v4917, %v5136
        %v5138 = vpop.f32.mrb[0].mxu0
        %v5139 = vadd.f32 %v4913, %v5138
        %v5140 = vpop.f32.mrb[0].mxu0
        %v5141 = vadd.f32 %v4917, %v5140
        %5142 = vmatprep.mubr.bf16.mxu0 %v4851
        %5143 = vmatmul.mubr.bf16.gmra.mrb[0].mxu0 %v4850
        %v5144 = vpop.f32.mrb[0].mxu0
        %v5145 = vadd.f32 %v4913, %v5144
        %v5146 = vpop.f32.mrb[0].mxu0
        %v5147 = vadd.f32 %v4917, %v5146
        %v5148 = vpop.f32.mrb[0].mxu0
        %v5149 = vadd.f32 %v4913, %v5148
        %v5150 = vpop.f32.mrb[0].mxu0
        %v5151 = vadd.f32 %v4917, %v5150
        %5152 = vmatprep.mubr.bf16.mxu0 %v4853
        %5153 = vmatmul.mubr.bf16.gmra.mrb[0].mxu0 %v4852
        %v5154 = vpop.f32.mrb[0].mxu0
        %v5155 = vadd.f32 %v4913, %v5154
        %v5156 = vpop.f32.mrb[0].mxu0
        %v5157 = vadd.f32 %v4917, %v5156
        %v5158 = vpop.f32.mrb[0].mxu0
        %v5159 = vadd.f32 %v4913, %v5158
        %v5160 = vpop.f32.mrb[0].mxu0
        %v5161 = vadd.f32 %v4917, %v5160
        %5162 = vmatprep.mubr.bf16.mxu0 %v4855
        %5163 = vmatmul.mubr.bf16.gmra.mrb[0].mxu0 %v4854
        %v5164 = vpop.f32.mrb[0].mxu0
        %v5165 = vadd.f32 %v4913, %v5164
        %v5166 = vpop.f32.mrb[0].mxu0
        %v5167 = vadd.f32 %v4917, %v5166
        %v5168 = vpop.f32.mrb[0].mxu0
        %v5169 = vadd.f32 %v4913, %v5168
        %v5170 = vpop.f32.mrb[0].mxu0
        %v5171 = vadd.f32 %v4917, %v5170
        %5172 = vmatprep.mubr.bf16.mxu0 %v4857
        %5173 = vmatmul.mubr.bf16.gmra.mrb[0].mxu0 %v4856
        %v5174 = vpop.f32.mrb[0].mxu0
        %v5175 = vadd.f32 %v4913, %v5174
        %v5176 = vpop.f32.mrb[0].mxu0
        %v5177 = vadd.f32 %v4917, %v5176
        %v5178 = vpop.f32.mrb[0].mxu0
        %v5179 = vadd.f32 %v4913, %v5178
        %v5180 = vpop.f32.mrb[0].mxu0
        %v5181 = vadd.f32 %v4917, %v5180
        %5182 = vmatprep.mubr.bf16.mxu0 %v4859
        %5183 = vmatmul.mubr.bf16.gmra.mrb[0].mxu0 %v4858
        %v5184 = vpop.f32.mrb[0].mxu0
        %v5185 = vadd.f32 %v4913, %v5184
        %v5186 = vpop.f32.mrb[0].mxu0
        %v5187 = vadd.f32 %v4917, %v5186
        %v5188 = vpop.f32.mrb[0].mxu0
        %v5189 = vadd.f32 %v4913, %v5188
        %v5190 = vpop.f32.mrb[0].mxu0
        %v5191 = vadd.f32 %v4917, %v5190
        %5192 = vmatprep.mubr.bf16.mxu0 %v4861
        %5193 = vmatmul.mubr.bf16.gmra.mrb[0].mxu0 %v4860
        %v5194 = vpop.f32.mrb[0].mxu0
        %v5195 = vadd.f32 %v4913, %v5194
        %v5196 = vpop.f32.mrb[0].mxu0
        %v5197 = vadd.f32 %v4917, %v5196
        %v5198 = vpop.f32.mrb[0].mxu0
        %v5199 = vadd.f32 %v4913, %v5198
        %v5200 = vpop.f32.mrb[0].mxu0
        %v5201 = vadd.f32 %v4917, %v5200
        %5202 = vmatprep.mubr.bf16.mxu0 %v4863
        %5203 = vmatmul.mubr.bf16.gmra.mrb[0].mxu0 %v4862
        %v5204 = vpop.f32.mrb[0].mxu0
        %v5205 = vadd.f32 %v4913, %v5204
        %v5206 = vpop.f32.mrb[0].mxu0
        %v5207 = vadd.f32 %v4917, %v5206
        %v5208 = vpop.f32.mrb[0].mxu0
        %v5209 = vadd.f32 %v4913, %v5208
        %v5210 = vpop.f32.mrb[0].mxu0
        %v5211 = vadd.f32 %v4917, %v5210
        %5212 = vmatprep.mubr.bf16.mxu0 %v4865
        %5213 = vmatmul.mubr.bf16.gmra.mrb[0].mxu0 %v4864
        %v5214 = vpop.f32.mrb[0].mxu0
        %v5215 = vadd.f32 %v4913, %v5214
        %v5216 = vpop.f32.mrb[0].mxu0
        %v5217 = vadd.f32 %v4917, %v5216
        %v5218 = vpop.f32.mrb[0].mxu0
        %v5219 = vadd.f32 %v4913, %v5218
        %v5220 = vpop.f32.mrb[0].mxu0
        %v5221 = vadd.f32 %v4917, %v5220
        %5222 = vmatprep.mubr.bf16.mxu0 %v4867
        %5223 = vmatmul.mubr.bf16.gmra.mrb[0].mxu0 %v4866
        %v5224 = vpop.f32.mrb[0].mxu0
        %v5225 = vadd.f32 %v4913, %v5224
        %v5226 = vpop.f32.mrb[0].mxu0
        %v5227 = vadd.f32 %v4917, %v5226
        %v5228 = vpop.f32.mrb[0].mxu0
        %v5229 = vadd.f32 %v4913, %v5228
        %v5230 = vpop.f32.mrb[0].mxu0
        %v5231 = vadd.f32 %v4917, %v5230
        %5232 = vmatprep.mubr.bf16.mxu0 %v4869
        %5233 = vmatmul.mubr.bf16.gmra.mrb[0].mxu0 %v4868
        %v5234 = vpop.f32.mrb[0].mxu0
        %v5235 = vadd.f32 %v4913, %v5234
        %v5236 = vpop.f32.mrb[0].mxu0
        %v5237 = vadd.f32 %v4917, %v5236
        %v5238 = vpop.f32.mrb[0].mxu0
        %v5239 = vadd.f32 %v4913, %v5238
        %v5240 = vpop.f32.mrb[0].mxu0
        %v5241 = vadd.f32 %v4917, %v5240
        %5242 = vmatprep.mubr.bf16.mxu0 %v4871
        %5243 = vmatmul.mubr.bf16.gmra.mrb[0].mxu0 %v4870
        %v5244 = vpop.f32.mrb[0].mxu0
        %v5245 = vadd.f32 %v4913, %v5244
        %v5246 = vpop.f32.mrb[0].mxu0
        %v5247 = vadd.f32 %v4917, %v5246
        %v5248 = vpop.f32.mrb[0].mxu0
        %v5249 = vadd.f32 %v4913, %v5248
        %v5250 = vpop.f32.mrb[0].mxu0
        %v5251 = vadd.f32 %v4917, %v5250
        %5252 = vmatprep.mubr.bf16.mxu0 %v4873
        %5253 = vmatmul.mubr.bf16.gmra.mrb[0].mxu0 %v4872
        %v5254 = vpop.f32.mrb[0].mxu0
        %v5255 = vadd.f32 %v4913, %v5254
        %v5256 = vpop.f32.mrb[0].mxu0
        %v5257 = vadd.f32 %v4917, %v5256
        %v5258 = vpop.f32.mrb[0].mxu0
        %v5259 = vadd.f32 %v4913, %v5258
        %v5260 = vpop.f32.mrb[0].mxu0
        %v5261 = vadd.f32 %v4917, %v5260
        %5262 = vmatprep.mubr.bf16.mxu0 %v4875
        %5263 = vmatmul.mubr.bf16.gmra.mrb[0].mxu0 %v4874
        %v5264 = vpop.f32.mrb[0].mxu0
        %v5265 = vadd.f32 %v4913, %v5264
        %v5266 = vpop.f32.mrb[0].mxu0
        %v5267 = vadd.f32 %v4917, %v5266
        %v5268 = vpop.f32.mrb[0].mxu0
        %v5269 = vadd.f32 %v4913, %v5268
        %v5270 = vpop.f32.mrb[0].mxu0
        %v5271 = vadd.f32 %v4917, %v5270
        %5272 = vdwg.mxu0
        %v5273 = vld [vmem:[%s749] sm:$0xf]
        %v5274 = vadd.f32 %v2081, %v5115
        %v5275 = vadd.f32 %v2082, %v5117
        %v5276 = vadd.f32 %v2083, %v5119
        %v5277 = vadd.f32 %v2084, %v5121
        %v5278 = vadd.f32 %v2085, %v5125
        %v5279 = vadd.f32 %v2086, %v5127
        %v5280 = vadd.f32 %v2087, %v5129
        %v5281 = vadd.f32 %v2088, %v5131
        %v5282 = vadd.f32 %v2089, %v5135
        %v5283 = vadd.f32 %v2090, %v5137
        %v5284 = vadd.f32 %v2091, %v5139
        %v5285 = vadd.f32 %v2092, %v5141
        %v5286 = vadd.f32 %v2093, %v5145
        %v5287 = vadd.f32 %v2094, %v5147
        %v5288 = vadd.f32 %v2095, %v5149
        %v5289 = vadd.f32 %v2096, %v5151
        %v5290 = vadd.f32 %v2097, %v5155
        %v5291 = vadd.f32 %v2098, %v5157
        %v5292 = vadd.f32 %v2099, %v5159
        %v5293 = vadd.f32 %v2100, %v5161
        %v5294 = vadd.f32 %v2101, %v5165
        %v5295 = vadd.f32 %v2102, %v5167
        %v5296 = vadd.f32 %v2103, %v5169
        %v5297 = vadd.f32 %v2104, %v5171
        %v5298 = vadd.f32 %v2105, %v5175
        %v5299 = vadd.f32 %v2106, %v5177
        %v5300 = vadd.f32 %v2107, %v5179
        %v5301 = vadd.f32 %v2108, %v5181
        %v5302 = vadd.f32 %v2109, %v5185
        %v5303 = vadd.f32 %v2110, %v5187
        %v5304 = vadd.f32 %v2111, %v5189
        %v5305 = vadd.f32 %v2112, %v5191
        %v5306 = vadd.f32 %v2113, %v5195
        %v5307 = vadd.f32 %v2114, %v5197
        %v5308 = vadd.f32 %v2115, %v5199
        %v5309 = vadd.f32 %v2116, %v5201
        %v5310 = vadd.f32 %v2117, %v5205
        %v5311 = vadd.f32 %v2118, %v5207
        %v5312 = vadd.f32 %v2119, %v5209
        %v5313 = vadd.f32 %v2120, %v5211
        %v5314 = vadd.f32 %v2121, %v5215
        %v5315 = vadd.f32 %v2122, %v5217
        %v5316 = vadd.f32 %v2123, %v5219
        %v5317 = vadd.f32 %v2124, %v5221
        %v5318 = vadd.f32 %v2125, %v5225
        %v5319 = vadd.f32 %v2126, %v5227
        %v5320 = vadd.f32 %v2127, %v5229
        %v5321 = vadd.f32 %v2128, %v5231
        %v5322 = vadd.f32 %v2129, %v5235
        %v5323 = vadd.f32 %v2130, %v5237
        %v5324 = vadd.f32 %v2131, %v5239
        %v5325 = vadd.f32 %v2132, %v5241
        %v5326 = vadd.f32 %v2133, %v5245
        %v5327 = vadd.f32 %v2134, %v5247
        %v5328 = vadd.f32 %v2135, %v5249
        %v5329 = vadd.f32 %v2136, %v5251
        %v5330 = vadd.f32 %v2137, %v5255
        %v5331 = vadd.f32 %v2138, %v5257
        %v5332 = vadd.f32 %v2139, %v5259
        %v5333 = vadd.f32 %v2140, %v5261
        %v5334 = vadd.f32 %v2141, %v5265
        %v5335 = vadd.f32 %v2142, %v5267
        %v5336 = vadd.f32 %v2143, %v5269
        %v5337 = vadd.f32 %v2144, %v5271
        %v5338 = vadd.f32 %v5274, %v5275
        %5339 = vadd.xlane.f32.xlu0 %v5338
        %v5340 = vpop.xlane.xlu0 %5339
        %v5341 = vadd.f32 %v5276, %v5277
        %5342 = vadd.xlane.f32.xlu0 %v5341
        %v5343 = vpop.xlane.xlu0 %5342
        %v5344 = vadd.f32 %v5278, %v5279
        %5345 = vadd.xlane.f32.xlu0 %v5344
        %v5346 = vpop.xlane.xlu0 %5345
        %v5347 = vadd.f32 %v5280, %v5281
        %5348 = vadd.xlane.f32.xlu0 %v5347
        %v5349 = vpop.xlane.xlu0 %5348
        %v5350 = vadd.f32 %v5282, %v5283
        %5351 = vadd.xlane.f32.xlu0 %v5350
        %v5352 = vpop.xlane.xlu0 %5351
        %v5353 = vadd.f32 %v5284, %v5285
        %5354 = vadd.xlane.f32.xlu0 %v5353
        %v5355 = vpop.xlane.xlu0 %5354
        %v5356 = vadd.f32 %v5286, %v5287
        %5357 = vadd.xlane.f32.xlu0 %v5356
        %v5358 = vpop.xlane.xlu0 %5357
        %v5359 = vadd.f32 %v5288, %v5289
        %5360 = vadd.xlane.f32.xlu0 %v5359
        %v5361 = vpop.xlane.xlu0 %5360
        %v5362 = vadd.f32 %v5290, %v5291
        %5363 = vadd.xlane.f32.xlu0 %v5362
        %v5364 = vpop.xlane.xlu0 %5363
        %v5365 = vadd.f32 %v5292, %v5293
        %5366 = vadd.xlane.f32.xlu0 %v5365
        %v5367 = vpop.xlane.xlu0 %5366
        %v5368 = vadd.f32 %v5294, %v5295
        %5369 = vadd.xlane.f32.xlu0 %v5368
        %v5370 = vpop.xlane.xlu0 %5369
        %v5371 = vadd.f32 %v5296, %v5297
        %5372 = vadd.xlane.f32.xlu0 %v5371
        %v5373 = vpop.xlane.xlu0 %5372
        %v5374 = vadd.f32 %v5298, %v5299
        %5375 = vadd.xlane.f32.xlu0 %v5374
        %v5376 = vpop.xlane.xlu0 %5375
        %v5377 = vadd.f32 %v5300, %v5301
        %5378 = vadd.xlane.f32.xlu0 %v5377
        %v5379 = vpop.xlane.xlu0 %5378
        %v5380 = vadd.f32 %v5302, %v5303
        %5381 = vadd.xlane.f32.xlu0 %v5380
        %v5382 = vpop.xlane.xlu0 %5381
        %v5383 = vadd.f32 %v5304, %v5305
        %5384 = vadd.xlane.f32.xlu0 %v5383
        %v5385 = vpop.xlane.xlu0 %5384
        %v5386 = vadd.f32 %v5306, %v5307
        %5387 = vadd.xlane.f32.xlu0 %v5386
        %v5388 = vpop.xlane.xlu0 %5387
        %v5389 = vadd.f32 %v5308, %v5309
        %5390 = vadd.xlane.f32.xlu0 %v5389
        %v5391 = vpop.xlane.xlu0 %5390
        %v5392 = vadd.f32 %v5310, %v5311
        %5393 = vadd.xlane.f32.xlu0 %v5392
        %v5394 = vpop.xlane.xlu0 %5393
        %v5395 = vadd.f32 %v5312, %v5313
        %5396 = vadd.xlane.f32.xlu0 %v5395
        %v5397 = vpop.xlane.xlu0 %5396
        %v5398 = vadd.f32 %v5314, %v5315
        %5399 = vadd.xlane.f32.xlu0 %v5398
        %v5400 = vpop.xlane.xlu0 %5399
        %v5401 = vadd.f32 %v5316, %v5317
        %5402 = vadd.xlane.f32.xlu0 %v5401
        %v5403 = vpop.xlane.xlu0 %5402
        %v5404 = vadd.f32 %v5318, %v5319
        %5405 = vadd.xlane.f32.xlu0 %v5404
        %v5406 = vpop.xlane.xlu0 %5405
        %v5407 = vadd.f32 %v5320, %v5321
        %5408 = vadd.xlane.f32.xlu0 %v5407
        %v5409 = vpop.xlane.xlu0 %5408
        %v5410 = vadd.f32 %v5322, %v5323
        %5411 = vadd.xlane.f32.xlu0 %v5410
        %v5412 = vpop.xlane.xlu0 %5411
        %v5413 = vadd.f32 %v5324, %v5325
        %5414 = vadd.xlane.f32.xlu0 %v5413
        %v5415 = vpop.xlane.xlu0 %5414
        %v5416 = vadd.f32 %v5326, %v5327
        %5417 = vadd.xlane.f32.xlu0 %v5416
        %v5418 = vpop.xlane.xlu0 %5417
        %v5419 = vadd.f32 %v5328, %v5329
        %5420 = vadd.xlane.f32.xlu0 %v5419
        %v5421 = vpop.xlane.xlu0 %5420
        %v5422 = vadd.f32 %v5330, %v5331
        %5423 = vadd.xlane.f32.xlu0 %v5422
        %v5424 = vpop.xlane.xlu0 %5423
        %v5425 = vadd.f32 %v5332, %v5333
        %5426 = vadd.xlane.f32.xlu0 %v5425
        %v5427 = vpop.xlane.xlu0 %5426
        %v5428 = vadd.f32 %v5334, %v5335
        %5429 = vadd.xlane.f32.xlu0 %v5428
        %v5430 = vpop.xlane.xlu0 %5429
        %v5431 = vadd.f32 %v5336, %v5337
        %5432 = vadd.xlane.f32.xlu0 %v5431
        %v5433 = vpop.xlane.xlu0 %5432
        %v5434 = vrcp.pop 256.0
        %v5435 = vmul.f32 %v5340, %v5434
        %v5436 = vmul.f32 %v5343, %v5434
        %v5437 = vmul.f32 %v5346, %v5434
        %v5438 = vmul.f32 %v5349, %v5434
        %v5439 = vmul.f32 %v5352, %v5434
        %v5440 = vmul.f32 %v5355, %v5434
        %v5441 = vmul.f32 %v5358, %v5434
        %v5442 = vmul.f32 %v5361, %v5434
        %v5443 = vmul.f32 %v5364, %v5434
        %v5444 = vmul.f32 %v5367, %v5434
        %v5445 = vmul.f32 %v5370, %v5434
        %v5446 = vmul.f32 %v5373, %v5434
        %v5447 = vmul.f32 %v5376, %v5434
        %v5448 = vmul.f32 %v5379, %v5434
        %v5449 = vmul.f32 %v5382, %v5434
        %v5450 = vmul.f32 %v5385, %v5434
        %v5451 = vmul.f32 %v5388, %v5434
        %v5452 = vmul.f32 %v5391, %v5434
        %v5453 = vmul.f32 %v5394, %v5434
        %v5454 = vmul.f32 %v5397, %v5434
        %v5455 = vmul.f32 %v5400, %v5434
        %v5456 = vmul.f32 %v5403, %v5434
        %v5457 = vmul.f32 %v5406, %v5434
        %v5458 = vmul.f32 %v5409, %v5434
        %v5459 = vmul.f32 %v5412, %v5434
        %v5460 = vmul.f32 %v5415, %v5434
        %v5461 = vmul.f32 %v5418, %v5434
        %v5462 = vmul.f32 %v5421, %v5434
        %v5463 = vmul.f32 %v5424, %v5434
        %v5464 = vmul.f32 %v5427, %v5434
        %v5465 = vmul.f32 %v5430, %v5434
        %v5466 = vmul.f32 %v5433, %v5434
        %v5467 = vsub.f32 %v5274, %v5435
        %v5468 = vsub.f32 %v5275, %v5435
        %v5469 = vsub.f32 %v5276, %v5436
        %v5470 = vsub.f32 %v5277, %v5436
        %v5471 = vsub.f32 %v5278, %v5437
        %v5472 = vsub.f32 %v5279, %v5437
        %v5473 = vsub.f32 %v5280, %v5438
        %v5474 = vsub.f32 %v5281, %v5438
        %v5475 = vsub.f32 %v5282, %v5439
        %v5476 = vsub.f32 %v5283, %v5439
        %v5477 = vsub.f32 %v5284, %v5440
        %v5478 = vsub.f32 %v5285, %v5440
        %v5479 = vsub.f32 %v5286, %v5441
        %v5480 = vsub.f32 %v5287, %v5441
        %v5481 = vsub.f32 %v5288, %v5442
        %v5482 = vsub.f32 %v5289, %v5442
        %v5483 = vsub.f32 %v5290, %v5443
        %v5484 = vsub.f32 %v5291, %v5443
        %v5485 = vsub.f32 %v5292, %v5444
        %v5486 = vsub.f32 %v5293, %v5444
        %v5487 = vsub.f32 %v5294, %v5445
        %v5488 = vsub.f32 %v5295, %v5445
        %v5489 = vsub.f32 %v5296, %v5446
        %v5490 = vsub.f32 %v5297, %v5446
        %v5491 = vsub.f32 %v5298, %v5447
        %v5492 = vsub.f32 %v5299, %v5447
        %v5493 = vsub.f32 %v5300, %v5448
        %v5494 = vsub.f32 %v5301, %v5448
        %v5495 = vsub.f32 %v5302, %v5449
        %v5496 = vsub.f32 %v5303, %v5449
        %v5497 = vsub.f32 %v5304, %v5450
        %v5498 = vsub.f32 %v5305, %v5450
        %v5499 = vsub.f32 %v5306, %v5451
        %v5500 = vsub.f32 %v5307, %v5451
        %v5501 = vsub.f32 %v5308, %v5452
        %v5502 = vsub.f32 %v5309, %v5452
        %v5503 = vsub.f32 %v5310, %v5453
        %v5504 = vsub.f32 %v5311, %v5453
        %v5505 = vsub.f32 %v5312, %v5454
        %v5506 = vsub.f32 %v5313, %v5454
        %v5507 = vsub.f32 %v5314, %v5455
        %v5508 = vsub.f32 %v5315, %v5455
        %v5509 = vsub.f32 %v5316, %v5456
        %v5510 = vsub.f32 %v5317, %v5456
        %v5511 = vsub.f32 %v5318, %v5457
        %v5512 = vsub.f32 %v5319, %v5457
        %v5513 = vsub.f32 %v5320, %v5458
        %v5514 = vsub.f32 %v5321, %v5458
        %v5515 = vsub.f32 %v5322, %v5459
        %v5516 = vsub.f32 %v5323, %v5459
        %v5517 = vsub.f32 %v5324, %v5460
        %v5518 = vsub.f32 %v5325, %v5460
        %v5519 = vsub.f32 %v5326, %v5461
        %v5520 = vsub.f32 %v5327, %v5461
        %v5521 = vsub.f32 %v5328, %v5462
        %v5522 = vsub.f32 %v5329, %v5462
        %v5523 = vsub.f32 %v5330, %v5463
        %v5524 = vsub.f32 %v5331, %v5463
        %v5525 = vsub.f32 %v5332, %v5464
        %v5526 = vsub.f32 %v5333, %v5464
        %v5527 = vsub.f32 %v5334, %v5465
        %v5528 = vsub.f32 %v5335, %v5465
        %v5529 = vsub.f32 %v5336, %v5466
        %v5530 = vsub.f32 %v5337, %v5466
        %v5531 = vmul.f32 %v5467, %v5467
        %v5532 = vmul.f32 %v5468, %v5468
        %v5533 = vmul.f32 %v5469, %v5469
        %v5534 = vmul.f32 %v5470, %v5470
        %v5535 = vmul.f32 %v5471, %v5471
        %v5536 = vmul.f32 %v5472, %v5472
        %v5537 = vmul.f32 %v5473, %v5473
        %v5538 = vmul.f32 %v5474, %v5474
        %v5539 = vmul.f32 %v5475, %v5475
        %v5540 = vmul.f32 %v5476, %v5476
        %v5541 = vmul.f32 %v5477, %v5477
        %v5542 = vmul.f32 %v5478, %v5478
        %v5543 = vmul.f32 %v5479, %v5479
        %v5544 = vmul.f32 %v5480, %v5480
        %v5545 = vmul.f32 %v5481, %v5481
        %v5546 = vmul.f32 %v5482, %v5482
        %v5547 = vmul.f32 %v5483, %v5483
        %v5548 = vmul.f32 %v5484, %v5484
        %v5549 = vmul.f32 %v5485, %v5485
        %v5550 = vmul.f32 %v5486, %v5486
        %v5551 = vmul.f32 %v5487, %v5487
        %v5552 = vmul.f32 %v5488, %v5488
        %v5553 = vmul.f32 %v5489, %v5489
        %v5554 = vmul.f32 %v5490, %v5490
        %v5555 = vmul.f32 %v5491, %v5491
        %v5556 = vmul.f32 %v5492, %v5492
        %v5557 = vmul.f32 %v5493, %v5493
        %v5558 = vmul.f32 %v5494, %v5494
        %v5559 = vmul.f32 %v5495, %v5495
        %v5560 = vmul.f32 %v5496, %v5496
        %v5561 = vmul.f32 %v5497, %v5497
        %v5562 = vmul.f32 %v5498, %v5498
        %v5563 = vmul.f32 %v5499, %v5499
        %v5564 = vmul.f32 %v5500, %v5500
        %v5565 = vmul.f32 %v5501, %v5501
        %v5566 = vmul.f32 %v5502, %v5502
        %v5567 = vmul.f32 %v5503, %v5503
        %v5568 = vmul.f32 %v5504, %v5504
        %v5569 = vmul.f32 %v5505, %v5505
        %v5570 = vmul.f32 %v5506, %v5506
        %v5571 = vmul.f32 %v5507, %v5507
        %v5572 = vmul.f32 %v5508, %v5508
        %v5573 = vmul.f32 %v5509, %v5509
        %v5574 = vmul.f32 %v5510, %v5510
        %v5575 = vmul.f32 %v5511, %v5511
        %v5576 = vmul.f32 %v5512, %v5512
        %v5577 = vmul.f32 %v5513, %v5513
        %v5578 = vmul.f32 %v5514, %v5514
        %v5579 = vmul.f32 %v5515, %v5515
        %v5580 = vmul.f32 %v5516, %v5516
        %v5581 = vmul.f32 %v5517, %v5517
        %v5582 = vmul.f32 %v5518, %v5518
        %v5583 = vmul.f32 %v5519, %v5519
        %v5584 = vmul.f32 %v5520, %v5520
        %v5585 = vmul.f32 %v5521, %v5521
        %v5586 = vmul.f32 %v5522, %v5522
        %v5587 = vmul.f32 %v5523, %v5523
        %v5588 = vmul.f32 %v5524, %v5524
        %v5589 = vmul.f32 %v5525, %v5525
        %v5590 = vmul.f32 %v5526, %v5526
        %v5591 = vmul.f32 %v5527, %v5527
        %v5592 = vmul.f32 %v5528, %v5528
        %v5593 = vmul.f32 %v5529, %v5529
        %v5594 = vmul.f32 %v5530, %v5530
        %v5595 = vadd.f32 %v5531, %v5532
        %5596 = vadd.xlane.f32.xlu0 %v5595
        %v5597 = vpop.xlane.xlu0 %5596
        %v5598 = vadd.f32 %v5533, %v5534
        %5599 = vadd.xlane.f32.xlu0 %v5598
        %v5600 = vpop.xlane.xlu0 %5599
        %v5601 = vadd.f32 %v5535, %v5536
        %5602 = vadd.xlane.f32.xlu0 %v5601
        %v5603 = vpop.xlane.xlu0 %5602
        %v5604 = vadd.f32 %v5537, %v5538
        %5605 = vadd.xlane.f32.xlu0 %v5604
        %v5606 = vpop.xlane.xlu0 %5605
        %v5607 = vadd.f32 %v5539, %v5540
        %5608 = vadd.xlane.f32.xlu0 %v5607
        %v5609 = vpop.xlane.xlu0 %5608
        %v5610 = vadd.f32 %v5541, %v5542
        %5611 = vadd.xlane.f32.xlu0 %v5610
        %v5612 = vpop.xlane.xlu0 %5611
        %v5613 = vadd.f32 %v5543, %v5544
        %5614 = vadd.xlane.f32.xlu0 %v5613
        %v5615 = vpop.xlane.xlu0 %5614
        %v5616 = vadd.f32 %v5545, %v5546
        %5617 = vadd.xlane.f32.xlu0 %v5616
        %v5618 = vpop.xlane.xlu0 %5617
        %v5619 = vadd.f32 %v5547, %v5548
        %5620 = vadd.xlane.f32.xlu0 %v5619
        %v5621 = vpop.xlane.xlu0 %5620
        %v5622 = vadd.f32 %v5549, %v5550
        %5623 = vadd.xlane.f32.xlu0 %v5622
        %v5624 = vpop.xlane.xlu0 %5623
        %v5625 = vadd.f32 %v5551, %v5552
        %5626 = vadd.xlane.f32.xlu0 %v5625
        %v5627 = vpop.xlane.xlu0 %5626
        %v5628 = vadd.f32 %v5553, %v5554
        %5629 = vadd.xlane.f32.xlu0 %v5628
        %v5630 = vpop.xlane.xlu0 %5629
        %v5631 = vadd.f32 %v5555, %v5556
        %5632 = vadd.xlane.f32.xlu0 %v5631
        %v5633 = vpop.xlane.xlu0 %5632
        %v5634 = vadd.f32 %v5557, %v5558
        %5635 = vadd.xlane.f32.xlu0 %v5634
        %v5636 = vpop.xlane.xlu0 %5635
        %v5637 = vadd.f32 %v5559, %v5560
        %5638 = vadd.xlane.f32.xlu0 %v5637
        %v5639 = vpop.xlane.xlu0 %5638
        %v5640 = vadd.f32 %v5561, %v5562
        %5641 = vadd.xlane.f32.xlu0 %v5640
        %v5642 = vpop.xlane.xlu0 %5641
        %v5643 = vadd.f32 %v5563, %v5564
        %5644 = vadd.xlane.f32.xlu0 %v5643
        %v5645 = vpop.xlane.xlu0 %5644
        %v5646 = vadd.f32 %v5565, %v5566
        %5647 = vadd.xlane.f32.xlu0 %v5646
        %v5648 = vpop.xlane.xlu0 %5647
        %v5649 = vadd.f32 %v5567, %v5568
        %5650 = vadd.xlane.f32.xlu0 %v5649
        %v5651 = vpop.xlane.xlu0 %5650
        %v5652 = vadd.f32 %v5569, %v5570
        %5653 = vadd.xlane.f32.xlu0 %v5652
        %v5654 = vpop.xlane.xlu0 %5653
        %v5655 = vadd.f32 %v5571, %v5572
        %5656 = vadd.xlane.f32.xlu0 %v5655
        %v5657 = vpop.xlane.xlu0 %5656
        %v5658 = vadd.f32 %v5573, %v5574
        %5659 = vadd.xlane.f32.xlu0 %v5658
        %v5660 = vpop.xlane.xlu0 %5659
        %v5661 = vadd.f32 %v5575, %v5576
        %5662 = vadd.xlane.f32.xlu0 %v5661
        %v5663 = vpop.xlane.xlu0 %5662
        %v5664 = vadd.f32 %v5577, %v5578
        %5665 = vadd.xlane.f32.xlu0 %v5664
        %v5666 = vpop.xlane.xlu0 %5665
        %v5667 = vadd.f32 %v5579, %v5580
        %5668 = vadd.xlane.f32.xlu0 %v5667
        %v5669 = vpop.xlane.xlu0 %5668
        %v5670 = vadd.f32 %v5581, %v5582
        %5671 = vadd.xlane.f32.xlu0 %v5670
        %v5672 = vpop.xlane.xlu0 %5671
        %v5673 = vadd.f32 %v5583, %v5584
        %5674 = vadd.xlane.f32.xlu0 %v5673
        %v5675 = vpop.xlane.xlu0 %5674
        %v5676 = vadd.f32 %v5585, %v5586
        %5677 = vadd.xlane.f32.xlu0 %v5676
        %v5678 = vpop.xlane.xlu0 %5677
        %v5679 = vadd.f32 %v5587, %v5588
        %5680 = vadd.xlane.f32.xlu0 %v5679
        %v5681 = vpop.xlane.xlu0 %5680
        %v5682 = vadd.f32 %v5589, %v5590
        %5683 = vadd.xlane.f32.xlu0 %v5682
        %v5684 = vpop.xlane.xlu0 %5683
        %v5685 = vadd.f32 %v5591, %v5592
        %5686 = vadd.xlane.f32.xlu0 %v5685
        %v5687 = vpop.xlane.xlu0 %5686
        %v5688 = vadd.f32 %v5593, %v5594
        %5689 = vadd.xlane.f32.xlu0 %v5688
        %v5690 = vpop.xlane.xlu0 %5689
        %v5691 = vmul.f32 %v5597, %v5434
        %v5692 = vmul.f32 %v5600, %v5434
        %v5693 = vmul.f32 %v5603, %v5434
        %v5694 = vmul.f32 %v5606, %v5434
        %v5695 = vmul.f32 %v5609, %v5434
        %v5696 = vmul.f32 %v5612, %v5434
        %v5697 = vmul.f32 %v5615, %v5434
        %v5698 = vmul.f32 %v5618, %v5434
        %v5699 = vmul.f32 %v5621, %v5434
        %v5700 = vmul.f32 %v5624, %v5434
        %v5701 = vmul.f32 %v5627, %v5434
        %v5702 = vmul.f32 %v5630, %v5434
        %v5703 = vmul.f32 %v5633, %v5434
        %v5704 = vmul.f32 %v5636, %v5434
        %v5705 = vmul.f32 %v5639, %v5434
        %v5706 = vmul.f32 %v5642, %v5434
        %v5707 = vmul.f32 %v5645, %v5434
        %v5708 = vmul.f32 %v5648, %v5434
        %v5709 = vmul.f32 %v5651, %v5434
        %v5710 = vmul.f32 %v5654, %v5434
        %v5711 = vmul.f32 %v5657, %v5434
        %v5712 = vmul.f32 %v5660, %v5434
        %v5713 = vmul.f32 %v5663, %v5434
        %v5714 = vmul.f32 %v5666, %v5434
        %v5715 = vmul.f32 %v5669, %v5434
        %v5716 = vmul.f32 %v5672, %v5434
        %v5717 = vmul.f32 %v5675, %v5434
        %v5718 = vmul.f32 %v5678, %v5434
        %v5719 = vmul.f32 %v5681, %v5434
        %v5720 = vmul.f32 %v5684, %v5434
        %v5721 = vmul.f32 %v5687, %v5434
        %v5722 = vmul.f32 %v5690, %v5434
        %v5723 = vadd.f32 %v5691, 1e-12
        %v5724 = vadd.f32 %v5692, 1e-12
        %v5725 = vadd.f32 %v5693, 1e-12
        %v5726 = vadd.f32 %v5694, 1e-12
        %v5727 = vadd.f32 %v5695, 1e-12
        %v5728 = vadd.f32 %v5696, 1e-12
        %v5729 = vadd.f32 %v5697, 1e-12
        %v5730 = vadd.f32 %v5698, 1e-12
        %v5731 = vadd.f32 %v5699, 1e-12
        %v5732 = vadd.f32 %v5700, 1e-12
        %v5733 = vadd.f32 %v5701, 1e-12
        %v5734 = vadd.f32 %v5702, 1e-12
        %v5735 = vadd.f32 %v5703, 1e-12
        %v5736 = vadd.f32 %v5704, 1e-12
        %v5737 = vadd.f32 %v5705, 1e-12
        %v5738 = vadd.f32 %v5706, 1e-12
        %v5739 = vadd.f32 %v5707, 1e-12
        %v5740 = vadd.f32 %v5708, 1e-12
        %v5741 = vadd.f32 %v5709, 1e-12
        %v5742 = vadd.f32 %v5710, 1e-12
        %v5743 = vadd.f32 %v5711, 1e-12
        %v5744 = vadd.f32 %v5712, 1e-12
        %v5745 = vadd.f32 %v5713, 1e-12
        %v5746 = vadd.f32 %v5714, 1e-12
        %v5747 = vadd.f32 %v5715, 1e-12
        %v5748 = vadd.f32 %v5716, 1e-12
        %v5749 = vadd.f32 %v5717, 1e-12
        %v5750 = vadd.f32 %v5718, 1e-12
        %v5751 = vadd.f32 %v5719, 1e-12
        %v5752 = vadd.f32 %v5720, 1e-12
        %v5753 = vadd.f32 %v5721, 1e-12
        %v5754 = vadd.f32 %v5722, 1e-12
        %v5755 = vrsqrt.pop %v5723
        %v5756 = vrsqrt.pop %v5724
        %v5757 = vrsqrt.pop %v5725
        %v5758 = vrsqrt.pop %v5726
        %v5759 = vrsqrt.pop %v5727
        %v5760 = vrsqrt.pop %v5728
        %v5761 = vrsqrt.pop %v5729
        %v5762 = vrsqrt.pop %v5730
        %v5763 = vrsqrt.pop %v5731
        %v5764 = vrsqrt.pop %v5732
        %v5765 = vrsqrt.pop %v5733
        %v5766 = vrsqrt.pop %v5734
        %v5767 = vrsqrt.pop %v5735
        %v5768 = vrsqrt.pop %v5736
        %v5769 = vrsqrt.pop %v5737
        %v5770 = vrsqrt.pop %v5738
        %v5771 = vrsqrt.pop %v5739
        %v5772 = vrsqrt.pop %v5740
        %v5773 = vrsqrt.pop %v5741
        %v5774 = vrsqrt.pop %v5742
        %v5775 = vrsqrt.pop %v5743
        %v5776 = vrsqrt.pop %v5744
        %v5777 = vrsqrt.pop %v5745
        %v5778 = vrsqrt.pop %v5746
        %v5779 = vrsqrt.pop %v5747
        %v5780 = vrsqrt.pop %v5748
        %v5781 = vrsqrt.pop %v5749
        %v5782 = vrsqrt.pop %v5750
        %v5783 = vrsqrt.pop %v5751
        %v5784 = vrsqrt.pop %v5752
        %v5785 = vrsqrt.pop %v5753
        %v5786 = vrsqrt.pop %v5754
        %v5787 = vmul.f32 %v5467, %v5755
        %v5788 = vmul.f32 %v5468, %v5755
        %v5789 = vmul.f32 %v5469, %v5756
        %v5790 = vmul.f32 %v5470, %v5756
        %v5791 = vmul.f32 %v5471, %v5757
        %v5792 = vmul.f32 %v5472, %v5757
        %v5793 = vmul.f32 %v5473, %v5758
        %v5794 = vmul.f32 %v5474, %v5758
        %v5795 = vmul.f32 %v5475, %v5759
        %v5796 = vmul.f32 %v5476, %v5759
        %v5797 = vmul.f32 %v5477, %v5760
        %v5798 = vmul.f32 %v5478, %v5760
        %v5799 = vmul.f32 %v5479, %v5761
        %v5800 = vmul.f32 %v5480, %v5761
        %v5801 = vmul.f32 %v5481, %v5762
        %v5802 = vmul.f32 %v5482, %v5762
        %v5803 = vmul.f32 %v5483, %v5763
        %v5804 = vmul.f32 %v5484, %v5763
        %v5805 = vmul.f32 %v5485, %v5764
        %v5806 = vmul.f32 %v5486, %v5764
        %v5807 = vmul.f32 %v5487, %v5765
        %v5808 = vmul.f32 %v5488, %v5765
        %v5809 = vmul.f32 %v5489, %v5766
        %v5810 = vmul.f32 %v5490, %v5766
        %v5811 = vmul.f32 %v5491, %v5767
        %v5812 = vmul.f32 %v5492, %v5767
        %v5813 = vmul.f32 %v5493, %v5768
        %v5814 = vmul.f32 %v5494, %v5768
        %v5815 = vmul.f32 %v5495, %v5769
        %v5816 = vmul.f32 %v5496, %v5769
        %v5817 = vmul.f32 %v5497, %v5770
        %v5818 = vmul.f32 %v5498, %v5770
        %v5819 = vmul.f32 %v5499, %v5771
        %v5820 = vmul.f32 %v5500, %v5771
        %v5821 = vmul.f32 %v5501, %v5772
        %v5822 = vmul.f32 %v5502, %v5772
        %v5823 = vmul.f32 %v5503, %v5773
        %v5824 = vmul.f32 %v5504, %v5773
        %v5825 = vmul.f32 %v5505, %v5774
        %v5826 = vmul.f32 %v5506, %v5774
        %v5827 = vmul.f32 %v5507, %v5775
        %v5828 = vmul.f32 %v5508, %v5775
        %v5829 = vmul.f32 %v5509, %v5776
        %v5830 = vmul.f32 %v5510, %v5776
        %v5831 = vmul.f32 %v5511, %v5777
        %v5832 = vmul.f32 %v5512, %v5777
        %v5833 = vmul.f32 %v5513, %v5778
        %v5834 = vmul.f32 %v5514, %v5778
        %v5835 = vmul.f32 %v5515, %v5779
        %v5836 = vmul.f32 %v5516, %v5779
        %v5837 = vmul.f32 %v5517, %v5780
        %v5838 = vmul.f32 %v5518, %v5780
        %v5839 = vmul.f32 %v5519, %v5781
        %v5840 = vmul.f32 %v5520, %v5781
        %v5841 = vmul.f32 %v5521, %v5782
        %v5842 = vmul.f32 %v5522, %v5782
        %v5843 = vmul.f32 %v5523, %v5783
        %v5844 = vmul.f32 %v5524, %v5783
        %v5845 = vmul.f32 %v5525, %v5784
        %v5846 = vmul.f32 %v5526, %v5784
        %v5847 = vmul.f32 %v5527, %v5785
        %v5848 = vmul.f32 %v5528, %v5785
        %v5849 = vmul.f32 %v5529, %v5786
        %v5850 = vmul.f32 %v5530, %v5786
        %v5852 = vlaneseq
        %v5853 = vshrl.u32 %v5852, 7
        %v5854 = vsub.s32 0, %v5853
        %v5855 = vrot.slane %v5273, %v5854
        %v5856 = vlaneseq
        %v5857 = vshrl.u32 %v5856, 7
        %v5858 = vsub.s32 2, %v5857
        %v5859 = vrot.slane %v5273, %v5858
        %v5862 = vlaneseq
        %v5863 = vshrl.u32 %v5862, 7
        %v5864 = vsub.s32 0, %v5863
        %v5865 = vrot.slane %v5855, %v5864
        %v5866 = vlaneseq
        %v5867 = vshrl.u32 %v5866, 7
        %v5868 = vsub.s32 0, %v5867
        %v5869 = vrot.slane %v5859, %v5868
        %v5870 = vmul.f32 %v5787, %v5865
        %v5871 = vmul.f32 %v5788, %v5869
        %v5872 = vmul.f32 %v5789, %v5865
        %v5873 = vmul.f32 %v5790, %v5869
        %v5874 = vmul.f32 %v5791, %v5865
        %v5875 = vmul.f32 %v5792, %v5869
        %v5876 = vmul.f32 %v5793, %v5865
        %v5877 = vmul.f32 %v5794, %v5869
        %v5878 = vmul.f32 %v5795, %v5865
        %v5879 = vmul.f32 %v5796, %v5869
        %v5880 = vmul.f32 %v5797, %v5865
        %v5881 = vmul.f32 %v5798, %v5869
        %v5882 = vmul.f32 %v5799, %v5865
        %v5883 = vmul.f32 %v5800, %v5869
        %v5884 = vmul.f32 %v5801, %v5865
        %v5885 = vmul.f32 %v5802, %v5869
        %v5886 = vmul.f32 %v5803, %v5865
        %v5887 = vmul.f32 %v5804, %v5869
        %v5888 = vmul.f32 %v5805, %v5865
        %v5889 = vmul.f32 %v5806, %v5869
        %v5890 = vmul.f32 %v5807, %v5865
        %v5891 = vmul.f32 %v5808, %v5869
        %v5892 = vmul.f32 %v5809, %v5865
        %v5893 = vmul.f32 %v5810, %v5869
        %v5894 = vmul.f32 %v5811, %v5865
        %v5895 = vmul.f32 %v5812, %v5869
        %v5896 = vmul.f32 %v5813, %v5865
        %v5897 = vmul.f32 %v5814, %v5869
        %v5898 = vmul.f32 %v5815, %v5865
        %v5899 = vmul.f32 %v5816, %v5869
        %v5900 = vmul.f32 %v5817, %v5865
        %v5901 = vmul.f32 %v5818, %v5869
        %v5902 = vmul.f32 %v5819, %v5865
        %v5903 = vmul.f32 %v5820, %v5869
        %v5904 = vmul.f32 %v5821, %v5865
        %v5905 = vmul.f32 %v5822, %v5869
        %v5906 = vmul.f32 %v5823, %v5865
        %v5907 = vmul.f32 %v5824, %v5869
        %v5908 = vmul.f32 %v5825, %v5865
        %v5909 = vmul.f32 %v5826, %v5869
        %v5910 = vmul.f32 %v5827, %v5865
        %v5911 = vmul.f32 %v5828, %v5869
        %v5912 = vmul.f32 %v5829, %v5865
        %v5913 = vmul.f32 %v5830, %v5869
        %v5914 = vmul.f32 %v5831, %v5865
        %v5915 = vmul.f32 %v5832, %v5869
        %v5916 = vmul.f32 %v5833, %v5865
        %v5917 = vmul.f32 %v5834, %v5869
        %v5918 = vmul.f32 %v5835, %v5865
        %v5919 = vmul.f32 %v5836, %v5869
        %v5920 = vmul.f32 %v5837, %v5865
        %v5921 = vmul.f32 %v5838, %v5869
        %v5922 = vmul.f32 %v5839, %v5865
        %v5923 = vmul.f32 %v5840, %v5869
        %v5924 = vmul.f32 %v5841, %v5865
        %v5925 = vmul.f32 %v5842, %v5869
        %v5926 = vmul.f32 %v5843, %v5865
        %v5927 = vmul.f32 %v5844, %v5869
        %v5928 = vmul.f32 %v5845, %v5865
        %v5929 = vmul.f32 %v5846, %v5869
        %v5930 = vmul.f32 %v5847, %v5865
        %v5931 = vmul.f32 %v5848, %v5869
        %v5932 = vmul.f32 %v5849, %v5865
        %v5933 = vmul.f32 %v5850, %v5869
        %v5934 = vlaneseq
        %v5935 = vshrl.u32 %v5934, 7
        %v5936 = vsub.s32 1, %v5935
        %v5937 = vrot.slane %v5273, %v5936
        %v5938 = vlaneseq
        %v5939 = vshrl.u32 %v5938, 7
        %v5940 = vsub.s32 3, %v5939
        %v5941 = vrot.slane %v5273, %v5940
        %v5944 = vlaneseq
        %v5945 = vshrl.u32 %v5944, 7
        %v5946 = vsub.s32 1, %v5945
        %v5947 = vrot.slane %v5937, %v5946
        %v5948 = vlaneseq
        %v5949 = vshrl.u32 %v5948, 7
        %v5950 = vsub.s32 1, %v5949
        %v5951 = vrot.slane %v5941, %v5950
        %v5952 = vadd.f32 %v5870, %v5947
        %v5953 = vadd.f32 %v5871, %v5951
        %v5954 = vadd.f32 %v5872, %v5947
        %v5955 = vadd.f32 %v5873, %v5951
        %v5956 = vadd.f32 %v5874, %v5947
        %v5957 = vadd.f32 %v5875, %v5951
        %v5958 = vadd.f32 %v5876, %v5947
        %v5959 = vadd.f32 %v5877, %v5951
        %v5960 = vadd.f32 %v5878, %v5947
        %v5961 = vadd.f32 %v5879, %v5951
        %v5962 = vadd.f32 %v5880, %v5947
        %v5963 = vadd.f32 %v5881, %v5951
        %v5964 = vadd.f32 %v5882, %v5947
        %v5965 = vadd.f32 %v5883, %v5951
        %v5966 = vadd.f32 %v5884, %v5947
        %v5967 = vadd.f32 %v5885, %v5951
        %v5968 = vadd.f32 %v5886, %v5947
        %v5969 = vadd.f32 %v5887, %v5951
        %v5970 = vadd.f32 %v5888, %v5947
        %v5971 = vadd.f32 %v5889, %v5951
        %v5972 = vadd.f32 %v5890, %v5947
        %v5973 = vadd.f32 %v5891, %v5951
        %v5974 = vadd.f32 %v5892, %v5947
        %v5975 = vadd.f32 %v5893, %v5951
        %v5976 = vadd.f32 %v5894, %v5947
        %v5977 = vadd.f32 %v5895, %v5951
        %v5978 = vadd.f32 %v5896, %v5947
        %v5979 = vadd.f32 %v5897, %v5951
        %v5980 = vadd.f32 %v5898, %v5947
        %v5981 = vadd.f32 %v5899, %v5951
        %v5982 = vadd.f32 %v5900, %v5947
        %v5983 = vadd.f32 %v5901, %v5951
        %v5984 = vadd.f32 %v5902, %v5947
        %v5985 = vadd.f32 %v5903, %v5951
        %v5986 = vadd.f32 %v5904, %v5947
        %v5987 = vadd.f32 %v5905, %v5951
        %v5988 = vadd.f32 %v5906, %v5947
        %v5989 = vadd.f32 %v5907, %v5951
        %v5990 = vadd.f32 %v5908, %v5947
        %v5991 = vadd.f32 %v5909, %v5951
        %v5992 = vadd.f32 %v5910, %v5947
        %v5993 = vadd.f32 %v5911, %v5951
        %v5994 = vadd.f32 %v5912, %v5947
        %v5995 = vadd.f32 %v5913, %v5951
        %v5996 = vadd.f32 %v5914, %v5947
        %v5997 = vadd.f32 %v5915, %v5951
        %v5998 = vadd.f32 %v5916, %v5947
        %v5999 = vadd.f32 %v5917, %v5951
        %v6000 = vadd.f32 %v5918, %v5947
        %v6001 = vadd.f32 %v5919, %v5951
        %v6002 = vadd.f32 %v5920, %v5947
        %v6003 = vadd.f32 %v5921, %v5951
        %v6004 = vadd.f32 %v5922, %v5947
        %v6005 = vadd.f32 %v5923, %v5951
        %v6006 = vadd.f32 %v5924, %v5947
        %v6007 = vadd.f32 %v5925, %v5951
        %v6008 = vadd.f32 %v5926, %v5947
        %v6009 = vadd.f32 %v5927, %v5951
        %v6010 = vadd.f32 %v5928, %v5947
        %v6011 = vadd.f32 %v5929, %v5951
        %v6012 = vadd.f32 %v5930, %v5947
        %v6013 = vadd.f32 %v5931, %v5951
        %v6014 = vadd.f32 %v5932, %v5947
        %v6015 = vadd.f32 %v5933, %v5951
        %v6016 = vpack.c.bf16 %v5954, %v5952
        %v6017 = vpack.c.bf16 %v5955, %v5953
        %v6018 = vpack.c.bf16 %v5958, %v5956
        %v6019 = vpack.c.bf16 %v5959, %v5957
        %v6020 = vpack.c.bf16 %v5962, %v5960
        %v6021 = vpack.c.bf16 %v5963, %v5961
        %v6022 = vpack.c.bf16 %v5966, %v5964
        %v6023 = vpack.c.bf16 %v5967, %v5965
        %v6024 = vpack.c.bf16 %v5970, %v5968
        %v6025 = vpack.c.bf16 %v5971, %v5969
        %v6026 = vpack.c.bf16 %v5974, %v5972
        %v6027 = vpack.c.bf16 %v5975, %v5973
        %v6028 = vpack.c.bf16 %v5978, %v5976
        %v6029 = vpack.c.bf16 %v5979, %v5977
        %v6030 = vpack.c.bf16 %v5982, %v5980
        %v6031 = vpack.c.bf16 %v5983, %v5981
        %v6032 = vpack.c.bf16 %v5986, %v5984
        %v6033 = vpack.c.bf16 %v5987, %v5985
        %v6034 = vpack.c.bf16 %v5990, %v5988
        %v6035 = vpack.c.bf16 %v5991, %v5989
        %v6036 = vpack.c.bf16 %v5994, %v5992
        %v6037 = vpack.c.bf16 %v5995, %v5993
        %v6038 = vpack.c.bf16 %v5998, %v5996
        %v6039 = vpack.c.bf16 %v5999, %v5997
        %v6040 = vpack.c.bf16 %v6002, %v6000
        %v6041 = vpack.c.bf16 %v6003, %v6001
        %v6042 = vpack.c.bf16 %v6006, %v6004
        %v6043 = vpack.c.bf16 %v6007, %v6005
        %v6044 = vpack.c.bf16 %v6010, %v6008
        %v6045 = vpack.c.bf16 %v6011, %v6009
        %v6046 = vpack.c.bf16 %v6014, %v6012
        %v6047 = vpack.c.bf16 %v6015, %v6013
        %v6048 = vld [vmem:[%s650] sm:$0xff]
        %v6049 = vld [vmem:[%s650 + $0x8] sm:$0xff]
        %v6050 = vld [vmem:[%s650 + $0x10] sm:$0xff]
        %v6051 = vld [vmem:[%s650 + $0x18] sm:$0xff]
        %v6052 = vld [vmem:[%s650 + $0x20] sm:$0xff]
        %v6053 = vld [vmem:[%s650 + $0x28] sm:$0xff]
        %v6054 = vld [vmem:[%s650 + $0x30] sm:$0xff]
        %v6055 = vld [vmem:[%s650 + $0x38] sm:$0xff]
        %v6056 = vld [vmem:[%s650 + $0x40] sm:$0xff]
        %v6057 = vld [vmem:[%s650 + $0x48] sm:$0xff]
        %v6058 = vld [vmem:[%s650 + $0x50] sm:$0xff]
        %v6059 = vld [vmem:[%s650 + $0x58] sm:$0xff]
        %v6060 = vld [vmem:[%s650 + $0x60] sm:$0xff]
        %v6061 = vld [vmem:[%s650 + $0x68] sm:$0xff]
        %v6062 = vld [vmem:[%s650 + $0x70] sm:$0xff]
        %v6063 = vld [vmem:[%s650 + $0x78] sm:$0xff]
        %v6064 = vld [vmem:[%s650 + $0x80] sm:$0xff]
        %v6065 = vld [vmem:[%s650 + $0x88] sm:$0xff]
        %v6066 = vld [vmem:[%s650 + $0x90] sm:$0xff]
        %v6067 = vld [vmem:[%s650 + $0x98] sm:$0xff]
        %v6068 = vld [vmem:[%s650 + $0xa0] sm:$0xff]
        %v6069 = vld [vmem:[%s650 + $0xa8] sm:$0xff]
        %v6070 = vld [vmem:[%s650 + $0xb0] sm:$0xff]
        %v6071 = vld [vmem:[%s650 + $0xb8] sm:$0xff]
        %v6072 = vld [vmem:[%s650 + $0xc0] sm:$0xff]
        %v6073 = vld [vmem:[%s650 + $0xc8] sm:$0xff]
        %v6074 = vld [vmem:[%s650 + $0xd0] sm:$0xff]
        %v6075 = vld [vmem:[%s650 + $0xd8] sm:$0xff]
        %v6076 = vld [vmem:[%s650 + $0xe0] sm:$0xff]
        %v6077 = vld [vmem:[%s650 + $0xe8] sm:$0xff]
        %v6078 = vld [vmem:[%s650 + $0xf0] sm:$0xff]
        %v6079 = vld [vmem:[%s650 + $0xf8] sm:$0xff]
        %v6080 = vld [vmem:[%s650 + $0x100] sm:$0xff]
        %v6081 = vld [vmem:[%s650 + $0x108] sm:$0xff]
        %v6082 = vld [vmem:[%s650 + $0x110] sm:$0xff]
        %v6083 = vld [vmem:[%s650 + $0x118] sm:$0xff]
        %v6084 = vld [vmem:[%s650 + $0x120] sm:$0xff]
        %v6085 = vld [vmem:[%s650 + $0x128] sm:$0xff]
        %v6086 = vld [vmem:[%s650 + $0x130] sm:$0xff]
        %v6087 = vld [vmem:[%s650 + $0x138] sm:$0xff]
        %v6088 = vld [vmem:[%s650 + $0x140] sm:$0xff]
        %v6089 = vld [vmem:[%s650 + $0x148] sm:$0xff]
        %v6090 = vld [vmem:[%s650 + $0x150] sm:$0xff]
        %v6091 = vld [vmem:[%s650 + $0x158] sm:$0xff]
        %v6092 = vld [vmem:[%s650 + $0x160] sm:$0xff]
        %v6093 = vld [vmem:[%s650 + $0x168] sm:$0xff]
        %v6094 = vld [vmem:[%s650 + $0x170] sm:$0xff]
        %v6095 = vld [vmem:[%s650 + $0x178] sm:$0xff]
        %v6096 = vld [vmem:[%s650 + $0x180] sm:$0xff]
        %v6097 = vld [vmem:[%s650 + $0x188] sm:$0xff]
        %v6098 = vld [vmem:[%s650 + $0x190] sm:$0xff]
        %v6099 = vld [vmem:[%s650 + $0x198] sm:$0xff]
        %v6100 = vld [vmem:[%s650 + $0x1a0] sm:$0xff]
        %v6101 = vld [vmem:[%s650 + $0x1a8] sm:$0xff]
        %v6102 = vld [vmem:[%s650 + $0x1b0] sm:$0xff]
        %v6103 = vld [vmem:[%s650 + $0x1b8] sm:$0xff]
        %v6104 = vld [vmem:[%s650 + $0x1c0] sm:$0xff]
        %v6105 = vld [vmem:[%s650 + $0x1c8] sm:$0xff]
        %v6106 = vld [vmem:[%s650 + $0x1d0] sm:$0xff]
        %v6107 = vld [vmem:[%s650 + $0x1d8] sm:$0xff]
        %v6108 = vld [vmem:[%s650 + $0x1e0] sm:$0xff]
        %v6109 = vld [vmem:[%s650 + $0x1e8] sm:$0xff]
        %v6110 = vld [vmem:[%s650 + $0x1f0] sm:$0xff]
        %v6111 = vld [vmem:[%s650 + $0x1f8] sm:$0xff]
        %v6112 = vld [vmem:[%s753] sm:$0xf]
        %v6114 = vlaneseq
        %v6115 = vshrl.u32 %v6114, 7
        %v6116 = vsub.s32 0, %v6115
        %v6117 = vrot.slane %v6112, %v6116
        %v6118 = vlaneseq
        %v6119 = vshrl.u32 %v6118, 7
        %v6120 = vsub.s32 1, %v6119
        %v6121 = vrot.slane %v6112, %v6120
        %v6122 = vlaneseq
        %v6123 = vshrl.u32 %v6122, 7
        %v6124 = vsub.s32 2, %v6123
        %v6125 = vrot.slane %v6112, %v6124
        %v6126 = vlaneseq
        %v6127 = vshrl.u32 %v6126, 7
        %v6128 = vsub.s32 3, %v6127
        %v6129 = vrot.slane %v6112, %v6128
        %v6198 = vunpack.c.l.b16 %v6048
        %v6199 = vunpack.c.h.b16 %v6048
        %v6200 = vunpack.c.l.b16 %v6049
        %v6201 = vunpack.c.h.b16 %v6049
        %v6202 = vunpack.c.l.b16 %v6050
        %v6203 = vunpack.c.h.b16 %v6050
        %v6204 = vunpack.c.l.b16 %v6051
        %v6205 = vunpack.c.h.b16 %v6051
        %v6206 = vunpack.c.l.b16 %v6052
        %v6207 = vunpack.c.h.b16 %v6052
        %v6208 = vunpack.c.l.b16 %v6053
        %v6209 = vunpack.c.h.b16 %v6053
        %v6210 = vunpack.c.l.b16 %v6054
        %v6211 = vunpack.c.h.b16 %v6054
        %v6212 = vunpack.c.l.b16 %v6055
        %v6213 = vunpack.c.h.b16 %v6055
        %v6214 = vunpack.c.l.b16 %v6056
        %v6215 = vunpack.c.h.b16 %v6056
        %v6216 = vunpack.c.l.b16 %v6057
        %v6217 = vunpack.c.h.b16 %v6057
        %v6218 = vunpack.c.l.b16 %v6058
        %v6219 = vunpack.c.h.b16 %v6058
        %v6220 = vunpack.c.l.b16 %v6059
        %v6221 = vunpack.c.h.b16 %v6059
        %v6222 = vunpack.c.l.b16 %v6060
        %v6223 = vunpack.c.h.b16 %v6060
        %v6224 = vunpack.c.l.b16 %v6061
        %v6225 = vunpack.c.h.b16 %v6061
        %v6226 = vunpack.c.l.b16 %v6062
        %v6227 = vunpack.c.h.b16 %v6062
        %v6228 = vunpack.c.l.b16 %v6063
        %v6229 = vunpack.c.h.b16 %v6063
        %v6230 = vunpack.c.l.b16 %v6064
        %v6231 = vunpack.c.h.b16 %v6064
        %v6232 = vunpack.c.l.b16 %v6065
        %v6233 = vunpack.c.h.b16 %v6065
        %v6234 = vunpack.c.l.b16 %v6066
        %v6235 = vunpack.c.h.b16 %v6066
        %v6236 = vunpack.c.l.b16 %v6067
        %v6237 = vunpack.c.h.b16 %v6067
        %v6238 = vunpack.c.l.b16 %v6068
        %v6239 = vunpack.c.h.b16 %v6068
        %v6240 = vunpack.c.l.b16 %v6069
        %v6241 = vunpack.c.h.b16 %v6069
        %v6242 = vunpack.c.l.b16 %v6070
        %v6243 = vunpack.c.h.b16 %v6070
        %v6244 = vunpack.c.l.b16 %v6071
        %v6245 = vunpack.c.h.b16 %v6071
        %v6246 = vunpack.c.l.b16 %v6072
        %v6247 = vunpack.c.h.b16 %v6072
        %v6248 = vunpack.c.l.b16 %v6073
        %v6249 = vunpack.c.h.b16 %v6073
        %v6250 = vunpack.c.l.b16 %v6074
        %v6251 = vunpack.c.h.b16 %v6074
        %v6252 = vunpack.c.l.b16 %v6075
        %v6253 = vunpack.c.h.b16 %v6075
        %v6254 = vunpack.c.l.b16 %v6076
        %v6255 = vunpack.c.h.b16 %v6076
        %v6256 = vunpack.c.l.b16 %v6077
        %v6257 = vunpack.c.h.b16 %v6077
        %v6258 = vunpack.c.l.b16 %v6078
        %v6259 = vunpack.c.h.b16 %v6078
        %v6260 = vunpack.c.l.b16 %v6079
        %v6261 = vunpack.c.h.b16 %v6079
        %v6262 = vunpack.c.l.b16 %v6080
        %v6263 = vunpack.c.h.b16 %v6080
        %v6264 = vunpack.c.l.b16 %v6081
        %v6265 = vunpack.c.h.b16 %v6081
        %v6266 = vunpack.c.l.b16 %v6082
        %v6267 = vunpack.c.h.b16 %v6082
        %v6268 = vunpack.c.l.b16 %v6083
        %v6269 = vunpack.c.h.b16 %v6083
        %v6270 = vunpack.c.l.b16 %v6084
        %v6271 = vunpack.c.h.b16 %v6084
        %v6272 = vunpack.c.l.b16 %v6085
        %v6273 = vunpack.c.h.b16 %v6085
        %v6274 = vunpack.c.l.b16 %v6086
        %v6275 = vunpack.c.h.b16 %v6086
        %v6276 = vunpack.c.l.b16 %v6087
        %v6277 = vunpack.c.h.b16 %v6087
        %v6278 = vunpack.c.l.b16 %v6088
        %v6279 = vunpack.c.h.b16 %v6088
        %v6280 = vunpack.c.l.b16 %v6089
        %v6281 = vunpack.c.h.b16 %v6089
        %v6282 = vunpack.c.l.b16 %v6090
        %v6283 = vunpack.c.h.b16 %v6090
        %v6284 = vunpack.c.l.b16 %v6091
        %v6285 = vunpack.c.h.b16 %v6091
        %v6286 = vunpack.c.l.b16 %v6092
        %v6287 = vunpack.c.h.b16 %v6092
        %v6288 = vunpack.c.l.b16 %v6093
        %v6289 = vunpack.c.h.b16 %v6093
        %v6290 = vunpack.c.l.b16 %v6094
        %v6291 = vunpack.c.h.b16 %v6094
        %v6292 = vunpack.c.l.b16 %v6095
        %v6293 = vunpack.c.h.b16 %v6095
        %v6294 = vunpack.c.l.b16 %v6096
        %v6295 = vunpack.c.h.b16 %v6096
        %v6296 = vunpack.c.l.b16 %v6097
        %v6297 = vunpack.c.h.b16 %v6097
        %v6298 = vunpack.c.l.b16 %v6098
        %v6299 = vunpack.c.h.b16 %v6098
        %v6300 = vunpack.c.l.b16 %v6099
        %v6301 = vunpack.c.h.b16 %v6099
        %v6302 = vunpack.c.l.b16 %v6100
        %v6303 = vunpack.c.h.b16 %v6100
        %v6304 = vunpack.c.l.b16 %v6101
        %v6305 = vunpack.c.h.b16 %v6101
        %v6306 = vunpack.c.l.b16 %v6102
        %v6307 = vunpack.c.h.b16 %v6102
        %v6308 = vunpack.c.l.b16 %v6103
        %v6309 = vunpack.c.h.b16 %v6103
        %v6310 = vunpack.c.l.b16 %v6104
        %v6311 = vunpack.c.h.b16 %v6104
        %v6312 = vunpack.c.l.b16 %v6105
        %v6313 = vunpack.c.h.b16 %v6105
        %v6314 = vunpack.c.l.b16 %v6106
        %v6315 = vunpack.c.h.b16 %v6106
        %v6316 = vunpack.c.l.b16 %v6107
        %v6317 = vunpack.c.h.b16 %v6107
        %v6318 = vunpack.c.l.b16 %v6108
        %v6319 = vunpack.c.h.b16 %v6108
        %v6320 = vunpack.c.l.b16 %v6109
        %v6321 = vunpack.c.h.b16 %v6109
        %v6322 = vunpack.c.l.b16 %v6110
        %v6323 = vunpack.c.h.b16 %v6110
        %v6324 = vunpack.c.l.b16 %v6111
        %v6325 = vunpack.c.h.b16 %v6111
        %v6326 = vpack.c.b16 %v6202, %v6198
        %v6327 = vpack.c.b16 %v6203, %v6199
        %v6328 = vpack.c.b16 %v6204, %v6200
        %v6329 = vpack.c.b16 %v6205, %v6201
        %v6330 = vpack.c.b16 %v6210, %v6206
        %v6331 = vpack.c.b16 %v6211, %v6207
        %v6332 = vpack.c.b16 %v6212, %v6208
        %v6333 = vpack.c.b16 %v6213, %v6209
        %v6334 = vpack.c.b16 %v6218, %v6214
        %v6335 = vpack.c.b16 %v6219, %v6215
        %v6336 = vpack.c.b16 %v6220, %v6216
        %v6337 = vpack.c.b16 %v6221, %v6217
        %v6338 = vpack.c.b16 %v6226, %v6222
        %v6339 = vpack.c.b16 %v6227, %v6223
        %v6340 = vpack.c.b16 %v6228, %v6224
        %v6341 = vpack.c.b16 %v6229, %v6225
        %v6342 = vpack.c.b16 %v6234, %v6230
        %v6343 = vpack.c.b16 %v6235, %v6231
        %v6344 = vpack.c.b16 %v6236, %v6232
        %v6345 = vpack.c.b16 %v6237, %v6233
        %v6346 = vpack.c.b16 %v6242, %v6238
        %v6347 = vpack.c.b16 %v6243, %v6239
        %v6348 = vpack.c.b16 %v6244, %v6240
        %v6349 = vpack.c.b16 %v6245, %v6241
        %v6350 = vpack.c.b16 %v6250, %v6246
        %v6351 = vpack.c.b16 %v6251, %v6247
        %v6352 = vpack.c.b16 %v6252, %v6248
        %v6353 = vpack.c.b16 %v6253, %v6249
        %v6354 = vpack.c.b16 %v6258, %v6254
        %v6355 = vpack.c.b16 %v6259, %v6255
        %v6356 = vpack.c.b16 %v6260, %v6256
        %v6357 = vpack.c.b16 %v6261, %v6257
        %v6358 = vpack.c.b16 %v6266, %v6262
        %v6359 = vpack.c.b16 %v6267, %v6263
        %v6360 = vpack.c.b16 %v6268, %v6264
        %v6361 = vpack.c.b16 %v6269, %v6265
        %v6362 = vpack.c.b16 %v6274, %v6270
        %v6363 = vpack.c.b16 %v6275, %v6271
        %v6364 = vpack.c.b16 %v6276, %v6272
        %v6365 = vpack.c.b16 %v6277, %v6273
        %v6366 = vpack.c.b16 %v6282, %v6278
        %v6367 = vpack.c.b16 %v6283, %v6279
        %v6368 = vpack.c.b16 %v6284, %v6280
        %v6369 = vpack.c.b16 %v6285, %v6281
        %v6370 = vpack.c.b16 %v6290, %v6286
        %v6371 = vpack.c.b16 %v6291, %v6287
        %v6372 = vpack.c.b16 %v6292, %v6288
        %v6373 = vpack.c.b16 %v6293, %v6289
        %v6374 = vpack.c.b16 %v6298, %v6294
        %v6375 = vpack.c.b16 %v6299, %v6295
        %v6376 = vpack.c.b16 %v6300, %v6296
        %v6377 = vpack.c.b16 %v6301, %v6297
        %v6378 = vpack.c.b16 %v6306, %v6302
        %v6379 = vpack.c.b16 %v6307, %v6303
        %v6380 = vpack.c.b16 %v6308, %v6304
        %v6381 = vpack.c.b16 %v6309, %v6305
        %v6382 = vpack.c.b16 %v6314, %v6310
        %v6383 = vpack.c.b16 %v6315, %v6311
        %v6384 = vpack.c.b16 %v6316, %v6312
        %v6385 = vpack.c.b16 %v6317, %v6313
        %v6386 = vpack.c.b16 %v6322, %v6318
        %v6387 = vpack.c.b16 %v6323, %v6319
        %v6388 = vpack.c.b16 %v6324, %v6320
        %v6389 = vpack.c.b16 %v6325, %v6321
        %6454 = vmatprep.subr.bf16.mxu0 %v6327
        %6455 = vmatpush1.bf16.msra.mxu0 %v6326
        %6456 = vmatprep.subr.bf16.mxu0 %v6331
        %6457 = vmatpush1.bf16.msra.mxu0 %v6330
        %6458 = vmatprep.subr.bf16.mxu0 %v6335
        %6459 = vmatpush1.bf16.msra.mxu0 %v6334
        %6460 = vmatprep.subr.bf16.mxu0 %v6339
        %6461 = vmatpush1.bf16.msra.mxu0 %v6338
        %6462 = vmatprep.subr.bf16.mxu0 %v6343
        %6463 = vmatpush1.bf16.msra.mxu0 %v6342
        %6464 = vmatprep.subr.bf16.mxu0 %v6347
        %6465 = vmatpush1.bf16.msra.mxu0 %v6346
        %6466 = vmatprep.subr.bf16.mxu0 %v6351
        %6467 = vmatpush1.bf16.msra.mxu0 %v6350
        %6468 = vmatprep.subr.bf16.mxu0 %v6355
        %6469 = vmatpush1.bf16.msra.mxu0 %v6354
        %6470 = vmatprep.subr.bf16.mxu0 %v6359
        %6471 = vmatpush1.bf16.msra.mxu0 %v6358
        %6472 = vmatprep.subr.bf16.mxu0 %v6363
        %6473 = vmatpush1.bf16.msra.mxu0 %v6362
        %6474 = vmatprep.subr.bf16.mxu0 %v6367
        %6475 = vmatpush1.bf16.msra.mxu0 %v6366
        %6476 = vmatprep.subr.bf16.mxu0 %v6371
        %6477 = vmatpush1.bf16.msra.mxu0 %v6370
        %6478 = vmatprep.subr.bf16.mxu0 %v6375
        %6479 = vmatpush1.bf16.msra.mxu0 %v6374
        %6480 = vmatprep.subr.bf16.mxu0 %v6379
        %6481 = vmatpush1.bf16.msra.mxu0 %v6378
        %6482 = vmatprep.subr.bf16.mxu0 %v6383
        %6483 = vmatpush1.bf16.msra.mxu0 %v6382
        %6484 = vmatprep.subr.bf16.mxu0 %v6387
        %6485 = vmatpush1.bf16.msra.mxu0 %v6386
        %6486 = vmatprep.mubr.bf16.mxu0 %v6017
        %6487 = vmatmul.mubr.bf16.gmra.mrb[0].mxu0 %v6016
        %v6488 = vpop.f32.mrb[0].mxu0
        %v6489 = vadd.f32 %v6117, %v6488
        %v6490 = vpop.f32.mrb[0].mxu0
        %v6491 = vadd.f32 %v6121, %v6490
        %v6492 = vpop.f32.mrb[0].mxu0
        %v6493 = vadd.f32 %v6117, %v6492
        %v6494 = vpop.f32.mrb[0].mxu0
        %v6495 = vadd.f32 %v6121, %v6494
        %6496 = vmatprep.mubr.bf16.mxu0 %v6019
        %6497 = vmatmul.mubr.bf16.gmra.mrb[0].mxu0 %v6018
        %v6498 = vpop.f32.mrb[0].mxu0
        %v6499 = vadd.f32 %v6117, %v6498
        %v6500 = vpop.f32.mrb[0].mxu0
        %v6501 = vadd.f32 %v6121, %v6500
        %v6502 = vpop.f32.mrb[0].mxu0
        %v6503 = vadd.f32 %v6117, %v6502
        %v6504 = vpop.f32.mrb[0].mxu0
        %v6505 = vadd.f32 %v6121, %v6504
        %6506 = vmatprep.mubr.bf16.mxu0 %v6021
        %6507 = vmatmul.mubr.bf16.gmra.mrb[0].mxu0 %v6020
        %v6508 = vpop.f32.mrb[0].mxu0
        %v6509 = vadd.f32 %v6117, %v6508
        %v6510 = vpop.f32.mrb[0].mxu0
        %v6511 = vadd.f32 %v6121, %v6510
        %v6512 = vpop.f32.mrb[0].mxu0
        %v6513 = vadd.f32 %v6117, %v6512
        %v6514 = vpop.f32.mrb[0].mxu0
        %v6515 = vadd.f32 %v6121, %v6514
        %6516 = vmatprep.mubr.bf16.mxu0 %v6023
        %6517 = vmatmul.mubr.bf16.gmra.mrb[0].mxu0 %v6022
        %v6518 = vpop.f32.mrb[0].mxu0
        %v6519 = vadd.f32 %v6117, %v6518
        %v6520 = vpop.f32.mrb[0].mxu0
        %v6521 = vadd.f32 %v6121, %v6520
        %v6522 = vpop.f32.mrb[0].mxu0
        %v6523 = vadd.f32 %v6117, %v6522
        %v6524 = vpop.f32.mrb[0].mxu0
        %v6525 = vadd.f32 %v6121, %v6524
        %6526 = vmatprep.mubr.bf16.mxu0 %v6025
        %6527 = vmatmul.mubr.bf16.gmra.mrb[0].mxu0 %v6024
        %v6528 = vpop.f32.mrb[0].mxu0
        %v6529 = vadd.f32 %v6117, %v6528
        %v6530 = vpop.f32.mrb[0].mxu0
        %v6531 = vadd.f32 %v6121, %v6530
        %v6532 = vpop.f32.mrb[0].mxu0
        %v6533 = vadd.f32 %v6117, %v6532
        %v6534 = vpop.f32.mrb[0].mxu0
        %v6535 = vadd.f32 %v6121, %v6534
        %6536 = vmatprep.mubr.bf16.mxu0 %v6027
        %6537 = vmatmul.mubr.bf16.gmra.mrb[0].mxu0 %v6026
        %v6538 = vpop.f32.mrb[0].mxu0
        %v6539 = vadd.f32 %v6117, %v6538
        %v6540 = vpop.f32.mrb[0].mxu0
        %v6541 = vadd.f32 %v6121, %v6540
        %v6542 = vpop.f32.mrb[0].mxu0
        %v6543 = vadd.f32 %v6117, %v6542
        %v6544 = vpop.f32.mrb[0].mxu0
        %v6545 = vadd.f32 %v6121, %v6544
        %6546 = vmatprep.mubr.bf16.mxu0 %v6029
        %6547 = vmatmul.mubr.bf16.gmra.mrb[0].mxu0 %v6028
        %v6548 = vpop.f32.mrb[0].mxu0
        %v6549 = vadd.f32 %v6117, %v6548
        %v6550 = vpop.f32.mrb[0].mxu0
        %v6551 = vadd.f32 %v6121, %v6550
        %v6552 = vpop.f32.mrb[0].mxu0
        %v6553 = vadd.f32 %v6117, %v6552
        %v6554 = vpop.f32.mrb[0].mxu0
        %v6555 = vadd.f32 %v6121, %v6554
        %6556 = vmatprep.mubr.bf16.mxu0 %v6031
        %6557 = vmatmul.mubr.bf16.gmra.mrb[0].mxu0 %v6030
        %v6558 = vpop.f32.mrb[0].mxu0
        %v6559 = vadd.f32 %v6117, %v6558
        %v6560 = vpop.f32.mrb[0].mxu0
        %v6561 = vadd.f32 %v6121, %v6560
        %v6562 = vpop.f32.mrb[0].mxu0
        %v6563 = vadd.f32 %v6117, %v6562
        %v6564 = vpop.f32.mrb[0].mxu0
        %v6565 = vadd.f32 %v6121, %v6564
        %6566 = vmatprep.mubr.bf16.mxu0 %v6033
        %6567 = vmatmul.mubr.bf16.gmra.mrb[0].mxu0 %v6032
        %v6568 = vpop.f32.mrb[0].mxu0
        %v6569 = vadd.f32 %v6117, %v6568
        %v6570 = vpop.f32.mrb[0].mxu0
        %v6571 = vadd.f32 %v6121, %v6570
        %v6572 = vpop.f32.mrb[0].mxu0
        %v6573 = vadd.f32 %v6117, %v6572
        %v6574 = vpop.f32.mrb[0].mxu0
        %v6575 = vadd.f32 %v6121, %v6574
        %6576 = vmatprep.mubr.bf16.mxu0 %v6035
        %6577 = vmatmul.mubr.bf16.gmra.mrb[0].mxu0 %v6034
        %v6578 = vpop.f32.mrb[0].mxu0
        %v6579 = vadd.f32 %v6117, %v6578
        %v6580 = vpop.f32.mrb[0].mxu0
        %v6581 = vadd.f32 %v6121, %v6580
        %v6582 = vpop.f32.mrb[0].mxu0
        %v6583 = vadd.f32 %v6117, %v6582
        %v6584 = vpop.f32.mrb[0].mxu0
        %v6585 = vadd.f32 %v6121, %v6584
        %6586 = vmatprep.mubr.bf16.mxu0 %v6037
        %6587 = vmatmul.mubr.bf16.gmra.mrb[0].mxu0 %v6036
        %v6588 = vpop.f32.mrb[0].mxu0
        %v6589 = vadd.f32 %v6117, %v6588
        %v6590 = vpop.f32.mrb[0].mxu0
        %v6591 = vadd.f32 %v6121, %v6590
        %v6592 = vpop.f32.mrb[0].mxu0
        %v6593 = vadd.f32 %v6117, %v6592
        %v6594 = vpop.f32.mrb[0].mxu0
        %v6595 = vadd.f32 %v6121, %v6594
        %6596 = vmatprep.mubr.bf16.mxu0 %v6039
        %6597 = vmatmul.mubr.bf16.gmra.mrb[0].mxu0 %v6038
        %v6598 = vpop.f32.mrb[0].mxu0
        %v6599 = vadd.f32 %v6117, %v6598
        %v6600 = vpop.f32.mrb[0].mxu0
        %v6601 = vadd.f32 %v6121, %v6600
        %v6602 = vpop.f32.mrb[0].mxu0
        %v6603 = vadd.f32 %v6117, %v6602
        %v6604 = vpop.f32.mrb[0].mxu0
        %v6605 = vadd.f32 %v6121, %v6604
        %6606 = vmatprep.mubr.bf16.mxu0 %v6041
        %6607 = vmatmul.mubr.bf16.gmra.mrb[0].mxu0 %v6040
        %v6608 = vpop.f32.mrb[0].mxu0
        %v6609 = vadd.f32 %v6117, %v6608
        %v6610 = vpop.f32.mrb[0].mxu0
        %v6611 = vadd.f32 %v6121, %v6610
        %v6612 = vpop.f32.mrb[0].mxu0
        %v6613 = vadd.f32 %v6117, %v6612
        %v6614 = vpop.f32.mrb[0].mxu0
        %v6615 = vadd.f32 %v6121, %v6614
        %6616 = vmatprep.mubr.bf16.mxu0 %v6043
        %6617 = vmatmul.mubr.bf16.gmra.mrb[0].mxu0 %v6042
        %v6618 = vpop.f32.mrb[0].mxu0
        %v6619 = vadd.f32 %v6117, %v6618
        %v6620 = vpop.f32.mrb[0].mxu0
        %v6621 = vadd.f32 %v6121, %v6620
        %v6622 = vpop.f32.mrb[0].mxu0
        %v6623 = vadd.f32 %v6117, %v6622
        %v6624 = vpop.f32.mrb[0].mxu0
        %v6625 = vadd.f32 %v6121, %v6624
        %6626 = vmatprep.mubr.bf16.mxu0 %v6045
        %6627 = vmatmul.mubr.bf16.gmra.mrb[0].mxu0 %v6044
        %v6628 = vpop.f32.mrb[0].mxu0
        %v6629 = vadd.f32 %v6117, %v6628
        %v6630 = vpop.f32.mrb[0].mxu0
        %v6631 = vadd.f32 %v6121, %v6630
        %v6632 = vpop.f32.mrb[0].mxu0
        %v6633 = vadd.f32 %v6117, %v6632
        %v6634 = vpop.f32.mrb[0].mxu0
        %v6635 = vadd.f32 %v6121, %v6634
        %6636 = vmatprep.mubr.bf16.mxu0 %v6047
        %6637 = vmatmul.mubr.bf16.gmra.mrb[0].mxu0 %v6046
        %v6638 = vpop.f32.mrb[0].mxu0
        %v6639 = vadd.f32 %v6117, %v6638
        %v6640 = vpop.f32.mrb[0].mxu0
        %v6641 = vadd.f32 %v6121, %v6640
        %v6642 = vpop.f32.mrb[0].mxu0
        %v6643 = vadd.f32 %v6117, %v6642
        %v6644 = vpop.f32.mrb[0].mxu0
        %v6645 = vadd.f32 %v6121, %v6644
        %6646 = vdwg.mxu0
        %6647 = vmatprep.subr.bf16.mxu0 %v6329
        %6648 = vmatpush1.bf16.msra.mxu0 %v6328
        %6649 = vmatprep.subr.bf16.mxu0 %v6333
        %6650 = vmatpush1.bf16.msra.mxu0 %v6332
        %6651 = vmatprep.subr.bf16.mxu0 %v6337
        %6652 = vmatpush1.bf16.msra.mxu0 %v6336
        %6653 = vmatprep.subr.bf16.mxu0 %v6341
        %6654 = vmatpush1.bf16.msra.mxu0 %v6340
        %6655 = vmatprep.subr.bf16.mxu0 %v6345
        %6656 = vmatpush1.bf16.msra.mxu0 %v6344
        %6657 = vmatprep.subr.bf16.mxu0 %v6349
        %6658 = vmatpush1.bf16.msra.mxu0 %v6348
        %6659 = vmatprep.subr.bf16.mxu0 %v6353
        %6660 = vmatpush1.bf16.msra.mxu0 %v6352
        %6661 = vmatprep.subr.bf16.mxu0 %v6357
        %6662 = vmatpush1.bf16.msra.mxu0 %v6356
        %6663 = vmatprep.subr.bf16.mxu0 %v6361
        %6664 = vmatpush1.bf16.msra.mxu0 %v6360
        %6665 = vmatprep.subr.bf16.mxu0 %v6365
        %6666 = vmatpush1.bf16.msra.mxu0 %v6364
        %6667 = vmatprep.subr.bf16.mxu0 %v6369
        %6668 = vmatpush1.bf16.msra.mxu0 %v6368
        %6669 = vmatprep.subr.bf16.mxu0 %v6373
        %6670 = vmatpush1.bf16.msra.mxu0 %v6372
        %6671 = vmatprep.subr.bf16.mxu0 %v6377
        %6672 = vmatpush1.bf16.msra.mxu0 %v6376
        %6673 = vmatprep.subr.bf16.mxu0 %v6381
        %6674 = vmatpush1.bf16.msra.mxu0 %v6380
        %6675 = vmatprep.subr.bf16.mxu0 %v6385
        %6676 = vmatpush1.bf16.msra.mxu0 %v6384
        %6677 = vmatprep.subr.bf16.mxu0 %v6389
        %6678 = vmatpush1.bf16.msra.mxu0 %v6388
        %6679 = vmatprep.mubr.bf16.mxu0 %v6017
        %6680 = vmatmul.mubr.bf16.gmra.mrb[0].mxu0 %v6016
        %v6681 = vpop.f32.mrb[0].mxu0
        %v6682 = vadd.f32 %v6125, %v6681
        %v6683 = vpop.f32.mrb[0].mxu0
        %v6684 = vadd.f32 %v6129, %v6683
        %v6685 = vpop.f32.mrb[0].mxu0
        %v6686 = vadd.f32 %v6125, %v6685
        %v6687 = vpop.f32.mrb[0].mxu0
        %v6688 = vadd.f32 %v6129, %v6687
        %6689 = vmatprep.mubr.bf16.mxu0 %v6019
        %6690 = vmatmul.mubr.bf16.gmra.mrb[0].mxu0 %v6018
        %v6691 = vpop.f32.mrb[0].mxu0
        %v6692 = vadd.f32 %v6125, %v6691
        %v6693 = vpop.f32.mrb[0].mxu0
        %v6694 = vadd.f32 %v6129, %v6693
        %v6695 = vpop.f32.mrb[0].mxu0
        %v6696 = vadd.f32 %v6125, %v6695
        %v6697 = vpop.f32.mrb[0].mxu0
        %v6698 = vadd.f32 %v6129, %v6697
        %6699 = vmatprep.mubr.bf16.mxu0 %v6021
        %6700 = vmatmul.mubr.bf16.gmra.mrb[0].mxu0 %v6020
        %v6701 = vpop.f32.mrb[0].mxu0
        %v6702 = vadd.f32 %v6125, %v6701
        %v6703 = vpop.f32.mrb[0].mxu0
        %v6704 = vadd.f32 %v6129, %v6703
        %v6705 = vpop.f32.mrb[0].mxu0
        %v6706 = vadd.f32 %v6125, %v6705
        %v6707 = vpop.f32.mrb[0].mxu0
        %v6708 = vadd.f32 %v6129, %v6707
        %6709 = vmatprep.mubr.bf16.mxu0 %v6023
        %6710 = vmatmul.mubr.bf16.gmra.mrb[0].mxu0 %v6022
        %v6711 = vpop.f32.mrb[0].mxu0
        %v6712 = vadd.f32 %v6125, %v6711
        %v6713 = vpop.f32.mrb[0].mxu0
        %v6714 = vadd.f32 %v6129, %v6713
        %v6715 = vpop.f32.mrb[0].mxu0
        %v6716 = vadd.f32 %v6125, %v6715
        %v6717 = vpop.f32.mrb[0].mxu0
        %v6718 = vadd.f32 %v6129, %v6717
        %6719 = vmatprep.mubr.bf16.mxu0 %v6025
        %6720 = vmatmul.mubr.bf16.gmra.mrb[0].mxu0 %v6024
        %v6721 = vpop.f32.mrb[0].mxu0
        %v6722 = vadd.f32 %v6125, %v6721
        %v6723 = vpop.f32.mrb[0].mxu0
        %v6724 = vadd.f32 %v6129, %v6723
        %v6725 = vpop.f32.mrb[0].mxu0
        %v6726 = vadd.f32 %v6125, %v6725
        %v6727 = vpop.f32.mrb[0].mxu0
        %v6728 = vadd.f32 %v6129, %v6727
        %6729 = vmatprep.mubr.bf16.mxu0 %v6027
        %6730 = vmatmul.mubr.bf16.gmra.mrb[0].mxu0 %v6026
        %v6731 = vpop.f32.mrb[0].mxu0
        %v6732 = vadd.f32 %v6125, %v6731
        %v6733 = vpop.f32.mrb[0].mxu0
        %v6734 = vadd.f32 %v6129, %v6733
        %v6735 = vpop.f32.mrb[0].mxu0
        %v6736 = vadd.f32 %v6125, %v6735
        %v6737 = vpop.f32.mrb[0].mxu0
        %v6738 = vadd.f32 %v6129, %v6737
        %6739 = vmatprep.mubr.bf16.mxu0 %v6029
        %6740 = vmatmul.mubr.bf16.gmra.mrb[0].mxu0 %v6028
        %v6741 = vpop.f32.mrb[0].mxu0
        %v6742 = vadd.f32 %v6125, %v6741
        %v6743 = vpop.f32.mrb[0].mxu0
        %v6744 = vadd.f32 %v6129, %v6743
        %v6745 = vpop.f32.mrb[0].mxu0
        %v6746 = vadd.f32 %v6125, %v6745
        %v6747 = vpop.f32.mrb[0].mxu0
        %v6748 = vadd.f32 %v6129, %v6747
        %6749 = vmatprep.mubr.bf16.mxu0 %v6031
        %6750 = vmatmul.mubr.bf16.gmra.mrb[0].mxu0 %v6030
        %v6751 = vpop.f32.mrb[0].mxu0
        %v6752 = vadd.f32 %v6125, %v6751
        %v6753 = vpop.f32.mrb[0].mxu0
        %v6754 = vadd.f32 %v6129, %v6753
        %v6755 = vpop.f32.mrb[0].mxu0
        %v6756 = vadd.f32 %v6125, %v6755
        %v6757 = vpop.f32.mrb[0].mxu0
        %v6758 = vadd.f32 %v6129, %v6757
        %6759 = vmatprep.mubr.bf16.mxu0 %v6033
        %6760 = vmatmul.mubr.bf16.gmra.mrb[0].mxu0 %v6032
        %v6761 = vpop.f32.mrb[0].mxu0
        %v6762 = vadd.f32 %v6125, %v6761
        %v6763 = vpop.f32.mrb[0].mxu0
        %v6764 = vadd.f32 %v6129, %v6763
        %v6765 = vpop.f32.mrb[0].mxu0
        %v6766 = vadd.f32 %v6125, %v6765
        %v6767 = vpop.f32.mrb[0].mxu0
        %v6768 = vadd.f32 %v6129, %v6767
        %6769 = vmatprep.mubr.bf16.mxu0 %v6035
        %6770 = vmatmul.mubr.bf16.gmra.mrb[0].mxu0 %v6034
        %v6771 = vpop.f32.mrb[0].mxu0
        %v6772 = vadd.f32 %v6125, %v6771
        %v6773 = vpop.f32.mrb[0].mxu0
        %v6774 = vadd.f32 %v6129, %v6773
        %v6775 = vpop.f32.mrb[0].mxu0
        %v6776 = vadd.f32 %v6125, %v6775
        %v6777 = vpop.f32.mrb[0].mxu0
        %v6778 = vadd.f32 %v6129, %v6777
        %6779 = vmatprep.mubr.bf16.mxu0 %v6037
        %6780 = vmatmul.mubr.bf16.gmra.mrb[0].mxu0 %v6036
        %v6781 = vpop.f32.mrb[0].mxu0
        %v6782 = vadd.f32 %v6125, %v6781
        %v6783 = vpop.f32.mrb[0].mxu0
        %v6784 = vadd.f32 %v6129, %v6783
        %v6785 = vpop.f32.mrb[0].mxu0
        %v6786 = vadd.f32 %v6125, %v6785
        %v6787 = vpop.f32.mrb[0].mxu0
        %v6788 = vadd.f32 %v6129, %v6787
        %6789 = vmatprep.mubr.bf16.mxu0 %v6039
        %6790 = vmatmul.mubr.bf16.gmra.mrb[0].mxu0 %v6038
        %v6791 = vpop.f32.mrb[0].mxu0
        %v6792 = vadd.f32 %v6125, %v6791
        %v6793 = vpop.f32.mrb[0].mxu0
        %v6794 = vadd.f32 %v6129, %v6793
        %v6795 = vpop.f32.mrb[0].mxu0
        %v6796 = vadd.f32 %v6125, %v6795
        %v6797 = vpop.f32.mrb[0].mxu0
        %v6798 = vadd.f32 %v6129, %v6797
        %6799 = vmatprep.mubr.bf16.mxu0 %v6041
        %6800 = vmatmul.mubr.bf16.gmra.mrb[0].mxu0 %v6040
        %v6801 = vpop.f32.mrb[0].mxu0
        %v6802 = vadd.f32 %v6125, %v6801
        %v6803 = vpop.f32.mrb[0].mxu0
        %v6804 = vadd.f32 %v6129, %v6803
        %v6805 = vpop.f32.mrb[0].mxu0
        %v6806 = vadd.f32 %v6125, %v6805
        %v6807 = vpop.f32.mrb[0].mxu0
        %v6808 = vadd.f32 %v6129, %v6807
        %6809 = vmatprep.mubr.bf16.mxu0 %v6043
        %6810 = vmatmul.mubr.bf16.gmra.mrb[0].mxu0 %v6042
        %v6811 = vpop.f32.mrb[0].mxu0
        %v6812 = vadd.f32 %v6125, %v6811
        %v6813 = vpop.f32.mrb[0].mxu0
        %v6814 = vadd.f32 %v6129, %v6813
        %v6815 = vpop.f32.mrb[0].mxu0
        %v6816 = vadd.f32 %v6125, %v6815
        %v6817 = vpop.f32.mrb[0].mxu0
        %v6818 = vadd.f32 %v6129, %v6817
        %6819 = vmatprep.mubr.bf16.mxu0 %v6045
        %6820 = vmatmul.mubr.bf16.gmra.mrb[0].mxu0 %v6044
        %v6821 = vpop.f32.mrb[0].mxu0
        %v6822 = vadd.f32 %v6125, %v6821
        %v6823 = vpop.f32.mrb[0].mxu0
        %v6824 = vadd.f32 %v6129, %v6823
        %v6825 = vpop.f32.mrb[0].mxu0
        %v6826 = vadd.f32 %v6125, %v6825
        %v6827 = vpop.f32.mrb[0].mxu0
        %v6828 = vadd.f32 %v6129, %v6827
        %6829 = vmatprep.mubr.bf16.mxu0 %v6047
        %6830 = vmatmul.mubr.bf16.gmra.mrb[0].mxu0 %v6046
        %v6831 = vpop.f32.mrb[0].mxu0
        %v6832 = vadd.f32 %v6125, %v6831
        %v6833 = vpop.f32.mrb[0].mxu0
        %v6834 = vadd.f32 %v6129, %v6833
        %v6835 = vpop.f32.mrb[0].mxu0
        %v6836 = vadd.f32 %v6125, %v6835
        %v6837 = vpop.f32.mrb[0].mxu0
        %v6838 = vadd.f32 %v6129, %v6837
        %6839 = vdwg.mxu0
        %v6840 = vmul.f32 %v6489, %v6489
        %v6841 = vmul.f32 %v6491, %v6491
        %v6842 = vmul.f32 %v6682, %v6682
        %v6843 = vmul.f32 %v6684, %v6684
        %v6844 = vmul.f32 %v6493, %v6493
        %v6845 = vmul.f32 %v6495, %v6495
        %v6846 = vmul.f32 %v6686, %v6686
        %v6847 = vmul.f32 %v6688, %v6688
        %v6848 = vmul.f32 %v6499, %v6499
        %v6849 = vmul.f32 %v6501, %v6501
        %v6850 = vmul.f32 %v6692, %v6692
        %v6851 = vmul.f32 %v6694, %v6694
        %v6852 = vmul.f32 %v6503, %v6503
        %v6853 = vmul.f32 %v6505, %v6505
        %v6854 = vmul.f32 %v6696, %v6696
        %v6855 = vmul.f32 %v6698, %v6698
        %v6856 = vmul.f32 %v6509, %v6509
        %v6857 = vmul.f32 %v6511, %v6511
        %v6858 = vmul.f32 %v6702, %v6702
        %v6859 = vmul.f32 %v6704, %v6704
        %v6860 = vmul.f32 %v6513, %v6513
        %v6861 = vmul.f32 %v6515, %v6515
        %v6862 = vmul.f32 %v6706, %v6706
        %v6863 = vmul.f32 %v6708, %v6708
        %v6864 = vmul.f32 %v6519, %v6519
        %v6865 = vmul.f32 %v6521, %v6521
        %v6866 = vmul.f32 %v6712, %v6712
        %v6867 = vmul.f32 %v6714, %v6714
        %v6868 = vmul.f32 %v6523, %v6523
        %v6869 = vmul.f32 %v6525, %v6525
        %v6870 = vmul.f32 %v6716, %v6716
        %v6871 = vmul.f32 %v6718, %v6718
        %v6872 = vmul.f32 %v6529, %v6529
        %v6873 = vmul.f32 %v6531, %v6531
        %v6874 = vmul.f32 %v6722, %v6722
        %v6875 = vmul.f32 %v6724, %v6724
        %v6876 = vmul.f32 %v6533, %v6533
        %v6877 = vmul.f32 %v6535, %v6535
        %v6878 = vmul.f32 %v6726, %v6726
        %v6879 = vmul.f32 %v6728, %v6728
        %v6880 = vmul.f32 %v6539, %v6539
        %v6881 = vmul.f32 %v6541, %v6541
        %v6882 = vmul.f32 %v6732, %v6732
        %v6883 = vmul.f32 %v6734, %v6734
        %v6884 = vmul.f32 %v6543, %v6543
        %v6885 = vmul.f32 %v6545, %v6545
        %v6886 = vmul.f32 %v6736, %v6736
        %v6887 = vmul.f32 %v6738, %v6738
        %v6888 = vmul.f32 %v6549, %v6549
        %v6889 = vmul.f32 %v6551, %v6551
        %v6890 = vmul.f32 %v6742, %v6742
        %v6891 = vmul.f32 %v6744, %v6744
        %v6892 = vmul.f32 %v6553, %v6553
        %v6893 = vmul.f32 %v6555, %v6555
        %v6894 = vmul.f32 %v6746, %v6746
        %v6895 = vmul.f32 %v6748, %v6748
        %v6896 = vmul.f32 %v6559, %v6559
        %v6897 = vmul.f32 %v6561, %v6561
        %v6898 = vmul.f32 %v6752, %v6752
        %v6899 = vmul.f32 %v6754, %v6754
        %v6900 = vmul.f32 %v6563, %v6563
        %v6901 = vmul.f32 %v6565, %v6565
        %v6902 = vmul.f32 %v6756, %v6756
        %v6903 = vmul.f32 %v6758, %v6758
        %v6904 = vmul.f32 %v6569, %v6569
        %v6905 = vmul.f32 %v6571, %v6571
        %v6906 = vmul.f32 %v6762, %v6762
        %v6907 = vmul.f32 %v6764, %v6764
        %v6908 = vmul.f32 %v6573, %v6573
        %v6909 = vmul.f32 %v6575, %v6575
        %v6910 = vmul.f32 %v6766, %v6766
        %v6911 = vmul.f32 %v6768, %v6768
        %v6912 = vmul.f32 %v6579, %v6579
        %v6913 = vmul.f32 %v6581, %v6581
        %v6914 = vmul.f32 %v6772, %v6772
        %v6915 = vmul.f32 %v6774, %v6774
        %v6916 = vmul.f32 %v6583, %v6583
        %v6917 = vmul.f32 %v6585, %v6585
        %v6918 = vmul.f32 %v6776, %v6776
        %v6919 = vmul.f32 %v6778, %v6778
        %v6920 = vmul.f32 %v6589, %v6589
        %v6921 = vmul.f32 %v6591, %v6591
        %v6922 = vmul.f32 %v6782, %v6782
        %v6923 = vmul.f32 %v6784, %v6784
        %v6924 = vmul.f32 %v6593, %v6593
        %v6925 = vmul.f32 %v6595, %v6595
        %v6926 = vmul.f32 %v6786, %v6786
        %v6927 = vmul.f32 %v6788, %v6788
        %v6928 = vmul.f32 %v6599, %v6599
        %v6929 = vmul.f32 %v6601, %v6601
        %v6930 = vmul.f32 %v6792, %v6792
        %v6931 = vmul.f32 %v6794, %v6794
        %v6932 = vmul.f32 %v6603, %v6603
        %v6933 = vmul.f32 %v6605, %v6605
        %v6934 = vmul.f32 %v6796, %v6796
        %v6935 = vmul.f32 %v6798, %v6798
        %v6936 = vmul.f32 %v6609, %v6609
        %v6937 = vmul.f32 %v6611, %v6611
        %v6938 = vmul.f32 %v6802, %v6802
        %v6939 = vmul.f32 %v6804, %v6804
        %v6940 = vmul.f32 %v6613, %v6613
        %v6941 = vmul.f32 %v6615, %v6615
        %v6942 = vmul.f32 %v6806, %v6806
        %v6943 = vmul.f32 %v6808, %v6808
        %v6944 = vmul.f32 %v6619, %v6619
        %v6945 = vmul.f32 %v6621, %v6621
        %v6946 = vmul.f32 %v6812, %v6812
        %v6947 = vmul.f32 %v6814, %v6814
        %v6948 = vmul.f32 %v6623, %v6623
        %v6949 = vmul.f32 %v6625, %v6625
        %v6950 = vmul.f32 %v6816, %v6816
        %v6951 = vmul.f32 %v6818, %v6818
        %v6952 = vmul.f32 %v6629, %v6629
        %v6953 = vmul.f32 %v6631, %v6631
        %v6954 = vmul.f32 %v6822, %v6822
        %v6955 = vmul.f32 %v6824, %v6824
        %v6956 = vmul.f32 %v6633, %v6633
        %v6957 = vmul.f32 %v6635, %v6635
        %v6958 = vmul.f32 %v6826, %v6826
        %v6959 = vmul.f32 %v6828, %v6828
        %v6960 = vmul.f32 %v6639, %v6639
        %v6961 = vmul.f32 %v6641, %v6641
        %v6962 = vmul.f32 %v6832, %v6832
        %v6963 = vmul.f32 %v6834, %v6834
        %v6964 = vmul.f32 %v6643, %v6643
        %v6965 = vmul.f32 %v6645, %v6645
        %v6966 = vmul.f32 %v6836, %v6836
        %v6967 = vmul.f32 %v6838, %v6838
        %v6968 = vmul.f32 %v6489, %v6840
        %v6969 = vmul.f32 %v6491, %v6841
        %v6970 = vmul.f32 %v6682, %v6842
        %v6971 = vmul.f32 %v6684, %v6843
        %v6972 = vmul.f32 %v6493, %v6844
        %v6973 = vmul.f32 %v6495, %v6845
        %v6974 = vmul.f32 %v6686, %v6846
        %v6975 = vmul.f32 %v6688, %v6847
        %v6976 = vmul.f32 %v6499, %v6848
        %v6977 = vmul.f32 %v6501, %v6849
        %v6978 = vmul.f32 %v6692, %v6850
        %v6979 = vmul.f32 %v6694, %v6851
        %v6980 = vmul.f32 %v6503, %v6852
        %v6981 = vmul.f32 %v6505, %v6853
        %v6982 = vmul.f32 %v6696, %v6854
        %v6983 = vmul.f32 %v6698, %v6855
        %v6984 = vmul.f32 %v6509, %v6856
        %v6985 = vmul.f32 %v6511, %v6857
        %v6986 = vmul.f32 %v6702, %v6858
        %v6987 = vmul.f32 %v6704, %v6859
        %v6988 = vmul.f32 %v6513, %v6860
        %v6989 = vmul.f32 %v6515, %v6861
        %v6990 = vmul.f32 %v6706, %v6862
        %v6991 = vmul.f32 %v6708, %v6863
        %v6992 = vmul.f32 %v6519, %v6864
        %v6993 = vmul.f32 %v6521, %v6865
        %v6994 = vmul.f32 %v6712, %v6866
        %v6995 = vmul.f32 %v6714, %v6867
        %v6996 = vmul.f32 %v6523, %v6868
        %v6997 = vmul.f32 %v6525, %v6869
        %v6998 = vmul.f32 %v6716, %v6870
        %v6999 = vmul.f32 %v6718, %v6871
        %v7000 = vmul.f32 %v6529, %v6872
        %v7001 = vmul.f32 %v6531, %v6873
        %v7002 = vmul.f32 %v6722, %v6874
        %v7003 = vmul.f32 %v6724, %v6875
        %v7004 = vmul.f32 %v6533, %v6876
        %v7005 = vmul.f32 %v6535, %v6877
        %v7006 = vmul.f32 %v6726, %v6878
        %v7007 = vmul.f32 %v6728, %v6879
        %v7008 = vmul.f32 %v6539, %v6880
        %v7009 = vmul.f32 %v6541, %v6881
        %v7010 = vmul.f32 %v6732, %v6882
        %v7011 = vmul.f32 %v6734, %v6883
        %v7012 = vmul.f32 %v6543, %v6884
        %v7013 = vmul.f32 %v6545, %v6885
        %v7014 = vmul.f32 %v6736, %v6886
        %v7015 = vmul.f32 %v6738, %v6887
        %v7016 = vmul.f32 %v6549, %v6888
        %v7017 = vmul.f32 %v6551, %v6889
        %v7018 = vmul.f32 %v6742, %v6890
        %v7019 = vmul.f32 %v6744, %v6891
        %v7020 = vmul.f32 %v6553, %v6892
        %v7021 = vmul.f32 %v6555, %v6893
        %v7022 = vmul.f32 %v6746, %v6894
        %v7023 = vmul.f32 %v6748, %v6895
        %v7024 = vmul.f32 %v6559, %v6896
        %v7025 = vmul.f32 %v6561, %v6897
        %v7026 = vmul.f32 %v6752, %v6898
        %v7027 = vmul.f32 %v6754, %v6899
        %v7028 = vmul.f32 %v6563, %v6900
        %v7029 = vmul.f32 %v6565, %v6901
        %v7030 = vmul.f32 %v6756, %v6902
        %v7031 = vmul.f32 %v6758, %v6903
        %v7032 = vmul.f32 %v6569, %v6904
        %v7033 = vmul.f32 %v6571, %v6905
        %v7034 = vmul.f32 %v6762, %v6906
        %v7035 = vmul.f32 %v6764, %v6907
        %v7036 = vmul.f32 %v6573, %v6908
        %v7037 = vmul.f32 %v6575, %v6909
        %v7038 = vmul.f32 %v6766, %v6910
        %v7039 = vmul.f32 %v6768, %v6911
        %v7040 = vmul.f32 %v6579, %v6912
        %v7041 = vmul.f32 %v6581, %v6913
        %v7042 = vmul.f32 %v6772, %v6914
        %v7043 = vmul.f32 %v6774, %v6915
        %v7044 = vmul.f32 %v6583, %v6916
        %v7045 = vmul.f32 %v6585, %v6917
        %v7046 = vmul.f32 %v6776, %v6918
        %v7047 = vmul.f32 %v6778, %v6919
        %v7048 = vmul.f32 %v6589, %v6920
        %v7049 = vmul.f32 %v6591, %v6921
        %v7050 = vmul.f32 %v6782, %v6922
        %v7051 = vmul.f32 %v6784, %v6923
        %v7052 = vmul.f32 %v6593, %v6924
        %v7053 = vmul.f32 %v6595, %v6925
        %v7054 = vmul.f32 %v6786, %v6926
        %v7055 = vmul.f32 %v6788, %v6927
        %v7056 = vmul.f32 %v6599, %v6928
        %v7057 = vmul.f32 %v6601, %v6929
        %v7058 = vmul.f32 %v6792, %v6930
        %v7059 = vmul.f32 %v6794, %v6931
        %v7060 = vmul.f32 %v6603, %v6932
        %v7061 = vmul.f32 %v6605, %v6933
        %v7062 = vmul.f32 %v6796, %v6934
        %v7063 = vmul.f32 %v6798, %v6935
        %v7064 = vmul.f32 %v6609, %v6936
        %v7065 = vmul.f32 %v6611, %v6937
        %v7066 = vmul.f32 %v6802, %v6938
        %v7067 = vmul.f32 %v6804, %v6939
        %v7068 = vmul.f32 %v6613, %v6940
        %v7069 = vmul.f32 %v6615, %v6941
        %v7070 = vmul.f32 %v6806, %v6942
        %v7071 = vmul.f32 %v6808, %v6943
        %v7072 = vmul.f32 %v6619, %v6944
        %v7073 = vmul.f32 %v6621, %v6945
        %v7074 = vmul.f32 %v6812, %v6946
        %v7075 = vmul.f32 %v6814, %v6947
        %v7076 = vmul.f32 %v6623, %v6948
        %v7077 = vmul.f32 %v6625, %v6949
        %v7078 = vmul.f32 %v6816, %v6950
        %v7079 = vmul.f32 %v6818, %v6951
        %v7080 = vmul.f32 %v6629, %v6952
        %v7081 = vmul.f32 %v6631, %v6953
        %v7082 = vmul.f32 %v6822, %v6954
        %v7083 = vmul.f32 %v6824, %v6955
        %v7084 = vmul.f32 %v6633, %v6956
        %v7085 = vmul.f32 %v6635, %v6957
        %v7086 = vmul.f32 %v6826, %v6958
        %v7087 = vmul.f32 %v6828, %v6959
        %v7088 = vmul.f32 %v6639, %v6960
        %v7089 = vmul.f32 %v6641, %v6961
        %v7090 = vmul.f32 %v6832, %v6962
        %v7091 = vmul.f32 %v6834, %v6963
        %v7092 = vmul.f32 %v6643, %v6964
        %v7093 = vmul.f32 %v6645, %v6965
        %v7094 = vmul.f32 %v6836, %v6966
        %v7095 = vmul.f32 %v6838, %v6967
        %v7096 = vmul.f32 %v6968, 0.044715
        %v7097 = vmul.f32 %v6969, 0.044715
        %v7098 = vmul.f32 %v6970, 0.044715
        %v7099 = vmul.f32 %v6971, 0.044715
        %v7100 = vmul.f32 %v6972, 0.044715
        %v7101 = vmul.f32 %v6973, 0.044715
        %v7102 = vmul.f32 %v6974, 0.044715
        %v7103 = vmul.f32 %v6975, 0.044715
        %v7104 = vmul.f32 %v6976, 0.044715
        %v7105 = vmul.f32 %v6977, 0.044715
        %v7106 = vmul.f32 %v6978, 0.044715
        %v7107 = vmul.f32 %v6979, 0.044715
        %v7108 = vmul.f32 %v6980, 0.044715
        %v7109 = vmul.f32 %v6981, 0.044715
        %v7110 = vmul.f32 %v6982, 0.044715
        %v7111 = vmul.f32 %v6983, 0.044715
        %v7112 = vmul.f32 %v6984, 0.044715
        %v7113 = vmul.f32 %v6985, 0.044715
        %v7114 = vmul.f32 %v6986, 0.044715
        %v7115 = vmul.f32 %v6987, 0.044715
        %v7116 = vmul.f32 %v6988, 0.044715
        %v7117 = vmul.f32 %v6989, 0.044715
        %v7118 = vmul.f32 %v6990, 0.044715
        %v7119 = vmul.f32 %v6991, 0.044715
        %v7120 = vmul.f32 %v6992, 0.044715
        %v7121 = vmul.f32 %v6993, 0.044715
        %v7122 = vmul.f32 %v6994, 0.044715
        %v7123 = vmul.f32 %v6995, 0.044715
        %v7124 = vmul.f32 %v6996, 0.044715
        %v7125 = vmul.f32 %v6997, 0.044715
        %v7126 = vmul.f32 %v6998, 0.044715
        %v7127 = vmul.f32 %v6999, 0.044715
        %v7128 = vmul.f32 %v7000, 0.044715
        %v7129 = vmul.f32 %v7001, 0.044715
        %v7130 = vmul.f32 %v7002, 0.044715
        %v7131 = vmul.f32 %v7003, 0.044715
        %v7132 = vmul.f32 %v7004, 0.044715
        %v7133 = vmul.f32 %v7005, 0.044715
        %v7134 = vmul.f32 %v7006, 0.044715
        %v7135 = vmul.f32 %v7007, 0.044715
        %v7136 = vmul.f32 %v7008, 0.044715
        %v7137 = vmul.f32 %v7009, 0.044715
        %v7138 = vmul.f32 %v7010, 0.044715
        %v7139 = vmul.f32 %v7011, 0.044715
        %v7140 = vmul.f32 %v7012, 0.044715
        %v7141 = vmul.f32 %v7013, 0.044715
        %v7142 = vmul.f32 %v7014, 0.044715
        %v7143 = vmul.f32 %v7015, 0.044715
        %v7144 = vmul.f32 %v7016, 0.044715
        %v7145 = vmul.f32 %v7017, 0.044715
        %v7146 = vmul.f32 %v7018, 0.044715
        %v7147 = vmul.f32 %v7019, 0.044715
        %v7148 = vmul.f32 %v7020, 0.044715
        %v7149 = vmul.f32 %v7021, 0.044715
        %v7150 = vmul.f32 %v7022, 0.044715
        %v7151 = vmul.f32 %v7023, 0.044715
        %v7152 = vmul.f32 %v7024, 0.044715
        %v7153 = vmul.f32 %v7025, 0.044715
        %v7154 = vmul.f32 %v7026, 0.044715
        %v7155 = vmul.f32 %v7027, 0.044715
        %v7156 = vmul.f32 %v7028, 0.044715
        %v7157 = vmul.f32 %v7029, 0.044715
        %v7158 = vmul.f32 %v7030, 0.044715
        %v7159 = vmul.f32 %v7031, 0.044715
        %v7160 = vmul.f32 %v7032, 0.044715
        %v7161 = vmul.f32 %v7033, 0.044715
        %v7162 = vmul.f32 %v7034, 0.044715
        %v7163 = vmul.f32 %v7035, 0.044715
        %v7164 = vmul.f32 %v7036, 0.044715
        %v7165 = vmul.f32 %v7037, 0.044715
        %v7166 = vmul.f32 %v7038, 0.044715
        %v7167 = vmul.f32 %v7039, 0.044715
        %v7168 = vmul.f32 %v7040, 0.044715
        %v7169 = vmul.f32 %v7041, 0.044715
        %v7170 = vmul.f32 %v7042, 0.044715
        %v7171 = vmul.f32 %v7043, 0.044715
        %v7172 = vmul.f32 %v7044, 0.044715
        %v7173 = vmul.f32 %v7045, 0.044715
        %v7174 = vmul.f32 %v7046, 0.044715
        %v7175 = vmul.f32 %v7047, 0.044715
        %v7176 = vmul.f32 %v7048, 0.044715
        %v7177 = vmul.f32 %v7049, 0.044715
        %v7178 = vmul.f32 %v7050, 0.044715
        %v7179 = vmul.f32 %v7051, 0.044715
        %v7180 = vmul.f32 %v7052, 0.044715
        %v7181 = vmul.f32 %v7053, 0.044715
        %v7182 = vmul.f32 %v7054, 0.044715
        %v7183 = vmul.f32 %v7055, 0.044715
        %v7184 = vmul.f32 %v7056, 0.044715
        %v7185 = vmul.f32 %v7057, 0.044715
        %v7186 = vmul.f32 %v7058, 0.044715
        %v7187 = vmul.f32 %v7059, 0.044715
        %v7188 = vmul.f32 %v7060, 0.044715
        %v7189 = vmul.f32 %v7061, 0.044715
        %v7190 = vmul.f32 %v7062, 0.044715
        %v7191 = vmul.f32 %v7063, 0.044715
        %v7192 = vmul.f32 %v7064, 0.044715
        %v7193 = vmul.f32 %v7065, 0.044715
        %v7194 = vmul.f32 %v7066, 0.044715
        %v7195 = vmul.f32 %v7067, 0.044715
        %v7196 = vmul.f32 %v7068, 0.044715
        %v7197 = vmul.f32 %v7069, 0.044715
        %v7198 = vmul.f32 %v7070, 0.044715
        %v7199 = vmul.f32 %v7071, 0.044715
        %v7200 = vmul.f32 %v7072, 0.044715
        %v7201 = vmul.f32 %v7073, 0.044715
        %v7202 = vmul.f32 %v7074, 0.044715
        %v7203 = vmul.f32 %v7075, 0.044715
        %v7204 = vmul.f32 %v7076, 0.044715
        %v7205 = vmul.f32 %v7077, 0.044715
        %v7206 = vmul.f32 %v7078, 0.044715
        %v7207 = vmul.f32 %v7079, 0.044715
        %v7208 = vmul.f32 %v7080, 0.044715
        %v7209 = vmul.f32 %v7081, 0.044715
        %v7210 = vmul.f32 %v7082, 0.044715
        %v7211 = vmul.f32 %v7083, 0.044715
        %v7212 = vmul.f32 %v7084, 0.044715
        %v7213 = vmul.f32 %v7085, 0.044715
        %v7214 = vmul.f32 %v7086, 0.044715
        %v7215 = vmul.f32 %v7087, 0.044715
        %v7216 = vmul.f32 %v7088, 0.044715
        %v7217 = vmul.f32 %v7089, 0.044715
        %v7218 = vmul.f32 %v7090, 0.044715
        %v7219 = vmul.f32 %v7091, 0.044715
        %v7220 = vmul.f32 %v7092, 0.044715
        %v7221 = vmul.f32 %v7093, 0.044715
        %v7222 = vmul.f32 %v7094, 0.044715
        %v7223 = vmul.f32 %v7095, 0.044715
        %v7224 = vadd.f32 %v6489, %v7096
        %v7225 = vadd.f32 %v6491, %v7097
        %v7226 = vadd.f32 %v6682, %v7098
        %v7227 = vadd.f32 %v6684, %v7099
        %v7228 = vadd.f32 %v6493, %v7100
        %v7229 = vadd.f32 %v6495, %v7101
        %v7230 = vadd.f32 %v6686, %v7102
        %v7231 = vadd.f32 %v6688, %v7103
        %v7232 = vadd.f32 %v6499, %v7104
        %v7233 = vadd.f32 %v6501, %v7105
        %v7234 = vadd.f32 %v6692, %v7106
        %v7235 = vadd.f32 %v6694, %v7107
        %v7236 = vadd.f32 %v6503, %v7108
        %v7237 = vadd.f32 %v6505, %v7109
        %v7238 = vadd.f32 %v6696, %v7110
        %v7239 = vadd.f32 %v6698, %v7111
        %v7240 = vadd.f32 %v6509, %v7112
        %v7241 = vadd.f32 %v6511, %v7113
        %v7242 = vadd.f32 %v6702, %v7114
        %v7243 = vadd.f32 %v6704, %v7115
        %v7244 = vadd.f32 %v6513, %v7116
        %v7245 = vadd.f32 %v6515, %v7117
        %v7246 = vadd.f32 %v6706, %v7118
        %v7247 = vadd.f32 %v6708, %v7119
        %v7248 = vadd.f32 %v6519, %v7120
        %v7249 = vadd.f32 %v6521, %v7121
        %v7250 = vadd.f32 %v6712, %v7122
        %v7251 = vadd.f32 %v6714, %v7123
        %v7252 = vadd.f32 %v6523, %v7124
        %v7253 = vadd.f32 %v6525, %v7125
        %v7254 = vadd.f32 %v6716, %v7126
        %v7255 = vadd.f32 %v6718, %v7127
        %v7256 = vadd.f32 %v6529, %v7128
        %v7257 = vadd.f32 %v6531, %v7129
        %v7258 = vadd.f32 %v6722, %v7130
        %v7259 = vadd.f32 %v6724, %v7131
        %v7260 = vadd.f32 %v6533, %v7132
        %v7261 = vadd.f32 %v6535, %v7133
        %v7262 = vadd.f32 %v6726, %v7134
        %v7263 = vadd.f32 %v6728, %v7135
        %v7264 = vadd.f32 %v6539, %v7136
        %v7265 = vadd.f32 %v6541, %v7137
        %v7266 = vadd.f32 %v6732, %v7138
        %v7267 = vadd.f32 %v6734, %v7139
        %v7268 = vadd.f32 %v6543, %v7140
        %v7269 = vadd.f32 %v6545, %v7141
        %v7270 = vadd.f32 %v6736, %v7142
        %v7271 = vadd.f32 %v6738, %v7143
        %v7272 = vadd.f32 %v6549, %v7144
        %v7273 = vadd.f32 %v6551, %v7145
        %v7274 = vadd.f32 %v6742, %v7146
        %v7275 = vadd.f32 %v6744, %v7147
        %v7276 = vadd.f32 %v6553, %v7148
        %v7277 = vadd.f32 %v6555, %v7149
        %v7278 = vadd.f32 %v6746, %v7150
        %v7279 = vadd.f32 %v6748, %v7151
        %v7280 = vadd.f32 %v6559, %v7152
        %v7281 = vadd.f32 %v6561, %v7153
        %v7282 = vadd.f32 %v6752, %v7154
        %v7283 = vadd.f32 %v6754, %v7155
        %v7284 = vadd.f32 %v6563, %v7156
        %v7285 = vadd.f32 %v6565, %v7157
        %v7286 = vadd.f32 %v6756, %v7158
        %v7287 = vadd.f32 %v6758, %v7159
        %v7288 = vadd.f32 %v6569, %v7160
        %v7289 = vadd.f32 %v6571, %v7161
        %v7290 = vadd.f32 %v6762, %v7162
        %v7291 = vadd.f32 %v6764, %v7163
        %v7292 = vadd.f32 %v6573, %v7164
        %v7293 = vadd.f32 %v6575, %v7165
        %v7294 = vadd.f32 %v6766, %v7166
        %v7295 = vadd.f32 %v6768, %v7167
        %v7296 = vadd.f32 %v6579, %v7168
        %v7297 = vadd.f32 %v6581, %v7169
        %v7298 = vadd.f32 %v6772, %v7170
        %v7299 = vadd.f32 %v6774, %v7171
        %v7300 = vadd.f32 %v6583, %v7172
        %v7301 = vadd.f32 %v6585, %v7173
        %v7302 = vadd.f32 %v6776, %v7174
        %v7303 = vadd.f32 %v6778, %v7175
        %v7304 = vadd.f32 %v6589, %v7176
        %v7305 = vadd.f32 %v6591, %v7177
        %v7306 = vadd.f32 %v6782, %v7178
        %v7307 = vadd.f32 %v6784, %v7179
        %v7308 = vadd.f32 %v6593, %v7180
        %v7309 = vadd.f32 %v6595, %v7181
        %v7310 = vadd.f32 %v6786, %v7182
        %v7311 = vadd.f32 %v6788, %v7183
        %v7312 = vadd.f32 %v6599, %v7184
        %v7313 = vadd.f32 %v6601, %v7185
        %v7314 = vadd.f32 %v6792, %v7186
        %v7315 = vadd.f32 %v6794, %v7187
        %v7316 = vadd.f32 %v6603, %v7188
        %v7317 = vadd.f32 %v6605, %v7189
        %v7318 = vadd.f32 %v6796, %v7190
        %v7319 = vadd.f32 %v6798, %v7191
        %v7320 = vadd.f32 %v6609, %v7192
        %v7321 = vadd.f32 %v6611, %v7193
        %v7322 = vadd.f32 %v6802, %v7194
        %v7323 = vadd.f32 %v6804, %v7195
        %v7324 = vadd.f32 %v6613, %v7196
        %v7325 = vadd.f32 %v6615, %v7197
        %v7326 = vadd.f32 %v6806, %v7198
        %v7327 = vadd.f32 %v6808, %v7199
        %v7328 = vadd.f32 %v6619, %v7200
        %v7329 = vadd.f32 %v6621, %v7201
        %v7330 = vadd.f32 %v6812, %v7202
        %v7331 = vadd.f32 %v6814, %v7203
        %v7332 = vadd.f32 %v6623, %v7204
        %v7333 = vadd.f32 %v6625, %v7205
        %v7334 = vadd.f32 %v6816, %v7206
        %v7335 = vadd.f32 %v6818, %v7207
        %v7336 = vadd.f32 %v6629, %v7208
        %v7337 = vadd.f32 %v6631, %v7209
        %v7338 = vadd.f32 %v6822, %v7210
        %v7339 = vadd.f32 %v6824, %v7211
        %v7340 = vadd.f32 %v6633, %v7212
        %v7341 = vadd.f32 %v6635, %v7213
        %v7342 = vadd.f32 %v6826, %v7214
        %v7343 = vadd.f32 %v6828, %v7215
        %v7344 = vadd.f32 %v6639, %v7216
        %v7345 = vadd.f32 %v6641, %v7217
        %v7346 = vadd.f32 %v6832, %v7218
        %v7347 = vadd.f32 %v6834, %v7219
        %v7348 = vadd.f32 %v6643, %v7220
        %v7349 = vadd.f32 %v6645, %v7221
        %v7350 = vadd.f32 %v6836, %v7222
        %v7351 = vadd.f32 %v6838, %v7223
        %v7352 = vmul.f32 %v7224, 0.7978846
        %v7353 = vmul.f32 %v7225, 0.7978846
        %v7354 = vmul.f32 %v7226, 0.7978846
        %v7355 = vmul.f32 %v7227, 0.7978846
        %v7356 = vmul.f32 %v7228, 0.7978846
        %v7357 = vmul.f32 %v7229, 0.7978846
        %v7358 = vmul.f32 %v7230, 0.7978846
        %v7359 = vmul.f32 %v7231, 0.7978846
        %v7360 = vmul.f32 %v7232, 0.7978846
        %v7361 = vmul.f32 %v7233, 0.7978846
        %v7362 = vmul.f32 %v7234, 0.7978846
        %v7363 = vmul.f32 %v7235, 0.7978846
        %v7364 = vmul.f32 %v7236, 0.7978846
        %v7365 = vmul.f32 %v7237, 0.7978846
        %v7366 = vmul.f32 %v7238, 0.7978846
        %v7367 = vmul.f32 %v7239, 0.7978846
        %v7368 = vmul.f32 %v7240, 0.7978846
        %v7369 = vmul.f32 %v7241, 0.7978846
        %v7370 = vmul.f32 %v7242, 0.7978846
        %v7371 = vmul.f32 %v7243, 0.7978846
        %v7372 = vmul.f32 %v7244, 0.7978846
        %v7373 = vmul.f32 %v7245, 0.7978846
        %v7374 = vmul.f32 %v7246, 0.7978846
        %v7375 = vmul.f32 %v7247, 0.7978846
        %v7376 = vmul.f32 %v7248, 0.7978846
        %v7377 = vmul.f32 %v7249, 0.7978846
        %v7378 = vmul.f32 %v7250, 0.7978846
        %v7379 = vmul.f32 %v7251, 0.7978846
        %v7380 = vmul.f32 %v7252, 0.7978846
        %v7381 = vmul.f32 %v7253, 0.7978846
        %v7382 = vmul.f32 %v7254, 0.7978846
        %v7383 = vmul.f32 %v7255, 0.7978846
        %v7384 = vmul.f32 %v7256, 0.7978846
        %v7385 = vmul.f32 %v7257, 0.7978846
        %v7386 = vmul.f32 %v7258, 0.7978846
        %v7387 = vmul.f32 %v7259, 0.7978846
        %v7388 = vmul.f32 %v7260, 0.7978846
        %v7389 = vmul.f32 %v7261, 0.7978846
        %v7390 = vmul.f32 %v7262, 0.7978846
        %v7391 = vmul.f32 %v7263, 0.7978846
        %v7392 = vmul.f32 %v7264, 0.7978846
        %v7393 = vmul.f32 %v7265, 0.7978846
        %v7394 = vmul.f32 %v7266, 0.7978846
        %v7395 = vmul.f32 %v7267, 0.7978846
        %v7396 = vmul.f32 %v7268, 0.7978846
        %v7397 = vmul.f32 %v7269, 0.7978846
        %v7398 = vmul.f32 %v7270, 0.7978846
        %v7399 = vmul.f32 %v7271, 0.7978846
        %v7400 = vmul.f32 %v7272, 0.7978846
        %v7401 = vmul.f32 %v7273, 0.7978846
        %v7402 = vmul.f32 %v7274, 0.7978846
        %v7403 = vmul.f32 %v7275, 0.7978846
        %v7404 = vmul.f32 %v7276, 0.7978846
        %v7405 = vmul.f32 %v7277, 0.7978846
        %v7406 = vmul.f32 %v7278, 0.7978846
        %v7407 = vmul.f32 %v7279, 0.7978846
        %v7408 = vmul.f32 %v7280, 0.7978846
        %v7409 = vmul.f32 %v7281, 0.7978846
        %v7410 = vmul.f32 %v7282, 0.7978846
        %v7411 = vmul.f32 %v7283, 0.7978846
        %v7412 = vmul.f32 %v7284, 0.7978846
        %v7413 = vmul.f32 %v7285, 0.7978846
        %v7414 = vmul.f32 %v7286, 0.7978846
        %v7415 = vmul.f32 %v7287, 0.7978846
        %v7416 = vmul.f32 %v7288, 0.7978846
        %v7417 = vmul.f32 %v7289, 0.7978846
        %v7418 = vmul.f32 %v7290, 0.7978846
        %v7419 = vmul.f32 %v7291, 0.7978846
        %v7420 = vmul.f32 %v7292, 0.7978846
        %v7421 = vmul.f32 %v7293, 0.7978846
        %v7422 = vmul.f32 %v7294, 0.7978846
        %v7423 = vmul.f32 %v7295, 0.7978846
        %v7424 = vmul.f32 %v7296, 0.7978846
        %v7425 = vmul.f32 %v7297, 0.7978846
        %v7426 = vmul.f32 %v7298, 0.7978846
        %v7427 = vmul.f32 %v7299, 0.7978846
        %v7428 = vmul.f32 %v7300, 0.7978846
        %v7429 = vmul.f32 %v7301, 0.7978846
        %v7430 = vmul.f32 %v7302, 0.7978846
        %v7431 = vmul.f32 %v7303, 0.7978846
        %v7432 = vmul.f32 %v7304, 0.7978846
        %v7433 = vmul.f32 %v7305, 0.7978846
        %v7434 = vmul.f32 %v7306, 0.7978846
        %v7435 = vmul.f32 %v7307, 0.7978846
        %v7436 = vmul.f32 %v7308, 0.7978846
        %v7437 = vmul.f32 %v7309, 0.7978846
        %v7438 = vmul.f32 %v7310, 0.7978846
        %v7439 = vmul.f32 %v7311, 0.7978846
        %v7440 = vmul.f32 %v7312, 0.7978846
        %v7441 = vmul.f32 %v7313, 0.7978846
        %v7442 = vmul.f32 %v7314, 0.7978846
        %v7443 = vmul.f32 %v7315, 0.7978846
        %v7444 = vmul.f32 %v7316, 0.7978846
        %v7445 = vmul.f32 %v7317, 0.7978846
        %v7446 = vmul.f32 %v7318, 0.7978846
        %v7447 = vmul.f32 %v7319, 0.7978846
        %v7448 = vmul.f32 %v7320, 0.7978846
        %v7449 = vmul.f32 %v7321, 0.7978846
        %v7450 = vmul.f32 %v7322, 0.7978846
        %v7451 = vmul.f32 %v7323, 0.7978846
        %v7452 = vmul.f32 %v7324, 0.7978846
        %v7453 = vmul.f32 %v7325, 0.7978846
        %v7454 = vmul.f32 %v7326, 0.7978846
        %v7455 = vmul.f32 %v7327, 0.7978846
        %v7456 = vmul.f32 %v7328, 0.7978846
        %v7457 = vmul.f32 %v7329, 0.7978846
        %v7458 = vmul.f32 %v7330, 0.7978846
        %v7459 = vmul.f32 %v7331, 0.7978846
        %v7460 = vmul.f32 %v7332, 0.7978846
        %v7461 = vmul.f32 %v7333, 0.7978846
        %v7462 = vmul.f32 %v7334, 0.7978846
        %v7463 = vmul.f32 %v7335, 0.7978846
        %v7464 = vmul.f32 %v7336, 0.7978846
        %v7465 = vmul.f32 %v7337, 0.7978846
        %v7466 = vmul.f32 %v7338, 0.7978846
        %v7467 = vmul.f32 %v7339, 0.7978846
        %v7468 = vmul.f32 %v7340, 0.7978846
        %v7469 = vmul.f32 %v7341, 0.7978846
        %v7470 = vmul.f32 %v7342, 0.7978846
        %v7471 = vmul.f32 %v7343, 0.7978846
        %v7472 = vmul.f32 %v7344, 0.7978846
        %v7473 = vmul.f32 %v7345, 0.7978846
        %v7474 = vmul.f32 %v7346, 0.7978846
        %v7475 = vmul.f32 %v7347, 0.7978846
        %v7476 = vmul.f32 %v7348, 0.7978846
        %v7477 = vmul.f32 %v7349, 0.7978846
        %v7478 = vmul.f32 %v7350, 0.7978846
        %v7479 = vmul.f32 %v7351, 0.7978846
        %v7480 = vtanh.pop %v7352
        %v7481 = vtanh.pop %v7353
        %v7482 = vtanh.pop %v7354
        %v7483 = vtanh.pop %v7355
        %v7484 = vtanh.pop %v7356
        %v7485 = vtanh.pop %v7357
        %v7486 = vtanh.pop %v7358
        %v7487 = vtanh.pop %v7359
        %v7488 = vtanh.pop %v7360
        %v7489 = vtanh.pop %v7361
        %v7490 = vtanh.pop %v7362
        %v7491 = vtanh.pop %v7363
        %v7492 = vtanh.pop %v7364
        %v7493 = vtanh.pop %v7365
        %v7494 = vtanh.pop %v7366
        %v7495 = vtanh.pop %v7367
        %v7496 = vtanh.pop %v7368
        %v7497 = vtanh.pop %v7369
        %v7498 = vtanh.pop %v7370
        %v7499 = vtanh.pop %v7371
        %v7500 = vtanh.pop %v7372
        %v7501 = vtanh.pop %v7373
        %v7502 = vtanh.pop %v7374
        %v7503 = vtanh.pop %v7375
        %v7504 = vtanh.pop %v7376
        %v7505 = vtanh.pop %v7377
        %v7506 = vtanh.pop %v7378
        %v7507 = vtanh.pop %v7379
        %v7508 = vtanh.pop %v7380
        %v7509 = vtanh.pop %v7381
        %v7510 = vtanh.pop %v7382
        %v7511 = vtanh.pop %v7383
        %v7512 = vtanh.pop %v7384
        %v7513 = vtanh.pop %v7385
        %v7514 = vtanh.pop %v7386
        %v7515 = vtanh.pop %v7387
        %v7516 = vtanh.pop %v7388
        %v7517 = vtanh.pop %v7389
        %v7518 = vtanh.pop %v7390
        %v7519 = vtanh.pop %v7391
        %v7520 = vtanh.pop %v7392
        %v7521 = vtanh.pop %v7393
        %v7522 = vtanh.pop %v7394
        %v7523 = vtanh.pop %v7395
        %v7524 = vtanh.pop %v7396
        %v7525 = vtanh.pop %v7397
        %v7526 = vtanh.pop %v7398
        %v7527 = vtanh.pop %v7399
        %v7528 = vtanh.pop %v7400
        %v7529 = vtanh.pop %v7401
        %v7530 = vtanh.pop %v7402
        %v7531 = vtanh.pop %v7403
        %v7532 = vtanh.pop %v7404
        %v7533 = vtanh.pop %v7405
        %v7534 = vtanh.pop %v7406
        %v7535 = vtanh.pop %v7407
        %v7536 = vtanh.pop %v7408
        %v7537 = vtanh.pop %v7409
        %v7538 = vtanh.pop %v7410
        %v7539 = vtanh.pop %v7411
        %v7540 = vtanh.pop %v7412
        %v7541 = vtanh.pop %v7413
        %v7542 = vtanh.pop %v7414
        %v7543 = vtanh.pop %v7415
        %v7544 = vtanh.pop %v7416
        %v7545 = vtanh.pop %v7417
        %v7546 = vtanh.pop %v7418
        %v7547 = vtanh.pop %v7419
        %v7548 = vtanh.pop %v7420
        %v7549 = vtanh.pop %v7421
        %v7550 = vtanh.pop %v7422
        %v7551 = vtanh.pop %v7423
        %v7552 = vtanh.pop %v7424
        %v7553 = vtanh.pop %v7425
        %v7554 = vtanh.pop %v7426
        %v7555 = vtanh.pop %v7427
        %v7556 = vtanh.pop %v7428
        %v7557 = vtanh.pop %v7429
        %v7558 = vtanh.pop %v7430
        %v7559 = vtanh.pop %v7431
        %v7560 = vtanh.pop %v7432
        %v7561 = vtanh.pop %v7433
        %v7562 = vtanh.pop %v7434
        %v7563 = vtanh.pop %v7435
        %v7564 = vtanh.pop %v7436
        %v7565 = vtanh.pop %v7437
        %v7566 = vtanh.pop %v7438
        %v7567 = vtanh.pop %v7439
        %v7568 = vtanh.pop %v7440
        %v7569 = vtanh.pop %v7441
        %v7570 = vtanh.pop %v7442
        %v7571 = vtanh.pop %v7443
        %v7572 = vtanh.pop %v7444
        %v7573 = vtanh.pop %v7445
        %v7574 = vtanh.pop %v7446
        %v7575 = vtanh.pop %v7447
        %v7576 = vtanh.pop %v7448
        %v7577 = vtanh.pop %v7449
        %v7578 = vtanh.pop %v7450
        %v7579 = vtanh.pop %v7451
        %v7580 = vtanh.pop %v7452
        %v7581 = vtanh.pop %v7453
        %v7582 = vtanh.pop %v7454
        %v7583 = vtanh.pop %v7455
        %v7584 = vtanh.pop %v7456
        %v7585 = vtanh.pop %v7457
        %v7586 = vtanh.pop %v7458
        %v7587 = vtanh.pop %v7459
        %v7588 = vtanh.pop %v7460
        %v7589 = vtanh.pop %v7461
        %v7590 = vtanh.pop %v7462
        %v7591 = vtanh.pop %v7463
        %v7592 = vtanh.pop %v7464
        %v7593 = vtanh.pop %v7465
        %v7594 = vtanh.pop %v7466
        %v7595 = vtanh.pop %v7467
        %v7596 = vtanh.pop %v7468
        %v7597 = vtanh.pop %v7469
        %v7598 = vtanh.pop %v7470
        %v7599 = vtanh.pop %v7471
        %v7600 = vtanh.pop %v7472
        %v7601 = vtanh.pop %v7473
        %v7602 = vtanh.pop %v7474
        %v7603 = vtanh.pop %v7475
        %v7604 = vtanh.pop %v7476
        %v7605 = vtanh.pop %v7477
        %v7606 = vtanh.pop %v7478
        %v7607 = vtanh.pop %v7479
        %v7608 = vadd.f32 %v7480, 1.0
        %v7609 = vadd.f32 %v7481, 1.0
        %v7610 = vadd.f32 %v7482, 1.0
        %v7611 = vadd.f32 %v7483, 1.0
        %v7612 = vadd.f32 %v7484, 1.0
        %v7613 = vadd.f32 %v7485, 1.0
        %v7614 = vadd.f32 %v7486, 1.0
        %v7615 = vadd.f32 %v7487, 1.0
        %v7616 = vadd.f32 %v7488, 1.0
        %v7617 = vadd.f32 %v7489, 1.0
        %v7618 = vadd.f32 %v7490, 1.0
        %v7619 = vadd.f32 %v7491, 1.0
        %v7620 = vadd.f32 %v7492, 1.0
        %v7621 = vadd.f32 %v7493, 1.0
        %v7622 = vadd.f32 %v7494, 1.0
        %v7623 = vadd.f32 %v7495, 1.0
        %v7624 = vadd.f32 %v7496, 1.0
        %v7625 = vadd.f32 %v7497, 1.0
        %v7626 = vadd.f32 %v7498, 1.0
        %v7627 = vadd.f32 %v7499, 1.0
        %v7628 = vadd.f32 %v7500, 1.0
        %v7629 = vadd.f32 %v7501, 1.0
        %v7630 = vadd.f32 %v7502, 1.0
        %v7631 = vadd.f32 %v7503, 1.0
        %v7632 = vadd.f32 %v7504, 1.0
        %v7633 = vadd.f32 %v7505, 1.0
        %v7634 = vadd.f32 %v7506, 1.0
        %v7635 = vadd.f32 %v7507, 1.0
        %v7636 = vadd.f32 %v7508, 1.0
        %v7637 = vadd.f32 %v7509, 1.0
        %v7638 = vadd.f32 %v7510, 1.0
        %v7639 = vadd.f32 %v7511, 1.0
        %v7640 = vadd.f32 %v7512, 1.0
        %v7641 = vadd.f32 %v7513, 1.0
        %v7642 = vadd.f32 %v7514, 1.0
        %v7643 = vadd.f32 %v7515, 1.0
        %v7644 = vadd.f32 %v7516, 1.0
        %v7645 = vadd.f32 %v7517, 1.0
        %v7646 = vadd.f32 %v7518, 1.0
        %v7647 = vadd.f32 %v7519, 1.0
        %v7648 = vadd.f32 %v7520, 1.0
        %v7649 = vadd.f32 %v7521, 1.0
        %v7650 = vadd.f32 %v7522, 1.0
        %v7651 = vadd.f32 %v7523, 1.0
        %v7652 = vadd.f32 %v7524, 1.0
        %v7653 = vadd.f32 %v7525, 1.0
        %v7654 = vadd.f32 %v7526, 1.0
        %v7655 = vadd.f32 %v7527, 1.0
        %v7656 = vadd.f32 %v7528, 1.0
        %v7657 = vadd.f32 %v7529, 1.0
        %v7658 = vadd.f32 %v7530, 1.0
        %v7659 = vadd.f32 %v7531, 1.0
        %v7660 = vadd.f32 %v7532, 1.0
        %v7661 = vadd.f32 %v7533, 1.0
        %v7662 = vadd.f32 %v7534, 1.0
        %v7663 = vadd.f32 %v7535, 1.0
        %v7664 = vadd.f32 %v7536, 1.0
        %v7665 = vadd.f32 %v7537, 1.0
        %v7666 = vadd.f32 %v7538, 1.0
        %v7667 = vadd.f32 %v7539, 1.0
        %v7668 = vadd.f32 %v7540, 1.0
        %v7669 = vadd.f32 %v7541, 1.0
        %v7670 = vadd.f32 %v7542, 1.0
        %v7671 = vadd.f32 %v7543, 1.0
        %v7672 = vadd.f32 %v7544, 1.0
        %v7673 = vadd.f32 %v7545, 1.0
        %v7674 = vadd.f32 %v7546, 1.0
        %v7675 = vadd.f32 %v7547, 1.0
        %v7676 = vadd.f32 %v7548, 1.0
        %v7677 = vadd.f32 %v7549, 1.0
        %v7678 = vadd.f32 %v7550, 1.0
        %v7679 = vadd.f32 %v7551, 1.0
        %v7680 = vadd.f32 %v7552, 1.0
        %v7681 = vadd.f32 %v7553, 1.0
        %v7682 = vadd.f32 %v7554, 1.0
        %v7683 = vadd.f32 %v7555, 1.0
        %v7684 = vadd.f32 %v7556, 1.0
        %v7685 = vadd.f32 %v7557, 1.0
        %v7686 = vadd.f32 %v7558, 1.0
        %v7687 = vadd.f32 %v7559, 1.0
        %v7688 = vadd.f32 %v7560, 1.0
        %v7689 = vadd.f32 %v7561, 1.0
        %v7690 = vadd.f32 %v7562, 1.0
        %v7691 = vadd.f32 %v7563, 1.0
        %v7692 = vadd.f32 %v7564, 1.0
        %v7693 = vadd.f32 %v7565, 1.0
        %v7694 = vadd.f32 %v7566, 1.0
        %v7695 = vadd.f32 %v7567, 1.0
        %v7696 = vadd.f32 %v7568, 1.0
        %v7697 = vadd.f32 %v7569, 1.0
        %v7698 = vadd.f32 %v7570, 1.0
        %v7699 = vadd.f32 %v7571, 1.0
        %v7700 = vadd.f32 %v7572, 1.0
        %v7701 = vadd.f32 %v7573, 1.0
        %v7702 = vadd.f32 %v7574, 1.0
        %v7703 = vadd.f32 %v7575, 1.0
        %v7704 = vadd.f32 %v7576, 1.0
        %v7705 = vadd.f32 %v7577, 1.0
        %v7706 = vadd.f32 %v7578, 1.0
        %v7707 = vadd.f32 %v7579, 1.0
        %v7708 = vadd.f32 %v7580, 1.0
        %v7709 = vadd.f32 %v7581, 1.0
        %v7710 = vadd.f32 %v7582, 1.0
        %v7711 = vadd.f32 %v7583, 1.0
        %v7712 = vadd.f32 %v7584, 1.0
        %v7713 = vadd.f32 %v7585, 1.0
        %v7714 = vadd.f32 %v7586, 1.0
        %v7715 = vadd.f32 %v7587, 1.0
        %v7716 = vadd.f32 %v7588, 1.0
        %v7717 = vadd.f32 %v7589, 1.0
        %v7718 = vadd.f32 %v7590, 1.0
        %v7719 = vadd.f32 %v7591, 1.0
        %v7720 = vadd.f32 %v7592, 1.0
        %v7721 = vadd.f32 %v7593, 1.0
        %v7722 = vadd.f32 %v7594, 1.0
        %v7723 = vadd.f32 %v7595, 1.0
        %v7724 = vadd.f32 %v7596, 1.0
        %v7725 = vadd.f32 %v7597, 1.0
        %v7726 = vadd.f32 %v7598, 1.0
        %v7727 = vadd.f32 %v7599, 1.0
        %v7728 = vadd.f32 %v7600, 1.0
        %v7729 = vadd.f32 %v7601, 1.0
        %v7730 = vadd.f32 %v7602, 1.0
        %v7731 = vadd.f32 %v7603, 1.0
        %v7732 = vadd.f32 %v7604, 1.0
        %v7733 = vadd.f32 %v7605, 1.0
        %v7734 = vadd.f32 %v7606, 1.0
        %v7735 = vadd.f32 %v7607, 1.0
        %v7736 = vmul.f32 %v7608, 0.5
        %v7737 = vmul.f32 %v7609, 0.5
        %v7738 = vmul.f32 %v7610, 0.5
        %v7739 = vmul.f32 %v7611, 0.5
        %v7740 = vmul.f32 %v7612, 0.5
        %v7741 = vmul.f32 %v7613, 0.5
        %v7742 = vmul.f32 %v7614, 0.5
        %v7743 = vmul.f32 %v7615, 0.5
        %v7744 = vmul.f32 %v7616, 0.5
        %v7745 = vmul.f32 %v7617, 0.5
        %v7746 = vmul.f32 %v7618, 0.5
        %v7747 = vmul.f32 %v7619, 0.5
        %v7748 = vmul.f32 %v7620, 0.5
        %v7749 = vmul.f32 %v7621, 0.5
        %v7750 = vmul.f32 %v7622, 0.5
        %v7751 = vmul.f32 %v7623, 0.5
        %v7752 = vmul.f32 %v7624, 0.5
        %v7753 = vmul.f32 %v7625, 0.5
        %v7754 = vmul.f32 %v7626, 0.5
        %v7755 = vmul.f32 %v7627, 0.5
        %v7756 = vmul.f32 %v7628, 0.5
        %v7757 = vmul.f32 %v7629, 0.5
        %v7758 = vmul.f32 %v7630, 0.5
        %v7759 = vmul.f32 %v7631, 0.5
        %v7760 = vmul.f32 %v7632, 0.5
        %v7761 = vmul.f32 %v7633, 0.5
        %v7762 = vmul.f32 %v7634, 0.5
        %v7763 = vmul.f32 %v7635, 0.5
        %v7764 = vmul.f32 %v7636, 0.5
        %v7765 = vmul.f32 %v7637, 0.5
        %v7766 = vmul.f32 %v7638, 0.5
        %v7767 = vmul.f32 %v7639, 0.5
        %v7768 = vmul.f32 %v7640, 0.5
        %v7769 = vmul.f32 %v7641, 0.5
        %v7770 = vmul.f32 %v7642, 0.5
        %v7771 = vmul.f32 %v7643, 0.5
        %v7772 = vmul.f32 %v7644, 0.5
        %v7773 = vmul.f32 %v7645, 0.5
        %v7774 = vmul.f32 %v7646, 0.5
        %v7775 = vmul.f32 %v7647, 0.5
        %v7776 = vmul.f32 %v7648, 0.5
        %v7777 = vmul.f32 %v7649, 0.5
        %v7778 = vmul.f32 %v7650, 0.5
        %v7779 = vmul.f32 %v7651, 0.5
        %v7780 = vmul.f32 %v7652, 0.5
        %v7781 = vmul.f32 %v7653, 0.5
        %v7782 = vmul.f32 %v7654, 0.5
        %v7783 = vmul.f32 %v7655, 0.5
        %v7784 = vmul.f32 %v7656, 0.5
        %v7785 = vmul.f32 %v7657, 0.5
        %v7786 = vmul.f32 %v7658, 0.5
        %v7787 = vmul.f32 %v7659, 0.5
        %v7788 = vmul.f32 %v7660, 0.5
        %v7789 = vmul.f32 %v7661, 0.5
        %v7790 = vmul.f32 %v7662, 0.5
        %v7791 = vmul.f32 %v7663, 0.5
        %v7792 = vmul.f32 %v7664, 0.5
        %v7793 = vmul.f32 %v7665, 0.5
        %v7794 = vmul.f32 %v7666, 0.5
        %v7795 = vmul.f32 %v7667, 0.5
        %v7796 = vmul.f32 %v7668, 0.5
        %v7797 = vmul.f32 %v7669, 0.5
        %v7798 = vmul.f32 %v7670, 0.5
        %v7799 = vmul.f32 %v7671, 0.5
        %v7800 = vmul.f32 %v7672, 0.5
        %v7801 = vmul.f32 %v7673, 0.5
        %v7802 = vmul.f32 %v7674, 0.5
        %v7803 = vmul.f32 %v7675, 0.5
        %v7804 = vmul.f32 %v7676, 0.5
        %v7805 = vmul.f32 %v7677, 0.5
        %v7806 = vmul.f32 %v7678, 0.5
        %v7807 = vmul.f32 %v7679, 0.5
        %v7808 = vmul.f32 %v7680, 0.5
        %v7809 = vmul.f32 %v7681, 0.5
        %v7810 = vmul.f32 %v7682, 0.5
        %v7811 = vmul.f32 %v7683, 0.5
        %v7812 = vmul.f32 %v7684, 0.5
        %v7813 = vmul.f32 %v7685, 0.5
        %v7814 = vmul.f32 %v7686, 0.5
        %v7815 = vmul.f32 %v7687, 0.5
        %v7816 = vmul.f32 %v7688, 0.5
        %v7817 = vmul.f32 %v7689, 0.5
        %v7818 = vmul.f32 %v7690, 0.5
        %v7819 = vmul.f32 %v7691, 0.5
        %v7820 = vmul.f32 %v7692, 0.5
        %v7821 = vmul.f32 %v7693, 0.5
        %v7822 = vmul.f32 %v7694, 0.5
        %v7823 = vmul.f32 %v7695, 0.5
        %v7824 = vmul.f32 %v7696, 0.5
        %v7825 = vmul.f32 %v7697, 0.5
        %v7826 = vmul.f32 %v7698, 0.5
        %v7827 = vmul.f32 %v7699, 0.5
        %v7828 = vmul.f32 %v7700, 0.5
        %v7829 = vmul.f32 %v7701, 0.5
        %v7830 = vmul.f32 %v7702, 0.5
        %v7831 = vmul.f32 %v7703, 0.5
        %v7832 = vmul.f32 %v7704, 0.5
        %v7833 = vmul.f32 %v7705, 0.5
        %v7834 = vmul.f32 %v7706, 0.5
        %v7835 = vmul.f32 %v7707, 0.5
        %v7836 = vmul.f32 %v7708, 0.5
        %v7837 = vmul.f32 %v7709, 0.5
        %v7838 = vmul.f32 %v7710, 0.5
        %v7839 = vmul.f32 %v7711, 0.5
        %v7840 = vmul.f32 %v7712, 0.5
        %v7841 = vmul.f32 %v7713, 0.5
        %v7842 = vmul.f32 %v7714, 0.5
        %v7843 = vmul.f32 %v7715, 0.5
        %v7844 = vmul.f32 %v7716, 0.5
        %v7845 = vmul.f32 %v7717, 0.5
        %v7846 = vmul.f32 %v7718, 0.5
        %v7847 = vmul.f32 %v7719, 0.5
        %v7848 = vmul.f32 %v7720, 0.5
        %v7849 = vmul.f32 %v7721, 0.5
        %v7850 = vmul.f32 %v7722, 0.5
        %v7851 = vmul.f32 %v7723, 0.5
        %v7852 = vmul.f32 %v7724, 0.5
        %v7853 = vmul.f32 %v7725, 0.5
        %v7854 = vmul.f32 %v7726, 0.5
        %v7855 = vmul.f32 %v7727, 0.5
        %v7856 = vmul.f32 %v7728, 0.5
        %v7857 = vmul.f32 %v7729, 0.5
        %v7858 = vmul.f32 %v7730, 0.5
        %v7859 = vmul.f32 %v7731, 0.5
        %v7860 = vmul.f32 %v7732, 0.5
        %v7861 = vmul.f32 %v7733, 0.5
        %v7862 = vmul.f32 %v7734, 0.5
        %v7863 = vmul.f32 %v7735, 0.5
        %v7864 = vmul.f32 %v6489, %v7736
        %v7865 = vmul.f32 %v6491, %v7737
        %v7866 = vmul.f32 %v6682, %v7738
        %v7867 = vmul.f32 %v6684, %v7739
        %v7868 = vmul.f32 %v6493, %v7740
        %v7869 = vmul.f32 %v6495, %v7741
        %v7870 = vmul.f32 %v6686, %v7742
        %v7871 = vmul.f32 %v6688, %v7743
        %v7872 = vmul.f32 %v6499, %v7744
        %v7873 = vmul.f32 %v6501, %v7745
        %v7874 = vmul.f32 %v6692, %v7746
        %v7875 = vmul.f32 %v6694, %v7747
        %v7876 = vmul.f32 %v6503, %v7748
        %v7877 = vmul.f32 %v6505, %v7749
        %v7878 = vmul.f32 %v6696, %v7750
        %v7879 = vmul.f32 %v6698, %v7751
        %v7880 = vmul.f32 %v6509, %v7752
        %v7881 = vmul.f32 %v6511, %v7753
        %v7882 = vmul.f32 %v6702, %v7754
        %v7883 = vmul.f32 %v6704, %v7755
        %v7884 = vmul.f32 %v6513, %v7756
        %v7885 = vmul.f32 %v6515, %v7757
        %v7886 = vmul.f32 %v6706, %v7758
        %v7887 = vmul.f32 %v6708, %v7759
        %v7888 = vmul.f32 %v6519, %v7760
        %v7889 = vmul.f32 %v6521, %v7761
        %v7890 = vmul.f32 %v6712, %v7762
        %v7891 = vmul.f32 %v6714, %v7763
        %v7892 = vmul.f32 %v6523, %v7764
        %v7893 = vmul.f32 %v6525, %v7765
        %v7894 = vmul.f32 %v6716, %v7766
        %v7895 = vmul.f32 %v6718, %v7767
        %v7896 = vmul.f32 %v6529, %v7768
        %v7897 = vmul.f32 %v6531, %v7769
        %v7898 = vmul.f32 %v6722, %v7770
        %v7899 = vmul.f32 %v6724, %v7771
        %v7900 = vmul.f32 %v6533, %v7772
        %v7901 = vmul.f32 %v6535, %v7773
        %v7902 = vmul.f32 %v6726, %v7774
        %v7903 = vmul.f32 %v6728, %v7775
        %v7904 = vmul.f32 %v6539, %v7776
        %v7905 = vmul.f32 %v6541, %v7777
        %v7906 = vmul.f32 %v6732, %v7778
        %v7907 = vmul.f32 %v6734, %v7779
        %v7908 = vmul.f32 %v6543, %v7780
        %v7909 = vmul.f32 %v6545, %v7781
        %v7910 = vmul.f32 %v6736, %v7782
        %v7911 = vmul.f32 %v6738, %v7783
        %v7912 = vmul.f32 %v6549, %v7784
        %v7913 = vmul.f32 %v6551, %v7785
        %v7914 = vmul.f32 %v6742, %v7786
        %v7915 = vmul.f32 %v6744, %v7787
        %v7916 = vmul.f32 %v6553, %v7788
        %v7917 = vmul.f32 %v6555, %v7789
        %v7918 = vmul.f32 %v6746, %v7790
        %v7919 = vmul.f32 %v6748, %v7791
        %v7920 = vmul.f32 %v6559, %v7792
        %v7921 = vmul.f32 %v6561, %v7793
        %v7922 = vmul.f32 %v6752, %v7794
        %v7923 = vmul.f32 %v6754, %v7795
        %v7924 = vmul.f32 %v6563, %v7796
        %v7925 = vmul.f32 %v6565, %v7797
        %v7926 = vmul.f32 %v6756, %v7798
        %v7927 = vmul.f32 %v6758, %v7799
        %v7928 = vmul.f32 %v6569, %v7800
        %v7929 = vmul.f32 %v6571, %v7801
        %v7930 = vmul.f32 %v6762, %v7802
        %v7931 = vmul.f32 %v6764, %v7803
        %v7932 = vmul.f32 %v6573, %v7804
        %v7933 = vmul.f32 %v6575, %v7805
        %v7934 = vmul.f32 %v6766, %v7806
        %v7935 = vmul.f32 %v6768, %v7807
        %v7936 = vmul.f32 %v6579, %v7808
        %v7937 = vmul.f32 %v6581, %v7809
        %v7938 = vmul.f32 %v6772, %v7810
        %v7939 = vmul.f32 %v6774, %v7811
        %v7940 = vmul.f32 %v6583, %v7812
        %v7941 = vmul.f32 %v6585, %v7813
        %v7942 = vmul.f32 %v6776, %v7814
        %v7943 = vmul.f32 %v6778, %v7815
        %v7944 = vmul.f32 %v6589, %v7816
        %v7945 = vmul.f32 %v6591, %v7817
        %v7946 = vmul.f32 %v6782, %v7818
        %v7947 = vmul.f32 %v6784, %v7819
        %v7948 = vmul.f32 %v6593, %v7820
        %v7949 = vmul.f32 %v6595, %v7821
        %v7950 = vmul.f32 %v6786, %v7822
        %v7951 = vmul.f32 %v6788, %v7823
        %v7952 = vmul.f32 %v6599, %v7824
        %v7953 = vmul.f32 %v6601, %v7825
        %v7954 = vmul.f32 %v6792, %v7826
        %v7955 = vmul.f32 %v6794, %v7827
        %v7956 = vmul.f32 %v6603, %v7828
        %v7957 = vmul.f32 %v6605, %v7829
        %v7958 = vmul.f32 %v6796, %v7830
        %v7959 = vmul.f32 %v6798, %v7831
        %v7960 = vmul.f32 %v6609, %v7832
        %v7961 = vmul.f32 %v6611, %v7833
        %v7962 = vmul.f32 %v6802, %v7834
        %v7963 = vmul.f32 %v6804, %v7835
        %v7964 = vmul.f32 %v6613, %v7836
        %v7965 = vmul.f32 %v6615, %v7837
        %v7966 = vmul.f32 %v6806, %v7838
        %v7967 = vmul.f32 %v6808, %v7839
        %v7968 = vmul.f32 %v6619, %v7840
        %v7969 = vmul.f32 %v6621, %v7841
        %v7970 = vmul.f32 %v6812, %v7842
        %v7971 = vmul.f32 %v6814, %v7843
        %v7972 = vmul.f32 %v6623, %v7844
        %v7973 = vmul.f32 %v6625, %v7845
        %v7974 = vmul.f32 %v6816, %v7846
        %v7975 = vmul.f32 %v6818, %v7847
        %v7976 = vmul.f32 %v6629, %v7848
        %v7977 = vmul.f32 %v6631, %v7849
        %v7978 = vmul.f32 %v6822, %v7850
        %v7979 = vmul.f32 %v6824, %v7851
        %v7980 = vmul.f32 %v6633, %v7852
        %v7981 = vmul.f32 %v6635, %v7853
        %v7982 = vmul.f32 %v6826, %v7854
        %v7983 = vmul.f32 %v6828, %v7855
        %v7984 = vmul.f32 %v6639, %v7856
        %v7985 = vmul.f32 %v6641, %v7857
        %v7986 = vmul.f32 %v6832, %v7858
        %v7987 = vmul.f32 %v6834, %v7859
        %v7988 = vmul.f32 %v6643, %v7860
        %v7989 = vmul.f32 %v6645, %v7861
        %v7990 = vmul.f32 %v6836, %v7862
        %v7991 = vmul.f32 %v6838, %v7863
        %v7992 = vpack.c.bf16 %v7868, %v7864
        %v7993 = vpack.c.bf16 %v7869, %v7865
        %v7994 = vpack.c.bf16 %v7870, %v7866
        %v7995 = vpack.c.bf16 %v7871, %v7867
        %v7996 = vpack.c.bf16 %v7876, %v7872
        %v7997 = vpack.c.bf16 %v7877, %v7873
        %v7998 = vpack.c.bf16 %v7878, %v7874
        %v7999 = vpack.c.bf16 %v7879, %v7875
        %v8000 = vpack.c.bf16 %v7884, %v7880
        %v8001 = vpack.c.bf16 %v7885, %v7881
        %v8002 = vpack.c.bf16 %v7886, %v7882
        %v8003 = vpack.c.bf16 %v7887, %v7883
        %v8004 = vpack.c.bf16 %v7892, %v7888
        %v8005 = vpack.c.bf16 %v7893, %v7889
        %v8006 = vpack.c.bf16 %v7894, %v7890
        %v8007 = vpack.c.bf16 %v7895, %v7891
        %v8008 = vpack.c.bf16 %v7900, %v7896
        %v8009 = vpack.c.bf16 %v7901, %v7897
        %v8010 = vpack.c.bf16 %v7902, %v7898
        %v8011 = vpack.c.bf16 %v7903, %v7899
        %v8012 = vpack.c.bf16 %v7908, %v7904
        %v8013 = vpack.c.bf16 %v7909, %v7905
        %v8014 = vpack.c.bf16 %v7910, %v7906
        %v8015 = vpack.c.bf16 %v7911, %v7907
        %v8016 = vpack.c.bf16 %v7916, %v7912
        %v8017 = vpack.c.bf16 %v7917, %v7913
        %v8018 = vpack.c.bf16 %v7918, %v7914
        %v8019 = vpack.c.bf16 %v7919, %v7915
        %v8020 = vpack.c.bf16 %v7924, %v7920
        %v8021 = vpack.c.bf16 %v7925, %v7921
        %v8022 = vpack.c.bf16 %v7926, %v7922
        %v8023 = vpack.c.bf16 %v7927, %v7923
        %v8024 = vpack.c.bf16 %v7932, %v7928
        %v8025 = vpack.c.bf16 %v7933, %v7929
        %v8026 = vpack.c.bf16 %v7934, %v7930
        %v8027 = vpack.c.bf16 %v7935, %v7931
        %v8028 = vpack.c.bf16 %v7940, %v7936
        %v8029 = vpack.c.bf16 %v7941, %v7937
        %v8030 = vpack.c.bf16 %v7942, %v7938
        %v8031 = vpack.c.bf16 %v7943, %v7939
        %v8032 = vpack.c.bf16 %v7948, %v7944
        %v8033 = vpack.c.bf16 %v7949, %v7945
        %v8034 = vpack.c.bf16 %v7950, %v7946
        %v8035 = vpack.c.bf16 %v7951, %v7947
        %v8036 = vpack.c.bf16 %v7956, %v7952
        %v8037 = vpack.c.bf16 %v7957, %v7953
        %v8038 = vpack.c.bf16 %v7958, %v7954
        %v8039 = vpack.c.bf16 %v7959, %v7955
        %v8040 = vpack.c.bf16 %v7964, %v7960
        %v8041 = vpack.c.bf16 %v7965, %v7961
        %v8042 = vpack.c.bf16 %v7966, %v7962
        %v8043 = vpack.c.bf16 %v7967, %v7963
        %v8044 = vpack.c.bf16 %v7972, %v7968
        %v8045 = vpack.c.bf16 %v7973, %v7969
        %v8046 = vpack.c.bf16 %v7974, %v7970
        %v8047 = vpack.c.bf16 %v7975, %v7971
        %v8048 = vpack.c.bf16 %v7980, %v7976
        %v8049 = vpack.c.bf16 %v7981, %v7977
        %v8050 = vpack.c.bf16 %v7982, %v7978
        %v8051 = vpack.c.bf16 %v7983, %v7979
        %v8052 = vpack.c.bf16 %v7988, %v7984
        %v8053 = vpack.c.bf16 %v7989, %v7985
        %v8054 = vpack.c.bf16 %v7990, %v7986
        %v8055 = vpack.c.bf16 %v7991, %v7987
        %v8056 = vld [vmem:[%s659] sm:$0xff]
        %v8057 = vld [vmem:[%s659 + $0x8] sm:$0xff]
        %v8058 = vld [vmem:[%s659 + $0x10] sm:$0xff]
        %v8059 = vld [vmem:[%s659 + $0x18] sm:$0xff]
        %v8060 = vld [vmem:[%s659 + $0x20] sm:$0xff]
        %v8061 = vld [vmem:[%s659 + $0x28] sm:$0xff]
        %v8062 = vld [vmem:[%s659 + $0x30] sm:$0xff]
        %v8063 = vld [vmem:[%s659 + $0x38] sm:$0xff]
        %v8064 = vld [vmem:[%s659 + $0x40] sm:$0xff]
        %v8065 = vld [vmem:[%s659 + $0x48] sm:$0xff]
        %v8066 = vld [vmem:[%s659 + $0x50] sm:$0xff]
        %v8067 = vld [vmem:[%s659 + $0x58] sm:$0xff]
        %v8068 = vld [vmem:[%s659 + $0x60] sm:$0xff]
        %v8069 = vld [vmem:[%s659 + $0x68] sm:$0xff]
        %v8070 = vld [vmem:[%s659 + $0x70] sm:$0xff]
        %v8071 = vld [vmem:[%s659 + $0x78] sm:$0xff]
        %v8072 = vld [vmem:[%s659 + $0x80] sm:$0xff]
        %v8073 = vld [vmem:[%s659 + $0x88] sm:$0xff]
        %v8074 = vld [vmem:[%s659 + $0x90] sm:$0xff]
        %v8075 = vld [vmem:[%s659 + $0x98] sm:$0xff]
        %v8076 = vld [vmem:[%s659 + $0xa0] sm:$0xff]
        %v8077 = vld [vmem:[%s659 + $0xa8] sm:$0xff]
        %v8078 = vld [vmem:[%s659 + $0xb0] sm:$0xff]
        %v8079 = vld [vmem:[%s659 + $0xb8] sm:$0xff]
        %v8080 = vld [vmem:[%s659 + $0xc0] sm:$0xff]
        %v8081 = vld [vmem:[%s659 + $0xc8] sm:$0xff]
        %v8082 = vld [vmem:[%s659 + $0xd0] sm:$0xff]
        %v8083 = vld [vmem:[%s659 + $0xd8] sm:$0xff]
        %v8084 = vld [vmem:[%s659 + $0xe0] sm:$0xff]
        %v8085 = vld [vmem:[%s659 + $0xe8] sm:$0xff]
        %v8086 = vld [vmem:[%s659 + $0xf0] sm:$0xff]
        %v8087 = vld [vmem:[%s659 + $0xf8] sm:$0xff]
        %v8088 = vld [vmem:[%s659 + $0x100] sm:$0xff]
        %v8089 = vld [vmem:[%s659 + $0x108] sm:$0xff]
        %v8090 = vld [vmem:[%s659 + $0x110] sm:$0xff]
        %v8091 = vld [vmem:[%s659 + $0x118] sm:$0xff]
        %v8092 = vld [vmem:[%s659 + $0x120] sm:$0xff]
        %v8093 = vld [vmem:[%s659 + $0x128] sm:$0xff]
        %v8094 = vld [vmem:[%s659 + $0x130] sm:$0xff]
        %v8095 = vld [vmem:[%s659 + $0x138] sm:$0xff]
        %v8096 = vld [vmem:[%s659 + $0x140] sm:$0xff]
        %v8097 = vld [vmem:[%s659 + $0x148] sm:$0xff]
        %v8098 = vld [vmem:[%s659 + $0x150] sm:$0xff]
        %v8099 = vld [vmem:[%s659 + $0x158] sm:$0xff]
        %v8100 = vld [vmem:[%s659 + $0x160] sm:$0xff]
        %v8101 = vld [vmem:[%s659 + $0x168] sm:$0xff]
        %v8102 = vld [vmem:[%s659 + $0x170] sm:$0xff]
        %v8103 = vld [vmem:[%s659 + $0x178] sm:$0xff]
        %v8104 = vld [vmem:[%s659 + $0x180] sm:$0xff]
        %v8105 = vld [vmem:[%s659 + $0x188] sm:$0xff]
        %v8106 = vld [vmem:[%s659 + $0x190] sm:$0xff]
        %v8107 = vld [vmem:[%s659 + $0x198] sm:$0xff]
        %v8108 = vld [vmem:[%s659 + $0x1a0] sm:$0xff]
        %v8109 = vld [vmem:[%s659 + $0x1a8] sm:$0xff]
        %v8110 = vld [vmem:[%s659 + $0x1b0] sm:$0xff]
        %v8111 = vld [vmem:[%s659 + $0x1b8] sm:$0xff]
        %v8112 = vld [vmem:[%s659 + $0x1c0] sm:$0xff]
        %v8113 = vld [vmem:[%s659 + $0x1c8] sm:$0xff]
        %v8114 = vld [vmem:[%s659 + $0x1d0] sm:$0xff]
        %v8115 = vld [vmem:[%s659 + $0x1d8] sm:$0xff]
        %v8116 = vld [vmem:[%s659 + $0x1e0] sm:$0xff]
        %v8117 = vld [vmem:[%s659 + $0x1e8] sm:$0xff]
        %v8118 = vld [vmem:[%s659 + $0x1f0] sm:$0xff]
        %v8119 = vld [vmem:[%s659 + $0x1f8] sm:$0xff]
        %v8120 = vld [vmem:[%s757] sm:$0x3]
        %v8122 = vlaneseq
        %v8123 = vshrl.u32 %v8122, 7
        %v8124 = vsub.s32 0, %v8123
        %v8125 = vrot.slane %v8120, %v8124
        %v8126 = vlaneseq
        %v8127 = vshrl.u32 %v8126, 7
        %v8128 = vsub.s32 1, %v8127
        %v8129 = vrot.slane %v8120, %v8128
        %v8196 = vunpack.c.l.b16 %v8056
        %v8197 = vunpack.c.h.b16 %v8056
        %v8198 = vunpack.c.l.b16 %v8057
        %v8199 = vunpack.c.h.b16 %v8057
        %v8200 = vunpack.c.l.b16 %v8058
        %v8201 = vunpack.c.h.b16 %v8058
        %v8202 = vunpack.c.l.b16 %v8059
        %v8203 = vunpack.c.h.b16 %v8059
        %v8204 = vunpack.c.l.b16 %v8060
        %v8205 = vunpack.c.h.b16 %v8060
        %v8206 = vunpack.c.l.b16 %v8061
        %v8207 = vunpack.c.h.b16 %v8061
        %v8208 = vunpack.c.l.b16 %v8062
        %v8209 = vunpack.c.h.b16 %v8062
        %v8210 = vunpack.c.l.b16 %v8063
        %v8211 = vunpack.c.h.b16 %v8063
        %v8212 = vunpack.c.l.b16 %v8064
        %v8213 = vunpack.c.h.b16 %v8064
        %v8214 = vunpack.c.l.b16 %v8065
        %v8215 = vunpack.c.h.b16 %v8065
        %v8216 = vunpack.c.l.b16 %v8066
        %v8217 = vunpack.c.h.b16 %v8066
        %v8218 = vunpack.c.l.b16 %v8067
        %v8219 = vunpack.c.h.b16 %v8067
        %v8220 = vunpack.c.l.b16 %v8068
        %v8221 = vunpack.c.h.b16 %v8068
        %v8222 = vunpack.c.l.b16 %v8069
        %v8223 = vunpack.c.h.b16 %v8069
        %v8224 = vunpack.c.l.b16 %v8070
        %v8225 = vunpack.c.h.b16 %v8070
        %v8226 = vunpack.c.l.b16 %v8071
        %v8227 = vunpack.c.h.b16 %v8071
        %v8228 = vunpack.c.l.b16 %v8072
        %v8229 = vunpack.c.h.b16 %v8072
        %v8230 = vunpack.c.l.b16 %v8073
        %v8231 = vunpack.c.h.b16 %v8073
        %v8232 = vunpack.c.l.b16 %v8074
        %v8233 = vunpack.c.h.b16 %v8074
        %v8234 = vunpack.c.l.b16 %v8075
        %v8235 = vunpack.c.h.b16 %v8075
        %v8236 = vunpack.c.l.b16 %v8076
        %v8237 = vunpack.c.h.b16 %v8076
        %v8238 = vunpack.c.l.b16 %v8077
        %v8239 = vunpack.c.h.b16 %v8077
        %v8240 = vunpack.c.l.b16 %v8078
        %v8241 = vunpack.c.h.b16 %v8078
        %v8242 = vunpack.c.l.b16 %v8079
        %v8243 = vunpack.c.h.b16 %v8079
        %v8244 = vunpack.c.l.b16 %v8080
        %v8245 = vunpack.c.h.b16 %v8080
        %v8246 = vunpack.c.l.b16 %v8081
        %v8247 = vunpack.c.h.b16 %v8081
        %v8248 = vunpack.c.l.b16 %v8082
        %v8249 = vunpack.c.h.b16 %v8082
        %v8250 = vunpack.c.l.b16 %v8083
        %v8251 = vunpack.c.h.b16 %v8083
        %v8252 = vunpack.c.l.b16 %v8084
        %v8253 = vunpack.c.h.b16 %v8084
        %v8254 = vunpack.c.l.b16 %v8085
        %v8255 = vunpack.c.h.b16 %v8085
        %v8256 = vunpack.c.l.b16 %v8086
        %v8257 = vunpack.c.h.b16 %v8086
        %v8258 = vunpack.c.l.b16 %v8087
        %v8259 = vunpack.c.h.b16 %v8087
        %v8260 = vunpack.c.l.b16 %v8088
        %v8261 = vunpack.c.h.b16 %v8088
        %v8262 = vunpack.c.l.b16 %v8089
        %v8263 = vunpack.c.h.b16 %v8089
        %v8264 = vunpack.c.l.b16 %v8090
        %v8265 = vunpack.c.h.b16 %v8090
        %v8266 = vunpack.c.l.b16 %v8091
        %v8267 = vunpack.c.h.b16 %v8091
        %v8268 = vunpack.c.l.b16 %v8092
        %v8269 = vunpack.c.h.b16 %v8092
        %v8270 = vunpack.c.l.b16 %v8093
        %v8271 = vunpack.c.h.b16 %v8093
        %v8272 = vunpack.c.l.b16 %v8094
        %v8273 = vunpack.c.h.b16 %v8094
        %v8274 = vunpack.c.l.b16 %v8095
        %v8275 = vunpack.c.h.b16 %v8095
        %v8276 = vunpack.c.l.b16 %v8096
        %v8277 = vunpack.c.h.b16 %v8096
        %v8278 = vunpack.c.l.b16 %v8097
        %v8279 = vunpack.c.h.b16 %v8097
        %v8280 = vunpack.c.l.b16 %v8098
        %v8281 = vunpack.c.h.b16 %v8098
        %v8282 = vunpack.c.l.b16 %v8099
        %v8283 = vunpack.c.h.b16 %v8099
        %v8284 = vunpack.c.l.b16 %v8100
        %v8285 = vunpack.c.h.b16 %v8100
        %v8286 = vunpack.c.l.b16 %v8101
        %v8287 = vunpack.c.h.b16 %v8101
        %v8288 = vunpack.c.l.b16 %v8102
        %v8289 = vunpack.c.h.b16 %v8102
        %v8290 = vunpack.c.l.b16 %v8103
        %v8291 = vunpack.c.h.b16 %v8103
        %v8292 = vunpack.c.l.b16 %v8104
        %v8293 = vunpack.c.h.b16 %v8104
        %v8294 = vunpack.c.l.b16 %v8105
        %v8295 = vunpack.c.h.b16 %v8105
        %v8296 = vunpack.c.l.b16 %v8106
        %v8297 = vunpack.c.h.b16 %v8106
        %v8298 = vunpack.c.l.b16 %v8107
        %v8299 = vunpack.c.h.b16 %v8107
        %v8300 = vunpack.c.l.b16 %v8108
        %v8301 = vunpack.c.h.b16 %v8108
        %v8302 = vunpack.c.l.b16 %v8109
        %v8303 = vunpack.c.h.b16 %v8109
        %v8304 = vunpack.c.l.b16 %v8110
        %v8305 = vunpack.c.h.b16 %v8110
        %v8306 = vunpack.c.l.b16 %v8111
        %v8307 = vunpack.c.h.b16 %v8111
        %v8308 = vunpack.c.l.b16 %v8112
        %v8309 = vunpack.c.h.b16 %v8112
        %v8310 = vunpack.c.l.b16 %v8113
        %v8311 = vunpack.c.h.b16 %v8113
        %v8312 = vunpack.c.l.b16 %v8114
        %v8313 = vunpack.c.h.b16 %v8114
        %v8314 = vunpack.c.l.b16 %v8115
        %v8315 = vunpack.c.h.b16 %v8115
        %v8316 = vunpack.c.l.b16 %v8116
        %v8317 = vunpack.c.h.b16 %v8116
        %v8318 = vunpack.c.l.b16 %v8117
        %v8319 = vunpack.c.h.b16 %v8117
        %v8320 = vunpack.c.l.b16 %v8118
        %v8321 = vunpack.c.h.b16 %v8118
        %v8322 = vunpack.c.l.b16 %v8119
        %v8323 = vunpack.c.h.b16 %v8119
        %v8324 = vpack.c.b16 %v8198, %v8196
        %v8325 = vpack.c.b16 %v8199, %v8197
        %v8326 = vpack.c.b16 %v8202, %v8200
        %v8327 = vpack.c.b16 %v8203, %v8201
        %v8328 = vpack.c.b16 %v8206, %v8204
        %v8329 = vpack.c.b16 %v8207, %v8205
        %v8330 = vpack.c.b16 %v8210, %v8208
        %v8331 = vpack.c.b16 %v8211, %v8209
        %v8332 = vpack.c.b16 %v8214, %v8212
        %v8333 = vpack.c.b16 %v8215, %v8213
        %v8334 = vpack.c.b16 %v8218, %v8216
        %v8335 = vpack.c.b16 %v8219, %v8217
        %v8336 = vpack.c.b16 %v8222, %v8220
        %v8337 = vpack.c.b16 %v8223, %v8221
        %v8338 = vpack.c.b16 %v8226, %v8224
        %v8339 = vpack.c.b16 %v8227, %v8225
        %v8340 = vpack.c.b16 %v8230, %v8228
        %v8341 = vpack.c.b16 %v8231, %v8229
        %v8342 = vpack.c.b16 %v8234, %v8232
        %v8343 = vpack.c.b16 %v8235, %v8233
        %v8344 = vpack.c.b16 %v8238, %v8236
        %v8345 = vpack.c.b16 %v8239, %v8237
        %v8346 = vpack.c.b16 %v8242, %v8240
        %v8347 = vpack.c.b16 %v8243, %v8241
        %v8348 = vpack.c.b16 %v8246, %v8244
        %v8349 = vpack.c.b16 %v8247, %v8245
        %v8350 = vpack.c.b16 %v8250, %v8248
        %v8351 = vpack.c.b16 %v8251, %v8249
        %v8352 = vpack.c.b16 %v8254, %v8252
        %v8353 = vpack.c.b16 %v8255, %v8253
        %v8354 = vpack.c.b16 %v8258, %v8256
        %v8355 = vpack.c.b16 %v8259, %v8257
        %v8356 = vpack.c.b16 %v8262, %v8260
        %v8357 = vpack.c.b16 %v8263, %v8261
        %v8358 = vpack.c.b16 %v8266, %v8264
        %v8359 = vpack.c.b16 %v8267, %v8265
        %v8360 = vpack.c.b16 %v8270, %v8268
        %v8361 = vpack.c.b16 %v8271, %v8269
        %v8362 = vpack.c.b16 %v8274, %v8272
        %v8363 = vpack.c.b16 %v8275, %v8273
        %v8364 = vpack.c.b16 %v8278, %v8276
        %v8365 = vpack.c.b16 %v8279, %v8277
        %v8366 = vpack.c.b16 %v8282, %v8280
        %v8367 = vpack.c.b16 %v8283, %v8281
        %v8368 = vpack.c.b16 %v8286, %v8284
        %v8369 = vpack.c.b16 %v8287, %v8285
        %v8370 = vpack.c.b16 %v8290, %v8288
        %v8371 = vpack.c.b16 %v8291, %v8289
        %v8372 = vpack.c.b16 %v8294, %v8292
        %v8373 = vpack.c.b16 %v8295, %v8293
        %v8374 = vpack.c.b16 %v8298, %v8296
        %v8375 = vpack.c.b16 %v8299, %v8297
        %v8376 = vpack.c.b16 %v8302, %v8300
        %v8377 = vpack.c.b16 %v8303, %v8301
        %v8378 = vpack.c.b16 %v8306, %v8304
        %v8379 = vpack.c.b16 %v8307, %v8305
        %v8380 = vpack.c.b16 %v8310, %v8308
        %v8381 = vpack.c.b16 %v8311, %v8309
        %v8382 = vpack.c.b16 %v8314, %v8312
        %v8383 = vpack.c.b16 %v8315, %v8313
        %v8384 = vpack.c.b16 %v8318, %v8316
        %v8385 = vpack.c.b16 %v8319, %v8317
        %v8386 = vpack.c.b16 %v8322, %v8320
        %v8387 = vpack.c.b16 %v8323, %v8321
        %8452 = vmatprep.subr.bf16.mxu0 %v8325
        %8453 = vmatpush1.bf16.msra.mxu0 %v8324
        %8454 = vmatprep.subr.bf16.mxu0 %v8327
        %8455 = vmatpush1.bf16.msra.mxu0 %v8326
        %8456 = vmatprep.subr.bf16.mxu0 %v8329
        %8457 = vmatpush1.bf16.msra.mxu0 %v8328
        %8458 = vmatprep.subr.bf16.mxu0 %v8331
        %8459 = vmatpush1.bf16.msra.mxu0 %v8330
        %8460 = vmatprep.subr.bf16.mxu0 %v8333
        %8461 = vmatpush1.bf16.msra.mxu0 %v8332
        %8462 = vmatprep.subr.bf16.mxu0 %v8335
        %8463 = vmatpush1.bf16.msra.mxu0 %v8334
        %8464 = vmatprep.subr.bf16.mxu0 %v8337
        %8465 = vmatpush1.bf16.msra.mxu0 %v8336
        %8466 = vmatprep.subr.bf16.mxu0 %v8339
        %8467 = vmatpush1.bf16.msra.mxu0 %v8338
        %8468 = vmatprep.subr.bf16.mxu0 %v8341
        %8469 = vmatpush1.bf16.msra.mxu0 %v8340
        %8470 = vmatprep.subr.bf16.mxu0 %v8343
        %8471 = vmatpush1.bf16.msra.mxu0 %v8342
        %8472 = vmatprep.subr.bf16.mxu0 %v8345
        %8473 = vmatpush1.bf16.msra.mxu0 %v8344
        %8474 = vmatprep.subr.bf16.mxu0 %v8347
        %8475 = vmatpush1.bf16.msra.mxu0 %v8346
        %8476 = vmatprep.subr.bf16.mxu0 %v8349
        %8477 = vmatpush1.bf16.msra.mxu0 %v8348
        %8478 = vmatprep.subr.bf16.mxu0 %v8351
        %8479 = vmatpush1.bf16.msra.mxu0 %v8350
        %8480 = vmatprep.subr.bf16.mxu0 %v8353
        %8481 = vmatpush1.bf16.msra.mxu0 %v8352
        %8482 = vmatprep.subr.bf16.mxu0 %v8355
        %8483 = vmatpush1.bf16.msra.mxu0 %v8354
        %8484 = vmatprep.mubr.bf16.mxu0 %v7993
        %8485 = vmatmul.mubr.bf16.gmra.mrb[0].mxu0 %v7992
        %v8486 = vpop.f32.mrb[0].mxu0
        %v8487 = vadd.f32 %v8125, %v8486
        %v8488 = vpop.f32.mrb[0].mxu0
        %v8489 = vadd.f32 %v8129, %v8488
        %v8490 = vpop.f32.mrb[0].mxu0
        %v8491 = vadd.f32 %v8125, %v8490
        %v8492 = vpop.f32.mrb[0].mxu0
        %v8493 = vadd.f32 %v8129, %v8492
        %8494 = vmatprep.mubr.bf16.mxu0 %v7997
        %8495 = vmatmul.mubr.bf16.gmra.mrb[0].mxu0 %v7996
        %v8496 = vpop.f32.mrb[0].mxu0
        %v8497 = vadd.f32 %v8125, %v8496
        %v8498 = vpop.f32.mrb[0].mxu0
        %v8499 = vadd.f32 %v8129, %v8498
        %v8500 = vpop.f32.mrb[0].mxu0
        %v8501 = vadd.f32 %v8125, %v8500
        %v8502 = vpop.f32.mrb[0].mxu0
        %v8503 = vadd.f32 %v8129, %v8502
        %8504 = vmatprep.mubr.bf16.mxu0 %v8001
        %8505 = vmatmul.mubr.bf16.gmra.mrb[0].mxu0 %v8000
        %v8506 = vpop.f32.mrb[0].mxu0
        %v8507 = vadd.f32 %v8125, %v8506
        %v8508 = vpop.f32.mrb[0].mxu0
        %v8509 = vadd.f32 %v8129, %v8508
        %v8510 = vpop.f32.mrb[0].mxu0
        %v8511 = vadd.f32 %v8125, %v8510
        %v8512 = vpop.f32.mrb[0].mxu0
        %v8513 = vadd.f32 %v8129, %v8512
        %8514 = vmatprep.mubr.bf16.mxu0 %v8005
        %8515 = vmatmul.mubr.bf16.gmra.mrb[0].mxu0 %v8004
        %v8516 = vpop.f32.mrb[0].mxu0
        %v8517 = vadd.f32 %v8125, %v8516
        %v8518 = vpop.f32.mrb[0].mxu0
        %v8519 = vadd.f32 %v8129, %v8518
        %v8520 = vpop.f32.mrb[0].mxu0
        %v8521 = vadd.f32 %v8125, %v8520
        %v8522 = vpop.f32.mrb[0].mxu0
        %v8523 = vadd.f32 %v8129, %v8522
        %8524 = vmatprep.mubr.bf16.mxu0 %v8009
        %8525 = vmatmul.mubr.bf16.gmra.mrb[0].mxu0 %v8008
        %v8526 = vpop.f32.mrb[0].mxu0
        %v8527 = vadd.f32 %v8125, %v8526
        %v8528 = vpop.f32.mrb[0].mxu0
        %v8529 = vadd.f32 %v8129, %v8528
        %v8530 = vpop.f32.mrb[0].mxu0
        %v8531 = vadd.f32 %v8125, %v8530
        %v8532 = vpop.f32.mrb[0].mxu0
        %v8533 = vadd.f32 %v8129, %v8532
        %8534 = vmatprep.mubr.bf16.mxu0 %v8013
        %8535 = vmatmul.mubr.bf16.gmra.mrb[0].mxu0 %v8012
        %v8536 = vpop.f32.mrb[0].mxu0
        %v8537 = vadd.f32 %v8125, %v8536
        %v8538 = vpop.f32.mrb[0].mxu0
        %v8539 = vadd.f32 %v8129, %v8538
        %v8540 = vpop.f32.mrb[0].mxu0
        %v8541 = vadd.f32 %v8125, %v8540
        %v8542 = vpop.f32.mrb[0].mxu0
        %v8543 = vadd.f32 %v8129, %v8542
        %8544 = vmatprep.mubr.bf16.mxu0 %v8017
        %8545 = vmatmul.mubr.bf16.gmra.mrb[0].mxu0 %v8016
        %v8546 = vpop.f32.mrb[0].mxu0
        %v8547 = vadd.f32 %v8125, %v8546
        %v8548 = vpop.f32.mrb[0].mxu0
        %v8549 = vadd.f32 %v8129, %v8548
        %v8550 = vpop.f32.mrb[0].mxu0
        %v8551 = vadd.f32 %v8125, %v8550
        %v8552 = vpop.f32.mrb[0].mxu0
        %v8553 = vadd.f32 %v8129, %v8552
        %8554 = vmatprep.mubr.bf16.mxu0 %v8021
        %8555 = vmatmul.mubr.bf16.gmra.mrb[0].mxu0 %v8020
        %v8556 = vpop.f32.mrb[0].mxu0
        %v8557 = vadd.f32 %v8125, %v8556
        %v8558 = vpop.f32.mrb[0].mxu0
        %v8559 = vadd.f32 %v8129, %v8558
        %v8560 = vpop.f32.mrb[0].mxu0
        %v8561 = vadd.f32 %v8125, %v8560
        %v8562 = vpop.f32.mrb[0].mxu0
        %v8563 = vadd.f32 %v8129, %v8562
        %8564 = vmatprep.mubr.bf16.mxu0 %v8025
        %8565 = vmatmul.mubr.bf16.gmra.mrb[0].mxu0 %v8024
        %v8566 = vpop.f32.mrb[0].mxu0
        %v8567 = vadd.f32 %v8125, %v8566
        %v8568 = vpop.f32.mrb[0].mxu0
        %v8569 = vadd.f32 %v8129, %v8568
        %v8570 = vpop.f32.mrb[0].mxu0
        %v8571 = vadd.f32 %v8125, %v8570
        %v8572 = vpop.f32.mrb[0].mxu0
        %v8573 = vadd.f32 %v8129, %v8572
        %8574 = vmatprep.mubr.bf16.mxu0 %v8029
        %8575 = vmatmul.mubr.bf16.gmra.mrb[0].mxu0 %v8028
        %v8576 = vpop.f32.mrb[0].mxu0
        %v8577 = vadd.f32 %v8125, %v8576
        %v8578 = vpop.f32.mrb[0].mxu0
        %v8579 = vadd.f32 %v8129, %v8578
        %v8580 = vpop.f32.mrb[0].mxu0
        %v8581 = vadd.f32 %v8125, %v8580
        %v8582 = vpop.f32.mrb[0].mxu0
        %v8583 = vadd.f32 %v8129, %v8582
        %8584 = vmatprep.mubr.bf16.mxu0 %v8033
        %8585 = vmatmul.mubr.bf16.gmra.mrb[0].mxu0 %v8032
        %v8586 = vpop.f32.mrb[0].mxu0
        %v8587 = vadd.f32 %v8125, %v8586
        %v8588 = vpop.f32.mrb[0].mxu0
        %v8589 = vadd.f32 %v8129, %v8588
        %v8590 = vpop.f32.mrb[0].mxu0
        %v8591 = vadd.f32 %v8125, %v8590
        %v8592 = vpop.f32.mrb[0].mxu0
        %v8593 = vadd.f32 %v8129, %v8592
        %8594 = vmatprep.mubr.bf16.mxu0 %v8037
        %8595 = vmatmul.mubr.bf16.gmra.mrb[0].mxu0 %v8036
        %v8596 = vpop.f32.mrb[0].mxu0
        %v8597 = vadd.f32 %v8125, %v8596
        %v8598 = vpop.f32.mrb[0].mxu0
        %v8599 = vadd.f32 %v8129, %v8598
        %v8600 = vpop.f32.mrb[0].mxu0
        %v8601 = vadd.f32 %v8125, %v8600
        %v8602 = vpop.f32.mrb[0].mxu0
        %v8603 = vadd.f32 %v8129, %v8602
        %8604 = vmatprep.mubr.bf16.mxu0 %v8041
        %8605 = vmatmul.mubr.bf16.gmra.mrb[0].mxu0 %v8040
        %v8606 = vpop.f32.mrb[0].mxu0
        %v8607 = vadd.f32 %v8125, %v8606
        %v8608 = vpop.f32.mrb[0].mxu0
        %v8609 = vadd.f32 %v8129, %v8608
        %v8610 = vpop.f32.mrb[0].mxu0
        %v8611 = vadd.f32 %v8125, %v8610
        %v8612 = vpop.f32.mrb[0].mxu0
        %v8613 = vadd.f32 %v8129, %v8612
        %8614 = vmatprep.mubr.bf16.mxu0 %v8045
        %8615 = vmatmul.mubr.bf16.gmra.mrb[0].mxu0 %v8044
        %v8616 = vpop.f32.mrb[0].mxu0
        %v8617 = vadd.f32 %v8125, %v8616
        %v8618 = vpop.f32.mrb[0].mxu0
        %v8619 = vadd.f32 %v8129, %v8618
        %v8620 = vpop.f32.mrb[0].mxu0
        %v8621 = vadd.f32 %v8125, %v8620
        %v8622 = vpop.f32.mrb[0].mxu0
        %v8623 = vadd.f32 %v8129, %v8622
        %8624 = vmatprep.mubr.bf16.mxu0 %v8049
        %8625 = vmatmul.mubr.bf16.gmra.mrb[0].mxu0 %v8048
        %v8626 = vpop.f32.mrb[0].mxu0
        %v8627 = vadd.f32 %v8125, %v8626
        %v8628 = vpop.f32.mrb[0].mxu0
        %v8629 = vadd.f32 %v8129, %v8628
        %v8630 = vpop.f32.mrb[0].mxu0
        %v8631 = vadd.f32 %v8125, %v8630
        %v8632 = vpop.f32.mrb[0].mxu0
        %v8633 = vadd.f32 %v8129, %v8632
        %8634 = vmatprep.mubr.bf16.mxu0 %v8053
        %8635 = vmatmul.mubr.bf16.gmra.mrb[0].mxu0 %v8052
        %v8636 = vpop.f32.mrb[0].mxu0
        %v8637 = vadd.f32 %v8125, %v8636
        %v8638 = vpop.f32.mrb[0].mxu0
        %v8639 = vadd.f32 %v8129, %v8638
        %v8640 = vpop.f32.mrb[0].mxu0
        %v8641 = vadd.f32 %v8125, %v8640
        %v8642 = vpop.f32.mrb[0].mxu0
        %v8643 = vadd.f32 %v8129, %v8642
        %8644 = vdwg.mxu0
        %8645 = vmatprep.subr.bf16.mxu0 %v8357
        %8646 = vmatpush1.bf16.msra.mxu0 %v8356
        %8647 = vmatprep.subr.bf16.mxu0 %v8359
        %8648 = vmatpush1.bf16.msra.mxu0 %v8358
        %8649 = vmatprep.subr.bf16.mxu0 %v8361
        %8650 = vmatpush1.bf16.msra.mxu0 %v8360
        %8651 = vmatprep.subr.bf16.mxu0 %v8363
        %8652 = vmatpush1.bf16.msra.mxu0 %v8362
        %8653 = vmatprep.subr.bf16.mxu0 %v8365
        %8654 = vmatpush1.bf16.msra.mxu0 %v8364
        %8655 = vmatprep.subr.bf16.mxu0 %v8367
        %8656 = vmatpush1.bf16.msra.mxu0 %v8366
        %8657 = vmatprep.subr.bf16.mxu0 %v8369
        %8658 = vmatpush1.bf16.msra.mxu0 %v8368
        %8659 = vmatprep.subr.bf16.mxu0 %v8371
        %8660 = vmatpush1.bf16.msra.mxu0 %v8370
        %8661 = vmatprep.subr.bf16.mxu0 %v8373
        %8662 = vmatpush1.bf16.msra.mxu0 %v8372
        %8663 = vmatprep.subr.bf16.mxu0 %v8375
        %8664 = vmatpush1.bf16.msra.mxu0 %v8374
        %8665 = vmatprep.subr.bf16.mxu0 %v8377
        %8666 = vmatpush1.bf16.msra.mxu0 %v8376
        %8667 = vmatprep.subr.bf16.mxu0 %v8379
        %8668 = vmatpush1.bf16.msra.mxu0 %v8378
        %8669 = vmatprep.subr.bf16.mxu0 %v8381
        %8670 = vmatpush1.bf16.msra.mxu0 %v8380
        %8671 = vmatprep.subr.bf16.mxu0 %v8383
        %8672 = vmatpush1.bf16.msra.mxu0 %v8382
        %8673 = vmatprep.subr.bf16.mxu0 %v8385
        %8674 = vmatpush1.bf16.msra.mxu0 %v8384
        %8675 = vmatprep.subr.bf16.mxu0 %v8387
        %8676 = vmatpush1.bf16.msra.mxu0 %v8386
        %8677 = vmatprep.mubr.bf16.mxu0 %v7995
        %8678 = vmatmul.mubr.bf16.gmra.mrb[0].mxu0 %v7994
        %v8679 = vpop.f32.mrb[0].mxu0
        %v8680 = vadd.f32 %v8487, %v8679
        %v8681 = vpop.f32.mrb[0].mxu0
        %v8682 = vadd.f32 %v8489, %v8681
        %v8683 = vpop.f32.mrb[0].mxu0
        %v8684 = vadd.f32 %v8491, %v8683
        %v8685 = vpop.f32.mrb[0].mxu0
        %v8686 = vadd.f32 %v8493, %v8685
        %8687 = vmatprep.mubr.bf16.mxu0 %v7999
        %8688 = vmatmul.mubr.bf16.gmra.mrb[0].mxu0 %v7998
        %v8689 = vpop.f32.mrb[0].mxu0
        %v8690 = vadd.f32 %v8497, %v8689
        %v8691 = vpop.f32.mrb[0].mxu0
        %v8692 = vadd.f32 %v8499, %v8691
        %v8693 = vpop.f32.mrb[0].mxu0
        %v8694 = vadd.f32 %v8501, %v8693
        %v8695 = vpop.f32.mrb[0].mxu0
        %v8696 = vadd.f32 %v8503, %v8695
        %8697 = vmatprep.mubr.bf16.mxu0 %v8003
        %8698 = vmatmul.mubr.bf16.gmra.mrb[0].mxu0 %v8002
        %v8699 = vpop.f32.mrb[0].mxu0
        %v8700 = vadd.f32 %v8507, %v8699
        %v8701 = vpop.f32.mrb[0].mxu0
        %v8702 = vadd.f32 %v8509, %v8701
        %v8703 = vpop.f32.mrb[0].mxu0
        %v8704 = vadd.f32 %v8511, %v8703
        %v8705 = vpop.f32.mrb[0].mxu0
        %v8706 = vadd.f32 %v8513, %v8705
        %8707 = vmatprep.mubr.bf16.mxu0 %v8007
        %8708 = vmatmul.mubr.bf16.gmra.mrb[0].mxu0 %v8006
        %v8709 = vpop.f32.mrb[0].mxu0
        %v8710 = vadd.f32 %v8517, %v8709
        %v8711 = vpop.f32.mrb[0].mxu0
        %v8712 = vadd.f32 %v8519, %v8711
        %v8713 = vpop.f32.mrb[0].mxu0
        %v8714 = vadd.f32 %v8521, %v8713
        %v8715 = vpop.f32.mrb[0].mxu0
        %v8716 = vadd.f32 %v8523, %v8715
        %8717 = vmatprep.mubr.bf16.mxu0 %v8011
        %8718 = vmatmul.mubr.bf16.gmra.mrb[0].mxu0 %v8010
        %v8719 = vpop.f32.mrb[0].mxu0
        %v8720 = vadd.f32 %v8527, %v8719
        %v8721 = vpop.f32.mrb[0].mxu0
        %v8722 = vadd.f32 %v8529, %v8721
        %v8723 = vpop.f32.mrb[0].mxu0
        %v8724 = vadd.f32 %v8531, %v8723
        %v8725 = vpop.f32.mrb[0].mxu0
        %v8726 = vadd.f32 %v8533, %v8725
        %8727 = vmatprep.mubr.bf16.mxu0 %v8015
        %8728 = vmatmul.mubr.bf16.gmra.mrb[0].mxu0 %v8014
        %v8729 = vpop.f32.mrb[0].mxu0
        %v8730 = vadd.f32 %v8537, %v8729
        %v8731 = vpop.f32.mrb[0].mxu0
        %v8732 = vadd.f32 %v8539, %v8731
        %v8733 = vpop.f32.mrb[0].mxu0
        %v8734 = vadd.f32 %v8541, %v8733
        %v8735 = vpop.f32.mrb[0].mxu0
        %v8736 = vadd.f32 %v8543, %v8735
        %8737 = vmatprep.mubr.bf16.mxu0 %v8019
        %8738 = vmatmul.mubr.bf16.gmra.mrb[0].mxu0 %v8018
        %v8739 = vpop.f32.mrb[0].mxu0
        %v8740 = vadd.f32 %v8547, %v8739
        %v8741 = vpop.f32.mrb[0].mxu0
        %v8742 = vadd.f32 %v8549, %v8741
        %v8743 = vpop.f32.mrb[0].mxu0
        %v8744 = vadd.f32 %v8551, %v8743
        %v8745 = vpop.f32.mrb[0].mxu0
        %v8746 = vadd.f32 %v8553, %v8745
        %8747 = vmatprep.mubr.bf16.mxu0 %v8023
        %8748 = vmatmul.mubr.bf16.gmra.mrb[0].mxu0 %v8022
        %v8749 = vpop.f32.mrb[0].mxu0
        %v8750 = vadd.f32 %v8557, %v8749
        %v8751 = vpop.f32.mrb[0].mxu0
        %v8752 = vadd.f32 %v8559, %v8751
        %v8753 = vpop.f32.mrb[0].mxu0
        %v8754 = vadd.f32 %v8561, %v8753
        %v8755 = vpop.f32.mrb[0].mxu0
        %v8756 = vadd.f32 %v8563, %v8755
        %8757 = vmatprep.mubr.bf16.mxu0 %v8027
        %8758 = vmatmul.mubr.bf16.gmra.mrb[0].mxu0 %v8026
        %v8759 = vpop.f32.mrb[0].mxu0
        %v8760 = vadd.f32 %v8567, %v8759
        %v8761 = vpop.f32.mrb[0].mxu0
        %v8762 = vadd.f32 %v8569, %v8761
        %v8763 = vpop.f32.mrb[0].mxu0
        %v8764 = vadd.f32 %v8571, %v8763
        %v8765 = vpop.f32.mrb[0].mxu0
        %v8766 = vadd.f32 %v8573, %v8765
        %8767 = vmatprep.mubr.bf16.mxu0 %v8031
        %8768 = vmatmul.mubr.bf16.gmra.mrb[0].mxu0 %v8030
        %v8769 = vpop.f32.mrb[0].mxu0
        %v8770 = vadd.f32 %v8577, %v8769
        %v8771 = vpop.f32.mrb[0].mxu0
        %v8772 = vadd.f32 %v8579, %v8771
        %v8773 = vpop.f32.mrb[0].mxu0
        %v8774 = vadd.f32 %v8581, %v8773
        %v8775 = vpop.f32.mrb[0].mxu0
        %v8776 = vadd.f32 %v8583, %v8775
        %8777 = vmatprep.mubr.bf16.mxu0 %v8035
        %8778 = vmatmul.mubr.bf16.gmra.mrb[0].mxu0 %v8034
        %v8779 = vpop.f32.mrb[0].mxu0
        %v8780 = vadd.f32 %v8587, %v8779
        %v8781 = vpop.f32.mrb[0].mxu0
        %v8782 = vadd.f32 %v8589, %v8781
        %v8783 = vpop.f32.mrb[0].mxu0
        %v8784 = vadd.f32 %v8591, %v8783
        %v8785 = vpop.f32.mrb[0].mxu0
        %v8786 = vadd.f32 %v8593, %v8785
        %8787 = vmatprep.mubr.bf16.mxu0 %v8039
        %8788 = vmatmul.mubr.bf16.gmra.mrb[0].mxu0 %v8038
        %v8789 = vpop.f32.mrb[0].mxu0
        %v8790 = vadd.f32 %v8597, %v8789
        %v8791 = vpop.f32.mrb[0].mxu0
        %v8792 = vadd.f32 %v8599, %v8791
        %v8793 = vpop.f32.mrb[0].mxu0
        %v8794 = vadd.f32 %v8601, %v8793
        %v8795 = vpop.f32.mrb[0].mxu0
        %v8796 = vadd.f32 %v8603, %v8795
        %8797 = vmatprep.mubr.bf16.mxu0 %v8043
        %8798 = vmatmul.mubr.bf16.gmra.mrb[0].mxu0 %v8042
        %v8799 = vpop.f32.mrb[0].mxu0
        %v8800 = vadd.f32 %v8607, %v8799
        %v8801 = vpop.f32.mrb[0].mxu0
        %v8802 = vadd.f32 %v8609, %v8801
        %v8803 = vpop.f32.mrb[0].mxu0
        %v8804 = vadd.f32 %v8611, %v8803
        %v8805 = vpop.f32.mrb[0].mxu0
        %v8806 = vadd.f32 %v8613, %v8805
        %8807 = vmatprep.mubr.bf16.mxu0 %v8047
        %8808 = vmatmul.mubr.bf16.gmra.mrb[0].mxu0 %v8046
        %v8809 = vpop.f32.mrb[0].mxu0
        %v8810 = vadd.f32 %v8617, %v8809
        %v8811 = vpop.f32.mrb[0].mxu0
        %v8812 = vadd.f32 %v8619, %v8811
        %v8813 = vpop.f32.mrb[0].mxu0
        %v8814 = vadd.f32 %v8621, %v8813
        %v8815 = vpop.f32.mrb[0].mxu0
        %v8816 = vadd.f32 %v8623, %v8815
        %8817 = vmatprep.mubr.bf16.mxu0 %v8051
        %8818 = vmatmul.mubr.bf16.gmra.mrb[0].mxu0 %v8050
        %v8819 = vpop.f32.mrb[0].mxu0
        %v8820 = vadd.f32 %v8627, %v8819
        %v8821 = vpop.f32.mrb[0].mxu0
        %v8822 = vadd.f32 %v8629, %v8821
        %v8823 = vpop.f32.mrb[0].mxu0
        %v8824 = vadd.f32 %v8631, %v8823
        %v8825 = vpop.f32.mrb[0].mxu0
        %v8826 = vadd.f32 %v8633, %v8825
        %8827 = vmatprep.mubr.bf16.mxu0 %v8055
        %8828 = vmatmul.mubr.bf16.gmra.mrb[0].mxu0 %v8054
        %v8829 = vpop.f32.mrb[0].mxu0
        %v8830 = vadd.f32 %v8637, %v8829
        %v8831 = vpop.f32.mrb[0].mxu0
        %v8832 = vadd.f32 %v8639, %v8831
        %v8833 = vpop.f32.mrb[0].mxu0
        %v8834 = vadd.f32 %v8641, %v8833
        %v8835 = vpop.f32.mrb[0].mxu0
        %v8836 = vadd.f32 %v8643, %v8835
        %8837 = vdwg.mxu0
        %v8838 = vld [vmem:[%s762] sm:$0xf]
        %v8839 = vadd.f32 %v5952, %v8680
        %v8840 = vadd.f32 %v5953, %v8682
        %v8841 = vadd.f32 %v5954, %v8684
        %v8842 = vadd.f32 %v5955, %v8686
        %v8843 = vadd.f32 %v5956, %v8690
        %v8844 = vadd.f32 %v5957, %v8692
        %v8845 = vadd.f32 %v5958, %v8694
        %v8846 = vadd.f32 %v5959, %v8696
        %v8847 = vadd.f32 %v5960, %v8700
        %v8848 = vadd.f32 %v5961, %v8702
        %v8849 = vadd.f32 %v5962, %v8704
        %v8850 = vadd.f32 %v5963, %v8706
        %v8851 = vadd.f32 %v5964, %v8710
        %v8852 = vadd.f32 %v5965, %v8712
        %v8853 = vadd.f32 %v5966, %v8714
        %v8854 = vadd.f32 %v5967, %v8716
        %v8855 = vadd.f32 %v5968, %v8720
        %v8856 = vadd.f32 %v5969, %v8722
        %v8857 = vadd.f32 %v5970, %v8724
        %v8858 = vadd.f32 %v5971, %v8726
        %v8859 = vadd.f32 %v5972, %v8730
        %v8860 = vadd.f32 %v5973, %v8732
        %v8861 = vadd.f32 %v5974, %v8734
        %v8862 = vadd.f32 %v5975, %v8736
        %v8863 = vadd.f32 %v5976, %v8740
        %v8864 = vadd.f32 %v5977, %v8742
        %v8865 = vadd.f32 %v5978, %v8744
        %v8866 = vadd.f32 %v5979, %v8746
        %v8867 = vadd.f32 %v5980, %v8750
        %v8868 = vadd.f32 %v5981, %v8752
        %v8869 = vadd.f32 %v5982, %v8754
        %v8870 = vadd.f32 %v5983, %v8756
        %v8871 = vadd.f32 %v5984, %v8760
        %v8872 = vadd.f32 %v5985, %v8762
        %v8873 = vadd.f32 %v5986, %v8764
        %v8874 = vadd.f32 %v5987, %v8766
        %v8875 = vadd.f32 %v5988, %v8770
        %v8876 = vadd.f32 %v5989, %v8772
        %v8877 = vadd.f32 %v5990, %v8774
        %v8878 = vadd.f32 %v5991, %v8776
        %v8879 = vadd.f32 %v5992, %v8780
        %v8880 = vadd.f32 %v5993, %v8782
        %v8881 = vadd.f32 %v5994, %v8784
        %v8882 = vadd.f32 %v5995, %v8786
        %v8883 = vadd.f32 %v5996, %v8790
        %v8884 = vadd.f32 %v5997, %v8792
        %v8885 = vadd.f32 %v5998, %v8794
        %v8886 = vadd.f32 %v5999, %v8796
        %v8887 = vadd.f32 %v6000, %v8800
        %v8888 = vadd.f32 %v6001, %v8802
        %v8889 = vadd.f32 %v6002, %v8804
        %v8890 = vadd.f32 %v6003, %v8806
        %v8891 = vadd.f32 %v6004, %v8810
        %v8892 = vadd.f32 %v6005, %v8812
        %v8893 = vadd.f32 %v6006, %v8814
        %v8894 = vadd.f32 %v6007, %v8816
        %v8895 = vadd.f32 %v6008, %v8820
        %v8896 = vadd.f32 %v6009, %v8822
        %v8897 = vadd.f32 %v6010, %v8824
        %v8898 = vadd.f32 %v6011, %v8826
        %v8899 = vadd.f32 %v6012, %v8830
        %v8900 = vadd.f32 %v6013, %v8832
        %v8901 = vadd.f32 %v6014, %v8834
        %v8902 = vadd.f32 %v6015, %v8836
        %v8903 = vadd.f32 %v8839, %v8840
        %8904 = vadd.xlane.f32.xlu0 %v8903
        %v8905 = vpop.xlane.xlu0 %8904
        %v8906 = vadd.f32 %v8841, %v8842
        %8907 = vadd.xlane.f32.xlu0 %v8906
        %v8908 = vpop.xlane.xlu0 %8907
        %v8909 = vadd.f32 %v8843, %v8844
        %8910 = vadd.xlane.f32.xlu0 %v8909
        %v8911 = vpop.xlane.xlu0 %8910
        %v8912 = vadd.f32 %v8845, %v8846
        %8913 = vadd.xlane.f32.xlu0 %v8912
        %v8914 = vpop.xlane.xlu0 %8913
        %v8915 = vadd.f32 %v8847, %v8848
        %8916 = vadd.xlane.f32.xlu0 %v8915
        %v8917 = vpop.xlane.xlu0 %8916
        %v8918 = vadd.f32 %v8849, %v8850
        %8919 = vadd.xlane.f32.xlu0 %v8918
        %v8920 = vpop.xlane.xlu0 %8919
        %v8921 = vadd.f32 %v8851, %v8852
        %8922 = vadd.xlane.f32.xlu0 %v8921
        %v8923 = vpop.xlane.xlu0 %8922
        %v8924 = vadd.f32 %v8853, %v8854
        %8925 = vadd.xlane.f32.xlu0 %v8924
        %v8926 = vpop.xlane.xlu0 %8925
        %v8927 = vadd.f32 %v8855, %v8856
        %8928 = vadd.xlane.f32.xlu0 %v8927
        %v8929 = vpop.xlane.xlu0 %8928
        %v8930 = vadd.f32 %v8857, %v8858
        %8931 = vadd.xlane.f32.xlu0 %v8930
        %v8932 = vpop.xlane.xlu0 %8931
        %v8933 = vadd.f32 %v8859, %v8860
        %8934 = vadd.xlane.f32.xlu0 %v8933
        %v8935 = vpop.xlane.xlu0 %8934
        %v8936 = vadd.f32 %v8861, %v8862
        %8937 = vadd.xlane.f32.xlu0 %v8936
        %v8938 = vpop.xlane.xlu0 %8937
        %v8939 = vadd.f32 %v8863, %v8864
        %8940 = vadd.xlane.f32.xlu0 %v8939
        %v8941 = vpop.xlane.xlu0 %8940
        %v8942 = vadd.f32 %v8865, %v8866
        %8943 = vadd.xlane.f32.xlu0 %v8942
        %v8944 = vpop.xlane.xlu0 %8943
        %v8945 = vadd.f32 %v8867, %v8868
        %8946 = vadd.xlane.f32.xlu0 %v8945
        %v8947 = vpop.xlane.xlu0 %8946
        %v8948 = vadd.f32 %v8869, %v8870
        %8949 = vadd.xlane.f32.xlu0 %v8948
        %v8950 = vpop.xlane.xlu0 %8949
        %v8951 = vadd.f32 %v8871, %v8872
        %8952 = vadd.xlane.f32.xlu0 %v8951
        %v8953 = vpop.xlane.xlu0 %8952
        %v8954 = vadd.f32 %v8873, %v8874
        %8955 = vadd.xlane.f32.xlu0 %v8954
        %v8956 = vpop.xlane.xlu0 %8955
        %v8957 = vadd.f32 %v8875, %v8876
        %8958 = vadd.xlane.f32.xlu0 %v8957
        %v8959 = vpop.xlane.xlu0 %8958
        %v8960 = vadd.f32 %v8877, %v8878
        %8961 = vadd.xlane.f32.xlu0 %v8960
        %v8962 = vpop.xlane.xlu0 %8961
        %v8963 = vadd.f32 %v8879, %v8880
        %8964 = vadd.xlane.f32.xlu0 %v8963
        %v8965 = vpop.xlane.xlu0 %8964
        %v8966 = vadd.f32 %v8881, %v8882
        %8967 = vadd.xlane.f32.xlu0 %v8966
        %v8968 = vpop.xlane.xlu0 %8967
        %v8969 = vadd.f32 %v8883, %v8884
        %8970 = vadd.xlane.f32.xlu0 %v8969
        %v8971 = vpop.xlane.xlu0 %8970
        %v8972 = vadd.f32 %v8885, %v8886
        %8973 = vadd.xlane.f32.xlu0 %v8972
        %v8974 = vpop.xlane.xlu0 %8973
        %v8975 = vadd.f32 %v8887, %v8888
        %8976 = vadd.xlane.f32.xlu0 %v8975
        %v8977 = vpop.xlane.xlu0 %8976
        %v8978 = vadd.f32 %v8889, %v8890
        %8979 = vadd.xlane.f32.xlu0 %v8978
        %v8980 = vpop.xlane.xlu0 %8979
        %v8981 = vadd.f32 %v8891, %v8892
        %8982 = vadd.xlane.f32.xlu0 %v8981
        %v8983 = vpop.xlane.xlu0 %8982
        %v8984 = vadd.f32 %v8893, %v8894
        %8985 = vadd.xlane.f32.xlu0 %v8984
        %v8986 = vpop.xlane.xlu0 %8985
        %v8987 = vadd.f32 %v8895, %v8896
        %8988 = vadd.xlane.f32.xlu0 %v8987
        %v8989 = vpop.xlane.xlu0 %8988
        %v8990 = vadd.f32 %v8897, %v8898
        %8991 = vadd.xlane.f32.xlu0 %v8990
        %v8992 = vpop.xlane.xlu0 %8991
        %v8993 = vadd.f32 %v8899, %v8900
        %8994 = vadd.xlane.f32.xlu0 %v8993
        %v8995 = vpop.xlane.xlu0 %8994
        %v8996 = vadd.f32 %v8901, %v8902
        %8997 = vadd.xlane.f32.xlu0 %v8996
        %v8998 = vpop.xlane.xlu0 %8997
        %v8999 = vmul.f32 %v8905, %v5434
        %v9000 = vmul.f32 %v8908, %v5434
        %v9001 = vmul.f32 %v8911, %v5434
        %v9002 = vmul.f32 %v8914, %v5434
        %v9003 = vmul.f32 %v8917, %v5434
        %v9004 = vmul.f32 %v8920, %v5434
        %v9005 = vmul.f32 %v8923, %v5434
        %v9006 = vmul.f32 %v8926, %v5434
        %v9007 = vmul.f32 %v8929, %v5434
        %v9008 = vmul.f32 %v8932, %v5434
        %v9009 = vmul.f32 %v8935, %v5434
        %v9010 = vmul.f32 %v8938, %v5434
        %v9011 = vmul.f32 %v8941, %v5434
        %v9012 = vmul.f32 %v8944, %v5434
        %v9013 = vmul.f32 %v8947, %v5434
        %v9014 = vmul.f32 %v8950, %v5434
        %v9015 = vmul.f32 %v8953, %v5434
        %v9016 = vmul.f32 %v8956, %v5434
        %v9017 = vmul.f32 %v8959, %v5434
        %v9018 = vmul.f32 %v8962, %v5434
        %v9019 = vmul.f32 %v8965, %v5434
        %v9020 = vmul.f32 %v8968, %v5434
        %v9021 = vmul.f32 %v8971, %v5434
        %v9022 = vmul.f32 %v8974, %v5434
        %v9023 = vmul.f32 %v8977, %v5434
        %v9024 = vmul.f32 %v8980, %v5434
        %v9025 = vmul.f32 %v8983, %v5434
        %v9026 = vmul.f32 %v8986, %v5434
        %v9027 = vmul.f32 %v8989, %v5434
        %v9028 = vmul.f32 %v8992, %v5434
        %v9029 = vmul.f32 %v8995, %v5434
        %v9030 = vmul.f32 %v8998, %v5434
        %v9031 = vsub.f32 %v8839, %v8999
        %v9032 = vsub.f32 %v8840, %v8999
        %v9033 = vsub.f32 %v8841, %v9000
        %v9034 = vsub.f32 %v8842, %v9000
        %v9035 = vsub.f32 %v8843, %v9001
        %v9036 = vsub.f32 %v8844, %v9001
        %v9037 = vsub.f32 %v8845, %v9002
        %v9038 = vsub.f32 %v8846, %v9002
        %v9039 = vsub.f32 %v8847, %v9003
        %v9040 = vsub.f32 %v8848, %v9003
        %v9041 = vsub.f32 %v8849, %v9004
        %v9042 = vsub.f32 %v8850, %v9004
        %v9043 = vsub.f32 %v8851, %v9005
        %v9044 = vsub.f32 %v8852, %v9005
        %v9045 = vsub.f32 %v8853, %v9006
        %v9046 = vsub.f32 %v8854, %v9006
        %v9047 = vsub.f32 %v8855, %v9007
        %v9048 = vsub.f32 %v8856, %v9007
        %v9049 = vsub.f32 %v8857, %v9008
        %v9050 = vsub.f32 %v8858, %v9008
        %v9051 = vsub.f32 %v8859, %v9009
        %v9052 = vsub.f32 %v8860, %v9009
        %v9053 = vsub.f32 %v8861, %v9010
        %v9054 = vsub.f32 %v8862, %v9010
        %v9055 = vsub.f32 %v8863, %v9011
        %v9056 = vsub.f32 %v8864, %v9011
        %v9057 = vsub.f32 %v8865, %v9012
        %v9058 = vsub.f32 %v8866, %v9012
        %v9059 = vsub.f32 %v8867, %v9013
        %v9060 = vsub.f32 %v8868, %v9013
        %v9061 = vsub.f32 %v8869, %v9014
        %v9062 = vsub.f32 %v8870, %v9014
        %v9063 = vsub.f32 %v8871, %v9015
        %v9064 = vsub.f32 %v8872, %v9015
        %v9065 = vsub.f32 %v8873, %v9016
        %v9066 = vsub.f32 %v8874, %v9016
        %v9067 = vsub.f32 %v8875, %v9017
        %v9068 = vsub.f32 %v8876, %v9017
        %v9069 = vsub.f32 %v8877, %v9018
        %v9070 = vsub.f32 %v8878, %v9018
        %v9071 = vsub.f32 %v8879, %v9019
        %v9072 = vsub.f32 %v8880, %v9019
        %v9073 = vsub.f32 %v8881, %v9020
        %v9074 = vsub.f32 %v8882, %v9020
        %v9075 = vsub.f32 %v8883, %v9021
        %v9076 = vsub.f32 %v8884, %v9021
        %v9077 = vsub.f32 %v8885, %v9022
        %v9078 = vsub.f32 %v8886, %v9022
        %v9079 = vsub.f32 %v8887, %v9023
        %v9080 = vsub.f32 %v8888, %v9023
        %v9081 = vsub.f32 %v8889, %v9024
        %v9082 = vsub.f32 %v8890, %v9024
        %v9083 = vsub.f32 %v8891, %v9025
        %v9084 = vsub.f32 %v8892, %v9025
        %v9085 = vsub.f32 %v8893, %v9026
        %v9086 = vsub.f32 %v8894, %v9026
        %v9087 = vsub.f32 %v8895, %v9027
        %v9088 = vsub.f32 %v8896, %v9027
        %v9089 = vsub.f32 %v8897, %v9028
        %v9090 = vsub.f32 %v8898, %v9028
        %v9091 = vsub.f32 %v8899, %v9029
        %v9092 = vsub.f32 %v8900, %v9029
        %v9093 = vsub.f32 %v8901, %v9030
        %v9094 = vsub.f32 %v8902, %v9030
        %v9095 = vmul.f32 %v9031, %v9031
        %v9096 = vmul.f32 %v9032, %v9032
        %v9097 = vmul.f32 %v9033, %v9033
        %v9098 = vmul.f32 %v9034, %v9034
        %v9099 = vmul.f32 %v9035, %v9035
        %v9100 = vmul.f32 %v9036, %v9036
        %v9101 = vmul.f32 %v9037, %v9037
        %v9102 = vmul.f32 %v9038, %v9038
        %v9103 = vmul.f32 %v9039, %v9039
        %v9104 = vmul.f32 %v9040, %v9040
        %v9105 = vmul.f32 %v9041, %v9041
        %v9106 = vmul.f32 %v9042, %v9042
        %v9107 = vmul.f32 %v9043, %v9043
        %v9108 = vmul.f32 %v9044, %v9044
        %v9109 = vmul.f32 %v9045, %v9045
        %v9110 = vmul.f32 %v9046, %v9046
        %v9111 = vmul.f32 %v9047, %v9047
        %v9112 = vmul.f32 %v9048, %v9048
        %v9113 = vmul.f32 %v9049, %v9049
        %v9114 = vmul.f32 %v9050, %v9050
        %v9115 = vmul.f32 %v9051, %v9051
        %v9116 = vmul.f32 %v9052, %v9052
        %v9117 = vmul.f32 %v9053, %v9053
        %v9118 = vmul.f32 %v9054, %v9054
        %v9119 = vmul.f32 %v9055, %v9055
        %v9120 = vmul.f32 %v9056, %v9056
        %v9121 = vmul.f32 %v9057, %v9057
        %v9122 = vmul.f32 %v9058, %v9058
        %v9123 = vmul.f32 %v9059, %v9059
        %v9124 = vmul.f32 %v9060, %v9060
        %v9125 = vmul.f32 %v9061, %v9061
        %v9126 = vmul.f32 %v9062, %v9062
        %v9127 = vmul.f32 %v9063, %v9063
        %v9128 = vmul.f32 %v9064, %v9064
        %v9129 = vmul.f32 %v9065, %v9065
        %v9130 = vmul.f32 %v9066, %v9066
        %v9131 = vmul.f32 %v9067, %v9067
        %v9132 = vmul.f32 %v9068, %v9068
        %v9133 = vmul.f32 %v9069, %v9069
        %v9134 = vmul.f32 %v9070, %v9070
        %v9135 = vmul.f32 %v9071, %v9071
        %v9136 = vmul.f32 %v9072, %v9072
        %v9137 = vmul.f32 %v9073, %v9073
        %v9138 = vmul.f32 %v9074, %v9074
        %v9139 = vmul.f32 %v9075, %v9075
        %v9140 = vmul.f32 %v9076, %v9076
        %v9141 = vmul.f32 %v9077, %v9077
        %v9142 = vmul.f32 %v9078, %v9078
        %v9143 = vmul.f32 %v9079, %v9079
        %v9144 = vmul.f32 %v9080, %v9080
        %v9145 = vmul.f32 %v9081, %v9081
        %v9146 = vmul.f32 %v9082, %v9082
        %v9147 = vmul.f32 %v9083, %v9083
        %v9148 = vmul.f32 %v9084, %v9084
        %v9149 = vmul.f32 %v9085, %v9085
        %v9150 = vmul.f32 %v9086, %v9086
        %v9151 = vmul.f32 %v9087, %v9087
        %v9152 = vmul.f32 %v9088, %v9088
        %v9153 = vmul.f32 %v9089, %v9089
        %v9154 = vmul.f32 %v9090, %v9090
        %v9155 = vmul.f32 %v9091, %v9091
        %v9156 = vmul.f32 %v9092, %v9092
        %v9157 = vmul.f32 %v9093, %v9093
        %v9158 = vmul.f32 %v9094, %v9094
        %v9159 = vadd.f32 %v9095, %v9096
        %9160 = vadd.xlane.f32.xlu0 %v9159
        %v9161 = vpop.xlane.xlu0 %9160
        %v9162 = vadd.f32 %v9097, %v9098
        %9163 = vadd.xlane.f32.xlu0 %v9162
        %v9164 = vpop.xlane.xlu0 %9163
        %v9165 = vadd.f32 %v9099, %v9100
        %9166 = vadd.xlane.f32.xlu0 %v9165
        %v9167 = vpop.xlane.xlu0 %9166
        %v9168 = vadd.f32 %v9101, %v9102
        %9169 = vadd.xlane.f32.xlu0 %v9168
        %v9170 = vpop.xlane.xlu0 %9169
        %v9171 = vadd.f32 %v9103, %v9104
        %9172 = vadd.xlane.f32.xlu0 %v9171
        %v9173 = vpop.xlane.xlu0 %9172
        %v9174 = vadd.f32 %v9105, %v9106
        %9175 = vadd.xlane.f32.xlu0 %v9174
        %v9176 = vpop.xlane.xlu0 %9175
        %v9177 = vadd.f32 %v9107, %v9108
        %9178 = vadd.xlane.f32.xlu0 %v9177
        %v9179 = vpop.xlane.xlu0 %9178
        %v9180 = vadd.f32 %v9109, %v9110
        %9181 = vadd.xlane.f32.xlu0 %v9180
        %v9182 = vpop.xlane.xlu0 %9181
        %v9183 = vadd.f32 %v9111, %v9112
        %9184 = vadd.xlane.f32.xlu0 %v9183
        %v9185 = vpop.xlane.xlu0 %9184
        %v9186 = vadd.f32 %v9113, %v9114
        %9187 = vadd.xlane.f32.xlu0 %v9186
        %v9188 = vpop.xlane.xlu0 %9187
        %v9189 = vadd.f32 %v9115, %v9116
        %9190 = vadd.xlane.f32.xlu0 %v9189
        %v9191 = vpop.xlane.xlu0 %9190
        %v9192 = vadd.f32 %v9117, %v9118
        %9193 = vadd.xlane.f32.xlu0 %v9192
        %v9194 = vpop.xlane.xlu0 %9193
        %v9195 = vadd.f32 %v9119, %v9120
        %9196 = vadd.xlane.f32.xlu0 %v9195
        %v9197 = vpop.xlane.xlu0 %9196
        %v9198 = vadd.f32 %v9121, %v9122
        %9199 = vadd.xlane.f32.xlu0 %v9198
        %v9200 = vpop.xlane.xlu0 %9199
        %v9201 = vadd.f32 %v9123, %v9124
        %9202 = vadd.xlane.f32.xlu0 %v9201
        %v9203 = vpop.xlane.xlu0 %9202
        %v9204 = vadd.f32 %v9125, %v9126
        %9205 = vadd.xlane.f32.xlu0 %v9204
        %v9206 = vpop.xlane.xlu0 %9205
        %v9207 = vadd.f32 %v9127, %v9128
        %9208 = vadd.xlane.f32.xlu0 %v9207
        %v9209 = vpop.xlane.xlu0 %9208
        %v9210 = vadd.f32 %v9129, %v9130
        %9211 = vadd.xlane.f32.xlu0 %v9210
        %v9212 = vpop.xlane.xlu0 %9211
        %v9213 = vadd.f32 %v9131, %v9132
        %9214 = vadd.xlane.f32.xlu0 %v9213
        %v9215 = vpop.xlane.xlu0 %9214
        %v9216 = vadd.f32 %v9133, %v9134
        %9217 = vadd.xlane.f32.xlu0 %v9216
        %v9218 = vpop.xlane.xlu0 %9217
        %v9219 = vadd.f32 %v9135, %v9136
        %9220 = vadd.xlane.f32.xlu0 %v9219
        %v9221 = vpop.xlane.xlu0 %9220
        %v9222 = vadd.f32 %v9137, %v9138
        %9223 = vadd.xlane.f32.xlu0 %v9222
        %v9224 = vpop.xlane.xlu0 %9223
        %v9225 = vadd.f32 %v9139, %v9140
        %9226 = vadd.xlane.f32.xlu0 %v9225
        %v9227 = vpop.xlane.xlu0 %9226
        %v9228 = vadd.f32 %v9141, %v9142
        %9229 = vadd.xlane.f32.xlu0 %v9228
        %v9230 = vpop.xlane.xlu0 %9229
        %v9231 = vadd.f32 %v9143, %v9144
        %9232 = vadd.xlane.f32.xlu0 %v9231
        %v9233 = vpop.xlane.xlu0 %9232
        %v9234 = vadd.f32 %v9145, %v9146
        %9235 = vadd.xlane.f32.xlu0 %v9234
        %v9236 = vpop.xlane.xlu0 %9235
        %v9237 = vadd.f32 %v9147, %v9148
        %9238 = vadd.xlane.f32.xlu0 %v9237
        %v9239 = vpop.xlane.xlu0 %9238
        %v9240 = vadd.f32 %v9149, %v9150
        %9241 = vadd.xlane.f32.xlu0 %v9240
        %v9242 = vpop.xlane.xlu0 %9241
        %v9243 = vadd.f32 %v9151, %v9152
        %9244 = vadd.xlane.f32.xlu0 %v9243
        %v9245 = vpop.xlane.xlu0 %9244
        %v9246 = vadd.f32 %v9153, %v9154
        %9247 = vadd.xlane.f32.xlu0 %v9246
        %v9248 = vpop.xlane.xlu0 %9247
        %v9249 = vadd.f32 %v9155, %v9156
        %9250 = vadd.xlane.f32.xlu0 %v9249
        %v9251 = vpop.xlane.xlu0 %9250
        %v9252 = vadd.f32 %v9157, %v9158
        %9253 = vadd.xlane.f32.xlu0 %v9252
        %v9254 = vpop.xlane.xlu0 %9253
        %v9255 = vmul.f32 %v9161, %v5434
        %v9256 = vmul.f32 %v9164, %v5434
        %v9257 = vmul.f32 %v9167, %v5434
        %v9258 = vmul.f32 %v9170, %v5434
        %v9259 = vmul.f32 %v9173, %v5434
        %v9260 = vmul.f32 %v9176, %v5434
        %v9261 = vmul.f32 %v9179, %v5434
        %v9262 = vmul.f32 %v9182, %v5434
        %v9263 = vmul.f32 %v9185, %v5434
        %v9264 = vmul.f32 %v9188, %v5434
        %v9265 = vmul.f32 %v9191, %v5434
        %v9266 = vmul.f32 %v9194, %v5434
        %v9267 = vmul.f32 %v9197, %v5434
        %v9268 = vmul.f32 %v9200, %v5434
        %v9269 = vmul.f32 %v9203, %v5434
        %v9270 = vmul.f32 %v9206, %v5434
        %v9271 = vmul.f32 %v9209, %v5434
        %v9272 = vmul.f32 %v9212, %v5434
        %v9273 = vmul.f32 %v9215, %v5434
        %v9274 = vmul.f32 %v9218, %v5434
        %v9275 = vmul.f32 %v9221, %v5434
        %v9276 = vmul.f32 %v9224, %v5434
        %v9277 = vmul.f32 %v9227, %v5434
        %v9278 = vmul.f32 %v9230, %v5434
        %v9279 = vmul.f32 %v9233, %v5434
        %v9280 = vmul.f32 %v9236, %v5434
        %v9281 = vmul.f32 %v9239, %v5434
        %v9282 = vmul.f32 %v9242, %v5434
        %v9283 = vmul.f32 %v9245, %v5434
        %v9284 = vmul.f32 %v9248, %v5434
        %v9285 = vmul.f32 %v9251, %v5434
        %v9286 = vmul.f32 %v9254, %v5434
        %v9287 = vadd.f32 %v9255, 1e-12
        %v9288 = vadd.f32 %v9256, 1e-12
        %v9289 = vadd.f32 %v9257, 1e-12
        %v9290 = vadd.f32 %v9258, 1e-12
        %v9291 = vadd.f32 %v9259, 1e-12
        %v9292 = vadd.f32 %v9260, 1e-12
        %v9293 = vadd.f32 %v9261, 1e-12
        %v9294 = vadd.f32 %v9262, 1e-12
        %v9295 = vadd.f32 %v9263, 1e-12
        %v9296 = vadd.f32 %v9264, 1e-12
        %v9297 = vadd.f32 %v9265, 1e-12
        %v9298 = vadd.f32 %v9266, 1e-12
        %v9299 = vadd.f32 %v9267, 1e-12
        %v9300 = vadd.f32 %v9268, 1e-12
        %v9301 = vadd.f32 %v9269, 1e-12
        %v9302 = vadd.f32 %v9270, 1e-12
        %v9303 = vadd.f32 %v9271, 1e-12
        %v9304 = vadd.f32 %v9272, 1e-12
        %v9305 = vadd.f32 %v9273, 1e-12
        %v9306 = vadd.f32 %v9274, 1e-12
        %v9307 = vadd.f32 %v9275, 1e-12
        %v9308 = vadd.f32 %v9276, 1e-12
        %v9309 = vadd.f32 %v9277, 1e-12
        %v9310 = vadd.f32 %v9278, 1e-12
        %v9311 = vadd.f32 %v9279, 1e-12
        %v9312 = vadd.f32 %v9280, 1e-12
        %v9313 = vadd.f32 %v9281, 1e-12
        %v9314 = vadd.f32 %v9282, 1e-12
        %v9315 = vadd.f32 %v9283, 1e-12
        %v9316 = vadd.f32 %v9284, 1e-12
        %v9317 = vadd.f32 %v9285, 1e-12
        %v9318 = vadd.f32 %v9286, 1e-12
        %v9319 = vrsqrt.pop %v9287
        %v9320 = vrsqrt.pop %v9288
        %v9321 = vrsqrt.pop %v9289
        %v9322 = vrsqrt.pop %v9290
        %v9323 = vrsqrt.pop %v9291
        %v9324 = vrsqrt.pop %v9292
        %v9325 = vrsqrt.pop %v9293
        %v9326 = vrsqrt.pop %v9294
        %v9327 = vrsqrt.pop %v9295
        %v9328 = vrsqrt.pop %v9296
        %v9329 = vrsqrt.pop %v9297
        %v9330 = vrsqrt.pop %v9298
        %v9331 = vrsqrt.pop %v9299
        %v9332 = vrsqrt.pop %v9300
        %v9333 = vrsqrt.pop %v9301
        %v9334 = vrsqrt.pop %v9302
        %v9335 = vrsqrt.pop %v9303
        %v9336 = vrsqrt.pop %v9304
        %v9337 = vrsqrt.pop %v9305
        %v9338 = vrsqrt.pop %v9306
        %v9339 = vrsqrt.pop %v9307
        %v9340 = vrsqrt.pop %v9308
        %v9341 = vrsqrt.pop %v9309
        %v9342 = vrsqrt.pop %v9310
        %v9343 = vrsqrt.pop %v9311
        %v9344 = vrsqrt.pop %v9312
        %v9345 = vrsqrt.pop %v9313
        %v9346 = vrsqrt.pop %v9314
        %v9347 = vrsqrt.pop %v9315
        %v9348 = vrsqrt.pop %v9316
        %v9349 = vrsqrt.pop %v9317
        %v9350 = vrsqrt.pop %v9318
        %v9351 = vmul.f32 %v9031, %v9319
        %v9352 = vmul.f32 %v9032, %v9319
        %v9353 = vmul.f32 %v9033, %v9320
        %v9354 = vmul.f32 %v9034, %v9320
        %v9355 = vmul.f32 %v9035, %v9321
        %v9356 = vmul.f32 %v9036, %v9321
        %v9357 = vmul.f32 %v9037, %v9322
        %v9358 = vmul.f32 %v9038, %v9322
        %v9359 = vmul.f32 %v9039, %v9323
        %v9360 = vmul.f32 %v9040, %v9323
        %v9361 = vmul.f32 %v9041, %v9324
        %v9362 = vmul.f32 %v9042, %v9324
        %v9363 = vmul.f32 %v9043, %v9325
        %v9364 = vmul.f32 %v9044, %v9325
        %v9365 = vmul.f32 %v9045, %v9326
        %v9366 = vmul.f32 %v9046, %v9326
        %v9367 = vmul.f32 %v9047, %v9327
        %v9368 = vmul.f32 %v9048, %v9327
        %v9369 = vmul.f32 %v9049, %v9328
        %v9370 = vmul.f32 %v9050, %v9328
        %v9371 = vmul.f32 %v9051, %v9329
        %v9372 = vmul.f32 %v9052, %v9329
        %v9373 = vmul.f32 %v9053, %v9330
        %v9374 = vmul.f32 %v9054, %v9330
        %v9375 = vmul.f32 %v9055, %v9331
        %v9376 = vmul.f32 %v9056, %v9331
        %v9377 = vmul.f32 %v9057, %v9332
        %v9378 = vmul.f32 %v9058, %v9332
        %v9379 = vmul.f32 %v9059, %v9333
        %v9380 = vmul.f32 %v9060, %v9333
        %v9381 = vmul.f32 %v9061, %v9334
        %v9382 = vmul.f32 %v9062, %v9334
        %v9383 = vmul.f32 %v9063, %v9335
        %v9384 = vmul.f32 %v9064, %v9335
        %v9385 = vmul.f32 %v9065, %v9336
        %v9386 = vmul.f32 %v9066, %v9336
        %v9387 = vmul.f32 %v9067, %v9337
        %v9388 = vmul.f32 %v9068, %v9337
        %v9389 = vmul.f32 %v9069, %v9338
        %v9390 = vmul.f32 %v9070, %v9338
        %v9391 = vmul.f32 %v9071, %v9339
        %v9392 = vmul.f32 %v9072, %v9339
        %v9393 = vmul.f32 %v9073, %v9340
        %v9394 = vmul.f32 %v9074, %v9340
        %v9395 = vmul.f32 %v9075, %v9341
        %v9396 = vmul.f32 %v9076, %v9341
        %v9397 = vmul.f32 %v9077, %v9342
        %v9398 = vmul.f32 %v9078, %v9342
        %v9399 = vmul.f32 %v9079, %v9343
        %v9400 = vmul.f32 %v9080, %v9343
        %v9401 = vmul.f32 %v9081, %v9344
        %v9402 = vmul.f32 %v9082, %v9344
        %v9403 = vmul.f32 %v9083, %v9345
        %v9404 = vmul.f32 %v9084, %v9345
        %v9405 = vmul.f32 %v9085, %v9346
        %v9406 = vmul.f32 %v9086, %v9346
        %v9407 = vmul.f32 %v9087, %v9347
        %v9408 = vmul.f32 %v9088, %v9347
        %v9409 = vmul.f32 %v9089, %v9348
        %v9410 = vmul.f32 %v9090, %v9348
        %v9411 = vmul.f32 %v9091, %v9349
        %v9412 = vmul.f32 %v9092, %v9349
        %v9413 = vmul.f32 %v9093, %v9350
        %v9414 = vmul.f32 %v9094, %v9350
        %v9416 = vlaneseq
        %v9417 = vshrl.u32 %v9416, 7
        %v9418 = vsub.s32 0, %v9417
        %v9419 = vrot.slane %v8838, %v9418
        %v9420 = vlaneseq
        %v9421 = vshrl.u32 %v9420, 7
        %v9422 = vsub.s32 2, %v9421
        %v9423 = vrot.slane %v8838, %v9422
        %v9426 = vlaneseq
        %v9427 = vshrl.u32 %v9426, 7
        %v9428 = vsub.s32 0, %v9427
        %v9429 = vrot.slane %v9419, %v9428
        %v9430 = vlaneseq
        %v9431 = vshrl.u32 %v9430, 7
        %v9432 = vsub.s32 0, %v9431
        %v9433 = vrot.slane %v9423, %v9432
        %v9434 = vmul.f32 %v9351, %v9429
        %v9435 = vmul.f32 %v9352, %v9433
        %v9436 = vmul.f32 %v9353, %v9429
        %v9437 = vmul.f32 %v9354, %v9433
        %v9438 = vmul.f32 %v9355, %v9429
        %v9439 = vmul.f32 %v9356, %v9433
        %v9440 = vmul.f32 %v9357, %v9429
        %v9441 = vmul.f32 %v9358, %v9433
        %v9442 = vmul.f32 %v9359, %v9429
        %v9443 = vmul.f32 %v9360, %v9433
        %v9444 = vmul.f32 %v9361, %v9429
        %v9445 = vmul.f32 %v9362, %v9433
        %v9446 = vmul.f32 %v9363, %v9429
        %v9447 = vmul.f32 %v9364, %v9433
        %v9448 = vmul.f32 %v9365, %v9429
        %v9449 = vmul.f32 %v9366, %v9433
        %v9450 = vmul.f32 %v9367, %v9429
        %v9451 = vmul.f32 %v9368, %v9433
        %v9452 = vmul.f32 %v9369, %v9429
        %v9453 = vmul.f32 %v9370, %v9433
        %v9454 = vmul.f32 %v9371, %v9429
        %v9455 = vmul.f32 %v9372, %v9433
        %v9456 = vmul.f32 %v9373, %v9429
        %v9457 = vmul.f32 %v9374, %v9433
        %v9458 = vmul.f32 %v9375, %v9429
        %v9459 = vmul.f32 %v9376, %v9433
        %v9460 = vmul.f32 %v9377, %v9429
        %v9461 = vmul.f32 %v9378, %v9433
        %v9462 = vmul.f32 %v9379, %v9429
        %v9463 = vmul.f32 %v9380, %v9433
        %v9464 = vmul.f32 %v9381, %v9429
        %v9465 = vmul.f32 %v9382, %v9433
        %v9466 = vmul.f32 %v9383, %v9429
        %v9467 = vmul.f32 %v9384, %v9433
        %v9468 = vmul.f32 %v9385, %v9429
        %v9469 = vmul.f32 %v9386, %v9433
        %v9470 = vmul.f32 %v9387, %v9429
        %v9471 = vmul.f32 %v9388, %v9433
        %v9472 = vmul.f32 %v9389, %v9429
        %v9473 = vmul.f32 %v9390, %v9433
        %v9474 = vmul.f32 %v9391, %v9429
        %v9475 = vmul.f32 %v9392, %v9433
        %v9476 = vmul.f32 %v9393, %v9429
        %v9477 = vmul.f32 %v9394, %v9433
        %v9478 = vmul.f32 %v9395, %v9429
        %v9479 = vmul.f32 %v9396, %v9433
        %v9480 = vmul.f32 %v9397, %v9429
        %v9481 = vmul.f32 %v9398, %v9433
        %v9482 = vmul.f32 %v9399, %v9429
        %v9483 = vmul.f32 %v9400, %v9433
        %v9484 = vmul.f32 %v9401, %v9429
        %v9485 = vmul.f32 %v9402, %v9433
        %v9486 = vmul.f32 %v9403, %v9429
        %v9487 = vmul.f32 %v9404, %v9433
        %v9488 = vmul.f32 %v9405, %v9429
        %v9489 = vmul.f32 %v9406, %v9433
        %v9490 = vmul.f32 %v9407, %v9429
        %v9491 = vmul.f32 %v9408, %v9433
        %v9492 = vmul.f32 %v9409, %v9429
        %v9493 = vmul.f32 %v9410, %v9433
        %v9494 = vmul.f32 %v9411, %v9429
        %v9495 = vmul.f32 %v9412, %v9433
        %v9496 = vmul.f32 %v9413, %v9429
        %v9497 = vmul.f32 %v9414, %v9433
        %v9498 = vlaneseq
        %v9499 = vshrl.u32 %v9498, 7
        %v9500 = vsub.s32 1, %v9499
        %v9501 = vrot.slane %v8838, %v9500
        %v9502 = vlaneseq
        %v9503 = vshrl.u32 %v9502, 7
        %v9504 = vsub.s32 3, %v9503
        %v9505 = vrot.slane %v8838, %v9504
        %v9508 = vlaneseq
        %v9509 = vshrl.u32 %v9508, 7
        %v9510 = vsub.s32 1, %v9509
        %v9511 = vrot.slane %v9501, %v9510
        %v9512 = vlaneseq
        %v9513 = vshrl.u32 %v9512, 7
        %v9514 = vsub.s32 1, %v9513
        %v9515 = vrot.slane %v9505, %v9514
        %v9516 = vadd.f32 %v9434, %v9511
        %v9517 = vadd.f32 %v9435, %v9515
        %v9518 = vadd.f32 %v9436, %v9511
        %v9519 = vadd.f32 %v9437, %v9515
        %v9520 = vadd.f32 %v9438, %v9511
        %v9521 = vadd.f32 %v9439, %v9515
        %v9522 = vadd.f32 %v9440, %v9511
        %v9523 = vadd.f32 %v9441, %v9515
        %v9524 = vadd.f32 %v9442, %v9511
        %v9525 = vadd.f32 %v9443, %v9515
        %v9526 = vadd.f32 %v9444, %v9511
        %v9527 = vadd.f32 %v9445, %v9515
        %v9528 = vadd.f32 %v9446, %v9511
        %v9529 = vadd.f32 %v9447, %v9515
        %v9530 = vadd.f32 %v9448, %v9511
        %v9531 = vadd.f32 %v9449, %v9515
        %v9532 = vadd.f32 %v9450, %v9511
        %v9533 = vadd.f32 %v9451, %v9515
        %v9534 = vadd.f32 %v9452, %v9511
        %v9535 = vadd.f32 %v9453, %v9515
        %v9536 = vadd.f32 %v9454, %v9511
        %v9537 = vadd.f32 %v9455, %v9515
        %v9538 = vadd.f32 %v9456, %v9511
        %v9539 = vadd.f32 %v9457, %v9515
        %v9540 = vadd.f32 %v9458, %v9511
        %v9541 = vadd.f32 %v9459, %v9515
        %v9542 = vadd.f32 %v9460, %v9511
        %v9543 = vadd.f32 %v9461, %v9515
        %v9544 = vadd.f32 %v9462, %v9511
        %v9545 = vadd.f32 %v9463, %v9515
        %v9546 = vadd.f32 %v9464, %v9511
        %v9547 = vadd.f32 %v9465, %v9515
        %v9548 = vadd.f32 %v9466, %v9511
        %v9549 = vadd.f32 %v9467, %v9515
        %v9550 = vadd.f32 %v9468, %v9511
        %v9551 = vadd.f32 %v9469, %v9515
        %v9552 = vadd.f32 %v9470, %v9511
        %v9553 = vadd.f32 %v9471, %v9515
        %v9554 = vadd.f32 %v9472, %v9511
        %v9555 = vadd.f32 %v9473, %v9515
        %v9556 = vadd.f32 %v9474, %v9511
        %v9557 = vadd.f32 %v9475, %v9515
        %v9558 = vadd.f32 %v9476, %v9511
        %v9559 = vadd.f32 %v9477, %v9515
        %v9560 = vadd.f32 %v9478, %v9511
        %v9561 = vadd.f32 %v9479, %v9515
        %v9562 = vadd.f32 %v9480, %v9511
        %v9563 = vadd.f32 %v9481, %v9515
        %v9564 = vadd.f32 %v9482, %v9511
        %v9565 = vadd.f32 %v9483, %v9515
        %v9566 = vadd.f32 %v9484, %v9511
        %v9567 = vadd.f32 %v9485, %v9515
        %v9568 = vadd.f32 %v9486, %v9511
        %v9569 = vadd.f32 %v9487, %v9515
        %v9570 = vadd.f32 %v9488, %v9511
        %v9571 = vadd.f32 %v9489, %v9515
        %v9572 = vadd.f32 %v9490, %v9511
        %v9573 = vadd.f32 %v9491, %v9515
        %v9574 = vadd.f32 %v9492, %v9511
        %v9575 = vadd.f32 %v9493, %v9515
        %v9576 = vadd.f32 %v9494, %v9511
        %v9577 = vadd.f32 %v9495, %v9515
        %v9578 = vadd.f32 %v9496, %v9511
        %v9579 = vadd.f32 %v9497, %v9515
        %9580 = vst [vmem:[#allocation2] sm:$0xff] %v9516
        %9581 = vst [vmem:[#allocation2 + $0x8] sm:$0xff] %v9517
        %9582 = vst [vmem:[#allocation2 + $0x10] sm:$0xff] %v9518
        %9583 = vst [vmem:[#allocation2 + $0x18] sm:$0xff] %v9519
        %9584 = vst [vmem:[#allocation2 + $0x20] sm:$0xff] %v9520
        %9585 = vst [vmem:[#allocation2 + $0x28] sm:$0xff] %v9521
        %9586 = vst [vmem:[#allocation2 + $0x30] sm:$0xff] %v9522
        %9587 = vst [vmem:[#allocation2 + $0x38] sm:$0xff] %v9523
        %9588 = vst [vmem:[#allocation2 + $0x40] sm:$0xff] %v9524
        %9589 = vst [vmem:[#allocation2 + $0x48] sm:$0xff] %v9525
        %9590 = vst [vmem:[#allocation2 + $0x50] sm:$0xff] %v9526
        %9591 = vst [vmem:[#allocation2 + $0x58] sm:$0xff] %v9527
        %9592 = vst [vmem:[#allocation2 + $0x60] sm:$0xff] %v9528
        %9593 = vst [vmem:[#allocation2 + $0x68] sm:$0xff] %v9529
        %9594 = vst [vmem:[#allocation2 + $0x70] sm:$0xff] %v9530
        %9595 = vst [vmem:[#allocation2 + $0x78] sm:$0xff] %v9531
        %9596 = vst [vmem:[#allocation2 + $0x80] sm:$0xff] %v9532
        %9597 = vst [vmem:[#allocation2 + $0x88] sm:$0xff] %v9533
        %9598 = vst [vmem:[#allocation2 + $0x90] sm:$0xff] %v9534
        %9599 = vst [vmem:[#allocation2 + $0x98] sm:$0xff] %v9535
        %9600 = vst [vmem:[#allocation2 + $0xa0] sm:$0xff] %v9536
        %9601 = vst [vmem:[#allocation2 + $0xa8] sm:$0xff] %v9537
        %9602 = vst [vmem:[#allocation2 + $0xb0] sm:$0xff] %v9538
        %9603 = vst [vmem:[#allocation2 + $0xb8] sm:$0xff] %v9539
        %9604 = vst [vmem:[#allocation2 + $0xc0] sm:$0xff] %v9540
        %9605 = vst [vmem:[#allocation2 + $0xc8] sm:$0xff] %v9541
        %9606 = vst [vmem:[#allocation2 + $0xd0] sm:$0xff] %v9542
        %9607 = vst [vmem:[#allocation2 + $0xd8] sm:$0xff] %v9543
        %9608 = vst [vmem:[#allocation2 + $0xe0] sm:$0xff] %v9544
        %9609 = vst [vmem:[#allocation2 + $0xe8] sm:$0xff] %v9545
        %9610 = vst [vmem:[#allocation2 + $0xf0] sm:$0xff] %v9546
        %9611 = vst [vmem:[#allocation2 + $0xf8] sm:$0xff] %v9547
        %9612 = vst [vmem:[#allocation2 + $0x100] sm:$0xff] %v9548
        %9613 = vst [vmem:[#allocation2 + $0x108] sm:$0xff] %v9549
        %9614 = vst [vmem:[#allocation2 + $0x110] sm:$0xff] %v9550
        %9615 = vst [vmem:[#allocation2 + $0x118] sm:$0xff] %v9551
        %9616 = vst [vmem:[#allocation2 + $0x120] sm:$0xff] %v9552
        %9617 = vst [vmem:[#allocation2 + $0x128] sm:$0xff] %v9553
        %9618 = vst [vmem:[#allocation2 + $0x130] sm:$0xff] %v9554
        %9619 = vst [vmem:[#allocation2 + $0x138] sm:$0xff] %v9555
        %9620 = vst [vmem:[#allocation2 + $0x140] sm:$0xff] %v9556
        %9621 = vst [vmem:[#allocation2 + $0x148] sm:$0xff] %v9557
        %9622 = vst [vmem:[#allocation2 + $0x150] sm:$0xff] %v9558
        %9623 = vst [vmem:[#allocation2 + $0x158] sm:$0xff] %v9559
        %9624 = vst [vmem:[#allocation2 + $0x160] sm:$0xff] %v9560
        %9625 = vst [vmem:[#allocation2 + $0x168] sm:$0xff] %v9561
        %9626 = vst [vmem:[#allocation2 + $0x170] sm:$0xff] %v9562
        %9627 = vst [vmem:[#allocation2 + $0x178] sm:$0xff] %v9563
        %9628 = vst [vmem:[#allocation2 + $0x180] sm:$0xff] %v9564
        %9629 = vst [vmem:[#allocation2 + $0x188] sm:$0xff] %v9565
        %9630 = vst [vmem:[#allocation2 + $0x190] sm:$0xff] %v9566
        %9631 = vst [vmem:[#allocation2 + $0x198] sm:$0xff] %v9567
        %9632 = vst [vmem:[#allocation2 + $0x1a0] sm:$0xff] %v9568
        %9633 = vst [vmem:[#allocation2 + $0x1a8] sm:$0xff] %v9569
        %9634 = vst [vmem:[#allocation2 + $0x1b0] sm:$0xff] %v9570
        %9635 = vst [vmem:[#allocation2 + $0x1b8] sm:$0xff] %v9571
        %9636 = vst [vmem:[#allocation2 + $0x1c0] sm:$0xff] %v9572
        %9637 = vst [vmem:[#allocation2 + $0x1c8] sm:$0xff] %v9573
        %9638 = vst [vmem:[#allocation2 + $0x1d0] sm:$0xff] %v9574
        %9639 = vst [vmem:[#allocation2 + $0x1d8] sm:$0xff] %v9575
        %9640 = vst [vmem:[#allocation2 + $0x1e0] sm:$0xff] %v9576
        %9641 = vst [vmem:[#allocation2 + $0x1e8] sm:$0xff] %v9577
        %9642 = vst [vmem:[#allocation2 + $0x1f0] sm:$0xff] %v9578
        %9643 = vst [vmem:[#allocation2 + $0x1f8] sm:$0xff] %v9579
        %p9644 = scmp.eq.s32.totalorder %s29, 1
        // Predicated region
        $region117: #{tpu_custom_call.1} parent=75 // pred_check
          %p9645 = pneg %p9644
        $region118: #{tpu_custom_call.1} parent=75 // pred_check_branch
          %9647 = sbr.rel (%p9645) target = $region120
        $region119: #{tpu_custom_call.1} parent=75 // pred_region
          %v9648 = vadd.f32 %v9516, %v9518
          %v9649 = vadd.f32 %v9648, %v9520
          %v9650 = vadd.f32 %v9649, %v9522
          %v9651 = vadd.f32 %v9650, %v9524
          %v9652 = vadd.f32 %v9651, %v9526
          %v9653 = vadd.f32 %v9652, %v9528
          %v9654 = vadd.f32 %v9653, %v9530
          %v9655 = vadd.f32 %v9654, %v9532
          %v9656 = vadd.f32 %v9655, %v9534
          %v9657 = vadd.f32 %v9656, %v9536
          %v9658 = vadd.f32 %v9657, %v9538
          %v9659 = vadd.f32 %v9658, %v9540
          %v9660 = vadd.f32 %v9659, %v9542
          %v9661 = vadd.f32 %v9660, %v9544
          %v9662 = vadd.f32 %v9661, %v9546
          %v9663 = vrot.slane %v9662, 4
          %v9664 = vadd.f32 %v9662, %v9663
          %v9665 = vrot.slane %v9664, 2
          %v9666 = vadd.f32 %v9664, %v9665
          %v9667 = vrot.slane %v9666, 1
          %v9668 = vadd.f32 %v9666, %v9667
          %v9669 = vadd.f32 %v9517, %v9519
          %v9670 = vadd.f32 %v9669, %v9521
          %v9671 = vadd.f32 %v9670, %v9523
          %v9672 = vadd.f32 %v9671, %v9525
          %v9673 = vadd.f32 %v9672, %v9527
          %v9674 = vadd.f32 %v9673, %v9529
          %v9675 = vadd.f32 %v9674, %v9531
          %v9676 = vadd.f32 %v9675, %v9533
          %v9677 = vadd.f32 %v9676, %v9535
          %v9678 = vadd.f32 %v9677, %v9537
          %v9679 = vadd.f32 %v9678, %v9539
          %v9680 = vadd.f32 %v9679, %v9541
          %v9681 = vadd.f32 %v9680, %v9543
          %v9682 = vadd.f32 %v9681, %v9545
          %v9683 = vadd.f32 %v9682, %v9547
          %v9684 = vrot.slane %v9683, 4
          %v9685 = vadd.f32 %v9683, %v9684
          %v9686 = vrot.slane %v9685, 2
          %v9687 = vadd.f32 %v9685, %v9686
          %v9688 = vrot.slane %v9687, 1
          %v9689 = vadd.f32 %v9687, %v9688
          %v9690 = vadd.f32 %v9548, %v9550
          %v9691 = vadd.f32 %v9690, %v9552
          %v9692 = vadd.f32 %v9691, %v9554
          %v9693 = vadd.f32 %v9692, %v9556
          %v9694 = vadd.f32 %v9693, %v9558
          %v9695 = vadd.f32 %v9694, %v9560
          %v9696 = vadd.f32 %v9695, %v9562
          %v9697 = vadd.f32 %v9696, %v9564
          %v9698 = vadd.f32 %v9697, %v9566
          %v9699 = vadd.f32 %v9698, %v9568
          %v9700 = vadd.f32 %v9699, %v9570
          %v9701 = vadd.f32 %v9700, %v9572
          %v9702 = vadd.f32 %v9701, %v9574
          %v9703 = vadd.f32 %v9702, %v9576
          %v9704 = vadd.f32 %v9703, %v9578
          %v9705 = vrot.slane %v9704, 4
          %v9706 = vadd.f32 %v9704, %v9705
          %v9707 = vrot.slane %v9706, 2
          %v9708 = vadd.f32 %v9706, %v9707
          %v9709 = vrot.slane %v9708, 1
          %v9710 = vadd.f32 %v9708, %v9709
          %v9711 = vadd.f32 %v9549, %v9551
          %v9712 = vadd.f32 %v9711, %v9553
          %v9713 = vadd.f32 %v9712, %v9555
          %v9714 = vadd.f32 %v9713, %v9557
          %v9715 = vadd.f32 %v9714, %v9559
          %v9716 = vadd.f32 %v9715, %v9561
          %v9717 = vadd.f32 %v9716, %v9563
          %v9718 = vadd.f32 %v9717, %v9565
          %v9719 = vadd.f32 %v9718, %v9567
          %v9720 = vadd.f32 %v9719, %v9569
          %v9721 = vadd.f32 %v9720, %v9571
          %v9722 = vadd.f32 %v9721, %v9573
          %v9723 = vadd.f32 %v9722, %v9575
          %v9724 = vadd.f32 %v9723, %v9577
          %v9725 = vadd.f32 %v9724, %v9579
          %v9726 = vrot.slane %v9725, 4
          %v9727 = vadd.f32 %v9725, %v9726
          %v9728 = vrot.slane %v9727, 2
          %v9729 = vadd.f32 %v9727, %v9728
          %v9730 = vrot.slane %v9729, 1
          %v9731 = vadd.f32 %v9729, %v9730
          %v9732 = vrcp.pop 128.0
          %v9733 = vmul.f32 %v9668, %v9732
          %v9734 = vmul.f32 %v9689, %v9732
          %v9735 = vmul.f32 %v9710, %v9732
          %v9736 = vmul.f32 %v9731, %v9732
          %v9741 = vcombine.low %v9733, %v9734
          %v9743 = vunpack.c.l.s4 1983009808
          %v9744 = vunpack.c.0.s8 %v9743
          %v9745 = vlaneseq
          %v9746 = vshrl.u32 %v9745, 7
          %v9747 = vsub.s32 %v9744, %v9746
          %v9748 = vrot.slane %v9741, %v9747
          %v9749 = vcombine.low %v9735, %v9736
          %v9751 = vunpack.c.l.s4 1983009808
          %v9752 = vunpack.c.0.s8 %v9751
          %v9753 = vlaneseq
          %v9754 = vshrl.u32 %v9753, 7
          %v9755 = vsub.s32 %v9752, %v9754
          %v9756 = vrot.slane %v9749, %v9755
          %vm9757 = vcmask 1044484
          %v9758 = vsel %vm9757, %v9748, %v9748
          %vm9759 = vcmask 1046534
          %v9760 = vsel %vm9759, %v9748, %v9758
          %v9761 = vrot.slane %v9756, 7
          %vm9762 = vcmask 1041409
          %v9763 = vsel %vm9762, %v9761, %v9760
          %vm9764 = vcmask 1043459
          %v9765 = vsel %vm9764, %v9761, %v9763
          %vm9766 = vcmask 1045509
          %v9767 = vsel %vm9766, %v9761, %v9765
          %vm9768 = vcmask 1047559
          %v9769 = vsel %vm9768, %v9761, %v9767
          %9771 = vst [vmem:[#allocation16] sm:$0xf] %v9769
        $region120: #{tpu_custom_call.1} parent=75 // pred_fallthru
          _
        // Predicated region
        $region121: #{tpu_custom_call.1} parent=75 // pred_check
          %p9772 = pneg %p386
        $region122: #{tpu_custom_call.1} parent=75 // pred_check_branch
          %9774 = sbr.rel (%p9772) target = $region124
        $region123: #{tpu_custom_call.1} parent=75 // pred_region
          %s9776 = ssub.s32 64, 64
          %9777 = vsyncadd [#allocation5], %s9776
          %s9779 = sshll.u32 [#allocation16], 4
          %s9780 = int_to_ptr.vmem [resolvable:$true] %s9779
          %9782 = dma.vmem_to_hbm [thread:$0]  %s9780, 64, %s14, [#allocation5]
        $region124: #{tpu_custom_call.1} parent=75 // pred_fallthru
          _
        // Predicated region
        $region125: #{tpu_custom_call.1} parent=75 // pred_check
          %p9783 = pneg %p386
        $region126: #{tpu_custom_call.1} parent=75 // pred_check_branch
          %9785 = sbr.rel (%p9783) target = $region128
        $region127: #{tpu_custom_call.1} parent=75 // pred_region
          %9786 = dma.done [#allocation5], 64
        $region128: #{tpu_custom_call.1} parent=75 // pred_fallthru
          _
      $region76: #{tpu_custom_call.1} parent=5 // pred_fallthru
        _
      %p9787 = scmp.le.s32.totalorder 2, %s24
      // Predicated region
      $region129: #{tpu_custom_call.1} parent=5 // pred_check
        %p9788 = pneg %p9787
      $region130: #{tpu_custom_call.1} parent=5 // pred_check_branch
        %9790 = sbr.rel (%p9788) target = $region132
      $region131: #{tpu_custom_call.1} parent=5 // pred_region
        %s9791 = ssub.s32 %s24, 2
      $region132: #{tpu_custom_call.1} parent=5 // pred_fallthru
        _
    $region6: #{tpu_custom_call.1} parent=1 // loop_footer
      %s28 = sadd.s32 1, %s24
    $region7: #{tpu_custom_call.1} parent=1 // loop_footer_branch
      %23 = sbr.rel target = $region3
    $region8: #{tpu_custom_call.1} parent=1 // loop_exit
      _
    %9792 = vsyncpa [#allocation4], 1
    %s9793 = scalar_lea.sflag [#allocation4], 1
    %9794 = vsyncpa %s9793, 1
    %9795 = vsyncpa [#allocation7], 1
    %9796 = vsyncpa [#allocation10], 1
    %9797 = vsyncpa [#allocation5], 1
    %s9798 = scalar_lea.sflag [#allocation5], 1
    %9799 = vsyncpa %s9798, 1

</llo_original>
